<compile_context>
chip_gen: v7x
topology: tpu7x:2x2x1
jax: 0.10.0
libtpu: 0.0.40
codegen_flags: <defaults>
</compile_context>

<pallas_src>
import jax
import jax.numpy as jnp
from jax import lax
from jax.experimental import pallas as pl
from jax.experimental.pallas import tpu as pltpu

F32 = jnp.float32
NS = 14                 # sensors / input features
SEQ = 30                # sequence length (Encoder hard-wires 30 * 14 = 420)
HID = 64                # GRU hidden size
GI_W = 3 * HID          # packed input-gate width  [r | z | n]  (192 lanes, no padding)
HEADW = 128             # packed SDE head width    [mu | sigma | nl x14 | 0]
RBH = 128               # ResidualBlock hidden width
RBO = 64                # ResidualBlock output width
RBW = RBH + RBO         # fused [linear_1 | linear_res] width
SUB = 8                 # f32 sublane tile
MAX_TILE = 128          # batch-tile rows (VMEM-safe on v5e/v6e/v7x)
SMALL_TILE = 16         # <= this: fully unroll the recurrence

W_SPEC = pl.BlockSpec(memory_space=pltpu.MemorySpace.VMEM)


def _round_up(a, m):
    return (a + m - 1) // m * m


# ----------------------------------------------------------------------------------
# Fused Encoder kernel: one batch tile per grid step, everything stays in VMEM.
# ----------------------------------------------------------------------------------
def encoder_kernel(
    x_ref,      # (SEQ*BT, 14)  time-major input tile
    noise_ref,  # (SEQ*BT, 14)  deterministic stand-in for torch.randn_like(sigma)
    wcomb_ref,  # (14, 192)     Conv1d(k=1) embedding folded into GRU W_ih  [r|z|n]
    bcomb_ref,  # (1, 192)      b_ih + folded emb bias + b_hr|b_hz (b_hn kept apart)
    whhrz_ref,  # (64, 128)     GRU W_hh for r|z
    whhn_ref,   # (64, 64)      GRU W_hh for n
    bhn_ref,    # (1, 64)       b_hn (must stay inside r * (W_hn h + b_hn))
    wsde_ref,   # (64, 128)     BN(eval)-folded fused heads [mu|sigma|nl x14|0]
    bsde_ref,   # (1, 128)
    wrb_ref,    # (SEQ, 14, 192) cmat-folded [linear_1 | linear_res], per timestep
    brb_ref,    # (1, 192)
    w2_ref,     # (128, 64)
    b2_ref,     # (1, 64)
    lng_ref,    # (1, 64)       LayerNorm gamma
    lnb_ref,    # (1, 64)       LayerNorm beta
    w8_ref,     # (64, 1)
    b8_ref,     # (1, 1)
    out_ref,    # (BT, 1)
    gi_ref,     # VMEM scratch (SEQ*BT, 192): hoisted input-gate activations
    hs_ref,     # VMEM scratch (SEQ*BT, 64):  all GRU hidden states
    sde_ref,    # VMEM scratch (SEQ*BT, 14):  SDE output (feeds the folded RB head)
):
    tb = x_ref.shape[0]
    bt = tb // SEQ
    small = bt <= SMALL_TILE

    # ---- 1) Embedding + input->gate projection for ALL timesteps: one big matmul. ----
    gi_ref[...] = (
        jnp.dot(x_ref[...], wcomb_ref[...], preferred_element_type=F32) + bcomb_ref[...]
    )

    # ---- 2) GRU recurrence (critical path). ------------------------------------------
    whh_rz = whhrz_ref[...]
    whh_n = whhn_ref[...]
    bhn = jnp.broadcast_to(bhn_ref[...], (bt, HID))        # hoisted broadcast

    def gru_step(h, row0):
        gi_t = gi_ref[pl.ds(row0, bt), :]                                   # (BT, 192)
        gh_rz = jnp.dot(h, whh_rz, preferred_element_type=F32)              # (BT, 128)
        gh_n = jnp.dot(h, whh_n, preferred_element_type=F32) + bhn          # (BT, 64)
        rz = jax.nn.sigmoid(gi_t[:, 0:2 * HID] + gh_rz)   # ONE EUP pass for r and z
        r = rz[:, 0:HID]
        z = pltpu.roll(rz, shift=HID, axis=1)[:, 0:HID]   # realign z with h (XLU)
        n = jnp.tanh(gi_t[:, 2 * HID:3 * HID] + r * gh_n)
        h_new = (1.0 - z) * n + z * h
        hs_ref[pl.ds(row0, bt), :] = h_new
        return h_new

    h0 = jnp.zeros((bt, HID), F32)
    if small:
        h = h0
        for t in range(SEQ):
            h = gru_step(h, t * bt)
    else:
        def gru_body(t, h):
            return gru_step(h, pl.multiple_of(t * bt, bt))
        lax.fori_loop(0, SEQ, gru_body, h0, unroll=2)

    # ---- 3) BN(eval) + fused SDE heads: one (TB,64)x(64,128) matmul. ------------------
    heads = (jnp.dot(hs_ref[...], wsde_ref[...], preferred_element_type=F32)
             + bsde_ref[...])                                               # (TB, 128)
    mu = heads[:, 0:NS]
    s_pre = pltpu.roll(heads, shift=HEADW - NS, axis=1)[:, 0:NS]            # lanes 14:28
    nl_pre = pltpu.roll(heads, shift=HEADW - 2 * NS, axis=1)[:, 0:NS]       # lanes 28:42
    sigma = jnp.where(s_pre > 20.0, s_pre,
                      jnp.log1p(jnp.exp(jnp.minimum(s_pre, 20.0))))         # softplus
    # dt = 1.0 ; dW = sigmoid(nl) * noise
    sde_ref[...] = mu + sigma * (jax.nn.sigmoid(nl_pre) * noise_ref[...])

    # ---- 4) ResidualBlock + fc8.  cmat (AttentionFusion) and the (B,420) reshape are
    #         folded into wrb_ref; independent accumulators let the 30 dots pipeline. --
    if small:
        accs = [jnp.zeros((bt, RBW), F32) for _ in range(3)]
        for t in range(SEQ):
            accs[t % 3] = accs[t % 3] + jnp.dot(
                sde_ref[pl.ds(t * bt, bt), :], wrb_ref[t],
                preferred_element_type=F32)
        hr = accs[0] + accs[1] + accs[2]
    else:
        def rb_body(i, carry):
            a0, a1 = carry
            t = 2 * i
            a0 = a0 + jnp.dot(sde_ref[pl.ds(pl.multiple_of(t * bt, bt), bt), :],
                              wrb_ref[t], preferred_element_type=F32)
            a1 = a1 + jnp.dot(sde_ref[pl.ds(pl.multiple_of((t + 1) * bt, bt), bt), :],
                              wrb_ref[t + 1], preferred_element_type=F32)
            return a0, a1
        a0, a1 = lax.fori_loop(
            0, SEQ // 2, rb_body,
            (jnp.zeros((bt, RBW), F32), jnp.zeros((bt, RBW), F32)))
        hr = a0 + a1
    hr = hr + brb_ref[...]
    h1 = jnp.maximum(hr[:, 0:RBH], 0.0)                                     # linear_1+relu
    res = hr[:, RBH:RBH + RBO]                                              # linear_res
    y = jnp.dot(h1, w2_ref[...], preferred_element_type=F32) + b2_ref[...] + res
    mean = jnp.mean(y, axis=-1, keepdims=True)
    var = jnp.mean((y - mean) ** 2, axis=-1, keepdims=True)
    yn = (y - mean) * lax.rsqrt(var + 1e-5) * lng_ref[...] + lnb_ref[...]
    out_ref[...] = jnp.dot(yn, w8_ref[...], preferred_element_type=F32) + b8_ref[...]


# ----------------------------------------------------------------------------------
# Wrapper: batch-tiled pallas_call with a "parallel" grid axis.
# ----------------------------------------------------------------------------------
@jax.jit
def encoder_forward(x, noise, pp):
    """x, noise: (B, SEQ, 14) float32.  Returns (B, 1)."""
    b, t, f = x.shape
    assert t == SEQ and f == NS
    bt = min(MAX_TILE, _round_up(b, SUB))            # rows per batch tile
    bp = _round_up(b, bt)                            # padded batch
    ntiles = bp // bt

    def prep(a):
        a = jnp.pad(a.astype(F32), ((0, bp - b), (0, 0), (0, 0)))       # (bp, SEQ, 14)
        a = jnp.transpose(a, (1, 0, 2))                                 # (SEQ, bp, 14)
        a = a.reshape(SEQ, ntiles, bt, NS).transpose(1, 0, 2, 3)        # (nt, SEQ, bt, 14)
        return a.reshape(ntiles, SEQ * bt, NS)                          # time-major tiles

    x_t = prep(x)
    n_t = prep(noise)

    data_spec = pl.BlockSpec((None, SEQ * bt, NS), lambda i: (i, 0, 0))

    # Per-tile VMEM budget (scratch + double-buffered inputs + activation temporaries).
    scratch_bytes = SEQ * bt * (GI_W + HID + HEADW) * 4
    io_bytes = 2 * 2 * SEQ * bt * NS * 4
    temp_bytes = 6 * SEQ * bt * HEADW * 4
    vmem_limit = max(16 << 20,
                     min(40 << 20, 2 * (scratch_bytes + io_bytes + temp_bytes) + (1 << 20)))

    out = pl.pallas_call(
        encoder_kernel,
        out_shape=jax.ShapeDtypeStruct((bp, 1), F32),
        grid=(ntiles,),
        in_specs=[data_spec, data_spec] + [W_SPEC] * 15,
        out_specs=pl.BlockSpec((bt, 1), lambda i: (i, 0)),
        scratch_shapes=[
            pltpu.VMEM((SEQ * bt, GI_W), F32),      # hoisted input-gate activations
            pltpu.VMEM((SEQ * bt, HID), F32),       # all GRU hidden states
            pltpu.VMEM((SEQ * bt, NS), F32),        # SDE output
        ],
        compiler_params=pltpu.CompilerParams(
            dimension_semantics=("parallel",),
            vmem_limit_bytes=int(vmem_limit)),
    )(x_t, n_t,
      pp["wcomb"], pp["bcomb"], pp["whh_rz"], pp["whh_n"], pp["bhn"],
      pp["wsde"], pp["bsde"], pp["wrb"], pp["brb"],
      pp["w2"], pp["b2"], pp["lng"], pp["lnb"], pp["w8"], pp["b8"])
    return out[:b]


# ----------------------------------------------------------------------------------
# One-time parameter folding (plain JAX, parameter-only; free at pack time).
# ----------------------------------------------------------------------------------
def pack_params(p):
    # --- GRU: fold Conv1d(k=1) embedding + b_hr/b_hz into the input projection. ---
    wih = p["gru_wihT"]                                            # (14, 192)  [r|z|n]
    bih = p["gru_bih"]                                             # (1, 192)
    bhh = p["gru_bhh"]                                             # (1, 192)
    whh = p["gru_whhT"]                                            # (64, 192)

    wcomb = jnp.dot(p["emb_wT"], wih)                              # (14, 192)
    bhh_rz = jnp.concatenate([bhh[:, :2 * HID], jnp.zeros((1, HID), F32)], axis=1)
    bcomb = jnp.dot(p["emb_b"], wih) + bih + bhh_rz                # (1, 192)
    whh_rz = whh[:, :2 * HID]                                      # (64, 128)
    whh_n = whh[:, 2 * HID:]                                       # (64, 64)
    bhn = bhh[:, 2 * HID:]                                         # (1, 64)

    # --- BatchNorm1d(64) eval mode folded into the fused SDE heads (one 128-lane
    #     block: [mu 0:14 | sigma 14:28 | noise_level x14 28:42 | 0]). ---
    scale = p["bn_g"] / jnp.sqrt(p["bn_v"] + 1e-5)                 # (1, 64)
    shift = p["bn_b"] - p["bn_m"] * scale
    w_heads = jnp.concatenate(
        [p["mu_wT"], p["sig_wT"], jnp.tile(p["nl_wT"], (1, NS)),
         jnp.zeros((HID, HEADW - 3 * NS), F32)], axis=1)           # (64, 128)
    b_heads = jnp.concatenate(
        [p["mu_b"], p["sig_b"], jnp.tile(p["nl_b"], (1, NS)),
         jnp.zeros((1, HEADW - 3 * NS), F32)], axis=1)             # (1, 128)
    wsde = scale.T * w_heads                                       # diag(scale) @ W
    bsde = jnp.dot(shift, w_heads) + b_heads

    # --- AttentionFusion (parameter-only): compute cmat once, fold into ResidualBlock.
    A = p["channels"]
    Badj = p["adj"]
    hmap = jax.nn.relu(p["af_w1"][:, 0][:, None, None] * A[None]
                       + p["af_w1"][:, 1][:, None, None] * Badj[None]
                       + p["af_b1"][:, None, None])                # (14, 14, 14)
    logits = jnp.einsum("c,cij->ij", p["af_w2"][0], hmap) + p["af_b2"][0]
    wgt = jax.nn.sigmoid(logits)
    cmat = wgt * A + (1.0 - wgt) * Badj                            # (14, 14)

    # ResidualBlock [linear_1 | linear_res]; absorb cmat and the (B, 420) reshape.
    wrb = jnp.concatenate([p["rb_w1T"], p["rb_wrT"]], axis=1)      # (420, 192)
    wrb3 = wrb.reshape(SEQ, NS, RBW)                               # (30, 14, 192)
    wrb_eff = jnp.einsum("ij,tjk->tik", cmat, wrb3)                # cmat @ wrb3[t]
    brb = jnp.concatenate([p["rb_b1"], p["rb_br"]], axis=1)        # (1, 192)

    return dict(
        wcomb=wcomb, bcomb=bcomb, whh_rz=whh_rz, whh_n=whh_n, bhn=bhn,
        wsde=wsde, bsde=bsde, wrb=wrb_eff, brb=brb,
        w2=p["rb_w2T"], b2=p["rb_b2"], lng=p["rb_lng"], lnb=p["rb_lnb"],
        w8=p["fc8_wT"], b8=p["fc8_b"],
    )


# ----------------------------------------------------------------------------------
# Deterministic parameter construction (synthetic init mirroring the module's shapes).
# ----------------------------------------------------------------------------------
def make_params(key):
    ks = iter(jax.random.split(key, 40))

    def u(shape, fan_in):
        bound = fan_in ** -0.5
        return jax.random.uniform(next(ks), shape, F32, -bound, bound)

    p = {}
    # embedding: Conv1d(14, 14, k=1) -> per-step linear, stored transposed (in, out)
    p["emb_wT"] = u((14, 14), 14)
    p["emb_b"] = u((1, 14), 14)
    # GRU(14 -> 64), gates [r, z, n] stacked along the 192 dim.
    p["gru_wihT"] = u((14, 3 * HID), HID)
    p["gru_whhT"] = u((HID, 3 * HID), HID)
    p["gru_bih"] = u((1, 3 * HID), HID)
    p["gru_bhh"] = u((1, 3 * HID), HID)
    # BatchNorm1d(64), eval mode (freshly initialized running stats).
    p["bn_g"] = jnp.ones((1, HID), F32)
    p["bn_b"] = jnp.zeros((1, HID), F32)
    p["bn_m"] = jnp.zeros((1, HID), F32)
    p["bn_v"] = jnp.ones((1, HID), F32)
    # SDE heads.
    p["mu_wT"] = u((HID, NS), HID);  p["mu_b"] = u((1, NS), HID)
    p["sig_wT"] = u((HID, NS), HID); p["sig_b"] = u((1, NS), HID)
    p["nl_wT"] = u((HID, 1), HID);   p["nl_b"] = u((1, 1), HID)
    # channels parameter: rand(14,14) with unit diagonal.
    ch = jax.random.uniform(next(ks), (NS, NS), F32, 0.0, 1.0)
    eye = jnp.eye(NS, dtype=F32)
    p["channels"] = ch * (1.0 - eye) + eye
    # TODO(synk): Priorknowledge.know_list is undefined in the source; synthesize a
    # deterministic sensor matrix and take its correlation coefficients instead.
    sensor_data = jax.random.normal(next(ks), (NS, 50), F32)
    p["adj"] = jnp.corrcoef(sensor_data).astype(F32)
    # AttentionFusion conv weights (1x1 convs flattened).
    p["af_w1"] = u((NS, 2), 2)       # conv1 weight (14, 2, 1, 1)
    p["af_b1"] = u((NS,), 2)
    p["af_w2"] = u((1, NS), NS)      # conv2 weight (1, 14, 1, 1)
    p["af_b2"] = u((1,), NS)
    # ResidualBlock(420, 128, 64).
    p["rb_w1T"] = u((420, RBH), 420); p["rb_b1"] = u((1, RBH), 420)
    p["rb_w2T"] = u((RBH, RBO), RBH); p["rb_b2"] = u((1, RBO), RBH)
    p["rb_wrT"] = u((420, RBO), 420); p["rb_br"] = u((1, RBO), 420)
    p["rb_lng"] = jnp.ones((1, RBO), F32)
    p["rb_lnb"] = jnp.zeros((1, RBO), F32)
    # fc8(64 -> 1).
    p["fc8_wT"] = u((RBO, 1), RBO); p["fc8_b"] = u((1, 1), RBO)
    return p


if __name__ == "__main__":
    B = 2
    key = jax.random.PRNGKey(0)
    k_par, k_x, k_n = jax.random.split(key, 3)
    params = make_params(k_par)
    packed = pack_params(params)

    x = jax.random.normal(k_x, (B, SEQ, NS), F32)
    # deterministic replacement for torch.randn_like(sigma)
    noise = jax.random.normal(k_n, (B, SEQ, NS), F32)

    out = encoder_forward(x, noise, packed)
    out = jax.block_until_ready(out)
    assert out.shape == (B, 1) and out.dtype == F32
    assert bool(jnp.all(jnp.isfinite(out)))
    print("KERNEL_OK")
</pallas_src>

<mosaic_0001>
module attributes {stable_mosaic.version = 11 : i64} {
  func.func @encoder_kernel(%arg0: i32, %arg1: memref<1x240x14xf32, #tpu.memory_space<vmem>>, %arg2: memref<1x240x14xf32, #tpu.memory_space<vmem>>, %arg3: memref<14x192xf32, #tpu.memory_space<vmem>>, %arg4: memref<1x192xf32, #tpu.memory_space<vmem>>, %arg5: memref<64x128xf32, #tpu.memory_space<vmem>>, %arg6: memref<64x64xf32, #tpu.memory_space<vmem>>, %arg7: memref<1x64xf32, #tpu.memory_space<vmem>>, %arg8: memref<64x128xf32, #tpu.memory_space<vmem>>, %arg9: memref<1x128xf32, #tpu.memory_space<vmem>>, %arg10: memref<30x14x192xf32, #tpu.memory_space<vmem>>, %arg11: memref<1x192xf32, #tpu.memory_space<vmem>>, %arg12: memref<128x64xf32, #tpu.memory_space<vmem>>, %arg13: memref<1x64xf32, #tpu.memory_space<vmem>>, %arg14: memref<1x64xf32, #tpu.memory_space<vmem>>, %arg15: memref<1x64xf32, #tpu.memory_space<vmem>>, %arg16: memref<64x1xf32, #tpu.memory_space<vmem>>, %arg17: memref<1x1xf32, #tpu.memory_space<vmem>>, %arg18: memref<8x1xf32, #tpu.memory_space<vmem>>, %arg19: memref<240x192xf32, #tpu.memory_space<vmem>>, %arg20: memref<240x64xf32, #tpu.memory_space<vmem>>, %arg21: memref<240x14xf32, #tpu.memory_space<vmem>>) attributes {dimension_semantics = [#tpu.dimension_semantics<parallel>], iteration_bounds = array<i64: 1>, scalar_prefetch = 0 : i64, scratch_operands = 3 : i64, tpu.core_type = #tpu.core_type<tc>, window_params = [{transform_indices = @transform_0, window_bounds = array<i64: 1, 240, 14>}, {transform_indices = @transform_1, window_bounds = array<i64: 1, 240, 14>}, {pipeline_mode = #tpu.pipeline_mode<synchronous>, transform_indices = @transform_2, window_bounds = array<i64: 14, 192>}, {pipeline_mode = #tpu.pipeline_mode<synchronous>, transform_indices = @transform_3, window_bounds = array<i64: 1, 192>}, {pipeline_mode = #tpu.pipeline_mode<synchronous>, transform_indices = @transform_4, window_bounds = array<i64: 64, 128>}, {pipeline_mode = #tpu.pipeline_mode<synchronous>, transform_indices = @transform_5, window_bounds = array<i64: 64, 64>}, {pipeline_mode = #tpu.pipeline_mode<synchronous>, transform_indices = @transform_6, window_bounds = array<i64: 1, 64>}, {pipeline_mode = #tpu.pipeline_mode<synchronous>, transform_indices = @transform_7, window_bounds = array<i64: 64, 128>}, {pipeline_mode = #tpu.pipeline_mode<synchronous>, transform_indices = @transform_8, window_bounds = array<i64: 1, 128>}, {pipeline_mode = #tpu.pipeline_mode<synchronous>, transform_indices = @transform_9, window_bounds = array<i64: 30, 14, 192>}, {pipeline_mode = #tpu.pipeline_mode<synchronous>, transform_indices = @transform_10, window_bounds = array<i64: 1, 192>}, {pipeline_mode = #tpu.pipeline_mode<synchronous>, transform_indices = @transform_11, window_bounds = array<i64: 128, 64>}, {pipeline_mode = #tpu.pipeline_mode<synchronous>, transform_indices = @transform_12, window_bounds = array<i64: 1, 64>}, {pipeline_mode = #tpu.pipeline_mode<synchronous>, transform_indices = @transform_13, window_bounds = array<i64: 1, 64>}, {pipeline_mode = #tpu.pipeline_mode<synchronous>, transform_indices = @transform_14, window_bounds = array<i64: 1, 64>}, {pipeline_mode = #tpu.pipeline_mode<synchronous>, transform_indices = @transform_15, window_bounds = array<i64: 64, 1>}, {pipeline_mode = #tpu.pipeline_mode<synchronous>, transform_indices = @transform_16, window_bounds = array<i64: 1, 1>}, {transform_indices = @transform_17, window_bounds = array<i64: 8, 1>}]} {
    %c0 = arith.constant 0 : index
    %c0_0 = arith.constant 0 : index
    %c0_1 = arith.constant 0 : index
    %0 = vector.load %arg1[%c0, %c0_0, %c0_1] : memref<1x240x14xf32, #tpu.memory_space<vmem>>, vector<1x240x14xf32>
    %1 = vector.shape_cast %0 : vector<1x240x14xf32> to vector<240x14xf32>
    %c0_2 = arith.constant 0 : index
    %c0_3 = arith.constant 0 : index
    %2 = vector.load %arg3[%c0_2, %c0_3] : memref<14x192xf32, #tpu.memory_space<vmem>>, vector<14x192xf32>
    %cst = arith.constant dense<0.000000e+00> : vector<240x192xf32>
    %3 = tpu.matmul %1, %2, %cst {dimension_numbers = #tpu.dot_dimension_numbers<[1], [0], [0], [1], [0, 0, 1, 1], [], []>} : vector<240x14xf32>, vector<14x192xf32>, vector<240x192xf32> -> vector<240x192xf32>
    %c0_4 = arith.constant 0 : index
    %c0_5 = arith.constant 0 : index
    %4 = vector.load %arg4[%c0_4, %c0_5] : memref<1x192xf32, #tpu.memory_space<vmem>>, vector<1x192xf32>
    %5 = vector.broadcast %4 : vector<1x192xf32> to vector<240x192xf32>
    %6 = arith.addf %3, %5 : vector<240x192xf32>
    %c0_6 = arith.constant 0 : index
    %c0_7 = arith.constant 0 : index
    %7 = vector.load %arg19[%c0_6, %c0_7] : memref<240x192xf32, #tpu.memory_space<vmem>>, vector<240x192xf32>
    tpu.vector_store %arg19[%c0_6, %c0_7], %6 {strides = array<i32>} : memref<240x192xf32, #tpu.memory_space<vmem>>, vector<240x192xf32>,
    %c0_8 = arith.constant 0 : index
    %c0_9 = arith.constant 0 : index
    %8 = vector.load %arg5[%c0_8, %c0_9] : memref<64x128xf32, #tpu.memory_space<vmem>>, vector<64x128xf32>
    %c0_10 = arith.constant 0 : index
    %c0_11 = arith.constant 0 : index
    %9 = vector.load %arg6[%c0_10, %c0_11] : memref<64x64xf32, #tpu.memory_space<vmem>>, vector<64x64xf32>
    %c0_12 = arith.constant 0 : index
    %c0_13 = arith.constant 0 : index
    %10 = vector.load %arg7[%c0_12, %c0_13] : memref<1x64xf32, #tpu.memory_space<vmem>>, vector<1x64xf32>
    %11 = vector.shape_cast %10 : vector<1x64xf32> to vector<1x64xf32>
    %12 = vector.broadcast %11 : vector<1x64xf32> to vector<8x64xf32>
    %cst_14 = arith.constant 0.000000e+00 : f32
    %13 = vector.broadcast %cst_14 : f32 to vector<8x64xf32>
    %c0_15 = arith.constant 0 : index
    %c0_16 = arith.constant 0 : index
    %14 = vector.load %arg19[%c0_15, %c0_16] : memref<240x192xf32, #tpu.memory_space<vmem>>, vector<8x192xf32>
    %cst_17 = arith.constant dense<0.000000e+00> : vector<8x128xf32>
    %15 = tpu.matmul %13, %8, %cst_17 {dimension_numbers = #tpu.dot_dimension_numbers<[1], [0], [0], [1], [0, 0, 1, 1], [], []>} : vector<8x64xf32>, vector<64x128xf32>, vector<8x128xf32> -> vector<8x128xf32>
    %cst_18 = arith.constant dense<0.000000e+00> : vector<8x64xf32>
    %16 = tpu.matmul %13, %9, %cst_18 {dimension_numbers = #tpu.dot_dimension_numbers<[1], [0], [0], [1], [0, 0, 1, 1], [], []>} : vector<8x64xf32>, vector<64x64xf32>, vector<8x64xf32> -> vector<8x64xf32>
    %17 = arith.addf %16, %12 : vector<8x64xf32>
    %18 = vector.extract_strided_slice %14 {offsets = [0, 0], sizes = [8, 128], strides = [1, 1]} : vector<8x192xf32> to vector<8x128xf32>
    %19 = arith.addf %18, %15 : vector<8x128xf32>
    %20 = arith.negf %19 : vector<8x128xf32>
    %21 = math.exp %20 : vector<8x128xf32>
    %cst_19 = arith.constant 1.000000e+00 : f32
    %22 = vector.broadcast %cst_19 : f32 to vector<8x128xf32>
    %23 = arith.addf %22, %21 : vector<8x128xf32>
    %24 = arith.divf %22, %23 : vector<8x128xf32>
    %25 = vector.extract_strided_slice %24 {offsets = [0, 0], sizes = [8, 64], strides = [1, 1]} : vector<8x128xf32> to vector<8x64xf32>
    %c64_i32 = arith.constant 64 : i32
    %26 = tpu.dynamic_rotate %24 by %c64_i32 dim 1 : vector<8x128xf32>, i32 -> vector<8x128xf32>
    %27 = vector.extract_strided_slice %26 {offsets = [0, 0], sizes = [8, 64], strides = [1, 1]} : vector<8x128xf32> to vector<8x64xf32>
    %28 = vector.extract_strided_slice %14 {offsets = [0, 128], sizes = [8, 64], strides = [1, 1]} : vector<8x192xf32> to vector<8x64xf32>
    %29 = arith.mulf %25, %17 : vector<8x64xf32>
    %30 = arith.addf %28, %29 : vector<8x64xf32>
    %31 = math.tanh %30 : vector<8x64xf32>
    %cst_20 = arith.constant 1.000000e+00 : f32
    %32 = vector.broadcast %cst_20 : f32 to vector<8x64xf32>
    %33 = arith.subf %32, %27 : vector<8x64xf32>
    %34 = arith.mulf %33, %31 : vector<8x64xf32>
    %35 = arith.mulf %27, %13 : vector<8x64xf32>
    %36 = arith.addf %34, %35 : vector<8x64xf32>
    %c0_21 = arith.constant 0 : index
    %c0_22 = arith.constant 0 : index
    %37 = vector.load %arg20[%c0_21, %c0_22] : memref<240x64xf32, #tpu.memory_space<vmem>>, vector<8x64xf32>
    tpu.vector_store %arg20[%c0_21, %c0_22], %36 {strides = array<i32>} : memref<240x64xf32, #tpu.memory_space<vmem>>, vector<8x64xf32>,
    %c8 = arith.constant 8 : index
    %c0_23 = arith.constant 0 : index
    %38 = vector.load %arg19[%c8, %c0_23] : memref<240x192xf32, #tpu.memory_space<vmem>>, vector<8x192xf32>
    %cst_24 = arith.constant dense<0.000000e+00> : vector<8x128xf32>
    %39 = tpu.matmul %36, %8, %cst_24 {dimension_numbers = #tpu.dot_dimension_numbers<[1], [0], [0], [1], [0, 0, 1, 1], [], []>} : vector<8x64xf32>, vector<64x128xf32>, vector<8x128xf32> -> vector<8x128xf32>
    %cst_25 = arith.constant dense<0.000000e+00> : vector<8x64xf32>
    %40 = tpu.matmul %36, %9, %cst_25 {dimension_numbers = #tpu.dot_dimension_numbers<[1], [0], [0], [1], [0, 0, 1, 1], [], []>} : vector<8x64xf32>, vector<64x64xf32>, vector<8x64xf32> -> vector<8x64xf32>
    %41 = arith.addf %40, %12 : vector<8x64xf32>
    %42 = vector.extract_strided_slice %38 {offsets = [0, 0], sizes = [8, 128], strides = [1, 1]} : vector<8x192xf32> to vector<8x128xf32>
    %43 = arith.addf %42, %39 : vector<8x128xf32>
    %44 = arith.negf %43 : vector<8x128xf32>
    %45 = math.exp %44 : vector<8x128xf32>
    %cst_26 = arith.constant 1.000000e+00 : f32
    %46 = vector.broadcast %cst_26 : f32 to vector<8x128xf32>
    %47 = arith.addf %46, %45 : vector<8x128xf32>
    %48 = arith.divf %46, %47 : vector<8x128xf32>
    %49 = vector.extract_strided_slice %48 {offsets = [0, 0], sizes = [8, 64], strides = [1, 1]} : vector<8x128xf32> to vector<8x64xf32>
    %c64_i32_27 = arith.constant 64 : i32
    %50 = tpu.dynamic_rotate %48 by %c64_i32_27 dim 1 : vector<8x128xf32>, i32 -> vector<8x128xf32>
    %51 = vector.extract_strided_slice %50 {offsets = [0, 0], sizes = [8, 64], strides = [1, 1]} : vector<8x128xf32> to vector<8x64xf32>
    %52 = vector.extract_strided_slice %38 {offsets = [0, 128], sizes = [8, 64], strides = [1, 1]} : vector<8x192xf32> to vector<8x64xf32>
    %53 = arith.mulf %49, %41 : vector<8x64xf32>
    %54 = arith.addf %52, %53 : vector<8x64xf32>
    %55 = math.tanh %54 : vector<8x64xf32>
    %cst_28 = arith.constant 1.000000e+00 : f32
    %56 = vector.broadcast %cst_28 : f32 to vector<8x64xf32>
    %57 = arith.subf %56, %51 : vector<8x64xf32>
    %58 = arith.mulf %57, %55 : vector<8x64xf32>
    %59 = arith.mulf %51, %36 : vector<8x64xf32>
    %60 = arith.addf %58, %59 : vector<8x64xf32>
    %c8_29 = arith.constant 8 : index
    %c0_30 = arith.constant 0 : index
    %61 = vector.load %arg20[%c8_29, %c0_30] : memref<240x64xf32, #tpu.memory_space<vmem>>, vector<8x64xf32>
    tpu.vector_store %arg20[%c8_29, %c0_30], %60 {strides = array<i32>} : memref<240x64xf32, #tpu.memory_space<vmem>>, vector<8x64xf32>,
    %c16 = arith.constant 16 : index
    %c0_31 = arith.constant 0 : index
    %62 = vector.load %arg19[%c16, %c0_31] : memref<240x192xf32, #tpu.memory_space<vmem>>, vector<8x192xf32>
    %cst_32 = arith.constant dense<0.000000e+00> : vector<8x128xf32>
    %63 = tpu.matmul %60, %8, %cst_32 {dimension_numbers = #tpu.dot_dimension_numbers<[1], [0], [0], [1], [0, 0, 1, 1], [], []>} : vector<8x64xf32>, vector<64x128xf32>, vector<8x128xf32> -> vector<8x128xf32>
    %cst_33 = arith.constant dense<0.000000e+00> : vector<8x64xf32>
    %64 = tpu.matmul %60, %9, %cst_33 {dimension_numbers = #tpu.dot_dimension_numbers<[1], [0], [0], [1], [0, 0, 1, 1], [], []>} : vector<8x64xf32>, vector<64x64xf32>, vector<8x64xf32> -> vector<8x64xf32>
    %65 = arith.addf %64, %12 : vector<8x64xf32>
    %66 = vector.extract_strided_slice %62 {offsets = [0, 0], sizes = [8, 128], strides = [1, 1]} : vector<8x192xf32> to vector<8x128xf32>
    %67 = arith.addf %66, %63 : vector<8x128xf32>
    %68 = arith.negf %67 : vector<8x128xf32>
    %69 = math.exp %68 : vector<8x128xf32>
    %cst_34 = arith.constant 1.000000e+00 : f32
    %70 = vector.broadcast %cst_34 : f32 to vector<8x128xf32>
    %71 = arith.addf %70, %69 : vector<8x128xf32>
    %72 = arith.divf %70, %71 : vector<8x128xf32>
    %73 = vector.extract_strided_slice %72 {offsets = [0, 0], sizes = [8, 64], strides = [1, 1]} : vector<8x128xf32> to vector<8x64xf32>
    %c64_i32_35 = arith.constant 64 : i32
    %74 = tpu.dynamic_rotate %72 by %c64_i32_35 dim 1 : vector<8x128xf32>, i32 -> vector<8x128xf32>
    %75 = vector.extract_strided_slice %74 {offsets = [0, 0], sizes = [8, 64], strides = [1, 1]} : vector<8x128xf32> to vector<8x64xf32>
    %76 = vector.extract_strided_slice %62 {offsets = [0, 128], sizes = [8, 64], strides = [1, 1]} : vector<8x192xf32> to vector<8x64xf32>
    %77 = arith.mulf %73, %65 : vector<8x64xf32>
    %78 = arith.addf %76, %77 : vector<8x64xf32>
    %79 = math.tanh %78 : vector<8x64xf32>
    %cst_36 = arith.constant 1.000000e+00 : f32
    %80 = vector.broadcast %cst_36 : f32 to vector<8x64xf32>
    %81 = arith.subf %80, %75 : vector<8x64xf32>
    %82 = arith.mulf %81, %79 : vector<8x64xf32>
    %83 = arith.mulf %75, %60 : vector<8x64xf32>
    %84 = arith.addf %82, %83 : vector<8x64xf32>
    %c16_37 = arith.constant 16 : index
    %c0_38 = arith.constant 0 : index
    %85 = vector.load %arg20[%c16_37, %c0_38] : memref<240x64xf32, #tpu.memory_space<vmem>>, vector<8x64xf32>
    tpu.vector_store %arg20[%c16_37, %c0_38], %84 {strides = array<i32>} : memref<240x64xf32, #tpu.memory_space<vmem>>, vector<8x64xf32>,
    %c24 = arith.constant 24 : index
    %c0_39 = arith.constant 0 : index
    %86 = vector.load %arg19[%c24, %c0_39] : memref<240x192xf32, #tpu.memory_space<vmem>>, vector<8x192xf32>
    %cst_40 = arith.constant dense<0.000000e+00> : vector<8x128xf32>
    %87 = tpu.matmul %84, %8, %cst_40 {dimension_numbers = #tpu.dot_dimension_numbers<[1], [0], [0], [1], [0, 0, 1, 1], [], []>} : vector<8x64xf32>, vector<64x128xf32>, vector<8x128xf32> -> vector<8x128xf32>
    %cst_41 = arith.constant dense<0.000000e+00> : vector<8x64xf32>
    %88 = tpu.matmul %84, %9, %cst_41 {dimension_numbers = #tpu.dot_dimension_numbers<[1], [0], [0], [1], [0, 0, 1, 1], [], []>} : vector<8x64xf32>, vector<64x64xf32>, vector<8x64xf32> -> vector<8x64xf32>
    %89 = arith.addf %88, %12 : vector<8x64xf32>
    %90 = vector.extract_strided_slice %86 {offsets = [0, 0], sizes = [8, 128], strides = [1, 1]} : vector<8x192xf32> to vector<8x128xf32>
    %91 = arith.addf %90, %87 : vector<8x128xf32>
    %92 = arith.negf %91 : vector<8x128xf32>
    %93 = math.exp %92 : vector<8x128xf32>
    %cst_42 = arith.constant 1.000000e+00 : f32
    %94 = vector.broadcast %cst_42 : f32 to vector<8x128xf32>
    %95 = arith.addf %94, %93 : vector<8x128xf32>
    %96 = arith.divf %94, %95 : vector<8x128xf32>
    %97 = vector.extract_strided_slice %96 {offsets = [0, 0], sizes = [8, 64], strides = [1, 1]} : vector<8x128xf32> to vector<8x64xf32>
    %c64_i32_43 = arith.constant 64 : i32
    %98 = tpu.dynamic_rotate %96 by %c64_i32_43 dim 1 : vector<8x128xf32>, i32 -> vector<8x128xf32>
    %99 = vector.extract_strided_slice %98 {offsets = [0, 0], sizes = [8, 64], strides = [1, 1]} : vector<8x128xf32> to vector<8x64xf32>
    %100 = vector.extract_strided_slice %86 {offsets = [0, 128], sizes = [8, 64], strides = [1, 1]} : vector<8x192xf32> to vector<8x64xf32>
    %101 = arith.mulf %97, %89 : vector<8x64xf32>
    %102 = arith.addf %100, %101 : vector<8x64xf32>
    %103 = math.tanh %102 : vector<8x64xf32>
    %cst_44 = arith.constant 1.000000e+00 : f32
    %104 = vector.broadcast %cst_44 : f32 to vector<8x64xf32>
    %105 = arith.subf %104, %99 : vector<8x64xf32>
    %106 = arith.mulf %105, %103 : vector<8x64xf32>
    %107 = arith.mulf %99, %84 : vector<8x64xf32>
    %108 = arith.addf %106, %107 : vector<8x64xf32>
    %c24_45 = arith.constant 24 : index
    %c0_46 = arith.constant 0 : index
    %109 = vector.load %arg20[%c24_45, %c0_46] : memref<240x64xf32, #tpu.memory_space<vmem>>, vector<8x64xf32>
    tpu.vector_store %arg20[%c24_45, %c0_46], %108 {strides = array<i32>} : memref<240x64xf32, #tpu.memory_space<vmem>>, vector<8x64xf32>,
    %c32 = arith.constant 32 : index
    %c0_47 = arith.constant 0 : index
    %110 = vector.load %arg19[%c32, %c0_47] : memref<240x192xf32, #tpu.memory_space<vmem>>, vector<8x192xf32>
    %cst_48 = arith.constant dense<0.000000e+00> : vector<8x128xf32>
    %111 = tpu.matmul %108, %8, %cst_48 {dimension_numbers = #tpu.dot_dimension_numbers<[1], [0], [0], [1], [0, 0, 1, 1], [], []>} : vector<8x64xf32>, vector<64x128xf32>, vector<8x128xf32> -> vector<8x128xf32>
    %cst_49 = arith.constant dense<0.000000e+00> : vector<8x64xf32>
    %112 = tpu.matmul %108, %9, %cst_49 {dimension_numbers = #tpu.dot_dimension_numbers<[1], [0], [0], [1], [0, 0, 1, 1], [], []>} : vector<8x64xf32>, vector<64x64xf32>, vector<8x64xf32> -> vector<8x64xf32>
    %113 = arith.addf %112, %12 : vector<8x64xf32>
    %114 = vector.extract_strided_slice %110 {offsets = [0, 0], sizes = [8, 128], strides = [1, 1]} : vector<8x192xf32> to vector<8x128xf32>
    %115 = arith.addf %114, %111 : vector<8x128xf32>
    %116 = arith.negf %115 : vector<8x128xf32>
    %117 = math.exp %116 : vector<8x128xf32>
    %cst_50 = arith.constant 1.000000e+00 : f32
    %118 = vector.broadcast %cst_50 : f32 to vector<8x128xf32>
    %119 = arith.addf %118, %117 : vector<8x128xf32>
    %120 = arith.divf %118, %119 : vector<8x128xf32>
    %121 = vector.extract_strided_slice %120 {offsets = [0, 0], sizes = [8, 64], strides = [1, 1]} : vector<8x128xf32> to vector<8x64xf32>
    %c64_i32_51 = arith.constant 64 : i32
    %122 = tpu.dynamic_rotate %120 by %c64_i32_51 dim 1 : vector<8x128xf32>, i32 -> vector<8x128xf32>
    %123 = vector.extract_strided_slice %122 {offsets = [0, 0], sizes = [8, 64], strides = [1, 1]} : vector<8x128xf32> to vector<8x64xf32>
    %124 = vector.extract_strided_slice %110 {offsets = [0, 128], sizes = [8, 64], strides = [1, 1]} : vector<8x192xf32> to vector<8x64xf32>
    %125 = arith.mulf %121, %113 : vector<8x64xf32>
    %126 = arith.addf %124, %125 : vector<8x64xf32>
    %127 = math.tanh %126 : vector<8x64xf32>
    %cst_52 = arith.constant 1.000000e+00 : f32
    %128 = vector.broadcast %cst_52 : f32 to vector<8x64xf32>
    %129 = arith.subf %128, %123 : vector<8x64xf32>
    %130 = arith.mulf %129, %127 : vector<8x64xf32>
    %131 = arith.mulf %123, %108 : vector<8x64xf32>
    %132 = arith.addf %130, %131 : vector<8x64xf32>
    %c32_53 = arith.constant 32 : index
    %c0_54 = arith.constant 0 : index
    %133 = vector.load %arg20[%c32_53, %c0_54] : memref<240x64xf32, #tpu.memory_space<vmem>>, vector<8x64xf32>
    tpu.vector_store %arg20[%c32_53, %c0_54], %132 {strides = array<i32>} : memref<240x64xf32, #tpu.memory_space<vmem>>, vector<8x64xf32>,
    %c40 = arith.constant 40 : index
    %c0_55 = arith.constant 0 : index
    %134 = vector.load %arg19[%c40, %c0_55] : memref<240x192xf32, #tpu.memory_space<vmem>>, vector<8x192xf32>
    %cst_56 = arith.constant dense<0.000000e+00> : vector<8x128xf32>
    %135 = tpu.matmul %132, %8, %cst_56 {dimension_numbers = #tpu.dot_dimension_numbers<[1], [0], [0], [1], [0, 0, 1, 1], [], []>} : vector<8x64xf32>, vector<64x128xf32>, vector<8x128xf32> -> vector<8x128xf32>
    %cst_57 = arith.constant dense<0.000000e+00> : vector<8x64xf32>
    %136 = tpu.matmul %132, %9, %cst_57 {dimension_numbers = #tpu.dot_dimension_numbers<[1], [0], [0], [1], [0, 0, 1, 1], [], []>} : vector<8x64xf32>, vector<64x64xf32>, vector<8x64xf32> -> vector<8x64xf32>
    %137 = arith.addf %136, %12 : vector<8x64xf32>
    %138 = vector.extract_strided_slice %134 {offsets = [0, 0], sizes = [8, 128], strides = [1, 1]} : vector<8x192xf32> to vector<8x128xf32>
    %139 = arith.addf %138, %135 : vector<8x128xf32>
    %140 = arith.negf %139 : vector<8x128xf32>
    %141 = math.exp %140 : vector<8x128xf32>
    %cst_58 = arith.constant 1.000000e+00 : f32
    %142 = vector.broadcast %cst_58 : f32 to vector<8x128xf32>
    %143 = arith.addf %142, %141 : vector<8x128xf32>
    %144 = arith.divf %142, %143 : vector<8x128xf32>
    %145 = vector.extract_strided_slice %144 {offsets = [0, 0], sizes = [8, 64], strides = [1, 1]} : vector<8x128xf32> to vector<8x64xf32>
    %c64_i32_59 = arith.constant 64 : i32
    %146 = tpu.dynamic_rotate %144 by %c64_i32_59 dim 1 : vector<8x128xf32>, i32 -> vector<8x128xf32>
    %147 = vector.extract_strided_slice %146 {offsets = [0, 0], sizes = [8, 64], strides = [1, 1]} : vector<8x128xf32> to vector<8x64xf32>
    %148 = vector.extract_strided_slice %134 {offsets = [0, 128], sizes = [8, 64], strides = [1, 1]} : vector<8x192xf32> to vector<8x64xf32>
    %149 = arith.mulf %145, %137 : vector<8x64xf32>
    %150 = arith.addf %148, %149 : vector<8x64xf32>
    %151 = math.tanh %150 : vector<8x64xf32>
    %cst_60 = arith.constant 1.000000e+00 : f32
    %152 = vector.broadcast %cst_60 : f32 to vector<8x64xf32>
    %153 = arith.subf %152, %147 : vector<8x64xf32>
    %154 = arith.mulf %153, %151 : vector<8x64xf32>
    %155 = arith.mulf %147, %132 : vector<8x64xf32>
    %156 = arith.addf %154, %155 : vector<8x64xf32>
    %c40_61 = arith.constant 40 : index
    %c0_62 = arith.constant 0 : index
    %157 = vector.load %arg20[%c40_61, %c0_62] : memref<240x64xf32, #tpu.memory_space<vmem>>, vector<8x64xf32>
    tpu.vector_store %arg20[%c40_61, %c0_62], %156 {strides = array<i32>} : memref<240x64xf32, #tpu.memory_space<vmem>>, vector<8x64xf32>,
    %c48 = arith.constant 48 : index
    %c0_63 = arith.constant 0 : index
    %158 = vector.load %arg19[%c48, %c0_63] : memref<240x192xf32, #tpu.memory_space<vmem>>, vector<8x192xf32>
    %cst_64 = arith.constant dense<0.000000e+00> : vector<8x128xf32>
    %159 = tpu.matmul %156, %8, %cst_64 {dimension_numbers = #tpu.dot_dimension_numbers<[1], [0], [0], [1], [0, 0, 1, 1], [], []>} : vector<8x64xf32>, vector<64x128xf32>, vector<8x128xf32> -> vector<8x128xf32>
    %cst_65 = arith.constant dense<0.000000e+00> : vector<8x64xf32>
    %160 = tpu.matmul %156, %9, %cst_65 {dimension_numbers = #tpu.dot_dimension_numbers<[1], [0], [0], [1], [0, 0, 1, 1], [], []>} : vector<8x64xf32>, vector<64x64xf32>, vector<8x64xf32> -> vector<8x64xf32>
    %161 = arith.addf %160, %12 : vector<8x64xf32>
    %162 = vector.extract_strided_slice %158 {offsets = [0, 0], sizes = [8, 128], strides = [1, 1]} : vector<8x192xf32> to vector<8x128xf32>
    %163 = arith.addf %162, %159 : vector<8x128xf32>
    %164 = arith.negf %163 : vector<8x128xf32>
    %165 = math.exp %164 : vector<8x128xf32>
    %cst_66 = arith.constant 1.000000e+00 : f32
    %166 = vector.broadcast %cst_66 : f32 to vector<8x128xf32>
    %167 = arith.addf %166, %165 : vector<8x128xf32>
    %168 = arith.divf %166, %167 : vector<8x128xf32>
    %169 = vector.extract_strided_slice %168 {offsets = [0, 0], sizes = [8, 64], strides = [1, 1]} : vector<8x128xf32> to vector<8x64xf32>
    %c64_i32_67 = arith.constant 64 : i32
    %170 = tpu.dynamic_rotate %168 by %c64_i32_67 dim 1 : vector<8x128xf32>, i32 -> vector<8x128xf32>
    %171 = vector.extract_strided_slice %170 {offsets = [0, 0], sizes = [8, 64], strides = [1, 1]} : vector<8x128xf32> to vector<8x64xf32>
    %172 = vector.extract_strided_slice %158 {offsets = [0, 128], sizes = [8, 64], strides = [1, 1]} : vector<8x192xf32> to vector<8x64xf32>
    %173 = arith.mulf %169, %161 : vector<8x64xf32>
    %174 = arith.addf %172, %173 : vector<8x64xf32>
    %175 = math.tanh %174 : vector<8x64xf32>
    %cst_68 = arith.constant 1.000000e+00 : f32
    %176 = vector.broadcast %cst_68 : f32 to vector<8x64xf32>
    %177 = arith.subf %176, %171 : vector<8x64xf32>
    %178 = arith.mulf %177, %175 : vector<8x64xf32>
    %179 = arith.mulf %171, %156 : vector<8x64xf32>
    %180 = arith.addf %178, %179 : vector<8x64xf32>
    %c48_69 = arith.constant 48 : index
    %c0_70 = arith.constant 0 : index
    %181 = vector.load %arg20[%c48_69, %c0_70] : memref<240x64xf32, #tpu.memory_space<vmem>>, vector<8x64xf32>
    tpu.vector_store %arg20[%c48_69, %c0_70], %180 {strides = array<i32>} : memref<240x64xf32, #tpu.memory_space<vmem>>, vector<8x64xf32>,
    %c56 = arith.constant 56 : index
    %c0_71 = arith.constant 0 : index
    %182 = vector.load %arg19[%c56, %c0_71] : memref<240x192xf32, #tpu.memory_space<vmem>>, vector<8x192xf32>
    %cst_72 = arith.constant dense<0.000000e+00> : vector<8x128xf32>
    %183 = tpu.matmul %180, %8, %cst_72 {dimension_numbers = #tpu.dot_dimension_numbers<[1], [0], [0], [1], [0, 0, 1, 1], [], []>} : vector<8x64xf32>, vector<64x128xf32>, vector<8x128xf32> -> vector<8x128xf32>
    %cst_73 = arith.constant dense<0.000000e+00> : vector<8x64xf32>
    %184 = tpu.matmul %180, %9, %cst_73 {dimension_numbers = #tpu.dot_dimension_numbers<[1], [0], [0], [1], [0, 0, 1, 1], [], []>} : vector<8x64xf32>, vector<64x64xf32>, vector<8x64xf32> -> vector<8x64xf32>
    %185 = arith.addf %184, %12 : vector<8x64xf32>
    %186 = vector.extract_strided_slice %182 {offsets = [0, 0], sizes = [8, 128], strides = [1, 1]} : vector<8x192xf32> to vector<8x128xf32>
    %187 = arith.addf %186, %183 : vector<8x128xf32>
    %188 = arith.negf %187 : vector<8x128xf32>
    %189 = math.exp %188 : vector<8x128xf32>
    %cst_74 = arith.constant 1.000000e+00 : f32
    %190 = vector.broadcast %cst_74 : f32 to vector<8x128xf32>
    %191 = arith.addf %190, %189 : vector<8x128xf32>
    %192 = arith.divf %190, %191 : vector<8x128xf32>
    %193 = vector.extract_strided_slice %192 {offsets = [0, 0], sizes = [8, 64], strides = [1, 1]} : vector<8x128xf32> to vector<8x64xf32>
    %c64_i32_75 = arith.constant 64 : i32
    %194 = tpu.dynamic_rotate %192 by %c64_i32_75 dim 1 : vector<8x128xf32>, i32 -> vector<8x128xf32>
    %195 = vector.extract_strided_slice %194 {offsets = [0, 0], sizes = [8, 64], strides = [1, 1]} : vector<8x128xf32> to vector<8x64xf32>
    %196 = vector.extract_strided_slice %182 {offsets = [0, 128], sizes = [8, 64], strides = [1, 1]} : vector<8x192xf32> to vector<8x64xf32>
    %197 = arith.mulf %193, %185 : vector<8x64xf32>
    %198 = arith.addf %196, %197 : vector<8x64xf32>
    %199 = math.tanh %198 : vector<8x64xf32>
    %cst_76 = arith.constant 1.000000e+00 : f32
    %200 = vector.broadcast %cst_76 : f32 to vector<8x64xf32>
    %201 = arith.subf %200, %195 : vector<8x64xf32>
    %202 = arith.mulf %201, %199 : vector<8x64xf32>
    %203 = arith.mulf %195, %180 : vector<8x64xf32>
    %204 = arith.addf %202, %203 : vector<8x64xf32>
    %c56_77 = arith.constant 56 : index
    %c0_78 = arith.constant 0 : index
    %205 = vector.load %arg20[%c56_77, %c0_78] : memref<240x64xf32, #tpu.memory_space<vmem>>, vector<8x64xf32>
    tpu.vector_store %arg20[%c56_77, %c0_78], %204 {strides = array<i32>} : memref<240x64xf32, #tpu.memory_space<vmem>>, vector<8x64xf32>,
    %c64 = arith.constant 64 : index
    %c0_79 = arith.constant 0 : index
    %206 = vector.load %arg19[%c64, %c0_79] : memref<240x192xf32, #tpu.memory_space<vmem>>, vector<8x192xf32>
    %cst_80 = arith.constant dense<0.000000e+00> : vector<8x128xf32>
    %207 = tpu.matmul %204, %8, %cst_80 {dimension_numbers = #tpu.dot_dimension_numbers<[1], [0], [0], [1], [0, 0, 1, 1], [], []>} : vector<8x64xf32>, vector<64x128xf32>, vector<8x128xf32> -> vector<8x128xf32>
    %cst_81 = arith.constant dense<0.000000e+00> : vector<8x64xf32>
    %208 = tpu.matmul %204, %9, %cst_81 {dimension_numbers = #tpu.dot_dimension_numbers<[1], [0], [0], [1], [0, 0, 1, 1], [], []>} : vector<8x64xf32>, vector<64x64xf32>, vector<8x64xf32> -> vector<8x64xf32>
    %209 = arith.addf %208, %12 : vector<8x64xf32>
    %210 = vector.extract_strided_slice %206 {offsets = [0, 0], sizes = [8, 128], strides = [1, 1]} : vector<8x192xf32> to vector<8x128xf32>
    %211 = arith.addf %210, %207 : vector<8x128xf32>
    %212 = arith.negf %211 : vector<8x128xf32>
    %213 = math.exp %212 : vector<8x128xf32>
    %cst_82 = arith.constant 1.000000e+00 : f32
    %214 = vector.broadcast %cst_82 : f32 to vector<8x128xf32>
    %215 = arith.addf %214, %213 : vector<8x128xf32>
    %216 = arith.divf %214, %215 : vector<8x128xf32>
    %217 = vector.extract_strided_slice %216 {offsets = [0, 0], sizes = [8, 64], strides = [1, 1]} : vector<8x128xf32> to vector<8x64xf32>
    %c64_i32_83 = arith.constant 64 : i32
    %218 = tpu.dynamic_rotate %216 by %c64_i32_83 dim 1 : vector<8x128xf32>, i32 -> vector<8x128xf32>
    %219 = vector.extract_strided_slice %218 {offsets = [0, 0], sizes = [8, 64], strides = [1, 1]} : vector<8x128xf32> to vector<8x64xf32>
    %220 = vector.extract_strided_slice %206 {offsets = [0, 128], sizes = [8, 64], strides = [1, 1]} : vector<8x192xf32> to vector<8x64xf32>
    %221 = arith.mulf %217, %209 : vector<8x64xf32>
    %222 = arith.addf %220, %221 : vector<8x64xf32>
    %223 = math.tanh %222 : vector<8x64xf32>
    %cst_84 = arith.constant 1.000000e+00 : f32
    %224 = vector.broadcast %cst_84 : f32 to vector<8x64xf32>
    %225 = arith.subf %224, %219 : vector<8x64xf32>
    %226 = arith.mulf %225, %223 : vector<8x64xf32>
    %227 = arith.mulf %219, %204 : vector<8x64xf32>
    %228 = arith.addf %226, %227 : vector<8x64xf32>
    %c64_85 = arith.constant 64 : index
    %c0_86 = arith.constant 0 : index
    %229 = vector.load %arg20[%c64_85, %c0_86] : memref<240x64xf32, #tpu.memory_space<vmem>>, vector<8x64xf32>
    tpu.vector_store %arg20[%c64_85, %c0_86], %228 {strides = array<i32>} : memref<240x64xf32, #tpu.memory_space<vmem>>, vector<8x64xf32>,
    %c72 = arith.constant 72 : index
    %c0_87 = arith.constant 0 : index
    %230 = vector.load %arg19[%c72, %c0_87] : memref<240x192xf32, #tpu.memory_space<vmem>>, vector<8x192xf32>
    %cst_88 = arith.constant dense<0.000000e+00> : vector<8x128xf32>
    %231 = tpu.matmul %228, %8, %cst_88 {dimension_numbers = #tpu.dot_dimension_numbers<[1], [0], [0], [1], [0, 0, 1, 1], [], []>} : vector<8x64xf32>, vector<64x128xf32>, vector<8x128xf32> -> vector<8x128xf32>
    %cst_89 = arith.constant dense<0.000000e+00> : vector<8x64xf32>
    %232 = tpu.matmul %228, %9, %cst_89 {dimension_numbers = #tpu.dot_dimension_numbers<[1], [0], [0], [1], [0, 0, 1, 1], [], []>} : vector<8x64xf32>, vector<64x64xf32>, vector<8x64xf32> -> vector<8x64xf32>
    %233 = arith.addf %232, %12 : vector<8x64xf32>
    %234 = vector.extract_strided_slice %230 {offsets = [0, 0], sizes = [8, 128], strides = [1, 1]} : vector<8x192xf32> to vector<8x128xf32>
    %235 = arith.addf %234, %231 : vector<8x128xf32>
    %236 = arith.negf %235 : vector<8x128xf32>
    %237 = math.exp %236 : vector<8x128xf32>
    %cst_90 = arith.constant 1.000000e+00 : f32
    %238 = vector.broadcast %cst_90 : f32 to vector<8x128xf32>
    %239 = arith.addf %238, %237 : vector<8x128xf32>
    %240 = arith.divf %238, %239 : vector<8x128xf32>
    %241 = vector.extract_strided_slice %240 {offsets = [0, 0], sizes = [8, 64], strides = [1, 1]} : vector<8x128xf32> to vector<8x64xf32>
    %c64_i32_91 = arith.constant 64 : i32
    %242 = tpu.dynamic_rotate %240 by %c64_i32_91 dim 1 : vector<8x128xf32>, i32 -> vector<8x128xf32>
    %243 = vector.extract_strided_slice %242 {offsets = [0, 0], sizes = [8, 64], strides = [1, 1]} : vector<8x128xf32> to vector<8x64xf32>
    %244 = vector.extract_strided_slice %230 {offsets = [0, 128], sizes = [8, 64], strides = [1, 1]} : vector<8x192xf32> to vector<8x64xf32>
    %245 = arith.mulf %241, %233 : vector<8x64xf32>
    %246 = arith.addf %244, %245 : vector<8x64xf32>
    %247 = math.tanh %246 : vector<8x64xf32>
    %cst_92 = arith.constant 1.000000e+00 : f32
    %248 = vector.broadcast %cst_92 : f32 to vector<8x64xf32>
    %249 = arith.subf %248, %243 : vector<8x64xf32>
    %250 = arith.mulf %249, %247 : vector<8x64xf32>
    %251 = arith.mulf %243, %228 : vector<8x64xf32>
    %252 = arith.addf %250, %251 : vector<8x64xf32>
    %c72_93 = arith.constant 72 : index
    %c0_94 = arith.constant 0 : index
    %253 = vector.load %arg20[%c72_93, %c0_94] : memref<240x64xf32, #tpu.memory_space<vmem>>, vector<8x64xf32>
    tpu.vector_store %arg20[%c72_93, %c0_94], %252 {strides = array<i32>} : memref<240x64xf32, #tpu.memory_space<vmem>>, vector<8x64xf32>,
    %c80 = arith.constant 80 : index
    %c0_95 = arith.constant 0 : index
    %254 = vector.load %arg19[%c80, %c0_95] : memref<240x192xf32, #tpu.memory_space<vmem>>, vector<8x192xf32>
    %cst_96 = arith.constant dense<0.000000e+00> : vector<8x128xf32>
    %255 = tpu.matmul %252, %8, %cst_96 {dimension_numbers = #tpu.dot_dimension_numbers<[1], [0], [0], [1], [0, 0, 1, 1], [], []>} : vector<8x64xf32>, vector<64x128xf32>, vector<8x128xf32> -> vector<8x128xf32>
    %cst_97 = arith.constant dense<0.000000e+00> : vector<8x64xf32>
    %256 = tpu.matmul %252, %9, %cst_97 {dimension_numbers = #tpu.dot_dimension_numbers<[1], [0], [0], [1], [0, 0, 1, 1], [], []>} : vector<8x64xf32>, vector<64x64xf32>, vector<8x64xf32> -> vector<8x64xf32>
    %257 = arith.addf %256, %12 : vector<8x64xf32>
    %258 = vector.extract_strided_slice %254 {offsets = [0, 0], sizes = [8, 128], strides = [1, 1]} : vector<8x192xf32> to vector<8x128xf32>
    %259 = arith.addf %258, %255 : vector<8x128xf32>
    %260 = arith.negf %259 : vector<8x128xf32>
    %261 = math.exp %260 : vector<8x128xf32>
    %cst_98 = arith.constant 1.000000e+00 : f32
    %262 = vector.broadcast %cst_98 : f32 to vector<8x128xf32>
    %263 = arith.addf %262, %261 : vector<8x128xf32>
    %264 = arith.divf %262, %263 : vector<8x128xf32>
    %265 = vector.extract_strided_slice %264 {offsets = [0, 0], sizes = [8, 64], strides = [1, 1]} : vector<8x128xf32> to vector<8x64xf32>
    %c64_i32_99 = arith.constant 64 : i32
    %266 = tpu.dynamic_rotate %264 by %c64_i32_99 dim 1 : vector<8x128xf32>, i32 -> vector<8x128xf32>
    %267 = vector.extract_strided_slice %266 {offsets = [0, 0], sizes = [8, 64], strides = [1, 1]} : vector<8x128xf32> to vector<8x64xf32>
    %268 = vector.extract_strided_slice %254 {offsets = [0, 128], sizes = [8, 64], strides = [1, 1]} : vector<8x192xf32> to vector<8x64xf32>
    %269 = arith.mulf %265, %257 : vector<8x64xf32>
    %270 = arith.addf %268, %269 : vector<8x64xf32>
    %271 = math.tanh %270 : vector<8x64xf32>
    %cst_100 = arith.constant 1.000000e+00 : f32
    %272 = vector.broadcast %cst_100 : f32 to vector<8x64xf32>
    %273 = arith.subf %272, %267 : vector<8x64xf32>
    %274 = arith.mulf %273, %271 : vector<8x64xf32>
    %275 = arith.mulf %267, %252 : vector<8x64xf32>
    %276 = arith.addf %274, %275 : vector<8x64xf32>
    %c80_101 = arith.constant 80 : index
    %c0_102 = arith.constant 0 : index
    %277 = vector.load %arg20[%c80_101, %c0_102] : memref<240x64xf32, #tpu.memory_space<vmem>>, vector<8x64xf32>
    tpu.vector_store %arg20[%c80_101, %c0_102], %276 {strides = array<i32>} : memref<240x64xf32, #tpu.memory_space<vmem>>, vector<8x64xf32>,
    %c88 = arith.constant 88 : index
    %c0_103 = arith.constant 0 : index
    %278 = vector.load %arg19[%c88, %c0_103] : memref<240x192xf32, #tpu.memory_space<vmem>>, vector<8x192xf32>
    %cst_104 = arith.constant dense<0.000000e+00> : vector<8x128xf32>
    %279 = tpu.matmul %276, %8, %cst_104 {dimension_numbers = #tpu.dot_dimension_numbers<[1], [0], [0], [1], [0, 0, 1, 1], [], []>} : vector<8x64xf32>, vector<64x128xf32>, vector<8x128xf32> -> vector<8x128xf32>
    %cst_105 = arith.constant dense<0.000000e+00> : vector<8x64xf32>
    %280 = tpu.matmul %276, %9, %cst_105 {dimension_numbers = #tpu.dot_dimension_numbers<[1], [0], [0], [1], [0, 0, 1, 1], [], []>} : vector<8x64xf32>, vector<64x64xf32>, vector<8x64xf32> -> vector<8x64xf32>
    %281 = arith.addf %280, %12 : vector<8x64xf32>
    %282 = vector.extract_strided_slice %278 {offsets = [0, 0], sizes = [8, 128], strides = [1, 1]} : vector<8x192xf32> to vector<8x128xf32>
    %283 = arith.addf %282, %279 : vector<8x128xf32>
    %284 = arith.negf %283 : vector<8x128xf32>
    %285 = math.exp %284 : vector<8x128xf32>
    %cst_106 = arith.constant 1.000000e+00 : f32
    %286 = vector.broadcast %cst_106 : f32 to vector<8x128xf32>
    %287 = arith.addf %286, %285 : vector<8x128xf32>
    %288 = arith.divf %286, %287 : vector<8x128xf32>
    %289 = vector.extract_strided_slice %288 {offsets = [0, 0], sizes = [8, 64], strides = [1, 1]} : vector<8x128xf32> to vector<8x64xf32>
    %c64_i32_107 = arith.constant 64 : i32
    %290 = tpu.dynamic_rotate %288 by %c64_i32_107 dim 1 : vector<8x128xf32>, i32 -> vector<8x128xf32>
    %291 = vector.extract_strided_slice %290 {offsets = [0, 0], sizes = [8, 64], strides = [1, 1]} : vector<8x128xf32> to vector<8x64xf32>
    %292 = vector.extract_strided_slice %278 {offsets = [0, 128], sizes = [8, 64], strides = [1, 1]} : vector<8x192xf32> to vector<8x64xf32>
    %293 = arith.mulf %289, %281 : vector<8x64xf32>
    %294 = arith.addf %292, %293 : vector<8x64xf32>
    %295 = math.tanh %294 : vector<8x64xf32>
    %cst_108 = arith.constant 1.000000e+00 : f32
    %296 = vector.broadcast %cst_108 : f32 to vector<8x64xf32>
    %297 = arith.subf %296, %291 : vector<8x64xf32>
    %298 = arith.mulf %297, %295 : vector<8x64xf32>
    %299 = arith.mulf %291, %276 : vector<8x64xf32>
    %300 = arith.addf %298, %299 : vector<8x64xf32>
    %c88_109 = arith.constant 88 : index
    %c0_110 = arith.constant 0 : index
    %301 = vector.load %arg20[%c88_109, %c0_110] : memref<240x64xf32, #tpu.memory_space<vmem>>, vector<8x64xf32>
    tpu.vector_store %arg20[%c88_109, %c0_110], %300 {strides = array<i32>} : memref<240x64xf32, #tpu.memory_space<vmem>>, vector<8x64xf32>,
    %c96 = arith.constant 96 : index
    %c0_111 = arith.constant 0 : index
    %302 = vector.load %arg19[%c96, %c0_111] : memref<240x192xf32, #tpu.memory_space<vmem>>, vector<8x192xf32>
    %cst_112 = arith.constant dense<0.000000e+00> : vector<8x128xf32>
    %303 = tpu.matmul %300, %8, %cst_112 {dimension_numbers = #tpu.dot_dimension_numbers<[1], [0], [0], [1], [0, 0, 1, 1], [], []>} : vector<8x64xf32>, vector<64x128xf32>, vector<8x128xf32> -> vector<8x128xf32>
    %cst_113 = arith.constant dense<0.000000e+00> : vector<8x64xf32>
    %304 = tpu.matmul %300, %9, %cst_113 {dimension_numbers = #tpu.dot_dimension_numbers<[1], [0], [0], [1], [0, 0, 1, 1], [], []>} : vector<8x64xf32>, vector<64x64xf32>, vector<8x64xf32> -> vector<8x64xf32>
    %305 = arith.addf %304, %12 : vector<8x64xf32>
    %306 = vector.extract_strided_slice %302 {offsets = [0, 0], sizes = [8, 128], strides = [1, 1]} : vector<8x192xf32> to vector<8x128xf32>
    %307 = arith.addf %306, %303 : vector<8x128xf32>
    %308 = arith.negf %307 : vector<8x128xf32>
    %309 = math.exp %308 : vector<8x128xf32>
    %cst_114 = arith.constant 1.000000e+00 : f32
    %310 = vector.broadcast %cst_114 : f32 to vector<8x128xf32>
    %311 = arith.addf %310, %309 : vector<8x128xf32>
    %312 = arith.divf %310, %311 : vector<8x128xf32>
    %313 = vector.extract_strided_slice %312 {offsets = [0, 0], sizes = [8, 64], strides = [1, 1]} : vector<8x128xf32> to vector<8x64xf32>
    %c64_i32_115 = arith.constant 64 : i32
    %314 = tpu.dynamic_rotate %312 by %c64_i32_115 dim 1 : vector<8x128xf32>, i32 -> vector<8x128xf32>
    %315 = vector.extract_strided_slice %314 {offsets = [0, 0], sizes = [8, 64], strides = [1, 1]} : vector<8x128xf32> to vector<8x64xf32>
    %316 = vector.extract_strided_slice %302 {offsets = [0, 128], sizes = [8, 64], strides = [1, 1]} : vector<8x192xf32> to vector<8x64xf32>
    %317 = arith.mulf %313, %305 : vector<8x64xf32>
    %318 = arith.addf %316, %317 : vector<8x64xf32>
    %319 = math.tanh %318 : vector<8x64xf32>
    %cst_116 = arith.constant 1.000000e+00 : f32
    %320 = vector.broadcast %cst_116 : f32 to vector<8x64xf32>
    %321 = arith.subf %320, %315 : vector<8x64xf32>
    %322 = arith.mulf %321, %319 : vector<8x64xf32>
    %323 = arith.mulf %315, %300 : vector<8x64xf32>
    %324 = arith.addf %322, %323 : vector<8x64xf32>
    %c96_117 = arith.constant 96 : index
    %c0_118 = arith.constant 0 : index
    %325 = vector.load %arg20[%c96_117, %c0_118] : memref<240x64xf32, #tpu.memory_space<vmem>>, vector<8x64xf32>
    tpu.vector_store %arg20[%c96_117, %c0_118], %324 {strides = array<i32>} : memref<240x64xf32, #tpu.memory_space<vmem>>, vector<8x64xf32>,
    %c104 = arith.constant 104 : index
    %c0_119 = arith.constant 0 : index
    %326 = vector.load %arg19[%c104, %c0_119] : memref<240x192xf32, #tpu.memory_space<vmem>>, vector<8x192xf32>
    %cst_120 = arith.constant dense<0.000000e+00> : vector<8x128xf32>
    %327 = tpu.matmul %324, %8, %cst_120 {dimension_numbers = #tpu.dot_dimension_numbers<[1], [0], [0], [1], [0, 0, 1, 1], [], []>} : vector<8x64xf32>, vector<64x128xf32>, vector<8x128xf32> -> vector<8x128xf32>
    %cst_121 = arith.constant dense<0.000000e+00> : vector<8x64xf32>
    %328 = tpu.matmul %324, %9, %cst_121 {dimension_numbers = #tpu.dot_dimension_numbers<[1], [0], [0], [1], [0, 0, 1, 1], [], []>} : vector<8x64xf32>, vector<64x64xf32>, vector<8x64xf32> -> vector<8x64xf32>
    %329 = arith.addf %328, %12 : vector<8x64xf32>
    %330 = vector.extract_strided_slice %326 {offsets = [0, 0], sizes = [8, 128], strides = [1, 1]} : vector<8x192xf32> to vector<8x128xf32>
    %331 = arith.addf %330, %327 : vector<8x128xf32>
    %332 = arith.negf %331 : vector<8x128xf32>
    %333 = math.exp %332 : vector<8x128xf32>
    %cst_122 = arith.constant 1.000000e+00 : f32
    %334 = vector.broadcast %cst_122 : f32 to vector<8x128xf32>
    %335 = arith.addf %334, %333 : vector<8x128xf32>
    %336 = arith.divf %334, %335 : vector<8x128xf32>
    %337 = vector.extract_strided_slice %336 {offsets = [0, 0], sizes = [8, 64], strides = [1, 1]} : vector<8x128xf32> to vector<8x64xf32>
    %c64_i32_123 = arith.constant 64 : i32
    %338 = tpu.dynamic_rotate %336 by %c64_i32_123 dim 1 : vector<8x128xf32>, i32 -> vector<8x128xf32>
    %339 = vector.extract_strided_slice %338 {offsets = [0, 0], sizes = [8, 64], strides = [1, 1]} : vector<8x128xf32> to vector<8x64xf32>
    %340 = vector.extract_strided_slice %326 {offsets = [0, 128], sizes = [8, 64], strides = [1, 1]} : vector<8x192xf32> to vector<8x64xf32>
    %341 = arith.mulf %337, %329 : vector<8x64xf32>
    %342 = arith.addf %340, %341 : vector<8x64xf32>
    %343 = math.tanh %342 : vector<8x64xf32>
    %cst_124 = arith.constant 1.000000e+00 : f32
    %344 = vector.broadcast %cst_124 : f32 to vector<8x64xf32>
    %345 = arith.subf %344, %339 : vector<8x64xf32>
    %346 = arith.mulf %345, %343 : vector<8x64xf32>
    %347 = arith.mulf %339, %324 : vector<8x64xf32>
    %348 = arith.addf %346, %347 : vector<8x64xf32>
    %c104_125 = arith.constant 104 : index
    %c0_126 = arith.constant 0 : index
    %349 = vector.load %arg20[%c104_125, %c0_126] : memref<240x64xf32, #tpu.memory_space<vmem>>, vector<8x64xf32>
    tpu.vector_store %arg20[%c104_125, %c0_126], %348 {strides = array<i32>} : memref<240x64xf32, #tpu.memory_space<vmem>>, vector<8x64xf32>,
    %c112 = arith.constant 112 : index
    %c0_127 = arith.constant 0 : index
    %350 = vector.load %arg19[%c112, %c0_127] : memref<240x192xf32, #tpu.memory_space<vmem>>, vector<8x192xf32>
    %cst_128 = arith.constant dense<0.000000e+00> : vector<8x128xf32>
    %351 = tpu.matmul %348, %8, %cst_128 {dimension_numbers = #tpu.dot_dimension_numbers<[1], [0], [0], [1], [0, 0, 1, 1], [], []>} : vector<8x64xf32>, vector<64x128xf32>, vector<8x128xf32> -> vector<8x128xf32>
    %cst_129 = arith.constant dense<0.000000e+00> : vector<8x64xf32>
    %352 = tpu.matmul %348, %9, %cst_129 {dimension_numbers = #tpu.dot_dimension_numbers<[1], [0], [0], [1], [0, 0, 1, 1], [], []>} : vector<8x64xf32>, vector<64x64xf32>, vector<8x64xf32> -> vector<8x64xf32>
    %353 = arith.addf %352, %12 : vector<8x64xf32>
    %354 = vector.extract_strided_slice %350 {offsets = [0, 0], sizes = [8, 128], strides = [1, 1]} : vector<8x192xf32> to vector<8x128xf32>
    %355 = arith.addf %354, %351 : vector<8x128xf32>
    %356 = arith.negf %355 : vector<8x128xf32>
    %357 = math.exp %356 : vector<8x128xf32>
    %cst_130 = arith.constant 1.000000e+00 : f32
    %358 = vector.broadcast %cst_130 : f32 to vector<8x128xf32>
    %359 = arith.addf %358, %357 : vector<8x128xf32>
    %360 = arith.divf %358, %359 : vector<8x128xf32>
    %361 = vector.extract_strided_slice %360 {offsets = [0, 0], sizes = [8, 64], strides = [1, 1]} : vector<8x128xf32> to vector<8x64xf32>
    %c64_i32_131 = arith.constant 64 : i32
    %362 = tpu.dynamic_rotate %360 by %c64_i32_131 dim 1 : vector<8x128xf32>, i32 -> vector<8x128xf32>
    %363 = vector.extract_strided_slice %362 {offsets = [0, 0], sizes = [8, 64], strides = [1, 1]} : vector<8x128xf32> to vector<8x64xf32>
    %364 = vector.extract_strided_slice %350 {offsets = [0, 128], sizes = [8, 64], strides = [1, 1]} : vector<8x192xf32> to vector<8x64xf32>
    %365 = arith.mulf %361, %353 : vector<8x64xf32>
    %366 = arith.addf %364, %365 : vector<8x64xf32>
    %367 = math.tanh %366 : vector<8x64xf32>
    %cst_132 = arith.constant 1.000000e+00 : f32
    %368 = vector.broadcast %cst_132 : f32 to vector<8x64xf32>
    %369 = arith.subf %368, %363 : vector<8x64xf32>
    %370 = arith.mulf %369, %367 : vector<8x64xf32>
    %371 = arith.mulf %363, %348 : vector<8x64xf32>
    %372 = arith.addf %370, %371 : vector<8x64xf32>
    %c112_133 = arith.constant 112 : index
    %c0_134 = arith.constant 0 : index
    %373 = vector.load %arg20[%c112_133, %c0_134] : memref<240x64xf32, #tpu.memory_space<vmem>>, vector<8x64xf32>
    tpu.vector_store %arg20[%c112_133, %c0_134], %372 {strides = array<i32>} : memref<240x64xf32, #tpu.memory_space<vmem>>, vector<8x64xf32>,
    %c120 = arith.constant 120 : index
    %c0_135 = arith.constant 0 : index
    %374 = vector.load %arg19[%c120, %c0_135] : memref<240x192xf32, #tpu.memory_space<vmem>>, vector<8x192xf32>
    %cst_136 = arith.constant dense<0.000000e+00> : vector<8x128xf32>
    %375 = tpu.matmul %372, %8, %cst_136 {dimension_numbers = #tpu.dot_dimension_numbers<[1], [0], [0], [1], [0, 0, 1, 1], [], []>} : vector<8x64xf32>, vector<64x128xf32>, vector<8x128xf32> -> vector<8x128xf32>
    %cst_137 = arith.constant dense<0.000000e+00> : vector<8x64xf32>
    %376 = tpu.matmul %372, %9, %cst_137 {dimension_numbers = #tpu.dot_dimension_numbers<[1], [0], [0], [1], [0, 0, 1, 1], [], []>} : vector<8x64xf32>, vector<64x64xf32>, vector<8x64xf32> -> vector<8x64xf32>
    %377 = arith.addf %376, %12 : vector<8x64xf32>
    %378 = vector.extract_strided_slice %374 {offsets = [0, 0], sizes = [8, 128], strides = [1, 1]} : vector<8x192xf32> to vector<8x128xf32>
    %379 = arith.addf %378, %375 : vector<8x128xf32>
    %380 = arith.negf %379 : vector<8x128xf32>
    %381 = math.exp %380 : vector<8x128xf32>
    %cst_138 = arith.constant 1.000000e+00 : f32
    %382 = vector.broadcast %cst_138 : f32 to vector<8x128xf32>
    %383 = arith.addf %382, %381 : vector<8x128xf32>
    %384 = arith.divf %382, %383 : vector<8x128xf32>
    %385 = vector.extract_strided_slice %384 {offsets = [0, 0], sizes = [8, 64], strides = [1, 1]} : vector<8x128xf32> to vector<8x64xf32>
    %c64_i32_139 = arith.constant 64 : i32
    %386 = tpu.dynamic_rotate %384 by %c64_i32_139 dim 1 : vector<8x128xf32>, i32 -> vector<8x128xf32>
    %387 = vector.extract_strided_slice %386 {offsets = [0, 0], sizes = [8, 64], strides = [1, 1]} : vector<8x128xf32> to vector<8x64xf32>
    %388 = vector.extract_strided_slice %374 {offsets = [0, 128], sizes = [8, 64], strides = [1, 1]} : vector<8x192xf32> to vector<8x64xf32>
    %389 = arith.mulf %385, %377 : vector<8x64xf32>
    %390 = arith.addf %388, %389 : vector<8x64xf32>
    %391 = math.tanh %390 : vector<8x64xf32>
    %cst_140 = arith.constant 1.000000e+00 : f32
    %392 = vector.broadcast %cst_140 : f32 to vector<8x64xf32>
    %393 = arith.subf %392, %387 : vector<8x64xf32>
    %394 = arith.mulf %393, %391 : vector<8x64xf32>
    %395 = arith.mulf %387, %372 : vector<8x64xf32>
    %396 = arith.addf %394, %395 : vector<8x64xf32>
    %c120_141 = arith.constant 120 : index
    %c0_142 = arith.constant 0 : index
    %397 = vector.load %arg20[%c120_141, %c0_142] : memref<240x64xf32, #tpu.memory_space<vmem>>, vector<8x64xf32>
    tpu.vector_store %arg20[%c120_141, %c0_142], %396 {strides = array<i32>} : memref<240x64xf32, #tpu.memory_space<vmem>>, vector<8x64xf32>,
    %c128 = arith.constant 128 : index
    %c0_143 = arith.constant 0 : index
    %398 = vector.load %arg19[%c128, %c0_143] : memref<240x192xf32, #tpu.memory_space<vmem>>, vector<8x192xf32>
    %cst_144 = arith.constant dense<0.000000e+00> : vector<8x128xf32>
    %399 = tpu.matmul %396, %8, %cst_144 {dimension_numbers = #tpu.dot_dimension_numbers<[1], [0], [0], [1], [0, 0, 1, 1], [], []>} : vector<8x64xf32>, vector<64x128xf32>, vector<8x128xf32> -> vector<8x128xf32>
    %cst_145 = arith.constant dense<0.000000e+00> : vector<8x64xf32>
    %400 = tpu.matmul %396, %9, %cst_145 {dimension_numbers = #tpu.dot_dimension_numbers<[1], [0], [0], [1], [0, 0, 1, 1], [], []>} : vector<8x64xf32>, vector<64x64xf32>, vector<8x64xf32> -> vector<8x64xf32>
    %401 = arith.addf %400, %12 : vector<8x64xf32>
    %402 = vector.extract_strided_slice %398 {offsets = [0, 0], sizes = [8, 128], strides = [1, 1]} : vector<8x192xf32> to vector<8x128xf32>
    %403 = arith.addf %402, %399 : vector<8x128xf32>
    %404 = arith.negf %403 : vector<8x128xf32>
    %405 = math.exp %404 : vector<8x128xf32>
    %cst_146 = arith.constant 1.000000e+00 : f32
    %406 = vector.broadcast %cst_146 : f32 to vector<8x128xf32>
    %407 = arith.addf %406, %405 : vector<8x128xf32>
    %408 = arith.divf %406, %407 : vector<8x128xf32>
    %409 = vector.extract_strided_slice %408 {offsets = [0, 0], sizes = [8, 64], strides = [1, 1]} : vector<8x128xf32> to vector<8x64xf32>
    %c64_i32_147 = arith.constant 64 : i32
    %410 = tpu.dynamic_rotate %408 by %c64_i32_147 dim 1 : vector<8x128xf32>, i32 -> vector<8x128xf32>
    %411 = vector.extract_strided_slice %410 {offsets = [0, 0], sizes = [8, 64], strides = [1, 1]} : vector<8x128xf32> to vector<8x64xf32>
    %412 = vector.extract_strided_slice %398 {offsets = [0, 128], sizes = [8, 64], strides = [1, 1]} : vector<8x192xf32> to vector<8x64xf32>
    %413 = arith.mulf %409, %401 : vector<8x64xf32>
    %414 = arith.addf %412, %413 : vector<8x64xf32>
    %415 = math.tanh %414 : vector<8x64xf32>
    %cst_148 = arith.constant 1.000000e+00 : f32
    %416 = vector.broadcast %cst_148 : f32 to vector<8x64xf32>
    %417 = arith.subf %416, %411 : vector<8x64xf32>
    %418 = arith.mulf %417, %415 : vector<8x64xf32>
    %419 = arith.mulf %411, %396 : vector<8x64xf32>
    %420 = arith.addf %418, %419 : vector<8x64xf32>
    %c128_149 = arith.constant 128 : index
    %c0_150 = arith.constant 0 : index
    %421 = vector.load %arg20[%c128_149, %c0_150] : memref<240x64xf32, #tpu.memory_space<vmem>>, vector<8x64xf32>
    tpu.vector_store %arg20[%c128_149, %c0_150], %420 {strides = array<i32>} : memref<240x64xf32, #tpu.memory_space<vmem>>, vector<8x64xf32>,
    %c136 = arith.constant 136 : index
    %c0_151 = arith.constant 0 : index
    %422 = vector.load %arg19[%c136, %c0_151] : memref<240x192xf32, #tpu.memory_space<vmem>>, vector<8x192xf32>
    %cst_152 = arith.constant dense<0.000000e+00> : vector<8x128xf32>
    %423 = tpu.matmul %420, %8, %cst_152 {dimension_numbers = #tpu.dot_dimension_numbers<[1], [0], [0], [1], [0, 0, 1, 1], [], []>} : vector<8x64xf32>, vector<64x128xf32>, vector<8x128xf32> -> vector<8x128xf32>
    %cst_153 = arith.constant dense<0.000000e+00> : vector<8x64xf32>
    %424 = tpu.matmul %420, %9, %cst_153 {dimension_numbers = #tpu.dot_dimension_numbers<[1], [0], [0], [1], [0, 0, 1, 1], [], []>} : vector<8x64xf32>, vector<64x64xf32>, vector<8x64xf32> -> vector<8x64xf32>
    %425 = arith.addf %424, %12 : vector<8x64xf32>
    %426 = vector.extract_strided_slice %422 {offsets = [0, 0], sizes = [8, 128], strides = [1, 1]} : vector<8x192xf32> to vector<8x128xf32>
    %427 = arith.addf %426, %423 : vector<8x128xf32>
    %428 = arith.negf %427 : vector<8x128xf32>
    %429 = math.exp %428 : vector<8x128xf32>
    %cst_154 = arith.constant 1.000000e+00 : f32
    %430 = vector.broadcast %cst_154 : f32 to vector<8x128xf32>
    %431 = arith.addf %430, %429 : vector<8x128xf32>
    %432 = arith.divf %430, %431 : vector<8x128xf32>
    %433 = vector.extract_strided_slice %432 {offsets = [0, 0], sizes = [8, 64], strides = [1, 1]} : vector<8x128xf32> to vector<8x64xf32>
    %c64_i32_155 = arith.constant 64 : i32
    %434 = tpu.dynamic_rotate %432 by %c64_i32_155 dim 1 : vector<8x128xf32>, i32 -> vector<8x128xf32>
    %435 = vector.extract_strided_slice %434 {offsets = [0, 0], sizes = [8, 64], strides = [1, 1]} : vector<8x128xf32> to vector<8x64xf32>
    %436 = vector.extract_strided_slice %422 {offsets = [0, 128], sizes = [8, 64], strides = [1, 1]} : vector<8x192xf32> to vector<8x64xf32>
    %437 = arith.mulf %433, %425 : vector<8x64xf32>
    %438 = arith.addf %436, %437 : vector<8x64xf32>
    %439 = math.tanh %438 : vector<8x64xf32>
    %cst_156 = arith.constant 1.000000e+00 : f32
    %440 = vector.broadcast %cst_156 : f32 to vector<8x64xf32>
    %441 = arith.subf %440, %435 : vector<8x64xf32>
    %442 = arith.mulf %441, %439 : vector<8x64xf32>
    %443 = arith.mulf %435, %420 : vector<8x64xf32>
    %444 = arith.addf %442, %443 : vector<8x64xf32>
    %c136_157 = arith.constant 136 : index
    %c0_158 = arith.constant 0 : index
    %445 = vector.load %arg20[%c136_157, %c0_158] : memref<240x64xf32, #tpu.memory_space<vmem>>, vector<8x64xf32>
    tpu.vector_store %arg20[%c136_157, %c0_158], %444 {strides = array<i32>} : memref<240x64xf32, #tpu.memory_space<vmem>>, vector<8x64xf32>,
    %c144 = arith.constant 144 : index
    %c0_159 = arith.constant 0 : index
    %446 = vector.load %arg19[%c144, %c0_159] : memref<240x192xf32, #tpu.memory_space<vmem>>, vector<8x192xf32>
    %cst_160 = arith.constant dense<0.000000e+00> : vector<8x128xf32>
    %447 = tpu.matmul %444, %8, %cst_160 {dimension_numbers = #tpu.dot_dimension_numbers<[1], [0], [0], [1], [0, 0, 1, 1], [], []>} : vector<8x64xf32>, vector<64x128xf32>, vector<8x128xf32> -> vector<8x128xf32>
    %cst_161 = arith.constant dense<0.000000e+00> : vector<8x64xf32>
    %448 = tpu.matmul %444, %9, %cst_161 {dimension_numbers = #tpu.dot_dimension_numbers<[1], [0], [0], [1], [0, 0, 1, 1], [], []>} : vector<8x64xf32>, vector<64x64xf32>, vector<8x64xf32> -> vector<8x64xf32>
    %449 = arith.addf %448, %12 : vector<8x64xf32>
    %450 = vector.extract_strided_slice %446 {offsets = [0, 0], sizes = [8, 128], strides = [1, 1]} : vector<8x192xf32> to vector<8x128xf32>
    %451 = arith.addf %450, %447 : vector<8x128xf32>
    %452 = arith.negf %451 : vector<8x128xf32>
    %453 = math.exp %452 : vector<8x128xf32>
    %cst_162 = arith.constant 1.000000e+00 : f32
    %454 = vector.broadcast %cst_162 : f32 to vector<8x128xf32>
    %455 = arith.addf %454, %453 : vector<8x128xf32>
    %456 = arith.divf %454, %455 : vector<8x128xf32>
    %457 = vector.extract_strided_slice %456 {offsets = [0, 0], sizes = [8, 64], strides = [1, 1]} : vector<8x128xf32> to vector<8x64xf32>
    %c64_i32_163 = arith.constant 64 : i32
    %458 = tpu.dynamic_rotate %456 by %c64_i32_163 dim 1 : vector<8x128xf32>, i32 -> vector<8x128xf32>
    %459 = vector.extract_strided_slice %458 {offsets = [0, 0], sizes = [8, 64], strides = [1, 1]} : vector<8x128xf32> to vector<8x64xf32>
    %460 = vector.extract_strided_slice %446 {offsets = [0, 128], sizes = [8, 64], strides = [1, 1]} : vector<8x192xf32> to vector<8x64xf32>
    %461 = arith.mulf %457, %449 : vector<8x64xf32>
    %462 = arith.addf %460, %461 : vector<8x64xf32>
    %463 = math.tanh %462 : vector<8x64xf32>
    %cst_164 = arith.constant 1.000000e+00 : f32
    %464 = vector.broadcast %cst_164 : f32 to vector<8x64xf32>
    %465 = arith.subf %464, %459 : vector<8x64xf32>
    %466 = arith.mulf %465, %463 : vector<8x64xf32>
    %467 = arith.mulf %459, %444 : vector<8x64xf32>
    %468 = arith.addf %466, %467 : vector<8x64xf32>
    %c144_165 = arith.constant 144 : index
    %c0_166 = arith.constant 0 : index
    %469 = vector.load %arg20[%c144_165, %c0_166] : memref<240x64xf32, #tpu.memory_space<vmem>>, vector<8x64xf32>
    tpu.vector_store %arg20[%c144_165, %c0_166], %468 {strides = array<i32>} : memref<240x64xf32, #tpu.memory_space<vmem>>, vector<8x64xf32>,
    %c152 = arith.constant 152 : index
    %c0_167 = arith.constant 0 : index
    %470 = vector.load %arg19[%c152, %c0_167] : memref<240x192xf32, #tpu.memory_space<vmem>>, vector<8x192xf32>
    %cst_168 = arith.constant dense<0.000000e+00> : vector<8x128xf32>
    %471 = tpu.matmul %468, %8, %cst_168 {dimension_numbers = #tpu.dot_dimension_numbers<[1], [0], [0], [1], [0, 0, 1, 1], [], []>} : vector<8x64xf32>, vector<64x128xf32>, vector<8x128xf32> -> vector<8x128xf32>
    %cst_169 = arith.constant dense<0.000000e+00> : vector<8x64xf32>
    %472 = tpu.matmul %468, %9, %cst_169 {dimension_numbers = #tpu.dot_dimension_numbers<[1], [0], [0], [1], [0, 0, 1, 1], [], []>} : vector<8x64xf32>, vector<64x64xf32>, vector<8x64xf32> -> vector<8x64xf32>
    %473 = arith.addf %472, %12 : vector<8x64xf32>
    %474 = vector.extract_strided_slice %470 {offsets = [0, 0], sizes = [8, 128], strides = [1, 1]} : vector<8x192xf32> to vector<8x128xf32>
    %475 = arith.addf %474, %471 : vector<8x128xf32>
    %476 = arith.negf %475 : vector<8x128xf32>
    %477 = math.exp %476 : vector<8x128xf32>
    %cst_170 = arith.constant 1.000000e+00 : f32
    %478 = vector.broadcast %cst_170 : f32 to vector<8x128xf32>
    %479 = arith.addf %478, %477 : vector<8x128xf32>
    %480 = arith.divf %478, %479 : vector<8x128xf32>
    %481 = vector.extract_strided_slice %480 {offsets = [0, 0], sizes = [8, 64], strides = [1, 1]} : vector<8x128xf32> to vector<8x64xf32>
    %c64_i32_171 = arith.constant 64 : i32
    %482 = tpu.dynamic_rotate %480 by %c64_i32_171 dim 1 : vector<8x128xf32>, i32 -> vector<8x128xf32>
    %483 = vector.extract_strided_slice %482 {offsets = [0, 0], sizes = [8, 64], strides = [1, 1]} : vector<8x128xf32> to vector<8x64xf32>
    %484 = vector.extract_strided_slice %470 {offsets = [0, 128], sizes = [8, 64], strides = [1, 1]} : vector<8x192xf32> to vector<8x64xf32>
    %485 = arith.mulf %481, %473 : vector<8x64xf32>
    %486 = arith.addf %484, %485 : vector<8x64xf32>
    %487 = math.tanh %486 : vector<8x64xf32>
    %cst_172 = arith.constant 1.000000e+00 : f32
    %488 = vector.broadcast %cst_172 : f32 to vector<8x64xf32>
    %489 = arith.subf %488, %483 : vector<8x64xf32>
    %490 = arith.mulf %489, %487 : vector<8x64xf32>
    %491 = arith.mulf %483, %468 : vector<8x64xf32>
    %492 = arith.addf %490, %491 : vector<8x64xf32>
    %c152_173 = arith.constant 152 : index
    %c0_174 = arith.constant 0 : index
    %493 = vector.load %arg20[%c152_173, %c0_174] : memref<240x64xf32, #tpu.memory_space<vmem>>, vector<8x64xf32>
    tpu.vector_store %arg20[%c152_173, %c0_174], %492 {strides = array<i32>} : memref<240x64xf32, #tpu.memory_space<vmem>>, vector<8x64xf32>,
    %c160 = arith.constant 160 : index
    %c0_175 = arith.constant 0 : index
    %494 = vector.load %arg19[%c160, %c0_175] : memref<240x192xf32, #tpu.memory_space<vmem>>, vector<8x192xf32>
    %cst_176 = arith.constant dense<0.000000e+00> : vector<8x128xf32>
    %495 = tpu.matmul %492, %8, %cst_176 {dimension_numbers = #tpu.dot_dimension_numbers<[1], [0], [0], [1], [0, 0, 1, 1], [], []>} : vector<8x64xf32>, vector<64x128xf32>, vector<8x128xf32> -> vector<8x128xf32>
    %cst_177 = arith.constant dense<0.000000e+00> : vector<8x64xf32>
    %496 = tpu.matmul %492, %9, %cst_177 {dimension_numbers = #tpu.dot_dimension_numbers<[1], [0], [0], [1], [0, 0, 1, 1], [], []>} : vector<8x64xf32>, vector<64x64xf32>, vector<8x64xf32> -> vector<8x64xf32>
    %497 = arith.addf %496, %12 : vector<8x64xf32>
    %498 = vector.extract_strided_slice %494 {offsets = [0, 0], sizes = [8, 128], strides = [1, 1]} : vector<8x192xf32> to vector<8x128xf32>
    %499 = arith.addf %498, %495 : vector<8x128xf32>
    %500 = arith.negf %499 : vector<8x128xf32>
    %501 = math.exp %500 : vector<8x128xf32>
    %cst_178 = arith.constant 1.000000e+00 : f32
    %502 = vector.broadcast %cst_178 : f32 to vector<8x128xf32>
    %503 = arith.addf %502, %501 : vector<8x128xf32>
    %504 = arith.divf %502, %503 : vector<8x128xf32>
    %505 = vector.extract_strided_slice %504 {offsets = [0, 0], sizes = [8, 64], strides = [1, 1]} : vector<8x128xf32> to vector<8x64xf32>
    %c64_i32_179 = arith.constant 64 : i32
    %506 = tpu.dynamic_rotate %504 by %c64_i32_179 dim 1 : vector<8x128xf32>, i32 -> vector<8x128xf32>
    %507 = vector.extract_strided_slice %506 {offsets = [0, 0], sizes = [8, 64], strides = [1, 1]} : vector<8x128xf32> to vector<8x64xf32>
    %508 = vector.extract_strided_slice %494 {offsets = [0, 128], sizes = [8, 64], strides = [1, 1]} : vector<8x192xf32> to vector<8x64xf32>
    %509 = arith.mulf %505, %497 : vector<8x64xf32>
    %510 = arith.addf %508, %509 : vector<8x64xf32>
    %511 = math.tanh %510 : vector<8x64xf32>
    %cst_180 = arith.constant 1.000000e+00 : f32
    %512 = vector.broadcast %cst_180 : f32 to vector<8x64xf32>
    %513 = arith.subf %512, %507 : vector<8x64xf32>
    %514 = arith.mulf %513, %511 : vector<8x64xf32>
    %515 = arith.mulf %507, %492 : vector<8x64xf32>
    %516 = arith.addf %514, %515 : vector<8x64xf32>
    %c160_181 = arith.constant 160 : index
    %c0_182 = arith.constant 0 : index
    %517 = vector.load %arg20[%c160_181, %c0_182] : memref<240x64xf32, #tpu.memory_space<vmem>>, vector<8x64xf32>
    tpu.vector_store %arg20[%c160_181, %c0_182], %516 {strides = array<i32>} : memref<240x64xf32, #tpu.memory_space<vmem>>, vector<8x64xf32>,
    %c168 = arith.constant 168 : index
    %c0_183 = arith.constant 0 : index
    %518 = vector.load %arg19[%c168, %c0_183] : memref<240x192xf32, #tpu.memory_space<vmem>>, vector<8x192xf32>
    %cst_184 = arith.constant dense<0.000000e+00> : vector<8x128xf32>
    %519 = tpu.matmul %516, %8, %cst_184 {dimension_numbers = #tpu.dot_dimension_numbers<[1], [0], [0], [1], [0, 0, 1, 1], [], []>} : vector<8x64xf32>, vector<64x128xf32>, vector<8x128xf32> -> vector<8x128xf32>
    %cst_185 = arith.constant dense<0.000000e+00> : vector<8x64xf32>
    %520 = tpu.matmul %516, %9, %cst_185 {dimension_numbers = #tpu.dot_dimension_numbers<[1], [0], [0], [1], [0, 0, 1, 1], [], []>} : vector<8x64xf32>, vector<64x64xf32>, vector<8x64xf32> -> vector<8x64xf32>
    %521 = arith.addf %520, %12 : vector<8x64xf32>
    %522 = vector.extract_strided_slice %518 {offsets = [0, 0], sizes = [8, 128], strides = [1, 1]} : vector<8x192xf32> to vector<8x128xf32>
    %523 = arith.addf %522, %519 : vector<8x128xf32>
    %524 = arith.negf %523 : vector<8x128xf32>
    %525 = math.exp %524 : vector<8x128xf32>
    %cst_186 = arith.constant 1.000000e+00 : f32
    %526 = vector.broadcast %cst_186 : f32 to vector<8x128xf32>
    %527 = arith.addf %526, %525 : vector<8x128xf32>
    %528 = arith.divf %526, %527 : vector<8x128xf32>
    %529 = vector.extract_strided_slice %528 {offsets = [0, 0], sizes = [8, 64], strides = [1, 1]} : vector<8x128xf32> to vector<8x64xf32>
    %c64_i32_187 = arith.constant 64 : i32
    %530 = tpu.dynamic_rotate %528 by %c64_i32_187 dim 1 : vector<8x128xf32>, i32 -> vector<8x128xf32>
    %531 = vector.extract_strided_slice %530 {offsets = [0, 0], sizes = [8, 64], strides = [1, 1]} : vector<8x128xf32> to vector<8x64xf32>
    %532 = vector.extract_strided_slice %518 {offsets = [0, 128], sizes = [8, 64], strides = [1, 1]} : vector<8x192xf32> to vector<8x64xf32>
    %533 = arith.mulf %529, %521 : vector<8x64xf32>
    %534 = arith.addf %532, %533 : vector<8x64xf32>
    %535 = math.tanh %534 : vector<8x64xf32>
    %cst_188 = arith.constant 1.000000e+00 : f32
    %536 = vector.broadcast %cst_188 : f32 to vector<8x64xf32>
    %537 = arith.subf %536, %531 : vector<8x64xf32>
    %538 = arith.mulf %537, %535 : vector<8x64xf32>
    %539 = arith.mulf %531, %516 : vector<8x64xf32>
    %540 = arith.addf %538, %539 : vector<8x64xf32>
    %c168_189 = arith.constant 168 : index
    %c0_190 = arith.constant 0 : index
    %541 = vector.load %arg20[%c168_189, %c0_190] : memref<240x64xf32, #tpu.memory_space<vmem>>, vector<8x64xf32>
    tpu.vector_store %arg20[%c168_189, %c0_190], %540 {strides = array<i32>} : memref<240x64xf32, #tpu.memory_space<vmem>>, vector<8x64xf32>,
    %c176 = arith.constant 176 : index
    %c0_191 = arith.constant 0 : index
    %542 = vector.load %arg19[%c176, %c0_191] : memref<240x192xf32, #tpu.memory_space<vmem>>, vector<8x192xf32>
    %cst_192 = arith.constant dense<0.000000e+00> : vector<8x128xf32>
    %543 = tpu.matmul %540, %8, %cst_192 {dimension_numbers = #tpu.dot_dimension_numbers<[1], [0], [0], [1], [0, 0, 1, 1], [], []>} : vector<8x64xf32>, vector<64x128xf32>, vector<8x128xf32> -> vector<8x128xf32>
    %cst_193 = arith.constant dense<0.000000e+00> : vector<8x64xf32>
    %544 = tpu.matmul %540, %9, %cst_193 {dimension_numbers = #tpu.dot_dimension_numbers<[1], [0], [0], [1], [0, 0, 1, 1], [], []>} : vector<8x64xf32>, vector<64x64xf32>, vector<8x64xf32> -> vector<8x64xf32>
    %545 = arith.addf %544, %12 : vector<8x64xf32>
    %546 = vector.extract_strided_slice %542 {offsets = [0, 0], sizes = [8, 128], strides = [1, 1]} : vector<8x192xf32> to vector<8x128xf32>
    %547 = arith.addf %546, %543 : vector<8x128xf32>
    %548 = arith.negf %547 : vector<8x128xf32>
    %549 = math.exp %548 : vector<8x128xf32>
    %cst_194 = arith.constant 1.000000e+00 : f32
    %550 = vector.broadcast %cst_194 : f32 to vector<8x128xf32>
    %551 = arith.addf %550, %549 : vector<8x128xf32>
    %552 = arith.divf %550, %551 : vector<8x128xf32>
    %553 = vector.extract_strided_slice %552 {offsets = [0, 0], sizes = [8, 64], strides = [1, 1]} : vector<8x128xf32> to vector<8x64xf32>
    %c64_i32_195 = arith.constant 64 : i32
    %554 = tpu.dynamic_rotate %552 by %c64_i32_195 dim 1 : vector<8x128xf32>, i32 -> vector<8x128xf32>
    %555 = vector.extract_strided_slice %554 {offsets = [0, 0], sizes = [8, 64], strides = [1, 1]} : vector<8x128xf32> to vector<8x64xf32>
    %556 = vector.extract_strided_slice %542 {offsets = [0, 128], sizes = [8, 64], strides = [1, 1]} : vector<8x192xf32> to vector<8x64xf32>
    %557 = arith.mulf %553, %545 : vector<8x64xf32>
    %558 = arith.addf %556, %557 : vector<8x64xf32>
    %559 = math.tanh %558 : vector<8x64xf32>
    %cst_196 = arith.constant 1.000000e+00 : f32
    %560 = vector.broadcast %cst_196 : f32 to vector<8x64xf32>
    %561 = arith.subf %560, %555 : vector<8x64xf32>
    %562 = arith.mulf %561, %559 : vector<8x64xf32>
    %563 = arith.mulf %555, %540 : vector<8x64xf32>
    %564 = arith.addf %562, %563 : vector<8x64xf32>
    %c176_197 = arith.constant 176 : index
    %c0_198 = arith.constant 0 : index
    %565 = vector.load %arg20[%c176_197, %c0_198] : memref<240x64xf32, #tpu.memory_space<vmem>>, vector<8x64xf32>
    tpu.vector_store %arg20[%c176_197, %c0_198], %564 {strides = array<i32>} : memref<240x64xf32, #tpu.memory_space<vmem>>, vector<8x64xf32>,
    %c184 = arith.constant 184 : index
    %c0_199 = arith.constant 0 : index
    %566 = vector.load %arg19[%c184, %c0_199] : memref<240x192xf32, #tpu.memory_space<vmem>>, vector<8x192xf32>
    %cst_200 = arith.constant dense<0.000000e+00> : vector<8x128xf32>
    %567 = tpu.matmul %564, %8, %cst_200 {dimension_numbers = #tpu.dot_dimension_numbers<[1], [0], [0], [1], [0, 0, 1, 1], [], []>} : vector<8x64xf32>, vector<64x128xf32>, vector<8x128xf32> -> vector<8x128xf32>
    %cst_201 = arith.constant dense<0.000000e+00> : vector<8x64xf32>
    %568 = tpu.matmul %564, %9, %cst_201 {dimension_numbers = #tpu.dot_dimension_numbers<[1], [0], [0], [1], [0, 0, 1, 1], [], []>} : vector<8x64xf32>, vector<64x64xf32>, vector<8x64xf32> -> vector<8x64xf32>
    %569 = arith.addf %568, %12 : vector<8x64xf32>
    %570 = vector.extract_strided_slice %566 {offsets = [0, 0], sizes = [8, 128], strides = [1, 1]} : vector<8x192xf32> to vector<8x128xf32>
    %571 = arith.addf %570, %567 : vector<8x128xf32>
    %572 = arith.negf %571 : vector<8x128xf32>
    %573 = math.exp %572 : vector<8x128xf32>
    %cst_202 = arith.constant 1.000000e+00 : f32
    %574 = vector.broadcast %cst_202 : f32 to vector<8x128xf32>
    %575 = arith.addf %574, %573 : vector<8x128xf32>
    %576 = arith.divf %574, %575 : vector<8x128xf32>
    %577 = vector.extract_strided_slice %576 {offsets = [0, 0], sizes = [8, 64], strides = [1, 1]} : vector<8x128xf32> to vector<8x64xf32>
    %c64_i32_203 = arith.constant 64 : i32
    %578 = tpu.dynamic_rotate %576 by %c64_i32_203 dim 1 : vector<8x128xf32>, i32 -> vector<8x128xf32>
    %579 = vector.extract_strided_slice %578 {offsets = [0, 0], sizes = [8, 64], strides = [1, 1]} : vector<8x128xf32> to vector<8x64xf32>
    %580 = vector.extract_strided_slice %566 {offsets = [0, 128], sizes = [8, 64], strides = [1, 1]} : vector<8x192xf32> to vector<8x64xf32>
    %581 = arith.mulf %577, %569 : vector<8x64xf32>
    %582 = arith.addf %580, %581 : vector<8x64xf32>
    %583 = math.tanh %582 : vector<8x64xf32>
    %cst_204 = arith.constant 1.000000e+00 : f32
    %584 = vector.broadcast %cst_204 : f32 to vector<8x64xf32>
    %585 = arith.subf %584, %579 : vector<8x64xf32>
    %586 = arith.mulf %585, %583 : vector<8x64xf32>
    %587 = arith.mulf %579, %564 : vector<8x64xf32>
    %588 = arith.addf %586, %587 : vector<8x64xf32>
    %c184_205 = arith.constant 184 : index
    %c0_206 = arith.constant 0 : index
    %589 = vector.load %arg20[%c184_205, %c0_206] : memref<240x64xf32, #tpu.memory_space<vmem>>, vector<8x64xf32>
    tpu.vector_store %arg20[%c184_205, %c0_206], %588 {strides = array<i32>} : memref<240x64xf32, #tpu.memory_space<vmem>>, vector<8x64xf32>,
    %c192 = arith.constant 192 : index
    %c0_207 = arith.constant 0 : index
    %590 = vector.load %arg19[%c192, %c0_207] : memref<240x192xf32, #tpu.memory_space<vmem>>, vector<8x192xf32>
    %cst_208 = arith.constant dense<0.000000e+00> : vector<8x128xf32>
    %591 = tpu.matmul %588, %8, %cst_208 {dimension_numbers = #tpu.dot_dimension_numbers<[1], [0], [0], [1], [0, 0, 1, 1], [], []>} : vector<8x64xf32>, vector<64x128xf32>, vector<8x128xf32> -> vector<8x128xf32>
    %cst_209 = arith.constant dense<0.000000e+00> : vector<8x64xf32>
    %592 = tpu.matmul %588, %9, %cst_209 {dimension_numbers = #tpu.dot_dimension_numbers<[1], [0], [0], [1], [0, 0, 1, 1], [], []>} : vector<8x64xf32>, vector<64x64xf32>, vector<8x64xf32> -> vector<8x64xf32>
    %593 = arith.addf %592, %12 : vector<8x64xf32>
    %594 = vector.extract_strided_slice %590 {offsets = [0, 0], sizes = [8, 128], strides = [1, 1]} : vector<8x192xf32> to vector<8x128xf32>
    %595 = arith.addf %594, %591 : vector<8x128xf32>
    %596 = arith.negf %595 : vector<8x128xf32>
    %597 = math.exp %596 : vector<8x128xf32>
    %cst_210 = arith.constant 1.000000e+00 : f32
    %598 = vector.broadcast %cst_210 : f32 to vector<8x128xf32>
    %599 = arith.addf %598, %597 : vector<8x128xf32>
    %600 = arith.divf %598, %599 : vector<8x128xf32>
    %601 = vector.extract_strided_slice %600 {offsets = [0, 0], sizes = [8, 64], strides = [1, 1]} : vector<8x128xf32> to vector<8x64xf32>
    %c64_i32_211 = arith.constant 64 : i32
    %602 = tpu.dynamic_rotate %600 by %c64_i32_211 dim 1 : vector<8x128xf32>, i32 -> vector<8x128xf32>
    %603 = vector.extract_strided_slice %602 {offsets = [0, 0], sizes = [8, 64], strides = [1, 1]} : vector<8x128xf32> to vector<8x64xf32>
    %604 = vector.extract_strided_slice %590 {offsets = [0, 128], sizes = [8, 64], strides = [1, 1]} : vector<8x192xf32> to vector<8x64xf32>
    %605 = arith.mulf %601, %593 : vector<8x64xf32>
    %606 = arith.addf %604, %605 : vector<8x64xf32>
    %607 = math.tanh %606 : vector<8x64xf32>
    %cst_212 = arith.constant 1.000000e+00 : f32
    %608 = vector.broadcast %cst_212 : f32 to vector<8x64xf32>
    %609 = arith.subf %608, %603 : vector<8x64xf32>
    %610 = arith.mulf %609, %607 : vector<8x64xf32>
    %611 = arith.mulf %603, %588 : vector<8x64xf32>
    %612 = arith.addf %610, %611 : vector<8x64xf32>
    %c192_213 = arith.constant 192 : index
    %c0_214 = arith.constant 0 : index
    %613 = vector.load %arg20[%c192_213, %c0_214] : memref<240x64xf32, #tpu.memory_space<vmem>>, vector<8x64xf32>
    tpu.vector_store %arg20[%c192_213, %c0_214], %612 {strides = array<i32>} : memref<240x64xf32, #tpu.memory_space<vmem>>, vector<8x64xf32>,
    %c200 = arith.constant 200 : index
    %c0_215 = arith.constant 0 : index
    %614 = vector.load %arg19[%c200, %c0_215] : memref<240x192xf32, #tpu.memory_space<vmem>>, vector<8x192xf32>
    %cst_216 = arith.constant dense<0.000000e+00> : vector<8x128xf32>
    %615 = tpu.matmul %612, %8, %cst_216 {dimension_numbers = #tpu.dot_dimension_numbers<[1], [0], [0], [1], [0, 0, 1, 1], [], []>} : vector<8x64xf32>, vector<64x128xf32>, vector<8x128xf32> -> vector<8x128xf32>
    %cst_217 = arith.constant dense<0.000000e+00> : vector<8x64xf32>
    %616 = tpu.matmul %612, %9, %cst_217 {dimension_numbers = #tpu.dot_dimension_numbers<[1], [0], [0], [1], [0, 0, 1, 1], [], []>} : vector<8x64xf32>, vector<64x64xf32>, vector<8x64xf32> -> vector<8x64xf32>
    %617 = arith.addf %616, %12 : vector<8x64xf32>
    %618 = vector.extract_strided_slice %614 {offsets = [0, 0], sizes = [8, 128], strides = [1, 1]} : vector<8x192xf32> to vector<8x128xf32>
    %619 = arith.addf %618, %615 : vector<8x128xf32>
    %620 = arith.negf %619 : vector<8x128xf32>
    %621 = math.exp %620 : vector<8x128xf32>
    %cst_218 = arith.constant 1.000000e+00 : f32
    %622 = vector.broadcast %cst_218 : f32 to vector<8x128xf32>
    %623 = arith.addf %622, %621 : vector<8x128xf32>
    %624 = arith.divf %622, %623 : vector<8x128xf32>
    %625 = vector.extract_strided_slice %624 {offsets = [0, 0], sizes = [8, 64], strides = [1, 1]} : vector<8x128xf32> to vector<8x64xf32>
    %c64_i32_219 = arith.constant 64 : i32
    %626 = tpu.dynamic_rotate %624 by %c64_i32_219 dim 1 : vector<8x128xf32>, i32 -> vector<8x128xf32>
    %627 = vector.extract_strided_slice %626 {offsets = [0, 0], sizes = [8, 64], strides = [1, 1]} : vector<8x128xf32> to vector<8x64xf32>
    %628 = vector.extract_strided_slice %614 {offsets = [0, 128], sizes = [8, 64], strides = [1, 1]} : vector<8x192xf32> to vector<8x64xf32>
    %629 = arith.mulf %625, %617 : vector<8x64xf32>
    %630 = arith.addf %628, %629 : vector<8x64xf32>
    %631 = math.tanh %630 : vector<8x64xf32>
    %cst_220 = arith.constant 1.000000e+00 : f32
    %632 = vector.broadcast %cst_220 : f32 to vector<8x64xf32>
    %633 = arith.subf %632, %627 : vector<8x64xf32>
    %634 = arith.mulf %633, %631 : vector<8x64xf32>
    %635 = arith.mulf %627, %612 : vector<8x64xf32>
    %636 = arith.addf %634, %635 : vector<8x64xf32>
    %c200_221 = arith.constant 200 : index
    %c0_222 = arith.constant 0 : index
    %637 = vector.load %arg20[%c200_221, %c0_222] : memref<240x64xf32, #tpu.memory_space<vmem>>, vector<8x64xf32>
    tpu.vector_store %arg20[%c200_221, %c0_222], %636 {strides = array<i32>} : memref<240x64xf32, #tpu.memory_space<vmem>>, vector<8x64xf32>,
    %c208 = arith.constant 208 : index
    %c0_223 = arith.constant 0 : index
    %638 = vector.load %arg19[%c208, %c0_223] : memref<240x192xf32, #tpu.memory_space<vmem>>, vector<8x192xf32>
    %cst_224 = arith.constant dense<0.000000e+00> : vector<8x128xf32>
    %639 = tpu.matmul %636, %8, %cst_224 {dimension_numbers = #tpu.dot_dimension_numbers<[1], [0], [0], [1], [0, 0, 1, 1], [], []>} : vector<8x64xf32>, vector<64x128xf32>, vector<8x128xf32> -> vector<8x128xf32>
    %cst_225 = arith.constant dense<0.000000e+00> : vector<8x64xf32>
    %640 = tpu.matmul %636, %9, %cst_225 {dimension_numbers = #tpu.dot_dimension_numbers<[1], [0], [0], [1], [0, 0, 1, 1], [], []>} : vector<8x64xf32>, vector<64x64xf32>, vector<8x64xf32> -> vector<8x64xf32>
    %641 = arith.addf %640, %12 : vector<8x64xf32>
    %642 = vector.extract_strided_slice %638 {offsets = [0, 0], sizes = [8, 128], strides = [1, 1]} : vector<8x192xf32> to vector<8x128xf32>
    %643 = arith.addf %642, %639 : vector<8x128xf32>
    %644 = arith.negf %643 : vector<8x128xf32>
    %645 = math.exp %644 : vector<8x128xf32>
    %cst_226 = arith.constant 1.000000e+00 : f32
    %646 = vector.broadcast %cst_226 : f32 to vector<8x128xf32>
    %647 = arith.addf %646, %645 : vector<8x128xf32>
    %648 = arith.divf %646, %647 : vector<8x128xf32>
    %649 = vector.extract_strided_slice %648 {offsets = [0, 0], sizes = [8, 64], strides = [1, 1]} : vector<8x128xf32> to vector<8x64xf32>
    %c64_i32_227 = arith.constant 64 : i32
    %650 = tpu.dynamic_rotate %648 by %c64_i32_227 dim 1 : vector<8x128xf32>, i32 -> vector<8x128xf32>
    %651 = vector.extract_strided_slice %650 {offsets = [0, 0], sizes = [8, 64], strides = [1, 1]} : vector<8x128xf32> to vector<8x64xf32>
    %652 = vector.extract_strided_slice %638 {offsets = [0, 128], sizes = [8, 64], strides = [1, 1]} : vector<8x192xf32> to vector<8x64xf32>
    %653 = arith.mulf %649, %641 : vector<8x64xf32>
    %654 = arith.addf %652, %653 : vector<8x64xf32>
    %655 = math.tanh %654 : vector<8x64xf32>
    %cst_228 = arith.constant 1.000000e+00 : f32
    %656 = vector.broadcast %cst_228 : f32 to vector<8x64xf32>
    %657 = arith.subf %656, %651 : vector<8x64xf32>
    %658 = arith.mulf %657, %655 : vector<8x64xf32>
    %659 = arith.mulf %651, %636 : vector<8x64xf32>
    %660 = arith.addf %658, %659 : vector<8x64xf32>
    %c208_229 = arith.constant 208 : index
    %c0_230 = arith.constant 0 : index
    %661 = vector.load %arg20[%c208_229, %c0_230] : memref<240x64xf32, #tpu.memory_space<vmem>>, vector<8x64xf32>
    tpu.vector_store %arg20[%c208_229, %c0_230], %660 {strides = array<i32>} : memref<240x64xf32, #tpu.memory_space<vmem>>, vector<8x64xf32>,
    %c216 = arith.constant 216 : index
    %c0_231 = arith.constant 0 : index
    %662 = vector.load %arg19[%c216, %c0_231] : memref<240x192xf32, #tpu.memory_space<vmem>>, vector<8x192xf32>
    %cst_232 = arith.constant dense<0.000000e+00> : vector<8x128xf32>
    %663 = tpu.matmul %660, %8, %cst_232 {dimension_numbers = #tpu.dot_dimension_numbers<[1], [0], [0], [1], [0, 0, 1, 1], [], []>} : vector<8x64xf32>, vector<64x128xf32>, vector<8x128xf32> -> vector<8x128xf32>
    %cst_233 = arith.constant dense<0.000000e+00> : vector<8x64xf32>
    %664 = tpu.matmul %660, %9, %cst_233 {dimension_numbers = #tpu.dot_dimension_numbers<[1], [0], [0], [1], [0, 0, 1, 1], [], []>} : vector<8x64xf32>, vector<64x64xf32>, vector<8x64xf32> -> vector<8x64xf32>
    %665 = arith.addf %664, %12 : vector<8x64xf32>
    %666 = vector.extract_strided_slice %662 {offsets = [0, 0], sizes = [8, 128], strides = [1, 1]} : vector<8x192xf32> to vector<8x128xf32>
    %667 = arith.addf %666, %663 : vector<8x128xf32>
    %668 = arith.negf %667 : vector<8x128xf32>
    %669 = math.exp %668 : vector<8x128xf32>
    %cst_234 = arith.constant 1.000000e+00 : f32
    %670 = vector.broadcast %cst_234 : f32 to vector<8x128xf32>
    %671 = arith.addf %670, %669 : vector<8x128xf32>
    %672 = arith.divf %670, %671 : vector<8x128xf32>
    %673 = vector.extract_strided_slice %672 {offsets = [0, 0], sizes = [8, 64], strides = [1, 1]} : vector<8x128xf32> to vector<8x64xf32>
    %c64_i32_235 = arith.constant 64 : i32
    %674 = tpu.dynamic_rotate %672 by %c64_i32_235 dim 1 : vector<8x128xf32>, i32 -> vector<8x128xf32>
    %675 = vector.extract_strided_slice %674 {offsets = [0, 0], sizes = [8, 64], strides = [1, 1]} : vector<8x128xf32> to vector<8x64xf32>
    %676 = vector.extract_strided_slice %662 {offsets = [0, 128], sizes = [8, 64], strides = [1, 1]} : vector<8x192xf32> to vector<8x64xf32>
    %677 = arith.mulf %673, %665 : vector<8x64xf32>
    %678 = arith.addf %676, %677 : vector<8x64xf32>
    %679 = math.tanh %678 : vector<8x64xf32>
    %cst_236 = arith.constant 1.000000e+00 : f32
    %680 = vector.broadcast %cst_236 : f32 to vector<8x64xf32>
    %681 = arith.subf %680, %675 : vector<8x64xf32>
    %682 = arith.mulf %681, %679 : vector<8x64xf32>
    %683 = arith.mulf %675, %660 : vector<8x64xf32>
    %684 = arith.addf %682, %683 : vector<8x64xf32>
    %c216_237 = arith.constant 216 : index
    %c0_238 = arith.constant 0 : index
    %685 = vector.load %arg20[%c216_237, %c0_238] : memref<240x64xf32, #tpu.memory_space<vmem>>, vector<8x64xf32>
    tpu.vector_store %arg20[%c216_237, %c0_238], %684 {strides = array<i32>} : memref<240x64xf32, #tpu.memory_space<vmem>>, vector<8x64xf32>,
    %c224 = arith.constant 224 : index
    %c0_239 = arith.constant 0 : index
    %686 = vector.load %arg19[%c224, %c0_239] : memref<240x192xf32, #tpu.memory_space<vmem>>, vector<8x192xf32>
    %cst_240 = arith.constant dense<0.000000e+00> : vector<8x128xf32>
    %687 = tpu.matmul %684, %8, %cst_240 {dimension_numbers = #tpu.dot_dimension_numbers<[1], [0], [0], [1], [0, 0, 1, 1], [], []>} : vector<8x64xf32>, vector<64x128xf32>, vector<8x128xf32> -> vector<8x128xf32>
    %cst_241 = arith.constant dense<0.000000e+00> : vector<8x64xf32>
    %688 = tpu.matmul %684, %9, %cst_241 {dimension_numbers = #tpu.dot_dimension_numbers<[1], [0], [0], [1], [0, 0, 1, 1], [], []>} : vector<8x64xf32>, vector<64x64xf32>, vector<8x64xf32> -> vector<8x64xf32>
    %689 = arith.addf %688, %12 : vector<8x64xf32>
    %690 = vector.extract_strided_slice %686 {offsets = [0, 0], sizes = [8, 128], strides = [1, 1]} : vector<8x192xf32> to vector<8x128xf32>
    %691 = arith.addf %690, %687 : vector<8x128xf32>
    %692 = arith.negf %691 : vector<8x128xf32>
    %693 = math.exp %692 : vector<8x128xf32>
    %cst_242 = arith.constant 1.000000e+00 : f32
    %694 = vector.broadcast %cst_242 : f32 to vector<8x128xf32>
    %695 = arith.addf %694, %693 : vector<8x128xf32>
    %696 = arith.divf %694, %695 : vector<8x128xf32>
    %697 = vector.extract_strided_slice %696 {offsets = [0, 0], sizes = [8, 64], strides = [1, 1]} : vector<8x128xf32> to vector<8x64xf32>
    %c64_i32_243 = arith.constant 64 : i32
    %698 = tpu.dynamic_rotate %696 by %c64_i32_243 dim 1 : vector<8x128xf32>, i32 -> vector<8x128xf32>
    %699 = vector.extract_strided_slice %698 {offsets = [0, 0], sizes = [8, 64], strides = [1, 1]} : vector<8x128xf32> to vector<8x64xf32>
    %700 = vector.extract_strided_slice %686 {offsets = [0, 128], sizes = [8, 64], strides = [1, 1]} : vector<8x192xf32> to vector<8x64xf32>
    %701 = arith.mulf %697, %689 : vector<8x64xf32>
    %702 = arith.addf %700, %701 : vector<8x64xf32>
    %703 = math.tanh %702 : vector<8x64xf32>
    %cst_244 = arith.constant 1.000000e+00 : f32
    %704 = vector.broadcast %cst_244 : f32 to vector<8x64xf32>
    %705 = arith.subf %704, %699 : vector<8x64xf32>
    %706 = arith.mulf %705, %703 : vector<8x64xf32>
    %707 = arith.mulf %699, %684 : vector<8x64xf32>
    %708 = arith.addf %706, %707 : vector<8x64xf32>
    %c224_245 = arith.constant 224 : index
    %c0_246 = arith.constant 0 : index
    %709 = vector.load %arg20[%c224_245, %c0_246] : memref<240x64xf32, #tpu.memory_space<vmem>>, vector<8x64xf32>
    tpu.vector_store %arg20[%c224_245, %c0_246], %708 {strides = array<i32>} : memref<240x64xf32, #tpu.memory_space<vmem>>, vector<8x64xf32>,
    %c232 = arith.constant 232 : index
    %c0_247 = arith.constant 0 : index
    %710 = vector.load %arg19[%c232, %c0_247] : memref<240x192xf32, #tpu.memory_space<vmem>>, vector<8x192xf32>
    %cst_248 = arith.constant dense<0.000000e+00> : vector<8x128xf32>
    %711 = tpu.matmul %708, %8, %cst_248 {dimension_numbers = #tpu.dot_dimension_numbers<[1], [0], [0], [1], [0, 0, 1, 1], [], []>} : vector<8x64xf32>, vector<64x128xf32>, vector<8x128xf32> -> vector<8x128xf32>
    %cst_249 = arith.constant dense<0.000000e+00> : vector<8x64xf32>
    %712 = tpu.matmul %708, %9, %cst_249 {dimension_numbers = #tpu.dot_dimension_numbers<[1], [0], [0], [1], [0, 0, 1, 1], [], []>} : vector<8x64xf32>, vector<64x64xf32>, vector<8x64xf32> -> vector<8x64xf32>
    %713 = arith.addf %712, %12 : vector<8x64xf32>
    %714 = vector.extract_strided_slice %710 {offsets = [0, 0], sizes = [8, 128], strides = [1, 1]} : vector<8x192xf32> to vector<8x128xf32>
    %715 = arith.addf %714, %711 : vector<8x128xf32>
    %716 = arith.negf %715 : vector<8x128xf32>
    %717 = math.exp %716 : vector<8x128xf32>
    %cst_250 = arith.constant 1.000000e+00 : f32
    %718 = vector.broadcast %cst_250 : f32 to vector<8x128xf32>
    %719 = arith.addf %718, %717 : vector<8x128xf32>
    %720 = arith.divf %718, %719 : vector<8x128xf32>
    %721 = vector.extract_strided_slice %720 {offsets = [0, 0], sizes = [8, 64], strides = [1, 1]} : vector<8x128xf32> to vector<8x64xf32>
    %c64_i32_251 = arith.constant 64 : i32
    %722 = tpu.dynamic_rotate %720 by %c64_i32_251 dim 1 : vector<8x128xf32>, i32 -> vector<8x128xf32>
    %723 = vector.extract_strided_slice %722 {offsets = [0, 0], sizes = [8, 64], strides = [1, 1]} : vector<8x128xf32> to vector<8x64xf32>
    %724 = vector.extract_strided_slice %710 {offsets = [0, 128], sizes = [8, 64], strides = [1, 1]} : vector<8x192xf32> to vector<8x64xf32>
    %725 = arith.mulf %721, %713 : vector<8x64xf32>
    %726 = arith.addf %724, %725 : vector<8x64xf32>
    %727 = math.tanh %726 : vector<8x64xf32>
    %cst_252 = arith.constant 1.000000e+00 : f32
    %728 = vector.broadcast %cst_252 : f32 to vector<8x64xf32>
    %729 = arith.subf %728, %723 : vector<8x64xf32>
    %730 = arith.mulf %729, %727 : vector<8x64xf32>
    %731 = arith.mulf %723, %708 : vector<8x64xf32>
    %732 = arith.addf %730, %731 : vector<8x64xf32>
    %c232_253 = arith.constant 232 : index
    %c0_254 = arith.constant 0 : index
    %733 = vector.load %arg20[%c232_253, %c0_254] : memref<240x64xf32, #tpu.memory_space<vmem>>, vector<8x64xf32>
    tpu.vector_store %arg20[%c232_253, %c0_254], %732 {strides = array<i32>} : memref<240x64xf32, #tpu.memory_space<vmem>>, vector<8x64xf32>,
    %c0_255 = arith.constant 0 : index
    %c0_256 = arith.constant 0 : index
    %734 = vector.load %arg20[%c0_255, %c0_256] : memref<240x64xf32, #tpu.memory_space<vmem>>, vector<240x64xf32>
    %c0_257 = arith.constant 0 : index
    %c0_258 = arith.constant 0 : index
    %735 = vector.load %arg8[%c0_257, %c0_258] : memref<64x128xf32, #tpu.memory_space<vmem>>, vector<64x128xf32>
    %cst_259 = arith.constant dense<0.000000e+00> : vector<240x128xf32>
    %736 = tpu.matmul %734, %735, %cst_259 {dimension_numbers = #tpu.dot_dimension_numbers<[1], [0], [0], [1], [0, 0, 1, 1], [], []>} : vector<240x64xf32>, vector<64x128xf32>, vector<240x128xf32> -> vector<240x128xf32>
    %c0_260 = arith.constant 0 : index
    %c0_261 = arith.constant 0 : index
    %737 = vector.load %arg9[%c0_260, %c0_261] : memref<1x128xf32, #tpu.memory_space<vmem>>, vector<1x128xf32>
    %738 = vector.broadcast %737 : vector<1x128xf32> to vector<240x128xf32>
    %739 = arith.addf %736, %738 : vector<240x128xf32>
    %740 = vector.extract_strided_slice %739 {offsets = [0, 0], sizes = [240, 14], strides = [1, 1]} : vector<240x128xf32> to vector<240x14xf32>
    %c114_i32 = arith.constant 114 : i32
    %741 = tpu.dynamic_rotate %739 by %c114_i32 dim 1 : vector<240x128xf32>, i32 -> vector<240x128xf32>
    %742 = vector.extract_strided_slice %741 {offsets = [0, 0], sizes = [240, 14], strides = [1, 1]} : vector<240x128xf32> to vector<240x14xf32>
    %c100_i32 = arith.constant 100 : i32
    %743 = tpu.dynamic_rotate %739 by %c100_i32 dim 1 : vector<240x128xf32>, i32 -> vector<240x128xf32>
    %744 = vector.extract_strided_slice %743 {offsets = [0, 0], sizes = [240, 14], strides = [1, 1]} : vector<240x128xf32> to vector<240x14xf32>
    %cst_262 = arith.constant 2.000000e+01 : f32
    %745 = vector.broadcast %cst_262 : f32 to vector<240x14xf32>
    %746 = arith.cmpf ogt, %742, %745 : vector<240x14xf32>
    %cst_263 = arith.constant 2.000000e+01 : f32
    %747 = vector.broadcast %cst_263 : f32 to vector<240x14xf32>
    %748 = arith.minimumf %742, %747 : vector<240x14xf32>
    %749 = math.exp %748 : vector<240x14xf32>
    %750 = math.log1p %749 : vector<240x14xf32>
    %751 = arith.select %746, %742, %750 : vector<240x14xi1>, vector<240x14xf32>
    %752 = arith.negf %744 : vector<240x14xf32>
    %753 = math.exp %752 : vector<240x14xf32>
    %cst_264 = arith.constant 1.000000e+00 : f32
    %754 = vector.broadcast %cst_264 : f32 to vector<240x14xf32>
    %755 = arith.addf %754, %753 : vector<240x14xf32>
    %756 = arith.divf %754, %755 : vector<240x14xf32>
    %c0_265 = arith.constant 0 : index
    %c0_266 = arith.constant 0 : index
    %c0_267 = arith.constant 0 : index
    %757 = vector.load %arg2[%c0_265, %c0_266, %c0_267] : memref<1x240x14xf32, #tpu.memory_space<vmem>>, vector<1x240x14xf32>
    %758 = vector.shape_cast %757 : vector<1x240x14xf32> to vector<240x14xf32>
    %759 = arith.mulf %756, %758 : vector<240x14xf32>
    %760 = arith.mulf %751, %759 : vector<240x14xf32>
    %761 = arith.addf %740, %760 : vector<240x14xf32>
    %c0_268 = arith.constant 0 : index
    %c0_269 = arith.constant 0 : index
    %762 = vector.load %arg21[%c0_268, %c0_269] : memref<240x14xf32, #tpu.memory_space<vmem>>, vector<240x14xf32>
    tpu.vector_store %arg21[%c0_268, %c0_269], %761 {strides = array<i32>} : memref<240x14xf32, #tpu.memory_space<vmem>>, vector<240x14xf32>,
    %cst_270 = arith.constant 0.000000e+00 : f32
    %763 = vector.broadcast %cst_270 : f32 to vector<8x192xf32>
    %cst_271 = arith.constant 0.000000e+00 : f32
    %764 = vector.broadcast %cst_271 : f32 to vector<8x192xf32>
    %cst_272 = arith.constant 0.000000e+00 : f32
    %765 = vector.broadcast %cst_272 : f32 to vector<8x192xf32>
    %c0_273 = arith.constant 0 : index
    %c0_274 = arith.constant 0 : index
    %766 = vector.load %arg21[%c0_273, %c0_274] : memref<240x14xf32, #tpu.memory_space<vmem>>, vector<8x14xf32>
    %c0_275 = arith.constant 0 : index
    %c0_276 = arith.constant 0 : index
    %c0_277 = arith.constant 0 : index
    %767 = vector.load %arg10[%c0_275, %c0_276, %c0_277] : memref<30x14x192xf32, #tpu.memory_space<vmem>>, vector<1x14x192xf32>
    %768 = vector.shape_cast %767 : vector<1x14x192xf32> to vector<14x192xf32>
    %cst_278 = arith.constant dense<0.000000e+00> : vector<8x192xf32>
    %769 = tpu.matmul %766, %768, %cst_278 {dimension_numbers = #tpu.dot_dimension_numbers<[1], [0], [0], [1], [0, 0, 1, 1], [], []>} : vector<8x14xf32>, vector<14x192xf32>, vector<8x192xf32> -> vector<8x192xf32>
    %770 = arith.addf %763, %769 : vector<8x192xf32>
    %c8_279 = arith.constant 8 : index
    %c0_280 = arith.constant 0 : index
    %771 = vector.load %arg21[%c8_279, %c0_280] : memref<240x14xf32, #tpu.memory_space<vmem>>, vector<8x14xf32>
    %c1 = arith.constant 1 : index
    %c0_281 = arith.constant 0 : index
    %c0_282 = arith.constant 0 : index
    %772 = vector.load %arg10[%c1, %c0_281, %c0_282] : memref<30x14x192xf32, #tpu.memory_space<vmem>>, vector<1x14x192xf32>
    %773 = vector.shape_cast %772 : vector<1x14x192xf32> to vector<14x192xf32>
    %cst_283 = arith.constant dense<0.000000e+00> : vector<8x192xf32>
    %774 = tpu.matmul %771, %773, %cst_283 {dimension_numbers = #tpu.dot_dimension_numbers<[1], [0], [0], [1], [0, 0, 1, 1], [], []>} : vector<8x14xf32>, vector<14x192xf32>, vector<8x192xf32> -> vector<8x192xf32>
    %775 = arith.addf %764, %774 : vector<8x192xf32>
    %c16_284 = arith.constant 16 : index
    %c0_285 = arith.constant 0 : index
    %776 = vector.load %arg21[%c16_284, %c0_285] : memref<240x14xf32, #tpu.memory_space<vmem>>, vector<8x14xf32>
    %c2 = arith.constant 2 : index
    %c0_286 = arith.constant 0 : index
    %c0_287 = arith.constant 0 : index
    %777 = vector.load %arg10[%c2, %c0_286, %c0_287] : memref<30x14x192xf32, #tpu.memory_space<vmem>>, vector<1x14x192xf32>
    %778 = vector.shape_cast %777 : vector<1x14x192xf32> to vector<14x192xf32>
    %cst_288 = arith.constant dense<0.000000e+00> : vector<8x192xf32>
    %779 = tpu.matmul %776, %778, %cst_288 {dimension_numbers = #tpu.dot_dimension_numbers<[1], [0], [0], [1], [0, 0, 1, 1], [], []>} : vector<8x14xf32>, vector<14x192xf32>, vector<8x192xf32> -> vector<8x192xf32>
    %780 = arith.addf %765, %779 : vector<8x192xf32>
    %c24_289 = arith.constant 24 : index
    %c0_290 = arith.constant 0 : index
    %781 = vector.load %arg21[%c24_289, %c0_290] : memref<240x14xf32, #tpu.memory_space<vmem>>, vector<8x14xf32>
    %c3 = arith.constant 3 : index
    %c0_291 = arith.constant 0 : index
    %c0_292 = arith.constant 0 : index
    %782 = vector.load %arg10[%c3, %c0_291, %c0_292] : memref<30x14x192xf32, #tpu.memory_space<vmem>>, vector<1x14x192xf32>
    %783 = vector.shape_cast %782 : vector<1x14x192xf32> to vector<14x192xf32>
    %cst_293 = arith.constant dense<0.000000e+00> : vector<8x192xf32>
    %784 = tpu.matmul %781, %783, %cst_293 {dimension_numbers = #tpu.dot_dimension_numbers<[1], [0], [0], [1], [0, 0, 1, 1], [], []>} : vector<8x14xf32>, vector<14x192xf32>, vector<8x192xf32> -> vector<8x192xf32>
    %785 = arith.addf %770, %784 : vector<8x192xf32>
    %c32_294 = arith.constant 32 : index
    %c0_295 = arith.constant 0 : index
    %786 = vector.load %arg21[%c32_294, %c0_295] : memref<240x14xf32, #tpu.memory_space<vmem>>, vector<8x14xf32>
    %c4 = arith.constant 4 : index
    %c0_296 = arith.constant 0 : index
    %c0_297 = arith.constant 0 : index
    %787 = vector.load %arg10[%c4, %c0_296, %c0_297] : memref<30x14x192xf32, #tpu.memory_space<vmem>>, vector<1x14x192xf32>
    %788 = vector.shape_cast %787 : vector<1x14x192xf32> to vector<14x192xf32>
    %cst_298 = arith.constant dense<0.000000e+00> : vector<8x192xf32>
    %789 = tpu.matmul %786, %788, %cst_298 {dimension_numbers = #tpu.dot_dimension_numbers<[1], [0], [0], [1], [0, 0, 1, 1], [], []>} : vector<8x14xf32>, vector<14x192xf32>, vector<8x192xf32> -> vector<8x192xf32>
    %790 = arith.addf %775, %789 : vector<8x192xf32>
    %c40_299 = arith.constant 40 : index
    %c0_300 = arith.constant 0 : index
    %791 = vector.load %arg21[%c40_299, %c0_300] : memref<240x14xf32, #tpu.memory_space<vmem>>, vector<8x14xf32>
    %c5 = arith.constant 5 : index
    %c0_301 = arith.constant 0 : index
    %c0_302 = arith.constant 0 : index
    %792 = vector.load %arg10[%c5, %c0_301, %c0_302] : memref<30x14x192xf32, #tpu.memory_space<vmem>>, vector<1x14x192xf32>
    %793 = vector.shape_cast %792 : vector<1x14x192xf32> to vector<14x192xf32>
    %cst_303 = arith.constant dense<0.000000e+00> : vector<8x192xf32>
    %794 = tpu.matmul %791, %793, %cst_303 {dimension_numbers = #tpu.dot_dimension_numbers<[1], [0], [0], [1], [0, 0, 1, 1], [], []>} : vector<8x14xf32>, vector<14x192xf32>, vector<8x192xf32> -> vector<8x192xf32>
    %795 = arith.addf %780, %794 : vector<8x192xf32>
    %c48_304 = arith.constant 48 : index
    %c0_305 = arith.constant 0 : index
    %796 = vector.load %arg21[%c48_304, %c0_305] : memref<240x14xf32, #tpu.memory_space<vmem>>, vector<8x14xf32>
    %c6 = arith.constant 6 : index
    %c0_306 = arith.constant 0 : index
    %c0_307 = arith.constant 0 : index
    %797 = vector.load %arg10[%c6, %c0_306, %c0_307] : memref<30x14x192xf32, #tpu.memory_space<vmem>>, vector<1x14x192xf32>
    %798 = vector.shape_cast %797 : vector<1x14x192xf32> to vector<14x192xf32>
    %cst_308 = arith.constant dense<0.000000e+00> : vector<8x192xf32>
    %799 = tpu.matmul %796, %798, %cst_308 {dimension_numbers = #tpu.dot_dimension_numbers<[1], [0], [0], [1], [0, 0, 1, 1], [], []>} : vector<8x14xf32>, vector<14x192xf32>, vector<8x192xf32> -> vector<8x192xf32>
    %800 = arith.addf %785, %799 : vector<8x192xf32>
    %c56_309 = arith.constant 56 : index
    %c0_310 = arith.constant 0 : index
    %801 = vector.load %arg21[%c56_309, %c0_310] : memref<240x14xf32, #tpu.memory_space<vmem>>, vector<8x14xf32>
    %c7 = arith.constant 7 : index
    %c0_311 = arith.constant 0 : index
    %c0_312 = arith.constant 0 : index
    %802 = vector.load %arg10[%c7, %c0_311, %c0_312] : memref<30x14x192xf32, #tpu.memory_space<vmem>>, vector<1x14x192xf32>
    %803 = vector.shape_cast %802 : vector<1x14x192xf32> to vector<14x192xf32>
    %cst_313 = arith.constant dense<0.000000e+00> : vector<8x192xf32>
    %804 = tpu.matmul %801, %803, %cst_313 {dimension_numbers = #tpu.dot_dimension_numbers<[1], [0], [0], [1], [0, 0, 1, 1], [], []>} : vector<8x14xf32>, vector<14x192xf32>, vector<8x192xf32> -> vector<8x192xf32>
    %805 = arith.addf %790, %804 : vector<8x192xf32>
    %c64_314 = arith.constant 64 : index
    %c0_315 = arith.constant 0 : index
    %806 = vector.load %arg21[%c64_314, %c0_315] : memref<240x14xf32, #tpu.memory_space<vmem>>, vector<8x14xf32>
    %c8_316 = arith.constant 8 : index
    %c0_317 = arith.constant 0 : index
    %c0_318 = arith.constant 0 : index
    %807 = vector.load %arg10[%c8_316, %c0_317, %c0_318] : memref<30x14x192xf32, #tpu.memory_space<vmem>>, vector<1x14x192xf32>
    %808 = vector.shape_cast %807 : vector<1x14x192xf32> to vector<14x192xf32>
    %cst_319 = arith.constant dense<0.000000e+00> : vector<8x192xf32>
    %809 = tpu.matmul %806, %808, %cst_319 {dimension_numbers = #tpu.dot_dimension_numbers<[1], [0], [0], [1], [0, 0, 1, 1], [], []>} : vector<8x14xf32>, vector<14x192xf32>, vector<8x192xf32> -> vector<8x192xf32>
    %810 = arith.addf %795, %809 : vector<8x192xf32>
    %c72_320 = arith.constant 72 : index
    %c0_321 = arith.constant 0 : index
    %811 = vector.load %arg21[%c72_320, %c0_321] : memref<240x14xf32, #tpu.memory_space<vmem>>, vector<8x14xf32>
    %c9 = arith.constant 9 : index
    %c0_322 = arith.constant 0 : index
    %c0_323 = arith.constant 0 : index
    %812 = vector.load %arg10[%c9, %c0_322, %c0_323] : memref<30x14x192xf32, #tpu.memory_space<vmem>>, vector<1x14x192xf32>
    %813 = vector.shape_cast %812 : vector<1x14x192xf32> to vector<14x192xf32>
    %cst_324 = arith.constant dense<0.000000e+00> : vector<8x192xf32>
    %814 = tpu.matmul %811, %813, %cst_324 {dimension_numbers = #tpu.dot_dimension_numbers<[1], [0], [0], [1], [0, 0, 1, 1], [], []>} : vector<8x14xf32>, vector<14x192xf32>, vector<8x192xf32> -> vector<8x192xf32>
    %815 = arith.addf %800, %814 : vector<8x192xf32>
    %c80_325 = arith.constant 80 : index
    %c0_326 = arith.constant 0 : index
    %816 = vector.load %arg21[%c80_325, %c0_326] : memref<240x14xf32, #tpu.memory_space<vmem>>, vector<8x14xf32>
    %c10 = arith.constant 10 : index
    %c0_327 = arith.constant 0 : index
    %c0_328 = arith.constant 0 : index
    %817 = vector.load %arg10[%c10, %c0_327, %c0_328] : memref<30x14x192xf32, #tpu.memory_space<vmem>>, vector<1x14x192xf32>
    %818 = vector.shape_cast %817 : vector<1x14x192xf32> to vector<14x192xf32>
    %cst_329 = arith.constant dense<0.000000e+00> : vector<8x192xf32>
    %819 = tpu.matmul %816, %818, %cst_329 {dimension_numbers = #tpu.dot_dimension_numbers<[1], [0], [0], [1], [0, 0, 1, 1], [], []>} : vector<8x14xf32>, vector<14x192xf32>, vector<8x192xf32> -> vector<8x192xf32>
    %820 = arith.addf %805, %819 : vector<8x192xf32>
    %c88_330 = arith.constant 88 : index
    %c0_331 = arith.constant 0 : index
    %821 = vector.load %arg21[%c88_330, %c0_331] : memref<240x14xf32, #tpu.memory_space<vmem>>, vector<8x14xf32>
    %c11 = arith.constant 11 : index
    %c0_332 = arith.constant 0 : index
    %c0_333 = arith.constant 0 : index
    %822 = vector.load %arg10[%c11, %c0_332, %c0_333] : memref<30x14x192xf32, #tpu.memory_space<vmem>>, vector<1x14x192xf32>
    %823 = vector.shape_cast %822 : vector<1x14x192xf32> to vector<14x192xf32>
    %cst_334 = arith.constant dense<0.000000e+00> : vector<8x192xf32>
    %824 = tpu.matmul %821, %823, %cst_334 {dimension_numbers = #tpu.dot_dimension_numbers<[1], [0], [0], [1], [0, 0, 1, 1], [], []>} : vector<8x14xf32>, vector<14x192xf32>, vector<8x192xf32> -> vector<8x192xf32>
    %825 = arith.addf %810, %824 : vector<8x192xf32>
    %c96_335 = arith.constant 96 : index
    %c0_336 = arith.constant 0 : index
    %826 = vector.load %arg21[%c96_335, %c0_336] : memref<240x14xf32, #tpu.memory_space<vmem>>, vector<8x14xf32>
    %c12 = arith.constant 12 : index
    %c0_337 = arith.constant 0 : index
    %c0_338 = arith.constant 0 : index
    %827 = vector.load %arg10[%c12, %c0_337, %c0_338] : memref<30x14x192xf32, #tpu.memory_space<vmem>>, vector<1x14x192xf32>
    %828 = vector.shape_cast %827 : vector<1x14x192xf32> to vector<14x192xf32>
    %cst_339 = arith.constant dense<0.000000e+00> : vector<8x192xf32>
    %829 = tpu.matmul %826, %828, %cst_339 {dimension_numbers = #tpu.dot_dimension_numbers<[1], [0], [0], [1], [0, 0, 1, 1], [], []>} : vector<8x14xf32>, vector<14x192xf32>, vector<8x192xf32> -> vector<8x192xf32>
    %830 = arith.addf %815, %829 : vector<8x192xf32>
    %c104_340 = arith.constant 104 : index
    %c0_341 = arith.constant 0 : index
    %831 = vector.load %arg21[%c104_340, %c0_341] : memref<240x14xf32, #tpu.memory_space<vmem>>, vector<8x14xf32>
    %c13 = arith.constant 13 : index
    %c0_342 = arith.constant 0 : index
    %c0_343 = arith.constant 0 : index
    %832 = vector.load %arg10[%c13, %c0_342, %c0_343] : memref<30x14x192xf32, #tpu.memory_space<vmem>>, vector<1x14x192xf32>
    %833 = vector.shape_cast %832 : vector<1x14x192xf32> to vector<14x192xf32>
    %cst_344 = arith.constant dense<0.000000e+00> : vector<8x192xf32>
    %834 = tpu.matmul %831, %833, %cst_344 {dimension_numbers = #tpu.dot_dimension_numbers<[1], [0], [0], [1], [0, 0, 1, 1], [], []>} : vector<8x14xf32>, vector<14x192xf32>, vector<8x192xf32> -> vector<8x192xf32>
    %835 = arith.addf %820, %834 : vector<8x192xf32>
    %c112_345 = arith.constant 112 : index
    %c0_346 = arith.constant 0 : index
    %836 = vector.load %arg21[%c112_345, %c0_346] : memref<240x14xf32, #tpu.memory_space<vmem>>, vector<8x14xf32>
    %c14 = arith.constant 14 : index
    %c0_347 = arith.constant 0 : index
    %c0_348 = arith.constant 0 : index
    %837 = vector.load %arg10[%c14, %c0_347, %c0_348] : memref<30x14x192xf32, #tpu.memory_space<vmem>>, vector<1x14x192xf32>
    %838 = vector.shape_cast %837 : vector<1x14x192xf32> to vector<14x192xf32>
    %cst_349 = arith.constant dense<0.000000e+00> : vector<8x192xf32>
    %839 = tpu.matmul %836, %838, %cst_349 {dimension_numbers = #tpu.dot_dimension_numbers<[1], [0], [0], [1], [0, 0, 1, 1], [], []>} : vector<8x14xf32>, vector<14x192xf32>, vector<8x192xf32> -> vector<8x192xf32>
    %840 = arith.addf %825, %839 : vector<8x192xf32>
    %c120_350 = arith.constant 120 : index
    %c0_351 = arith.constant 0 : index
    %841 = vector.load %arg21[%c120_350, %c0_351] : memref<240x14xf32, #tpu.memory_space<vmem>>, vector<8x14xf32>
    %c15 = arith.constant 15 : index
    %c0_352 = arith.constant 0 : index
    %c0_353 = arith.constant 0 : index
    %842 = vector.load %arg10[%c15, %c0_352, %c0_353] : memref<30x14x192xf32, #tpu.memory_space<vmem>>, vector<1x14x192xf32>
    %843 = vector.shape_cast %842 : vector<1x14x192xf32> to vector<14x192xf32>
    %cst_354 = arith.constant dense<0.000000e+00> : vector<8x192xf32>
    %844 = tpu.matmul %841, %843, %cst_354 {dimension_numbers = #tpu.dot_dimension_numbers<[1], [0], [0], [1], [0, 0, 1, 1], [], []>} : vector<8x14xf32>, vector<14x192xf32>, vector<8x192xf32> -> vector<8x192xf32>
    %845 = arith.addf %830, %844 : vector<8x192xf32>
    %c128_355 = arith.constant 128 : index
    %c0_356 = arith.constant 0 : index
    %846 = vector.load %arg21[%c128_355, %c0_356] : memref<240x14xf32, #tpu.memory_space<vmem>>, vector<8x14xf32>
    %c16_357 = arith.constant 16 : index
    %c0_358 = arith.constant 0 : index
    %c0_359 = arith.constant 0 : index
    %847 = vector.load %arg10[%c16_357, %c0_358, %c0_359] : memref<30x14x192xf32, #tpu.memory_space<vmem>>, vector<1x14x192xf32>
    %848 = vector.shape_cast %847 : vector<1x14x192xf32> to vector<14x192xf32>
    %cst_360 = arith.constant dense<0.000000e+00> : vector<8x192xf32>
    %849 = tpu.matmul %846, %848, %cst_360 {dimension_numbers = #tpu.dot_dimension_numbers<[1], [0], [0], [1], [0, 0, 1, 1], [], []>} : vector<8x14xf32>, vector<14x192xf32>, vector<8x192xf32> -> vector<8x192xf32>
    %850 = arith.addf %835, %849 : vector<8x192xf32>
    %c136_361 = arith.constant 136 : index
    %c0_362 = arith.constant 0 : index
    %851 = vector.load %arg21[%c136_361, %c0_362] : memref<240x14xf32, #tpu.memory_space<vmem>>, vector<8x14xf32>
    %c17 = arith.constant 17 : index
    %c0_363 = arith.constant 0 : index
    %c0_364 = arith.constant 0 : index
    %852 = vector.load %arg10[%c17, %c0_363, %c0_364] : memref<30x14x192xf32, #tpu.memory_space<vmem>>, vector<1x14x192xf32>
    %853 = vector.shape_cast %852 : vector<1x14x192xf32> to vector<14x192xf32>
    %cst_365 = arith.constant dense<0.000000e+00> : vector<8x192xf32>
    %854 = tpu.matmul %851, %853, %cst_365 {dimension_numbers = #tpu.dot_dimension_numbers<[1], [0], [0], [1], [0, 0, 1, 1], [], []>} : vector<8x14xf32>, vector<14x192xf32>, vector<8x192xf32> -> vector<8x192xf32>
    %855 = arith.addf %840, %854 : vector<8x192xf32>
    %c144_366 = arith.constant 144 : index
    %c0_367 = arith.constant 0 : index
    %856 = vector.load %arg21[%c144_366, %c0_367] : memref<240x14xf32, #tpu.memory_space<vmem>>, vector<8x14xf32>
    %c18 = arith.constant 18 : index
    %c0_368 = arith.constant 0 : index
    %c0_369 = arith.constant 0 : index
    %857 = vector.load %arg10[%c18, %c0_368, %c0_369] : memref<30x14x192xf32, #tpu.memory_space<vmem>>, vector<1x14x192xf32>
    %858 = vector.shape_cast %857 : vector<1x14x192xf32> to vector<14x192xf32>
    %cst_370 = arith.constant dense<0.000000e+00> : vector<8x192xf32>
    %859 = tpu.matmul %856, %858, %cst_370 {dimension_numbers = #tpu.dot_dimension_numbers<[1], [0], [0], [1], [0, 0, 1, 1], [], []>} : vector<8x14xf32>, vector<14x192xf32>, vector<8x192xf32> -> vector<8x192xf32>
    %860 = arith.addf %845, %859 : vector<8x192xf32>
    %c152_371 = arith.constant 152 : index
    %c0_372 = arith.constant 0 : index
    %861 = vector.load %arg21[%c152_371, %c0_372] : memref<240x14xf32, #tpu.memory_space<vmem>>, vector<8x14xf32>
    %c19 = arith.constant 19 : index
    %c0_373 = arith.constant 0 : index
    %c0_374 = arith.constant 0 : index
    %862 = vector.load %arg10[%c19, %c0_373, %c0_374] : memref<30x14x192xf32, #tpu.memory_space<vmem>>, vector<1x14x192xf32>
    %863 = vector.shape_cast %862 : vector<1x14x192xf32> to vector<14x192xf32>
    %cst_375 = arith.constant dense<0.000000e+00> : vector<8x192xf32>
    %864 = tpu.matmul %861, %863, %cst_375 {dimension_numbers = #tpu.dot_dimension_numbers<[1], [0], [0], [1], [0, 0, 1, 1], [], []>} : vector<8x14xf32>, vector<14x192xf32>, vector<8x192xf32> -> vector<8x192xf32>
    %865 = arith.addf %850, %864 : vector<8x192xf32>
    %c160_376 = arith.constant 160 : index
    %c0_377 = arith.constant 0 : index
    %866 = vector.load %arg21[%c160_376, %c0_377] : memref<240x14xf32, #tpu.memory_space<vmem>>, vector<8x14xf32>
    %c20 = arith.constant 20 : index
    %c0_378 = arith.constant 0 : index
    %c0_379 = arith.constant 0 : index
    %867 = vector.load %arg10[%c20, %c0_378, %c0_379] : memref<30x14x192xf32, #tpu.memory_space<vmem>>, vector<1x14x192xf32>
    %868 = vector.shape_cast %867 : vector<1x14x192xf32> to vector<14x192xf32>
    %cst_380 = arith.constant dense<0.000000e+00> : vector<8x192xf32>
    %869 = tpu.matmul %866, %868, %cst_380 {dimension_numbers = #tpu.dot_dimension_numbers<[1], [0], [0], [1], [0, 0, 1, 1], [], []>} : vector<8x14xf32>, vector<14x192xf32>, vector<8x192xf32> -> vector<8x192xf32>
    %870 = arith.addf %855, %869 : vector<8x192xf32>
    %c168_381 = arith.constant 168 : index
    %c0_382 = arith.constant 0 : index
    %871 = vector.load %arg21[%c168_381, %c0_382] : memref<240x14xf32, #tpu.memory_space<vmem>>, vector<8x14xf32>
    %c21 = arith.constant 21 : index
    %c0_383 = arith.constant 0 : index
    %c0_384 = arith.constant 0 : index
    %872 = vector.load %arg10[%c21, %c0_383, %c0_384] : memref<30x14x192xf32, #tpu.memory_space<vmem>>, vector<1x14x192xf32>
    %873 = vector.shape_cast %872 : vector<1x14x192xf32> to vector<14x192xf32>
    %cst_385 = arith.constant dense<0.000000e+00> : vector<8x192xf32>
    %874 = tpu.matmul %871, %873, %cst_385 {dimension_numbers = #tpu.dot_dimension_numbers<[1], [0], [0], [1], [0, 0, 1, 1], [], []>} : vector<8x14xf32>, vector<14x192xf32>, vector<8x192xf32> -> vector<8x192xf32>
    %875 = arith.addf %860, %874 : vector<8x192xf32>
    %c176_386 = arith.constant 176 : index
    %c0_387 = arith.constant 0 : index
    %876 = vector.load %arg21[%c176_386, %c0_387] : memref<240x14xf32, #tpu.memory_space<vmem>>, vector<8x14xf32>
    %c22 = arith.constant 22 : index
    %c0_388 = arith.constant 0 : index
    %c0_389 = arith.constant 0 : index
    %877 = vector.load %arg10[%c22, %c0_388, %c0_389] : memref<30x14x192xf32, #tpu.memory_space<vmem>>, vector<1x14x192xf32>
    %878 = vector.shape_cast %877 : vector<1x14x192xf32> to vector<14x192xf32>
    %cst_390 = arith.constant dense<0.000000e+00> : vector<8x192xf32>
    %879 = tpu.matmul %876, %878, %cst_390 {dimension_numbers = #tpu.dot_dimension_numbers<[1], [0], [0], [1], [0, 0, 1, 1], [], []>} : vector<8x14xf32>, vector<14x192xf32>, vector<8x192xf32> -> vector<8x192xf32>
    %880 = arith.addf %865, %879 : vector<8x192xf32>
    %c184_391 = arith.constant 184 : index
    %c0_392 = arith.constant 0 : index
    %881 = vector.load %arg21[%c184_391, %c0_392] : memref<240x14xf32, #tpu.memory_space<vmem>>, vector<8x14xf32>
    %c23 = arith.constant 23 : index
    %c0_393 = arith.constant 0 : index
    %c0_394 = arith.constant 0 : index
    %882 = vector.load %arg10[%c23, %c0_393, %c0_394] : memref<30x14x192xf32, #tpu.memory_space<vmem>>, vector<1x14x192xf32>
    %883 = vector.shape_cast %882 : vector<1x14x192xf32> to vector<14x192xf32>
    %cst_395 = arith.constant dense<0.000000e+00> : vector<8x192xf32>
    %884 = tpu.matmul %881, %883, %cst_395 {dimension_numbers = #tpu.dot_dimension_numbers<[1], [0], [0], [1], [0, 0, 1, 1], [], []>} : vector<8x14xf32>, vector<14x192xf32>, vector<8x192xf32> -> vector<8x192xf32>
    %885 = arith.addf %870, %884 : vector<8x192xf32>
    %c192_396 = arith.constant 192 : index
    %c0_397 = arith.constant 0 : index
    %886 = vector.load %arg21[%c192_396, %c0_397] : memref<240x14xf32, #tpu.memory_space<vmem>>, vector<8x14xf32>
    %c24_398 = arith.constant 24 : index
    %c0_399 = arith.constant 0 : index
    %c0_400 = arith.constant 0 : index
    %887 = vector.load %arg10[%c24_398, %c0_399, %c0_400] : memref<30x14x192xf32, #tpu.memory_space<vmem>>, vector<1x14x192xf32>
    %888 = vector.shape_cast %887 : vector<1x14x192xf32> to vector<14x192xf32>
    %cst_401 = arith.constant dense<0.000000e+00> : vector<8x192xf32>
    %889 = tpu.matmul %886, %888, %cst_401 {dimension_numbers = #tpu.dot_dimension_numbers<[1], [0], [0], [1], [0, 0, 1, 1], [], []>} : vector<8x14xf32>, vector<14x192xf32>, vector<8x192xf32> -> vector<8x192xf32>
    %890 = arith.addf %875, %889 : vector<8x192xf32>
    %c200_402 = arith.constant 200 : index
    %c0_403 = arith.constant 0 : index
    %891 = vector.load %arg21[%c200_402, %c0_403] : memref<240x14xf32, #tpu.memory_space<vmem>>, vector<8x14xf32>
    %c25 = arith.constant 25 : index
    %c0_404 = arith.constant 0 : index
    %c0_405 = arith.constant 0 : index
    %892 = vector.load %arg10[%c25, %c0_404, %c0_405] : memref<30x14x192xf32, #tpu.memory_space<vmem>>, vector<1x14x192xf32>
    %893 = vector.shape_cast %892 : vector<1x14x192xf32> to vector<14x192xf32>
    %cst_406 = arith.constant dense<0.000000e+00> : vector<8x192xf32>
    %894 = tpu.matmul %891, %893, %cst_406 {dimension_numbers = #tpu.dot_dimension_numbers<[1], [0], [0], [1], [0, 0, 1, 1], [], []>} : vector<8x14xf32>, vector<14x192xf32>, vector<8x192xf32> -> vector<8x192xf32>
    %895 = arith.addf %880, %894 : vector<8x192xf32>
    %c208_407 = arith.constant 208 : index
    %c0_408 = arith.constant 0 : index
    %896 = vector.load %arg21[%c208_407, %c0_408] : memref<240x14xf32, #tpu.memory_space<vmem>>, vector<8x14xf32>
    %c26 = arith.constant 26 : index
    %c0_409 = arith.constant 0 : index
    %c0_410 = arith.constant 0 : index
    %897 = vector.load %arg10[%c26, %c0_409, %c0_410] : memref<30x14x192xf32, #tpu.memory_space<vmem>>, vector<1x14x192xf32>
    %898 = vector.shape_cast %897 : vector<1x14x192xf32> to vector<14x192xf32>
    %cst_411 = arith.constant dense<0.000000e+00> : vector<8x192xf32>
    %899 = tpu.matmul %896, %898, %cst_411 {dimension_numbers = #tpu.dot_dimension_numbers<[1], [0], [0], [1], [0, 0, 1, 1], [], []>} : vector<8x14xf32>, vector<14x192xf32>, vector<8x192xf32> -> vector<8x192xf32>
    %900 = arith.addf %885, %899 : vector<8x192xf32>
    %c216_412 = arith.constant 216 : index
    %c0_413 = arith.constant 0 : index
    %901 = vector.load %arg21[%c216_412, %c0_413] : memref<240x14xf32, #tpu.memory_space<vmem>>, vector<8x14xf32>
    %c27 = arith.constant 27 : index
    %c0_414 = arith.constant 0 : index
    %c0_415 = arith.constant 0 : index
    %902 = vector.load %arg10[%c27, %c0_414, %c0_415] : memref<30x14x192xf32, #tpu.memory_space<vmem>>, vector<1x14x192xf32>
    %903 = vector.shape_cast %902 : vector<1x14x192xf32> to vector<14x192xf32>
    %cst_416 = arith.constant dense<0.000000e+00> : vector<8x192xf32>
    %904 = tpu.matmul %901, %903, %cst_416 {dimension_numbers = #tpu.dot_dimension_numbers<[1], [0], [0], [1], [0, 0, 1, 1], [], []>} : vector<8x14xf32>, vector<14x192xf32>, vector<8x192xf32> -> vector<8x192xf32>
    %905 = arith.addf %890, %904 : vector<8x192xf32>
    %c224_417 = arith.constant 224 : index
    %c0_418 = arith.constant 0 : index
    %906 = vector.load %arg21[%c224_417, %c0_418] : memref<240x14xf32, #tpu.memory_space<vmem>>, vector<8x14xf32>
    %c28 = arith.constant 28 : index
    %c0_419 = arith.constant 0 : index
    %c0_420 = arith.constant 0 : index
    %907 = vector.load %arg10[%c28, %c0_419, %c0_420] : memref<30x14x192xf32, #tpu.memory_space<vmem>>, vector<1x14x192xf32>
    %908 = vector.shape_cast %907 : vector<1x14x192xf32> to vector<14x192xf32>
    %cst_421 = arith.constant dense<0.000000e+00> : vector<8x192xf32>
    %909 = tpu.matmul %906, %908, %cst_421 {dimension_numbers = #tpu.dot_dimension_numbers<[1], [0], [0], [1], [0, 0, 1, 1], [], []>} : vector<8x14xf32>, vector<14x192xf32>, vector<8x192xf32> -> vector<8x192xf32>
    %910 = arith.addf %895, %909 : vector<8x192xf32>
    %c232_422 = arith.constant 232 : index
    %c0_423 = arith.constant 0 : index
    %911 = vector.load %arg21[%c232_422, %c0_423] : memref<240x14xf32, #tpu.memory_space<vmem>>, vector<8x14xf32>
    %c29 = arith.constant 29 : index
    %c0_424 = arith.constant 0 : index
    %c0_425 = arith.constant 0 : index
    %912 = vector.load %arg10[%c29, %c0_424, %c0_425] : memref<30x14x192xf32, #tpu.memory_space<vmem>>, vector<1x14x192xf32>
    %913 = vector.shape_cast %912 : vector<1x14x192xf32> to vector<14x192xf32>
    %cst_426 = arith.constant dense<0.000000e+00> : vector<8x192xf32>
    %914 = tpu.matmul %911, %913, %cst_426 {dimension_numbers = #tpu.dot_dimension_numbers<[1], [0], [0], [1], [0, 0, 1, 1], [], []>} : vector<8x14xf32>, vector<14x192xf32>, vector<8x192xf32> -> vector<8x192xf32>
    %915 = arith.addf %900, %914 : vector<8x192xf32>
    %916 = arith.addf %905, %910 : vector<8x192xf32>
    %917 = arith.addf %916, %915 : vector<8x192xf32>
    %c0_427 = arith.constant 0 : index
    %c0_428 = arith.constant 0 : index
    %918 = vector.load %arg11[%c0_427, %c0_428] : memref<1x192xf32, #tpu.memory_space<vmem>>, vector<1x192xf32>
    %919 = vector.broadcast %918 : vector<1x192xf32> to vector<8x192xf32>
    %920 = arith.addf %917, %919 : vector<8x192xf32>
    %921 = vector.extract_strided_slice %920 {offsets = [0, 0], sizes = [8, 128], strides = [1, 1]} : vector<8x192xf32> to vector<8x128xf32>
    %cst_429 = arith.constant 0.000000e+00 : f32
    %922 = vector.broadcast %cst_429 : f32 to vector<8x128xf32>
    %923 = arith.maximumf %921, %922 : vector<8x128xf32>
    %924 = vector.extract_strided_slice %920 {offsets = [0, 128], sizes = [8, 64], strides = [1, 1]} : vector<8x192xf32> to vector<8x64xf32>
    %c0_430 = arith.constant 0 : index
    %c0_431 = arith.constant 0 : index
    %925 = vector.load %arg12[%c0_430, %c0_431] : memref<128x64xf32, #tpu.memory_space<vmem>>, vector<128x64xf32>
    %cst_432 = arith.constant dense<0.000000e+00> : vector<8x64xf32>
    %926 = tpu.matmul %923, %925, %cst_432 {dimension_numbers = #tpu.dot_dimension_numbers<[1], [0], [0], [1], [0, 0, 1, 1], [], []>} : vector<8x128xf32>, vector<128x64xf32>, vector<8x64xf32> -> vector<8x64xf32>
    %c0_433 = arith.constant 0 : index
    %c0_434 = arith.constant 0 : index
    %927 = vector.load %arg13[%c0_433, %c0_434] : memref<1x64xf32, #tpu.memory_space<vmem>>, vector<1x64xf32>
    %928 = vector.broadcast %927 : vector<1x64xf32> to vector<8x64xf32>
    %929 = arith.addf %926, %928 : vector<8x64xf32>
    %930 = arith.addf %929, %924 : vector<8x64xf32>
    %cst_435 = arith.constant dense<0.000000e+00> : vector<8xf32>
    %931 = vector.multi_reduction <add>, %930, %cst_435 [1] : vector<8x64xf32> to vector<8xf32>
    %932 = vector.shape_cast %931 : vector<8xf32> to vector<8x1xf32>
    %cst_436 = arith.constant 6.400000e+01 : f32
    %933 = vector.broadcast %cst_436 : f32 to vector<8x1xf32>
    %934 = arith.divf %932, %933 : vector<8x1xf32>
    %935 = vector.broadcast %934 : vector<8x1xf32> to vector<8x64xf32>
    %936 = arith.subf %930, %935 : vector<8x64xf32>
    %937 = arith.mulf %936, %936 : vector<8x64xf32>
    %cst_437 = arith.constant dense<0.000000e+00> : vector<8xf32>
    %938 = vector.multi_reduction <add>, %937, %cst_437 [1] : vector<8x64xf32> to vector<8xf32>
    %939 = vector.shape_cast %938 : vector<8xf32> to vector<8x1xf32>
    %cst_438 = arith.constant 6.400000e+01 : f32
    %940 = vector.broadcast %cst_438 : f32 to vector<8x1xf32>
    %941 = arith.divf %939, %940 : vector<8x1xf32>
    %942 = vector.broadcast %934 : vector<8x1xf32> to vector<8x64xf32>
    %943 = arith.subf %930, %942 : vector<8x64xf32>
    %cst_439 = arith.constant 9.99999974E-6 : f32
    %944 = vector.broadcast %cst_439 : f32 to vector<8x1xf32>
    %945 = arith.addf %941, %944 : vector<8x1xf32>
    %946 = math.rsqrt %945 : vector<8x1xf32>
    %947 = vector.broadcast %946 : vector<8x1xf32> to vector<8x64xf32>
    %948 = arith.mulf %943, %947 : vector<8x64xf32>
    %c0_440 = arith.constant 0 : index
    %c0_441 = arith.constant 0 : index
    %949 = vector.load %arg14[%c0_440, %c0_441] : memref<1x64xf32, #tpu.memory_space<vmem>>, vector<1x64xf32>
    %950 = vector.broadcast %949 : vector<1x64xf32> to vector<8x64xf32>
    %951 = arith.mulf %948, %950 : vector<8x64xf32>
    %c0_442 = arith.constant 0 : index
    %c0_443 = arith.constant 0 : index
    %952 = vector.load %arg15[%c0_442, %c0_443] : memref<1x64xf32, #tpu.memory_space<vmem>>, vector<1x64xf32>
    %953 = vector.broadcast %952 : vector<1x64xf32> to vector<8x64xf32>
    %954 = arith.addf %951, %953 : vector<8x64xf32>
    %c0_444 = arith.constant 0 : index
    %c0_445 = arith.constant 0 : index
    %955 = vector.load %arg16[%c0_444, %c0_445] : memref<64x1xf32, #tpu.memory_space<vmem>>, vector<64x1xf32>
    %cst_446 = arith.constant dense<0.000000e+00> : vector<8x1xf32>
    %956 = tpu.matmul %954, %955, %cst_446 {dimension_numbers = #tpu.dot_dimension_numbers<[1], [0], [0], [1], [0, 0, 1, 1], [], []>} : vector<8x64xf32>, vector<64x1xf32>, vector<8x1xf32> -> vector<8x1xf32>
    %c0_447 = arith.constant 0 : index
    %c0_448 = arith.constant 0 : index
    %957 = vector.load %arg17[%c0_447, %c0_448] : memref<1x1xf32, #tpu.memory_space<vmem>>, vector<1x1xf32>
    %958 = vector.broadcast %957 : vector<1x1xf32> to vector<8x1xf32>
    %959 = arith.addf %956, %958 : vector<8x1xf32>
    %c0_449 = arith.constant 0 : index
    %c0_450 = arith.constant 0 : index
    %960 = vector.load %arg18[%c0_449, %c0_450] : memref<8x1xf32, #tpu.memory_space<vmem>>, vector<8x1xf32>
    tpu.vector_store %arg18[%c0_449, %c0_450], %959 {strides = array<i32>} : memref<8x1xf32, #tpu.memory_space<vmem>>, vector<8x1xf32>,
    return
  }
  func.func @transform_0(%arg0: i32) -> (i32, i32, i32) {
    %c0_i32 = arith.constant 0 : i32
    %c0_i32_0 = arith.constant 0 : i32
    %c0_i32_1 = arith.constant 0 : i32
    return %arg0, %c0_i32, %c0_i32_0 : i32, i32, i32
  }
  func.func @transform_1(%arg0: i32) -> (i32, i32, i32) {
    %c0_i32 = arith.constant 0 : i32
    %c0_i32_0 = arith.constant 0 : i32
    %c0_i32_1 = arith.constant 0 : i32
    return %arg0, %c0_i32, %c0_i32_0 : i32, i32, i32
  }
  func.func @transform_2(%arg0: i32) -> (i32, i32) {
    %c0_i32 = arith.constant 0 : i32
    %c0_i32_0 = arith.constant 0 : i32
    %c0_i32_1 = arith.constant 0 : i32
    return %c0_i32, %c0_i32_0 : i32, i32
  }
  func.func @transform_3(%arg0: i32) -> (i32, i32) {
    %c0_i32 = arith.constant 0 : i32
    %c0_i32_0 = arith.constant 0 : i32
    %c0_i32_1 = arith.constant 0 : i32
    return %c0_i32, %c0_i32_0 : i32, i32
  }
  func.func @transform_4(%arg0: i32) -> (i32, i32) {
    %c0_i32 = arith.constant 0 : i32
    %c0_i32_0 = arith.constant 0 : i32
    %c0_i32_1 = arith.constant 0 : i32
    return %c0_i32, %c0_i32_0 : i32, i32
  }
  func.func @transform_5(%arg0: i32) -> (i32, i32) {
    %c0_i32 = arith.constant 0 : i32
    %c0_i32_0 = arith.constant 0 : i32
    %c0_i32_1 = arith.constant 0 : i32
    return %c0_i32, %c0_i32_0 : i32, i32
  }
  func.func @transform_6(%arg0: i32) -> (i32, i32) {
    %c0_i32 = arith.constant 0 : i32
    %c0_i32_0 = arith.constant 0 : i32
    %c0_i32_1 = arith.constant 0 : i32
    return %c0_i32, %c0_i32_0 : i32, i32
  }
  func.func @transform_7(%arg0: i32) -> (i32, i32) {
    %c0_i32 = arith.constant 0 : i32
    %c0_i32_0 = arith.constant 0 : i32
    %c0_i32_1 = arith.constant 0 : i32
    return %c0_i32, %c0_i32_0 : i32, i32
  }
  func.func @transform_8(%arg0: i32) -> (i32, i32) {
    %c0_i32 = arith.constant 0 : i32
    %c0_i32_0 = arith.constant 0 : i32
    %c0_i32_1 = arith.constant 0 : i32
    return %c0_i32, %c0_i32_0 : i32, i32
  }
  func.func @transform_9(%arg0: i32) -> (i32, i32, i32) {
    %c0_i32 = arith.constant 0 : i32
    %c0_i32_0 = arith.constant 0 : i32
    %c0_i32_1 = arith.constant 0 : i32
    %c0_i32_2 = arith.constant 0 : i32
    return %c0_i32, %c0_i32_0, %c0_i32_1 : i32, i32, i32
  }
  func.func @transform_10(%arg0: i32) -> (i32, i32) {
    %c0_i32 = arith.constant 0 : i32
    %c0_i32_0 = arith.constant 0 : i32
    %c0_i32_1 = arith.constant 0 : i32
    return %c0_i32, %c0_i32_0 : i32, i32
  }
  func.func @transform_11(%arg0: i32) -> (i32, i32) {
    %c0_i32 = arith.constant 0 : i32
    %c0_i32_0 = arith.constant 0 : i32
    %c0_i32_1 = arith.constant 0 : i32
    return %c0_i32, %c0_i32_0 : i32, i32
  }
  func.func @transform_12(%arg0: i32) -> (i32, i32) {
    %c0_i32 = arith.constant 0 : i32
    %c0_i32_0 = arith.constant 0 : i32
    %c0_i32_1 = arith.constant 0 : i32
    return %c0_i32, %c0_i32_0 : i32, i32
  }
  func.func @transform_13(%arg0: i32) -> (i32, i32) {
    %c0_i32 = arith.constant 0 : i32
    %c0_i32_0 = arith.constant 0 : i32
    %c0_i32_1 = arith.constant 0 : i32
    return %c0_i32, %c0_i32_0 : i32, i32
  }
  func.func @transform_14(%arg0: i32) -> (i32, i32) {
    %c0_i32 = arith.constant 0 : i32
    %c0_i32_0 = arith.constant 0 : i32
    %c0_i32_1 = arith.constant 0 : i32
    return %c0_i32, %c0_i32_0 : i32, i32
  }
  func.func @transform_15(%arg0: i32) -> (i32, i32) {
    %c0_i32 = arith.constant 0 : i32
    %c0_i32_0 = arith.constant 0 : i32
    %c0_i32_1 = arith.constant 0 : i32
    return %c0_i32, %c0_i32_0 : i32, i32
  }
  func.func @transform_16(%arg0: i32) -> (i32, i32) {
    %c0_i32 = arith.constant 0 : i32
    %c0_i32_0 = arith.constant 0 : i32
    %c0_i32_1 = arith.constant 0 : i32
    return %c0_i32, %c0_i32_0 : i32, i32
  }
  func.func @transform_17(%arg0: i32) -> (i32, i32) {
    %c0_i32 = arith.constant 0 : i32
    %c0_i32_0 = arith.constant 0 : i32
    return %arg0, %c0_i32 : i32, i32
  }
}

</mosaic_0001>

<llo_original>
// kernel: encoder_forward.1
$region0: #{encoder_forward.1}
  #allocation0 [shape = 'u32[]', space=smem, size = 0x4, offset = 0x4, fixed_abs, tag = 'smem constant byte address 0x4 - core index']
  #allocation1 [shape = 'u32[144,128]{1,0:T(1,128)}', space=vmem, size = 0x12000, scoped, tag = 'internal scratch']
  #allocation2 [shape = 'f32[240,192]{1,0:T(8,128)}', space=vmem, size = 0x3c000, scoped, tag = 'scratch operand']
  #allocation3 [shape = 'f32[240,64]{1,0:T(8,128)}', space=vmem, size = 0x1e000, scoped, tag = 'scratch operand']
  #allocation4 [shape = 'f32[240,14]{1,0:T(8,128)}', space=vmem, size = 0x1e000, scoped, tag = 'scratch operand']
  #allocation5 [shape = 'f32[1,1]{1,0:T(1,128)S(1)}', space=vmem, size = 0x200, scoped, tag = 'scoped memory for encoder_forward.1']
  %s0 = inlined_call_operand.vmem [shape: f32[1,240,14], index: 0, kind: input, shape index: {}]
  %s1 = inlined_call_operand.vmem [shape: f32[1,240,14], index: 1, kind: input, shape index: {}]
  %s2 = inlined_call_operand.vmem [shape: f32[14,192], index: 2, kind: input, shape index: {}]
  %s3 = inlined_call_operand.vmem [shape: f32[1,192], index: 3, kind: input, shape index: {}]
  %s4 = inlined_call_operand.vmem [shape: f32[64,128], index: 4, kind: input, shape index: {}]
  %s5 = inlined_call_operand.vmem [shape: f32[64,64], index: 5, kind: input, shape index: {}]
  %s6 = inlined_call_operand.vmem [shape: f32[1,64], index: 6, kind: input, shape index: {}]
  %s7 = inlined_call_operand.vmem [shape: f32[64,128], index: 7, kind: input, shape index: {}]
  %s8 = inlined_call_operand.vmem [shape: f32[1,128], index: 8, kind: input, shape index: {}]
  %s9 = inlined_call_operand.vmem [shape: f32[30,14,192], index: 9, kind: input, shape index: {}]
  %s10 = inlined_call_operand.vmem [shape: f32[1,192], index: 10, kind: input, shape index: {}]
  %s11 = inlined_call_operand.vmem [shape: f32[128,64], index: 11, kind: input, shape index: {}]
  %s12 = inlined_call_operand.vmem [shape: f32[1,64], index: 12, kind: input, shape index: {}]
  %s13 = inlined_call_operand.vmem [shape: f32[1,64], index: 13, kind: input, shape index: {}]
  %s14 = inlined_call_operand.vmem [shape: f32[1,64], index: 14, kind: input, shape index: {}]
  %s15 = inlined_call_operand.vmem [shape: f32[64,1], index: 15, kind: input, shape index: {}]
  %s16 = inlined_call_operand.<no memory space> [shape: f32[1,1], index: 16, kind: input, shape index: {}]
  %s17 = inlined_call_operand.vmem [shape: f32[8,1], index: 17, kind: output, shape index: {}]
  %s18 = sld [smem:[#allocation0]]
  $region78: #{encoder_forward.1} parent=0
    _
  %s20 = ssub.s32 1, %s18
  %s21 = scalar_select 0, %s20, %s18
  %v22 = vstv %s16
  %23 = vst [vmem:[#allocation5] sm:$0x1] %v22
  // Predicated region
  $region2: #{encoder_forward.1} parent=0 // pred_check
    _
  $region3: #{encoder_forward.1} parent=0 // pred_check_branch
    %25 = sbr.rel (0) target = $region5
  $region4: #{encoder_forward.1} parent=0 // pred_region
    _
  $region5: #{encoder_forward.1} parent=0 // pred_fallthru
    _
  // Predicated region
  $region6: #{encoder_forward.1} parent=0 // pred_check
    _
  $region7: #{encoder_forward.1} parent=0 // pred_check_branch
    %27 = sbr.rel (0) target = $region9
  $region8: #{encoder_forward.1} parent=0 // pred_region
    _
  $region9: #{encoder_forward.1} parent=0 // pred_fallthru
    _
  // Predicated region
  $region10: #{encoder_forward.1} parent=0 // pred_check
    _
  $region11: #{encoder_forward.1} parent=0 // pred_check_branch
    %29 = sbr.rel (0) target = $region13
  $region12: #{encoder_forward.1} parent=0 // pred_region
    _
  $region13: #{encoder_forward.1} parent=0 // pred_fallthru
    _
  // Predicated region
  $region14: #{encoder_forward.1} parent=0 // pred_check
    _
  $region15: #{encoder_forward.1} parent=0 // pred_check_branch
    %31 = sbr.rel (0) target = $region17
  $region16: #{encoder_forward.1} parent=0 // pred_region
    _
  $region17: #{encoder_forward.1} parent=0 // pred_fallthru
    _
  // Predicated region
  $region18: #{encoder_forward.1} parent=0 // pred_check
    _
  $region19: #{encoder_forward.1} parent=0 // pred_check_branch
    %33 = sbr.rel (0) target = $region21
  $region20: #{encoder_forward.1} parent=0 // pred_region
    _
  $region21: #{encoder_forward.1} parent=0 // pred_fallthru
    _
  // Predicated region
  $region22: #{encoder_forward.1} parent=0 // pred_check
    _
  $region23: #{encoder_forward.1} parent=0 // pred_check_branch
    %35 = sbr.rel (0) target = $region25
  $region24: #{encoder_forward.1} parent=0 // pred_region
    _
  $region25: #{encoder_forward.1} parent=0 // pred_fallthru
    _
  // Predicated region
  $region26: #{encoder_forward.1} parent=0 // pred_check
    _
  $region27: #{encoder_forward.1} parent=0 // pred_check_branch
    %37 = sbr.rel (0) target = $region29
  $region28: #{encoder_forward.1} parent=0 // pred_region
    _
  $region29: #{encoder_forward.1} parent=0 // pred_fallthru
    _
  // Predicated region
  $region30: #{encoder_forward.1} parent=0 // pred_check
    _
  $region31: #{encoder_forward.1} parent=0 // pred_check_branch
    %39 = sbr.rel (0) target = $region33
  $region32: #{encoder_forward.1} parent=0 // pred_region
    _
  $region33: #{encoder_forward.1} parent=0 // pred_fallthru
    _
  // Predicated region
  $region34: #{encoder_forward.1} parent=0 // pred_check
    _
  $region35: #{encoder_forward.1} parent=0 // pred_check_branch
    %41 = sbr.rel (0) target = $region37
  $region36: #{encoder_forward.1} parent=0 // pred_region
    _
  $region37: #{encoder_forward.1} parent=0 // pred_fallthru
    _
  // Predicated region
  $region38: #{encoder_forward.1} parent=0 // pred_check
    _
  $region39: #{encoder_forward.1} parent=0 // pred_check_branch
    %43 = sbr.rel (0) target = $region41
  $region40: #{encoder_forward.1} parent=0 // pred_region
    _
  $region41: #{encoder_forward.1} parent=0 // pred_fallthru
    _
  // Predicated region
  $region42: #{encoder_forward.1} parent=0 // pred_check
    _
  $region43: #{encoder_forward.1} parent=0 // pred_check_branch
    %45 = sbr.rel (0) target = $region45
  $region44: #{encoder_forward.1} parent=0 // pred_region
    _
  $region45: #{encoder_forward.1} parent=0 // pred_fallthru
    _
  // Predicated region
  $region46: #{encoder_forward.1} parent=0 // pred_check
    _
  $region47: #{encoder_forward.1} parent=0 // pred_check_branch
    %47 = sbr.rel (0) target = $region49
  $region48: #{encoder_forward.1} parent=0 // pred_region
    _
  $region49: #{encoder_forward.1} parent=0 // pred_fallthru
    _
  // Predicated region
  $region50: #{encoder_forward.1} parent=0 // pred_check
    _
  $region51: #{encoder_forward.1} parent=0 // pred_check_branch
    %49 = sbr.rel (0) target = $region53
  $region52: #{encoder_forward.1} parent=0 // pred_region
    _
  $region53: #{encoder_forward.1} parent=0 // pred_fallthru
    _
  // Predicated region
  $region54: #{encoder_forward.1} parent=0 // pred_check
    _
  $region55: #{encoder_forward.1} parent=0 // pred_check_branch
    %51 = sbr.rel (0) target = $region57
  $region56: #{encoder_forward.1} parent=0 // pred_region
    _
  $region57: #{encoder_forward.1} parent=0 // pred_fallthru
    _
  // Predicated region
  $region58: #{encoder_forward.1} parent=0 // pred_check
    _
  $region59: #{encoder_forward.1} parent=0 // pred_check_branch
    %53 = sbr.rel (0) target = $region61
  $region60: #{encoder_forward.1} parent=0 // pred_region
    _
  $region61: #{encoder_forward.1} parent=0 // pred_fallthru
    _
  // Predicated region
  $region62: #{encoder_forward.1} parent=0 // pred_check
    _
  $region63: #{encoder_forward.1} parent=0 // pred_check_branch
    %55 = sbr.rel (0) target = $region65
  $region64: #{encoder_forward.1} parent=0 // pred_region
    _
  $region65: #{encoder_forward.1} parent=0 // pred_fallthru
    _
  // Predicated region
  $region66: #{encoder_forward.1} parent=0 // pred_check
    _
  $region67: #{encoder_forward.1} parent=0 // pred_check_branch
    %57 = sbr.rel (0) target = $region69
  $region68: #{encoder_forward.1} parent=0 // pred_region
    _
  $region69: #{encoder_forward.1} parent=0 // pred_fallthru
    _
  %v58 = vld [vmem:[%s0] sm:$0xff]
  %v59 = vld [vmem:[%s0 + $0x8] sm:$0xff]
  %v60 = vld [vmem:[%s0 + $0x10] sm:$0xff]
  %v61 = vld [vmem:[%s0 + $0x18] sm:$0xff]
  %v62 = vld [vmem:[%s0 + $0x20] sm:$0xff]
  %v63 = vld [vmem:[%s0 + $0x28] sm:$0xff]
  %v64 = vld [vmem:[%s0 + $0x30] sm:$0xff]
  %v65 = vld [vmem:[%s0 + $0x38] sm:$0xff]
  %v66 = vld [vmem:[%s0 + $0x40] sm:$0xff]
  %v67 = vld [vmem:[%s0 + $0x48] sm:$0xff]
  %v68 = vld [vmem:[%s0 + $0x50] sm:$0xff]
  %v69 = vld [vmem:[%s0 + $0x58] sm:$0xff]
  %v70 = vld [vmem:[%s0 + $0x60] sm:$0xff]
  %v71 = vld [vmem:[%s0 + $0x68] sm:$0xff]
  %v72 = vld [vmem:[%s0 + $0x70] sm:$0xff]
  %v73 = vld [vmem:[%s0 + $0x78] sm:$0xff]
  %v74 = vld [vmem:[%s0 + $0x80] sm:$0xff]
  %v75 = vld [vmem:[%s0 + $0x88] sm:$0xff]
  %v76 = vld [vmem:[%s0 + $0x90] sm:$0xff]
  %v77 = vld [vmem:[%s0 + $0x98] sm:$0xff]
  %v78 = vld [vmem:[%s0 + $0xa0] sm:$0xff]
  %v79 = vld [vmem:[%s0 + $0xa8] sm:$0xff]
  %v80 = vld [vmem:[%s0 + $0xb0] sm:$0xff]
  %v81 = vld [vmem:[%s0 + $0xb8] sm:$0xff]
  %v82 = vld [vmem:[%s0 + $0xc0] sm:$0xff]
  %v83 = vld [vmem:[%s0 + $0xc8] sm:$0xff]
  %v84 = vld [vmem:[%s0 + $0xd0] sm:$0xff]
  %v85 = vld [vmem:[%s0 + $0xd8] sm:$0xff]
  %v86 = vld [vmem:[%s0 + $0xe0] sm:$0xff]
  %v87 = vld [vmem:[%s0 + $0xe8] sm:$0xff]
  %v88 = vld [vmem:[%s2] sm:$0xff]
  %v89 = vld [vmem:[%s2 + $0x8] sm:$0xff]
  %v90 = vld [vmem:[%s2 + $0x10] sm:$0x3f]
  %v91 = vld [vmem:[%s2 + $0x18] sm:$0x3f]
  %v92 = vld [vmem:[%s3] sm:$0x3]
  %v94 = vlaneseq
  %v95 = vshrl.u32 %v94, 7
  %v96 = vsub.s32 0, %v95
  %v97 = vrot.slane %v92, %v96
  %v98 = vlaneseq
  %v99 = vshrl.u32 %v98, 7
  %v100 = vsub.s32 1, %v99
  %v101 = vrot.slane %v92, %v100
  %vm104 = vcmask 113664
  %v106 = vsel %vm104, %v58, 0
  %v109 = vsel %vm104, %v59, 0
  %v112 = vsel %vm104, %v60, 0
  %v115 = vsel %vm104, %v61, 0
  %v118 = vsel %vm104, %v62, 0
  %v121 = vsel %vm104, %v63, 0
  %v124 = vsel %vm104, %v64, 0
  %v127 = vsel %vm104, %v65, 0
  %v130 = vsel %vm104, %v66, 0
  %v133 = vsel %vm104, %v67, 0
  %v136 = vsel %vm104, %v68, 0
  %v139 = vsel %vm104, %v69, 0
  %v142 = vsel %vm104, %v70, 0
  %v145 = vsel %vm104, %v71, 0
  %v148 = vsel %vm104, %v72, 0
  %v151 = vsel %vm104, %v73, 0
  %v154 = vsel %vm104, %v74, 0
  %v157 = vsel %vm104, %v75, 0
  %v160 = vsel %vm104, %v76, 0
  %v163 = vsel %vm104, %v77, 0
  %v166 = vsel %vm104, %v78, 0
  %v169 = vsel %vm104, %v79, 0
  %v172 = vsel %vm104, %v80, 0
  %v175 = vsel %vm104, %v81, 0
  %v178 = vsel %vm104, %v82, 0
  %v181 = vsel %vm104, %v83, 0
  %v184 = vsel %vm104, %v84, 0
  %v187 = vsel %vm104, %v85, 0
  %v190 = vsel %vm104, %v86, 0
  %v193 = vsel %vm104, %v87, 0
  %vm195 = vcmask 1045504
  %v197 = vsel %vm195, %v90, 0
  %v200 = vsel %vm195, %v91, 0
  %202 = vmatprep.subr.mxu0 %v89
  %203 = vmatpush1.msra.mxu0 %v88
  %204 = vmatprep.subr.mxu0 %v200
  %205 = vmatpush1.msra.mxu0 %v197
  %206 = vmatprep.subr.mxu0 0.0
  %207 = vmatpush1.msra.mxu0 0.0
  %208 = vmatprep.subr.mxu0 0.0
  %209 = vmatpush1.msra.mxu0 0.0
  %210 = vmatprep.subr.mxu0 0.0
  %211 = vmatpush1.msra.mxu0 0.0
  %212 = vmatprep.subr.mxu0 0.0
  %213 = vmatpush1.msra.mxu0 0.0
  %214 = vmatprep.subr.mxu0 0.0
  %215 = vmatpush1.msra.mxu0 0.0
  %216 = vmatprep.subr.mxu0 0.0
  %217 = vmatpush1.msra.mxu0 0.0
  %218 = vmatprep.subr.mxu0 0.0
  %219 = vmatpush1.msra.mxu0 0.0
  %220 = vmatprep.subr.mxu0 0.0
  %221 = vmatpush1.msra.mxu0 0.0
  %222 = vmatprep.subr.mxu0 0.0
  %223 = vmatpush1.msra.mxu0 0.0
  %224 = vmatprep.subr.mxu0 0.0
  %225 = vmatpush1.msra.mxu0 0.0
  %226 = vmatprep.subr.mxu0 0.0
  %227 = vmatpush1.msra.mxu0 0.0
  %228 = vmatprep.subr.mxu0 0.0
  %229 = vmatpush1.msra.mxu0 0.0
  %230 = vmatprep.subr.mxu0 0.0
  %231 = vmatpush1.msra.mxu0 0.0
  %232 = vmatprep.subr.mxu0 0.0
  %233 = vmatpush1.msra.mxu0 0.0
  %234 = vmatprep.subr.mxu0 0.0
  %235 = vmatpush1.msra.mxu0 0.0
  %236 = vmatprep.subr.mxu0 0.0
  %237 = vmatpush1.msra.mxu0 0.0
  %238 = vmatprep.subr.mxu0 0.0
  %239 = vmatpush1.msra.mxu0 0.0
  %240 = vmatprep.subr.mxu0 0.0
  %241 = vmatpush1.msra.mxu0 0.0
  %242 = vmatprep.subr.mxu0 0.0
  %243 = vmatpush1.msra.mxu0 0.0
  %244 = vmatprep.subr.mxu0 0.0
  %245 = vmatpush1.msra.mxu0 0.0
  %246 = vmatprep.subr.mxu0 0.0
  %247 = vmatpush1.msra.mxu0 0.0
  %248 = vmatprep.subr.mxu0 0.0
  %249 = vmatpush1.msra.mxu0 0.0
  %250 = vmatprep.subr.mxu0 0.0
  %251 = vmatpush1.msra.mxu0 0.0
  %252 = vmatprep.subr.mxu0 0.0
  %253 = vmatpush1.msra.mxu0 0.0
  %254 = vmatprep.subr.mxu0 0.0
  %255 = vmatpush1.msra.mxu0 0.0
  %256 = vmatprep.subr.mxu0 0.0
  %257 = vmatpush1.msra.mxu0 0.0
  %258 = vmatprep.subr.mxu0 0.0
  %259 = vmatpush1.msra.mxu0 0.0
  %260 = vmatprep.subr.mxu0 0.0
  %261 = vmatpush1.msra.mxu0 0.0
  %262 = vmatprep.subr.mxu0 0.0
  %263 = vmatpush1.msra.mxu0 0.0
  %264 = vmatprep.subr.mxu0 0.0
  %265 = vmatpush1.msra.mxu0 0.0
  %266 = vmatprep.mubr.f32.mxu0 0.0
  %267 = vmatmul.mubr.f32.gmra.mrb[0].mxu0 %v106
  %v268 = vpop.f32.mrb[0].mxu0
  %v269 = vadd.f32 %v97, %v268
  %v270 = vpop.f32.mrb[0].mxu0
  %v271 = vadd.f32 %v101, %v270
  %272 = vmatprep.mubr.f32.mxu0 0.0
  %273 = vmatmul.mubr.f32.gmra.mrb[0].mxu0 %v109
  %v274 = vpop.f32.mrb[0].mxu0
  %v275 = vadd.f32 %v97, %v274
  %v276 = vpop.f32.mrb[0].mxu0
  %v277 = vadd.f32 %v101, %v276
  %278 = vmatprep.mubr.f32.mxu0 0.0
  %279 = vmatmul.mubr.f32.gmra.mrb[0].mxu0 %v112
  %v280 = vpop.f32.mrb[0].mxu0
  %v281 = vadd.f32 %v97, %v280
  %v282 = vpop.f32.mrb[0].mxu0
  %v283 = vadd.f32 %v101, %v282
  %284 = vmatprep.mubr.f32.mxu0 0.0
  %285 = vmatmul.mubr.f32.gmra.mrb[0].mxu0 %v115
  %v286 = vpop.f32.mrb[0].mxu0
  %v287 = vadd.f32 %v97, %v286
  %v288 = vpop.f32.mrb[0].mxu0
  %v289 = vadd.f32 %v101, %v288
  %290 = vmatprep.mubr.f32.mxu0 0.0
  %291 = vmatmul.mubr.f32.gmra.mrb[0].mxu0 %v118
  %v292 = vpop.f32.mrb[0].mxu0
  %v293 = vadd.f32 %v97, %v292
  %v294 = vpop.f32.mrb[0].mxu0
  %v295 = vadd.f32 %v101, %v294
  %296 = vmatprep.mubr.f32.mxu0 0.0
  %297 = vmatmul.mubr.f32.gmra.mrb[0].mxu0 %v121
  %v298 = vpop.f32.mrb[0].mxu0
  %v299 = vadd.f32 %v97, %v298
  %v300 = vpop.f32.mrb[0].mxu0
  %v301 = vadd.f32 %v101, %v300
  %302 = vmatprep.mubr.f32.mxu0 0.0
  %303 = vmatmul.mubr.f32.gmra.mrb[0].mxu0 %v124
  %v304 = vpop.f32.mrb[0].mxu0
  %v305 = vadd.f32 %v97, %v304
  %v306 = vpop.f32.mrb[0].mxu0
  %v307 = vadd.f32 %v101, %v306
  %308 = vmatprep.mubr.f32.mxu0 0.0
  %309 = vmatmul.mubr.f32.gmra.mrb[0].mxu0 %v127
  %v310 = vpop.f32.mrb[0].mxu0
  %v311 = vadd.f32 %v97, %v310
  %v312 = vpop.f32.mrb[0].mxu0
  %v313 = vadd.f32 %v101, %v312
  %314 = vmatprep.mubr.f32.mxu0 0.0
  %315 = vmatmul.mubr.f32.gmra.mrb[0].mxu0 %v130
  %v316 = vpop.f32.mrb[0].mxu0
  %v317 = vadd.f32 %v97, %v316
  %v318 = vpop.f32.mrb[0].mxu0
  %v319 = vadd.f32 %v101, %v318
  %320 = vmatprep.mubr.f32.mxu0 0.0
  %321 = vmatmul.mubr.f32.gmra.mrb[0].mxu0 %v133
  %v322 = vpop.f32.mrb[0].mxu0
  %v323 = vadd.f32 %v97, %v322
  %v324 = vpop.f32.mrb[0].mxu0
  %v325 = vadd.f32 %v101, %v324
  %326 = vmatprep.mubr.f32.mxu0 0.0
  %327 = vmatmul.mubr.f32.gmra.mrb[0].mxu0 %v136
  %v328 = vpop.f32.mrb[0].mxu0
  %v329 = vadd.f32 %v97, %v328
  %v330 = vpop.f32.mrb[0].mxu0
  %v331 = vadd.f32 %v101, %v330
  %332 = vmatprep.mubr.f32.mxu0 0.0
  %333 = vmatmul.mubr.f32.gmra.mrb[0].mxu0 %v139
  %v334 = vpop.f32.mrb[0].mxu0
  %v335 = vadd.f32 %v97, %v334
  %v336 = vpop.f32.mrb[0].mxu0
  %v337 = vadd.f32 %v101, %v336
  %338 = vmatprep.mubr.f32.mxu0 0.0
  %339 = vmatmul.mubr.f32.gmra.mrb[0].mxu0 %v142
  %v340 = vpop.f32.mrb[0].mxu0
  %v341 = vadd.f32 %v97, %v340
  %v342 = vpop.f32.mrb[0].mxu0
  %v343 = vadd.f32 %v101, %v342
  %344 = vmatprep.mubr.f32.mxu0 0.0
  %345 = vmatmul.mubr.f32.gmra.mrb[0].mxu0 %v145
  %v346 = vpop.f32.mrb[0].mxu0
  %v347 = vadd.f32 %v97, %v346
  %v348 = vpop.f32.mrb[0].mxu0
  %v349 = vadd.f32 %v101, %v348
  %350 = vmatprep.mubr.f32.mxu0 0.0
  %351 = vmatmul.mubr.f32.gmra.mrb[0].mxu0 %v148
  %v352 = vpop.f32.mrb[0].mxu0
  %v353 = vadd.f32 %v97, %v352
  %v354 = vpop.f32.mrb[0].mxu0
  %v355 = vadd.f32 %v101, %v354
  %356 = vmatprep.mubr.f32.mxu0 0.0
  %357 = vmatmul.mubr.f32.gmra.mrb[0].mxu0 %v151
  %v358 = vpop.f32.mrb[0].mxu0
  %v359 = vadd.f32 %v97, %v358
  %v360 = vpop.f32.mrb[0].mxu0
  %v361 = vadd.f32 %v101, %v360
  %362 = vmatprep.mubr.f32.mxu0 0.0
  %363 = vmatmul.mubr.f32.gmra.mrb[0].mxu0 %v154
  %v364 = vpop.f32.mrb[0].mxu0
  %v365 = vadd.f32 %v97, %v364
  %v366 = vpop.f32.mrb[0].mxu0
  %v367 = vadd.f32 %v101, %v366
  %368 = vmatprep.mubr.f32.mxu0 0.0
  %369 = vmatmul.mubr.f32.gmra.mrb[0].mxu0 %v157
  %v370 = vpop.f32.mrb[0].mxu0
  %v371 = vadd.f32 %v97, %v370
  %v372 = vpop.f32.mrb[0].mxu0
  %v373 = vadd.f32 %v101, %v372
  %374 = vmatprep.mubr.f32.mxu0 0.0
  %375 = vmatmul.mubr.f32.gmra.mrb[0].mxu0 %v160
  %v376 = vpop.f32.mrb[0].mxu0
  %v377 = vadd.f32 %v97, %v376
  %v378 = vpop.f32.mrb[0].mxu0
  %v379 = vadd.f32 %v101, %v378
  %380 = vmatprep.mubr.f32.mxu0 0.0
  %381 = vmatmul.mubr.f32.gmra.mrb[0].mxu0 %v163
  %v382 = vpop.f32.mrb[0].mxu0
  %v383 = vadd.f32 %v97, %v382
  %v384 = vpop.f32.mrb[0].mxu0
  %v385 = vadd.f32 %v101, %v384
  %386 = vmatprep.mubr.f32.mxu0 0.0
  %387 = vmatmul.mubr.f32.gmra.mrb[0].mxu0 %v166
  %v388 = vpop.f32.mrb[0].mxu0
  %v389 = vadd.f32 %v97, %v388
  %v390 = vpop.f32.mrb[0].mxu0
  %v391 = vadd.f32 %v101, %v390
  %392 = vmatprep.mubr.f32.mxu0 0.0
  %393 = vmatmul.mubr.f32.gmra.mrb[0].mxu0 %v169
  %v394 = vpop.f32.mrb[0].mxu0
  %v395 = vadd.f32 %v97, %v394
  %v396 = vpop.f32.mrb[0].mxu0
  %v397 = vadd.f32 %v101, %v396
  %398 = vmatprep.mubr.f32.mxu0 0.0
  %399 = vmatmul.mubr.f32.gmra.mrb[0].mxu0 %v172
  %v400 = vpop.f32.mrb[0].mxu0
  %v401 = vadd.f32 %v97, %v400
  %v402 = vpop.f32.mrb[0].mxu0
  %v403 = vadd.f32 %v101, %v402
  %404 = vmatprep.mubr.f32.mxu0 0.0
  %405 = vmatmul.mubr.f32.gmra.mrb[0].mxu0 %v175
  %v406 = vpop.f32.mrb[0].mxu0
  %v407 = vadd.f32 %v97, %v406
  %v408 = vpop.f32.mrb[0].mxu0
  %v409 = vadd.f32 %v101, %v408
  %410 = vmatprep.mubr.f32.mxu0 0.0
  %411 = vmatmul.mubr.f32.gmra.mrb[0].mxu0 %v178
  %v412 = vpop.f32.mrb[0].mxu0
  %v413 = vadd.f32 %v97, %v412
  %v414 = vpop.f32.mrb[0].mxu0
  %v415 = vadd.f32 %v101, %v414
  %416 = vmatprep.mubr.f32.mxu0 0.0
  %417 = vmatmul.mubr.f32.gmra.mrb[0].mxu0 %v181
  %v418 = vpop.f32.mrb[0].mxu0
  %v419 = vadd.f32 %v97, %v418
  %v420 = vpop.f32.mrb[0].mxu0
  %v421 = vadd.f32 %v101, %v420
  %422 = vmatprep.mubr.f32.mxu0 0.0
  %423 = vmatmul.mubr.f32.gmra.mrb[0].mxu0 %v184
  %v424 = vpop.f32.mrb[0].mxu0
  %v425 = vadd.f32 %v97, %v424
  %v426 = vpop.f32.mrb[0].mxu0
  %v427 = vadd.f32 %v101, %v426
  %428 = vmatprep.mubr.f32.mxu0 0.0
  %429 = vmatmul.mubr.f32.gmra.mrb[0].mxu0 %v187
  %v430 = vpop.f32.mrb[0].mxu0
  %v431 = vadd.f32 %v97, %v430
  %v432 = vpop.f32.mrb[0].mxu0
  %v433 = vadd.f32 %v101, %v432
  %434 = vmatprep.mubr.f32.mxu0 0.0
  %435 = vmatmul.mubr.f32.gmra.mrb[0].mxu0 %v190
  %v436 = vpop.f32.mrb[0].mxu0
  %v437 = vadd.f32 %v97, %v436
  %v438 = vpop.f32.mrb[0].mxu0
  %v439 = vadd.f32 %v101, %v438
  %440 = vmatprep.mubr.f32.mxu0 0.0
  %441 = vmatmul.mubr.f32.gmra.mrb[0].mxu0 %v193
  %v442 = vpop.f32.mrb[0].mxu0
  %v443 = vadd.f32 %v97, %v442
  %v444 = vpop.f32.mrb[0].mxu0
  %v445 = vadd.f32 %v101, %v444
  %446 = vdwg.mxu0
  %447 = vst [vmem:[#allocation2] sm:$0xff] %v269
  %vm448 = vcmask 523264
  %449 = vst.msk [vmem:[#allocation2 + $0x8] sm:$0xff] %vm448, %v271
  %450 = vst [vmem:[#allocation2 + $0x10] sm:$0xff] %v275
  %451 = vst.msk [vmem:[#allocation2 + $0x18] sm:$0xff] %vm448, %v277
  %452 = vst [vmem:[#allocation2 + $0x20] sm:$0xff] %v281
  %453 = vst.msk [vmem:[#allocation2 + $0x28] sm:$0xff] %vm448, %v283
  %454 = vst [vmem:[#allocation2 + $0x30] sm:$0xff] %v287
  %455 = vst.msk [vmem:[#allocation2 + $0x38] sm:$0xff] %vm448, %v289
  %456 = vst [vmem:[#allocation2 + $0x40] sm:$0xff] %v293
  %457 = vst.msk [vmem:[#allocation2 + $0x48] sm:$0xff] %vm448, %v295
  %458 = vst [vmem:[#allocation2 + $0x50] sm:$0xff] %v299
  %459 = vst.msk [vmem:[#allocation2 + $0x58] sm:$0xff] %vm448, %v301
  %460 = vst [vmem:[#allocation2 + $0x60] sm:$0xff] %v305
  %461 = vst.msk [vmem:[#allocation2 + $0x68] sm:$0xff] %vm448, %v307
  %462 = vst [vmem:[#allocation2 + $0x70] sm:$0xff] %v311
  %463 = vst.msk [vmem:[#allocation2 + $0x78] sm:$0xff] %vm448, %v313
  %464 = vst [vmem:[#allocation2 + $0x80] sm:$0xff] %v317
  %465 = vst.msk [vmem:[#allocation2 + $0x88] sm:$0xff] %vm448, %v319
  %466 = vst [vmem:[#allocation2 + $0x90] sm:$0xff] %v323
  %467 = vst.msk [vmem:[#allocation2 + $0x98] sm:$0xff] %vm448, %v325
  %468 = vst [vmem:[#allocation2 + $0xa0] sm:$0xff] %v329
  %469 = vst.msk [vmem:[#allocation2 + $0xa8] sm:$0xff] %vm448, %v331
  %470 = vst [vmem:[#allocation2 + $0xb0] sm:$0xff] %v335
  %471 = vst.msk [vmem:[#allocation2 + $0xb8] sm:$0xff] %vm448, %v337
  %472 = vst [vmem:[#allocation2 + $0xc0] sm:$0xff] %v341
  %473 = vst.msk [vmem:[#allocation2 + $0xc8] sm:$0xff] %vm448, %v343
  %474 = vst [vmem:[#allocation2 + $0xd0] sm:$0xff] %v347
  %475 = vst.msk [vmem:[#allocation2 + $0xd8] sm:$0xff] %vm448, %v349
  %476 = vst [vmem:[#allocation2 + $0xe0] sm:$0xff] %v353
  %477 = vst.msk [vmem:[#allocation2 + $0xe8] sm:$0xff] %vm448, %v355
  %478 = vst [vmem:[#allocation2 + $0xf0] sm:$0xff] %v359
  %479 = vst.msk [vmem:[#allocation2 + $0xf8] sm:$0xff] %vm448, %v361
  %480 = vst [vmem:[#allocation2 + $0x100] sm:$0xff] %v365
  %481 = vst.msk [vmem:[#allocation2 + $0x108] sm:$0xff] %vm448, %v367
  %482 = vst [vmem:[#allocation2 + $0x110] sm:$0xff] %v371
  %483 = vst.msk [vmem:[#allocation2 + $0x118] sm:$0xff] %vm448, %v373
  %484 = vst [vmem:[#allocation2 + $0x120] sm:$0xff] %v377
  %485 = vst.msk [vmem:[#allocation2 + $0x128] sm:$0xff] %vm448, %v379
  %486 = vst [vmem:[#allocation2 + $0x130] sm:$0xff] %v383
  %487 = vst.msk [vmem:[#allocation2 + $0x138] sm:$0xff] %vm448, %v385
  %488 = vst [vmem:[#allocation2 + $0x140] sm:$0xff] %v389
  %489 = vst.msk [vmem:[#allocation2 + $0x148] sm:$0xff] %vm448, %v391
  %490 = vst [vmem:[#allocation2 + $0x150] sm:$0xff] %v395
  %491 = vst.msk [vmem:[#allocation2 + $0x158] sm:$0xff] %vm448, %v397
  %492 = vst [vmem:[#allocation2 + $0x160] sm:$0xff] %v401
  %493 = vst.msk [vmem:[#allocation2 + $0x168] sm:$0xff] %vm448, %v403
  %494 = vst [vmem:[#allocation2 + $0x170] sm:$0xff] %v407
  %495 = vst.msk [vmem:[#allocation2 + $0x178] sm:$0xff] %vm448, %v409
  %496 = vst [vmem:[#allocation2 + $0x180] sm:$0xff] %v413
  %497 = vst.msk [vmem:[#allocation2 + $0x188] sm:$0xff] %vm448, %v415
  %498 = vst [vmem:[#allocation2 + $0x190] sm:$0xff] %v419
  %499 = vst.msk [vmem:[#allocation2 + $0x198] sm:$0xff] %vm448, %v421
  %500 = vst [vmem:[#allocation2 + $0x1a0] sm:$0xff] %v425
  %501 = vst.msk [vmem:[#allocation2 + $0x1a8] sm:$0xff] %vm448, %v427
  %502 = vst [vmem:[#allocation2 + $0x1b0] sm:$0xff] %v431
  %503 = vst.msk [vmem:[#allocation2 + $0x1b8] sm:$0xff] %vm448, %v433
  %504 = vst [vmem:[#allocation2 + $0x1c0] sm:$0xff] %v437
  %505 = vst.msk [vmem:[#allocation2 + $0x1c8] sm:$0xff] %vm448, %v439
  %506 = vst [vmem:[#allocation2 + $0x1d0] sm:$0xff] %v443
  %507 = vst.msk [vmem:[#allocation2 + $0x1d8] sm:$0xff] %vm448, %v445
  %v508 = vld [vmem:[%s4] sm:$0xff]
  %v509 = vld [vmem:[%s4 + $0x8] sm:$0xff]
  %v510 = vld [vmem:[%s4 + $0x10] sm:$0xff]
  %v511 = vld [vmem:[%s4 + $0x18] sm:$0xff]
  %v512 = vld [vmem:[%s4 + $0x20] sm:$0xff]
  %v513 = vld [vmem:[%s4 + $0x28] sm:$0xff]
  %v514 = vld [vmem:[%s4 + $0x30] sm:$0xff]
  %v515 = vld [vmem:[%s4 + $0x38] sm:$0xff]
  %v516 = vld [vmem:[%s5] sm:$0xff]
  %v517 = vld [vmem:[%s5 + $0x8] sm:$0xff]
  %v518 = vld [vmem:[%s5 + $0x10] sm:$0xff]
  %v519 = vld [vmem:[%s5 + $0x18] sm:$0xff]
  %v520 = vld [vmem:[%s5 + $0x20] sm:$0xff]
  %v521 = vld [vmem:[%s5 + $0x28] sm:$0xff]
  %v522 = vld [vmem:[%s5 + $0x30] sm:$0xff]
  %v523 = vld [vmem:[%s5 + $0x38] sm:$0xff]
  %v524 = vld [vmem:[%s6] sm:$0x1]
  %v526 = vlaneseq
  %v527 = vshrl.u32 %v526, 7
  %v528 = vsub.s32 0, %v527
  %v529 = vrot.slane %v524, %v528
  %v531 = vld [vmem:[#allocation2] sm:$0xff]
  %v532 = vld [vmem:[#allocation2 + $0x8] sm:$0xff]
  %v534 = vsel %vm448, 0.0, 0
  %536 = vmatprep.subr.mxu0 0.0
  %537 = vmatpush1.msra.mxu0 %v508
  %538 = vmatprep.subr.mxu0 0.0
  %539 = vmatpush1.msra.mxu0 %v509
  %540 = vmatprep.subr.mxu0 0.0
  %541 = vmatpush1.msra.mxu0 %v510
  %542 = vmatprep.subr.mxu0 0.0
  %543 = vmatpush1.msra.mxu0 %v511
  %544 = vmatprep.subr.mxu0 0.0
  %545 = vmatpush1.msra.mxu0 %v512
  %546 = vmatprep.subr.mxu0 0.0
  %547 = vmatpush1.msra.mxu0 %v513
  %548 = vmatprep.subr.mxu0 0.0
  %549 = vmatpush1.msra.mxu0 %v514
  %550 = vmatprep.subr.mxu0 0.0
  %551 = vmatpush1.msra.mxu0 %v515
  %552 = vmatprep.subr.mxu0 0.0
  %553 = vmatpush1.msra.mxu0 0.0
  %554 = vmatprep.subr.mxu0 0.0
  %555 = vmatpush1.msra.mxu0 0.0
  %556 = vmatprep.subr.mxu0 0.0
  %557 = vmatpush1.msra.mxu0 0.0
  %558 = vmatprep.subr.mxu0 0.0
  %559 = vmatpush1.msra.mxu0 0.0
  %560 = vmatprep.subr.mxu0 0.0
  %561 = vmatpush1.msra.mxu0 0.0
  %562 = vmatprep.subr.mxu0 0.0
  %563 = vmatpush1.msra.mxu0 0.0
  %564 = vmatprep.subr.mxu0 0.0
  %565 = vmatpush1.msra.mxu0 0.0
  %566 = vmatprep.subr.mxu0 0.0
  %567 = vmatpush1.msra.mxu0 0.0
  %568 = vmatprep.subr.mxu0 0.0
  %569 = vmatpush1.msra.mxu0 0.0
  %570 = vmatprep.subr.mxu0 0.0
  %571 = vmatpush1.msra.mxu0 0.0
  %572 = vmatprep.subr.mxu0 0.0
  %573 = vmatpush1.msra.mxu0 0.0
  %574 = vmatprep.subr.mxu0 0.0
  %575 = vmatpush1.msra.mxu0 0.0
  %576 = vmatprep.subr.mxu0 0.0
  %577 = vmatpush1.msra.mxu0 0.0
  %578 = vmatprep.subr.mxu0 0.0
  %579 = vmatpush1.msra.mxu0 0.0
  %580 = vmatprep.subr.mxu0 0.0
  %581 = vmatpush1.msra.mxu0 0.0
  %582 = vmatprep.subr.mxu0 0.0
  %583 = vmatpush1.msra.mxu0 0.0
  %584 = vmatprep.subr.mxu0 0.0
  %585 = vmatpush1.msra.mxu0 0.0
  %586 = vmatprep.subr.mxu0 0.0
  %587 = vmatpush1.msra.mxu0 0.0
  %588 = vmatprep.subr.mxu0 0.0
  %589 = vmatpush1.msra.mxu0 0.0
  %590 = vmatprep.subr.mxu0 0.0
  %591 = vmatpush1.msra.mxu0 0.0
  %592 = vmatprep.subr.mxu0 0.0
  %593 = vmatpush1.msra.mxu0 0.0
  %594 = vmatprep.subr.mxu0 0.0
  %595 = vmatpush1.msra.mxu0 0.0
  %596 = vmatprep.subr.mxu0 0.0
  %597 = vmatpush1.msra.mxu0 0.0
  %598 = vmatprep.subr.mxu0 0.0
  %599 = vmatpush1.msra.mxu0 0.0
  %600 = vmatprep.mubr.f32.mxu0 0.0
  %601 = vmatmul.mubr.f32.gmra.mrb[0].mxu0 %v534
  %v602 = vpop.f32.mrb[0].mxu0
  %v603 = vadd.f32 0.0, %v602
  %v604 = vpop.f32.mrb[0].mxu0
  %605 = vdwg.mxu0
  %606 = vmatprep.subr.mxu0 0.0
  %607 = vmatpush1.msra.mxu0 %v516
  %608 = vmatprep.subr.mxu0 0.0
  %609 = vmatpush1.msra.mxu0 %v517
  %610 = vmatprep.subr.mxu0 0.0
  %611 = vmatpush1.msra.mxu0 %v518
  %612 = vmatprep.subr.mxu0 0.0
  %613 = vmatpush1.msra.mxu0 %v519
  %614 = vmatprep.subr.mxu0 0.0
  %615 = vmatpush1.msra.mxu0 %v520
  %616 = vmatprep.subr.mxu0 0.0
  %617 = vmatpush1.msra.mxu0 %v521
  %618 = vmatprep.subr.mxu0 0.0
  %619 = vmatpush1.msra.mxu0 %v522
  %620 = vmatprep.subr.mxu0 0.0
  %621 = vmatpush1.msra.mxu0 %v523
  %622 = vmatprep.subr.mxu0 0.0
  %623 = vmatpush1.msra.mxu0 0.0
  %624 = vmatprep.subr.mxu0 0.0
  %625 = vmatpush1.msra.mxu0 0.0
  %626 = vmatprep.subr.mxu0 0.0
  %627 = vmatpush1.msra.mxu0 0.0
  %628 = vmatprep.subr.mxu0 0.0
  %629 = vmatpush1.msra.mxu0 0.0
  %630 = vmatprep.subr.mxu0 0.0
  %631 = vmatpush1.msra.mxu0 0.0
  %632 = vmatprep.subr.mxu0 0.0
  %633 = vmatpush1.msra.mxu0 0.0
  %634 = vmatprep.subr.mxu0 0.0
  %635 = vmatpush1.msra.mxu0 0.0
  %636 = vmatprep.subr.mxu0 0.0
  %637 = vmatpush1.msra.mxu0 0.0
  %638 = vmatprep.subr.mxu0 0.0
  %639 = vmatpush1.msra.mxu0 0.0
  %640 = vmatprep.subr.mxu0 0.0
  %641 = vmatpush1.msra.mxu0 0.0
  %642 = vmatprep.subr.mxu0 0.0
  %643 = vmatpush1.msra.mxu0 0.0
  %644 = vmatprep.subr.mxu0 0.0
  %645 = vmatpush1.msra.mxu0 0.0
  %646 = vmatprep.subr.mxu0 0.0
  %647 = vmatpush1.msra.mxu0 0.0
  %648 = vmatprep.subr.mxu0 0.0
  %649 = vmatpush1.msra.mxu0 0.0
  %650 = vmatprep.subr.mxu0 0.0
  %651 = vmatpush1.msra.mxu0 0.0
  %652 = vmatprep.subr.mxu0 0.0
  %653 = vmatpush1.msra.mxu0 0.0
  %654 = vmatprep.subr.mxu0 0.0
  %655 = vmatpush1.msra.mxu0 0.0
  %656 = vmatprep.subr.mxu0 0.0
  %657 = vmatpush1.msra.mxu0 0.0
  %658 = vmatprep.subr.mxu0 0.0
  %659 = vmatpush1.msra.mxu0 0.0
  %660 = vmatprep.subr.mxu0 0.0
  %661 = vmatpush1.msra.mxu0 0.0
  %662 = vmatprep.subr.mxu0 0.0
  %663 = vmatpush1.msra.mxu0 0.0
  %664 = vmatprep.subr.mxu0 0.0
  %665 = vmatpush1.msra.mxu0 0.0
  %666 = vmatprep.subr.mxu0 0.0
  %667 = vmatpush1.msra.mxu0 0.0
  %668 = vmatprep.subr.mxu0 0.0
  %669 = vmatpush1.msra.mxu0 0.0
  %670 = vmatprep.mubr.f32.mxu0 0.0
  %671 = vmatmul.mubr.f32.gmra.mrb[0].mxu0 %v534
  %v672 = vpop.f32.mrb[0].mxu0
  %v673 = vadd.f32 %v529, %v672
  %v674 = vpop.f32.mrb[0].mxu0
  %675 = vdwg.mxu0
  %v676 = vadd.f32 %v531, %v603
  %v677 = vxor.u32 %v676, 2147483648
  %v678 = vmul.f32 %v677, 1.442695
  %v679 = vpow.pop %v678
  %v680 = vadd.f32 %v679, 1.0
  %v681 = vrcp.pop %v680
  %v682 = vmul.f32 1.0, %v681
  %683 = vrot.lane.b32.xlu0 %v682, 64
  %v684 = vpop.permute.xlu0 %683
  %v685 = vmul.f32 %v682, %v673
  %v686 = vadd.f32 %v532, %v685
  %v687 = vtanh.pop %v686
  %v688 = vsub.f32 1.0, %v684
  %v689 = vmul.f32 %v688, %v687
  %v690 = vmul.f32 %v684, 0.0
  %v691 = vadd.f32 %v689, %v690
  %692 = vst.msk [vmem:[#allocation3] sm:$0xff] %vm448, %v691
  %v693 = vld [vmem:[#allocation2 + $0x10] sm:$0xff]
  %v694 = vld [vmem:[#allocation2 + $0x18] sm:$0xff]
  %v696 = vsel %vm448, %v691, 0
  %698 = vmatprep.subr.mxu0 0.0
  %699 = vmatpush1.msra.mxu0 %v508
  %700 = vmatprep.subr.mxu0 0.0
  %701 = vmatpush1.msra.mxu0 %v509
  %702 = vmatprep.subr.mxu0 0.0
  %703 = vmatpush1.msra.mxu0 %v510
  %704 = vmatprep.subr.mxu0 0.0
  %705 = vmatpush1.msra.mxu0 %v511
  %706 = vmatprep.subr.mxu0 0.0
  %707 = vmatpush1.msra.mxu0 %v512
  %708 = vmatprep.subr.mxu0 0.0
  %709 = vmatpush1.msra.mxu0 %v513
  %710 = vmatprep.subr.mxu0 0.0
  %711 = vmatpush1.msra.mxu0 %v514
  %712 = vmatprep.subr.mxu0 0.0
  %713 = vmatpush1.msra.mxu0 %v515
  %714 = vmatprep.subr.mxu0 0.0
  %715 = vmatpush1.msra.mxu0 0.0
  %716 = vmatprep.subr.mxu0 0.0
  %717 = vmatpush1.msra.mxu0 0.0
  %718 = vmatprep.subr.mxu0 0.0
  %719 = vmatpush1.msra.mxu0 0.0
  %720 = vmatprep.subr.mxu0 0.0
  %721 = vmatpush1.msra.mxu0 0.0
  %722 = vmatprep.subr.mxu0 0.0
  %723 = vmatpush1.msra.mxu0 0.0
  %724 = vmatprep.subr.mxu0 0.0
  %725 = vmatpush1.msra.mxu0 0.0
  %726 = vmatprep.subr.mxu0 0.0
  %727 = vmatpush1.msra.mxu0 0.0
  %728 = vmatprep.subr.mxu0 0.0
  %729 = vmatpush1.msra.mxu0 0.0
  %730 = vmatprep.subr.mxu0 0.0
  %731 = vmatpush1.msra.mxu0 0.0
  %732 = vmatprep.subr.mxu0 0.0
  %733 = vmatpush1.msra.mxu0 0.0
  %734 = vmatprep.subr.mxu0 0.0
  %735 = vmatpush1.msra.mxu0 0.0
  %736 = vmatprep.subr.mxu0 0.0
  %737 = vmatpush1.msra.mxu0 0.0
  %738 = vmatprep.subr.mxu0 0.0
  %739 = vmatpush1.msra.mxu0 0.0
  %740 = vmatprep.subr.mxu0 0.0
  %741 = vmatpush1.msra.mxu0 0.0
  %742 = vmatprep.subr.mxu0 0.0
  %743 = vmatpush1.msra.mxu0 0.0
  %744 = vmatprep.subr.mxu0 0.0
  %745 = vmatpush1.msra.mxu0 0.0
  %746 = vmatprep.subr.mxu0 0.0
  %747 = vmatpush1.msra.mxu0 0.0
  %748 = vmatprep.subr.mxu0 0.0
  %749 = vmatpush1.msra.mxu0 0.0
  %750 = vmatprep.subr.mxu0 0.0
  %751 = vmatpush1.msra.mxu0 0.0
  %752 = vmatprep.subr.mxu0 0.0
  %753 = vmatpush1.msra.mxu0 0.0
  %754 = vmatprep.subr.mxu0 0.0
  %755 = vmatpush1.msra.mxu0 0.0
  %756 = vmatprep.subr.mxu0 0.0
  %757 = vmatpush1.msra.mxu0 0.0
  %758 = vmatprep.subr.mxu0 0.0
  %759 = vmatpush1.msra.mxu0 0.0
  %760 = vmatprep.subr.mxu0 0.0
  %761 = vmatpush1.msra.mxu0 0.0
  %762 = vmatprep.mubr.f32.mxu0 0.0
  %763 = vmatmul.mubr.f32.gmra.mrb[0].mxu0 %v696
  %v764 = vpop.f32.mrb[0].mxu0
  %v765 = vadd.f32 0.0, %v764
  %v766 = vpop.f32.mrb[0].mxu0
  %767 = vdwg.mxu0
  %768 = vmatprep.subr.mxu0 0.0
  %769 = vmatpush1.msra.mxu0 %v516
  %770 = vmatprep.subr.mxu0 0.0
  %771 = vmatpush1.msra.mxu0 %v517
  %772 = vmatprep.subr.mxu0 0.0
  %773 = vmatpush1.msra.mxu0 %v518
  %774 = vmatprep.subr.mxu0 0.0
  %775 = vmatpush1.msra.mxu0 %v519
  %776 = vmatprep.subr.mxu0 0.0
  %777 = vmatpush1.msra.mxu0 %v520
  %778 = vmatprep.subr.mxu0 0.0
  %779 = vmatpush1.msra.mxu0 %v521
  %780 = vmatprep.subr.mxu0 0.0
  %781 = vmatpush1.msra.mxu0 %v522
  %782 = vmatprep.subr.mxu0 0.0
  %783 = vmatpush1.msra.mxu0 %v523
  %784 = vmatprep.subr.mxu0 0.0
  %785 = vmatpush1.msra.mxu0 0.0
  %786 = vmatprep.subr.mxu0 0.0
  %787 = vmatpush1.msra.mxu0 0.0
  %788 = vmatprep.subr.mxu0 0.0
  %789 = vmatpush1.msra.mxu0 0.0
  %790 = vmatprep.subr.mxu0 0.0
  %791 = vmatpush1.msra.mxu0 0.0
  %792 = vmatprep.subr.mxu0 0.0
  %793 = vmatpush1.msra.mxu0 0.0
  %794 = vmatprep.subr.mxu0 0.0
  %795 = vmatpush1.msra.mxu0 0.0
  %796 = vmatprep.subr.mxu0 0.0
  %797 = vmatpush1.msra.mxu0 0.0
  %798 = vmatprep.subr.mxu0 0.0
  %799 = vmatpush1.msra.mxu0 0.0
  %800 = vmatprep.subr.mxu0 0.0
  %801 = vmatpush1.msra.mxu0 0.0
  %802 = vmatprep.subr.mxu0 0.0
  %803 = vmatpush1.msra.mxu0 0.0
  %804 = vmatprep.subr.mxu0 0.0
  %805 = vmatpush1.msra.mxu0 0.0
  %806 = vmatprep.subr.mxu0 0.0
  %807 = vmatpush1.msra.mxu0 0.0
  %808 = vmatprep.subr.mxu0 0.0
  %809 = vmatpush1.msra.mxu0 0.0
  %810 = vmatprep.subr.mxu0 0.0
  %811 = vmatpush1.msra.mxu0 0.0
  %812 = vmatprep.subr.mxu0 0.0
  %813 = vmatpush1.msra.mxu0 0.0
  %814 = vmatprep.subr.mxu0 0.0
  %815 = vmatpush1.msra.mxu0 0.0
  %816 = vmatprep.subr.mxu0 0.0
  %817 = vmatpush1.msra.mxu0 0.0
  %818 = vmatprep.subr.mxu0 0.0
  %819 = vmatpush1.msra.mxu0 0.0
  %820 = vmatprep.subr.mxu0 0.0
  %821 = vmatpush1.msra.mxu0 0.0
  %822 = vmatprep.subr.mxu0 0.0
  %823 = vmatpush1.msra.mxu0 0.0
  %824 = vmatprep.subr.mxu0 0.0
  %825 = vmatpush1.msra.mxu0 0.0
  %826 = vmatprep.subr.mxu0 0.0
  %827 = vmatpush1.msra.mxu0 0.0
  %828 = vmatprep.subr.mxu0 0.0
  %829 = vmatpush1.msra.mxu0 0.0
  %830 = vmatprep.subr.mxu0 0.0
  %831 = vmatpush1.msra.mxu0 0.0
  %832 = vmatprep.mubr.f32.mxu0 0.0
  %833 = vmatmul.mubr.f32.gmra.mrb[0].mxu0 %v696
  %v834 = vpop.f32.mrb[0].mxu0
  %v835 = vadd.f32 %v529, %v834
  %v836 = vpop.f32.mrb[0].mxu0
  %837 = vdwg.mxu0
  %v838 = vadd.f32 %v693, %v765
  %v839 = vxor.u32 %v838, 2147483648
  %v840 = vmul.f32 %v839, 1.442695
  %v841 = vpow.pop %v840
  %v842 = vadd.f32 %v841, 1.0
  %v843 = vrcp.pop %v842
  %v844 = vmul.f32 1.0, %v843
  %845 = vrot.lane.b32.xlu0 %v844, 64
  %v846 = vpop.permute.xlu0 %845
  %v847 = vmul.f32 %v844, %v835
  %v848 = vadd.f32 %v694, %v847
  %v849 = vtanh.pop %v848
  %v850 = vsub.f32 1.0, %v846
  %v851 = vmul.f32 %v850, %v849
  %v852 = vmul.f32 %v846, %v691
  %v853 = vadd.f32 %v851, %v852
  %854 = vst.msk [vmem:[#allocation3 + $0x8] sm:$0xff] %vm448, %v853
  %v855 = vld [vmem:[#allocation2 + $0x20] sm:$0xff]
  %v856 = vld [vmem:[#allocation2 + $0x28] sm:$0xff]
  %v858 = vsel %vm448, %v853, 0
  %860 = vmatprep.subr.mxu0 0.0
  %861 = vmatpush1.msra.mxu0 %v508
  %862 = vmatprep.subr.mxu0 0.0
  %863 = vmatpush1.msra.mxu0 %v509
  %864 = vmatprep.subr.mxu0 0.0
  %865 = vmatpush1.msra.mxu0 %v510
  %866 = vmatprep.subr.mxu0 0.0
  %867 = vmatpush1.msra.mxu0 %v511
  %868 = vmatprep.subr.mxu0 0.0
  %869 = vmatpush1.msra.mxu0 %v512
  %870 = vmatprep.subr.mxu0 0.0
  %871 = vmatpush1.msra.mxu0 %v513
  %872 = vmatprep.subr.mxu0 0.0
  %873 = vmatpush1.msra.mxu0 %v514
  %874 = vmatprep.subr.mxu0 0.0
  %875 = vmatpush1.msra.mxu0 %v515
  %876 = vmatprep.subr.mxu0 0.0
  %877 = vmatpush1.msra.mxu0 0.0
  %878 = vmatprep.subr.mxu0 0.0
  %879 = vmatpush1.msra.mxu0 0.0
  %880 = vmatprep.subr.mxu0 0.0
  %881 = vmatpush1.msra.mxu0 0.0
  %882 = vmatprep.subr.mxu0 0.0
  %883 = vmatpush1.msra.mxu0 0.0
  %884 = vmatprep.subr.mxu0 0.0
  %885 = vmatpush1.msra.mxu0 0.0
  %886 = vmatprep.subr.mxu0 0.0
  %887 = vmatpush1.msra.mxu0 0.0
  %888 = vmatprep.subr.mxu0 0.0
  %889 = vmatpush1.msra.mxu0 0.0
  %890 = vmatprep.subr.mxu0 0.0
  %891 = vmatpush1.msra.mxu0 0.0
  %892 = vmatprep.subr.mxu0 0.0
  %893 = vmatpush1.msra.mxu0 0.0
  %894 = vmatprep.subr.mxu0 0.0
  %895 = vmatpush1.msra.mxu0 0.0
  %896 = vmatprep.subr.mxu0 0.0
  %897 = vmatpush1.msra.mxu0 0.0
  %898 = vmatprep.subr.mxu0 0.0
  %899 = vmatpush1.msra.mxu0 0.0
  %900 = vmatprep.subr.mxu0 0.0
  %901 = vmatpush1.msra.mxu0 0.0
  %902 = vmatprep.subr.mxu0 0.0
  %903 = vmatpush1.msra.mxu0 0.0
  %904 = vmatprep.subr.mxu0 0.0
  %905 = vmatpush1.msra.mxu0 0.0
  %906 = vmatprep.subr.mxu0 0.0
  %907 = vmatpush1.msra.mxu0 0.0
  %908 = vmatprep.subr.mxu0 0.0
  %909 = vmatpush1.msra.mxu0 0.0
  %910 = vmatprep.subr.mxu0 0.0
  %911 = vmatpush1.msra.mxu0 0.0
  %912 = vmatprep.subr.mxu0 0.0
  %913 = vmatpush1.msra.mxu0 0.0
  %914 = vmatprep.subr.mxu0 0.0
  %915 = vmatpush1.msra.mxu0 0.0
  %916 = vmatprep.subr.mxu0 0.0
  %917 = vmatpush1.msra.mxu0 0.0
  %918 = vmatprep.subr.mxu0 0.0
  %919 = vmatpush1.msra.mxu0 0.0
  %920 = vmatprep.subr.mxu0 0.0
  %921 = vmatpush1.msra.mxu0 0.0
  %922 = vmatprep.subr.mxu0 0.0
  %923 = vmatpush1.msra.mxu0 0.0
  %924 = vmatprep.mubr.f32.mxu0 0.0
  %925 = vmatmul.mubr.f32.gmra.mrb[0].mxu0 %v858
  %v926 = vpop.f32.mrb[0].mxu0
  %v927 = vadd.f32 0.0, %v926
  %v928 = vpop.f32.mrb[0].mxu0
  %929 = vdwg.mxu0
  %930 = vmatprep.subr.mxu0 0.0
  %931 = vmatpush1.msra.mxu0 %v516
  %932 = vmatprep.subr.mxu0 0.0
  %933 = vmatpush1.msra.mxu0 %v517
  %934 = vmatprep.subr.mxu0 0.0
  %935 = vmatpush1.msra.mxu0 %v518
  %936 = vmatprep.subr.mxu0 0.0
  %937 = vmatpush1.msra.mxu0 %v519
  %938 = vmatprep.subr.mxu0 0.0
  %939 = vmatpush1.msra.mxu0 %v520
  %940 = vmatprep.subr.mxu0 0.0
  %941 = vmatpush1.msra.mxu0 %v521
  %942 = vmatprep.subr.mxu0 0.0
  %943 = vmatpush1.msra.mxu0 %v522
  %944 = vmatprep.subr.mxu0 0.0
  %945 = vmatpush1.msra.mxu0 %v523
  %946 = vmatprep.subr.mxu0 0.0
  %947 = vmatpush1.msra.mxu0 0.0
  %948 = vmatprep.subr.mxu0 0.0
  %949 = vmatpush1.msra.mxu0 0.0
  %950 = vmatprep.subr.mxu0 0.0
  %951 = vmatpush1.msra.mxu0 0.0
  %952 = vmatprep.subr.mxu0 0.0
  %953 = vmatpush1.msra.mxu0 0.0
  %954 = vmatprep.subr.mxu0 0.0
  %955 = vmatpush1.msra.mxu0 0.0
  %956 = vmatprep.subr.mxu0 0.0
  %957 = vmatpush1.msra.mxu0 0.0
  %958 = vmatprep.subr.mxu0 0.0
  %959 = vmatpush1.msra.mxu0 0.0
  %960 = vmatprep.subr.mxu0 0.0
  %961 = vmatpush1.msra.mxu0 0.0
  %962 = vmatprep.subr.mxu0 0.0
  %963 = vmatpush1.msra.mxu0 0.0
  %964 = vmatprep.subr.mxu0 0.0
  %965 = vmatpush1.msra.mxu0 0.0
  %966 = vmatprep.subr.mxu0 0.0
  %967 = vmatpush1.msra.mxu0 0.0
  %968 = vmatprep.subr.mxu0 0.0
  %969 = vmatpush1.msra.mxu0 0.0
  %970 = vmatprep.subr.mxu0 0.0
  %971 = vmatpush1.msra.mxu0 0.0
  %972 = vmatprep.subr.mxu0 0.0
  %973 = vmatpush1.msra.mxu0 0.0
  %974 = vmatprep.subr.mxu0 0.0
  %975 = vmatpush1.msra.mxu0 0.0
  %976 = vmatprep.subr.mxu0 0.0
  %977 = vmatpush1.msra.mxu0 0.0
  %978 = vmatprep.subr.mxu0 0.0
  %979 = vmatpush1.msra.mxu0 0.0
  %980 = vmatprep.subr.mxu0 0.0
  %981 = vmatpush1.msra.mxu0 0.0
  %982 = vmatprep.subr.mxu0 0.0
  %983 = vmatpush1.msra.mxu0 0.0
  %984 = vmatprep.subr.mxu0 0.0
  %985 = vmatpush1.msra.mxu0 0.0
  %986 = vmatprep.subr.mxu0 0.0
  %987 = vmatpush1.msra.mxu0 0.0
  %988 = vmatprep.subr.mxu0 0.0
  %989 = vmatpush1.msra.mxu0 0.0
  %990 = vmatprep.subr.mxu0 0.0
  %991 = vmatpush1.msra.mxu0 0.0
  %992 = vmatprep.subr.mxu0 0.0
  %993 = vmatpush1.msra.mxu0 0.0
  %994 = vmatprep.mubr.f32.mxu0 0.0
  %995 = vmatmul.mubr.f32.gmra.mrb[0].mxu0 %v858
  %v996 = vpop.f32.mrb[0].mxu0
  %v997 = vadd.f32 %v529, %v996
  %v998 = vpop.f32.mrb[0].mxu0
  %999 = vdwg.mxu0
  %v1000 = vadd.f32 %v855, %v927
  %v1001 = vxor.u32 %v1000, 2147483648
  %v1002 = vmul.f32 %v1001, 1.442695
  %v1003 = vpow.pop %v1002
  %v1004 = vadd.f32 %v1003, 1.0
  %v1005 = vrcp.pop %v1004
  %v1006 = vmul.f32 1.0, %v1005
  %1007 = vrot.lane.b32.xlu0 %v1006, 64
  %v1008 = vpop.permute.xlu0 %1007
  %v1009 = vmul.f32 %v1006, %v997
  %v1010 = vadd.f32 %v856, %v1009
  %v1011 = vtanh.pop %v1010
  %v1012 = vsub.f32 1.0, %v1008
  %v1013 = vmul.f32 %v1012, %v1011
  %v1014 = vmul.f32 %v1008, %v853
  %v1015 = vadd.f32 %v1013, %v1014
  %1016 = vst.msk [vmem:[#allocation3 + $0x10] sm:$0xff] %vm448, %v1015
  %v1017 = vld [vmem:[#allocation2 + $0x30] sm:$0xff]
  %v1018 = vld [vmem:[#allocation2 + $0x38] sm:$0xff]
  %v1020 = vsel %vm448, %v1015, 0
  %1022 = vmatprep.subr.mxu0 0.0
  %1023 = vmatpush1.msra.mxu0 %v508
  %1024 = vmatprep.subr.mxu0 0.0
  %1025 = vmatpush1.msra.mxu0 %v509
  %1026 = vmatprep.subr.mxu0 0.0
  %1027 = vmatpush1.msra.mxu0 %v510
  %1028 = vmatprep.subr.mxu0 0.0
  %1029 = vmatpush1.msra.mxu0 %v511
  %1030 = vmatprep.subr.mxu0 0.0
  %1031 = vmatpush1.msra.mxu0 %v512
  %1032 = vmatprep.subr.mxu0 0.0
  %1033 = vmatpush1.msra.mxu0 %v513
  %1034 = vmatprep.subr.mxu0 0.0
  %1035 = vmatpush1.msra.mxu0 %v514
  %1036 = vmatprep.subr.mxu0 0.0
  %1037 = vmatpush1.msra.mxu0 %v515
  %1038 = vmatprep.subr.mxu0 0.0
  %1039 = vmatpush1.msra.mxu0 0.0
  %1040 = vmatprep.subr.mxu0 0.0
  %1041 = vmatpush1.msra.mxu0 0.0
  %1042 = vmatprep.subr.mxu0 0.0
  %1043 = vmatpush1.msra.mxu0 0.0
  %1044 = vmatprep.subr.mxu0 0.0
  %1045 = vmatpush1.msra.mxu0 0.0
  %1046 = vmatprep.subr.mxu0 0.0
  %1047 = vmatpush1.msra.mxu0 0.0
  %1048 = vmatprep.subr.mxu0 0.0
  %1049 = vmatpush1.msra.mxu0 0.0
  %1050 = vmatprep.subr.mxu0 0.0
  %1051 = vmatpush1.msra.mxu0 0.0
  %1052 = vmatprep.subr.mxu0 0.0
  %1053 = vmatpush1.msra.mxu0 0.0
  %1054 = vmatprep.subr.mxu0 0.0
  %1055 = vmatpush1.msra.mxu0 0.0
  %1056 = vmatprep.subr.mxu0 0.0
  %1057 = vmatpush1.msra.mxu0 0.0
  %1058 = vmatprep.subr.mxu0 0.0
  %1059 = vmatpush1.msra.mxu0 0.0
  %1060 = vmatprep.subr.mxu0 0.0
  %1061 = vmatpush1.msra.mxu0 0.0
  %1062 = vmatprep.subr.mxu0 0.0
  %1063 = vmatpush1.msra.mxu0 0.0
  %1064 = vmatprep.subr.mxu0 0.0
  %1065 = vmatpush1.msra.mxu0 0.0
  %1066 = vmatprep.subr.mxu0 0.0
  %1067 = vmatpush1.msra.mxu0 0.0
  %1068 = vmatprep.subr.mxu0 0.0
  %1069 = vmatpush1.msra.mxu0 0.0
  %1070 = vmatprep.subr.mxu0 0.0
  %1071 = vmatpush1.msra.mxu0 0.0
  %1072 = vmatprep.subr.mxu0 0.0
  %1073 = vmatpush1.msra.mxu0 0.0
  %1074 = vmatprep.subr.mxu0 0.0
  %1075 = vmatpush1.msra.mxu0 0.0
  %1076 = vmatprep.subr.mxu0 0.0
  %1077 = vmatpush1.msra.mxu0 0.0
  %1078 = vmatprep.subr.mxu0 0.0
  %1079 = vmatpush1.msra.mxu0 0.0
  %1080 = vmatprep.subr.mxu0 0.0
  %1081 = vmatpush1.msra.mxu0 0.0
  %1082 = vmatprep.subr.mxu0 0.0
  %1083 = vmatpush1.msra.mxu0 0.0
  %1084 = vmatprep.subr.mxu0 0.0
  %1085 = vmatpush1.msra.mxu0 0.0
  %1086 = vmatprep.mubr.f32.mxu0 0.0
  %1087 = vmatmul.mubr.f32.gmra.mrb[0].mxu0 %v1020
  %v1088 = vpop.f32.mrb[0].mxu0
  %v1089 = vadd.f32 0.0, %v1088
  %v1090 = vpop.f32.mrb[0].mxu0
  %1091 = vdwg.mxu0
  %1092 = vmatprep.subr.mxu0 0.0
  %1093 = vmatpush1.msra.mxu0 %v516
  %1094 = vmatprep.subr.mxu0 0.0
  %1095 = vmatpush1.msra.mxu0 %v517
  %1096 = vmatprep.subr.mxu0 0.0
  %1097 = vmatpush1.msra.mxu0 %v518
  %1098 = vmatprep.subr.mxu0 0.0
  %1099 = vmatpush1.msra.mxu0 %v519
  %1100 = vmatprep.subr.mxu0 0.0
  %1101 = vmatpush1.msra.mxu0 %v520
  %1102 = vmatprep.subr.mxu0 0.0
  %1103 = vmatpush1.msra.mxu0 %v521
  %1104 = vmatprep.subr.mxu0 0.0
  %1105 = vmatpush1.msra.mxu0 %v522
  %1106 = vmatprep.subr.mxu0 0.0
  %1107 = vmatpush1.msra.mxu0 %v523
  %1108 = vmatprep.subr.mxu0 0.0
  %1109 = vmatpush1.msra.mxu0 0.0
  %1110 = vmatprep.subr.mxu0 0.0
  %1111 = vmatpush1.msra.mxu0 0.0
  %1112 = vmatprep.subr.mxu0 0.0
  %1113 = vmatpush1.msra.mxu0 0.0
  %1114 = vmatprep.subr.mxu0 0.0
  %1115 = vmatpush1.msra.mxu0 0.0
  %1116 = vmatprep.subr.mxu0 0.0
  %1117 = vmatpush1.msra.mxu0 0.0
  %1118 = vmatprep.subr.mxu0 0.0
  %1119 = vmatpush1.msra.mxu0 0.0
  %1120 = vmatprep.subr.mxu0 0.0
  %1121 = vmatpush1.msra.mxu0 0.0
  %1122 = vmatprep.subr.mxu0 0.0
  %1123 = vmatpush1.msra.mxu0 0.0
  %1124 = vmatprep.subr.mxu0 0.0
  %1125 = vmatpush1.msra.mxu0 0.0
  %1126 = vmatprep.subr.mxu0 0.0
  %1127 = vmatpush1.msra.mxu0 0.0
  %1128 = vmatprep.subr.mxu0 0.0
  %1129 = vmatpush1.msra.mxu0 0.0
  %1130 = vmatprep.subr.mxu0 0.0
  %1131 = vmatpush1.msra.mxu0 0.0
  %1132 = vmatprep.subr.mxu0 0.0
  %1133 = vmatpush1.msra.mxu0 0.0
  %1134 = vmatprep.subr.mxu0 0.0
  %1135 = vmatpush1.msra.mxu0 0.0
  %1136 = vmatprep.subr.mxu0 0.0
  %1137 = vmatpush1.msra.mxu0 0.0
  %1138 = vmatprep.subr.mxu0 0.0
  %1139 = vmatpush1.msra.mxu0 0.0
  %1140 = vmatprep.subr.mxu0 0.0
  %1141 = vmatpush1.msra.mxu0 0.0
  %1142 = vmatprep.subr.mxu0 0.0
  %1143 = vmatpush1.msra.mxu0 0.0
  %1144 = vmatprep.subr.mxu0 0.0
  %1145 = vmatpush1.msra.mxu0 0.0
  %1146 = vmatprep.subr.mxu0 0.0
  %1147 = vmatpush1.msra.mxu0 0.0
  %1148 = vmatprep.subr.mxu0 0.0
  %1149 = vmatpush1.msra.mxu0 0.0
  %1150 = vmatprep.subr.mxu0 0.0
  %1151 = vmatpush1.msra.mxu0 0.0
  %1152 = vmatprep.subr.mxu0 0.0
  %1153 = vmatpush1.msra.mxu0 0.0
  %1154 = vmatprep.subr.mxu0 0.0
  %1155 = vmatpush1.msra.mxu0 0.0
  %1156 = vmatprep.mubr.f32.mxu0 0.0
  %1157 = vmatmul.mubr.f32.gmra.mrb[0].mxu0 %v1020
  %v1158 = vpop.f32.mrb[0].mxu0
  %v1159 = vadd.f32 %v529, %v1158
  %v1160 = vpop.f32.mrb[0].mxu0
  %1161 = vdwg.mxu0
  %v1162 = vadd.f32 %v1017, %v1089
  %v1163 = vxor.u32 %v1162, 2147483648
  %v1164 = vmul.f32 %v1163, 1.442695
  %v1165 = vpow.pop %v1164
  %v1166 = vadd.f32 %v1165, 1.0
  %v1167 = vrcp.pop %v1166
  %v1168 = vmul.f32 1.0, %v1167
  %1169 = vrot.lane.b32.xlu0 %v1168, 64
  %v1170 = vpop.permute.xlu0 %1169
  %v1171 = vmul.f32 %v1168, %v1159
  %v1172 = vadd.f32 %v1018, %v1171
  %v1173 = vtanh.pop %v1172
  %v1174 = vsub.f32 1.0, %v1170
  %v1175 = vmul.f32 %v1174, %v1173
  %v1176 = vmul.f32 %v1170, %v1015
  %v1177 = vadd.f32 %v1175, %v1176
  %1178 = vst.msk [vmem:[#allocation3 + $0x18] sm:$0xff] %vm448, %v1177
  %v1179 = vld [vmem:[#allocation2 + $0x40] sm:$0xff]
  %v1180 = vld [vmem:[#allocation2 + $0x48] sm:$0xff]
  %v1182 = vsel %vm448, %v1177, 0
  %1184 = vmatprep.subr.mxu0 0.0
  %1185 = vmatpush1.msra.mxu0 %v508
  %1186 = vmatprep.subr.mxu0 0.0
  %1187 = vmatpush1.msra.mxu0 %v509
  %1188 = vmatprep.subr.mxu0 0.0
  %1189 = vmatpush1.msra.mxu0 %v510
  %1190 = vmatprep.subr.mxu0 0.0
  %1191 = vmatpush1.msra.mxu0 %v511
  %1192 = vmatprep.subr.mxu0 0.0
  %1193 = vmatpush1.msra.mxu0 %v512
  %1194 = vmatprep.subr.mxu0 0.0
  %1195 = vmatpush1.msra.mxu0 %v513
  %1196 = vmatprep.subr.mxu0 0.0
  %1197 = vmatpush1.msra.mxu0 %v514
  %1198 = vmatprep.subr.mxu0 0.0
  %1199 = vmatpush1.msra.mxu0 %v515
  %1200 = vmatprep.subr.mxu0 0.0
  %1201 = vmatpush1.msra.mxu0 0.0
  %1202 = vmatprep.subr.mxu0 0.0
  %1203 = vmatpush1.msra.mxu0 0.0
  %1204 = vmatprep.subr.mxu0 0.0
  %1205 = vmatpush1.msra.mxu0 0.0
  %1206 = vmatprep.subr.mxu0 0.0
  %1207 = vmatpush1.msra.mxu0 0.0
  %1208 = vmatprep.subr.mxu0 0.0
  %1209 = vmatpush1.msra.mxu0 0.0
  %1210 = vmatprep.subr.mxu0 0.0
  %1211 = vmatpush1.msra.mxu0 0.0
  %1212 = vmatprep.subr.mxu0 0.0
  %1213 = vmatpush1.msra.mxu0 0.0
  %1214 = vmatprep.subr.mxu0 0.0
  %1215 = vmatpush1.msra.mxu0 0.0
  %1216 = vmatprep.subr.mxu0 0.0
  %1217 = vmatpush1.msra.mxu0 0.0
  %1218 = vmatprep.subr.mxu0 0.0
  %1219 = vmatpush1.msra.mxu0 0.0
  %1220 = vmatprep.subr.mxu0 0.0
  %1221 = vmatpush1.msra.mxu0 0.0
  %1222 = vmatprep.subr.mxu0 0.0
  %1223 = vmatpush1.msra.mxu0 0.0
  %1224 = vmatprep.subr.mxu0 0.0
  %1225 = vmatpush1.msra.mxu0 0.0
  %1226 = vmatprep.subr.mxu0 0.0
  %1227 = vmatpush1.msra.mxu0 0.0
  %1228 = vmatprep.subr.mxu0 0.0
  %1229 = vmatpush1.msra.mxu0 0.0
  %1230 = vmatprep.subr.mxu0 0.0
  %1231 = vmatpush1.msra.mxu0 0.0
  %1232 = vmatprep.subr.mxu0 0.0
  %1233 = vmatpush1.msra.mxu0 0.0
  %1234 = vmatprep.subr.mxu0 0.0
  %1235 = vmatpush1.msra.mxu0 0.0
  %1236 = vmatprep.subr.mxu0 0.0
  %1237 = vmatpush1.msra.mxu0 0.0
  %1238 = vmatprep.subr.mxu0 0.0
  %1239 = vmatpush1.msra.mxu0 0.0
  %1240 = vmatprep.subr.mxu0 0.0
  %1241 = vmatpush1.msra.mxu0 0.0
  %1242 = vmatprep.subr.mxu0 0.0
  %1243 = vmatpush1.msra.mxu0 0.0
  %1244 = vmatprep.subr.mxu0 0.0
  %1245 = vmatpush1.msra.mxu0 0.0
  %1246 = vmatprep.subr.mxu0 0.0
  %1247 = vmatpush1.msra.mxu0 0.0
  %1248 = vmatprep.mubr.f32.mxu0 0.0
  %1249 = vmatmul.mubr.f32.gmra.mrb[0].mxu0 %v1182
  %v1250 = vpop.f32.mrb[0].mxu0
  %v1251 = vadd.f32 0.0, %v1250
  %v1252 = vpop.f32.mrb[0].mxu0
  %1253 = vdwg.mxu0
  %1254 = vmatprep.subr.mxu0 0.0
  %1255 = vmatpush1.msra.mxu0 %v516
  %1256 = vmatprep.subr.mxu0 0.0
  %1257 = vmatpush1.msra.mxu0 %v517
  %1258 = vmatprep.subr.mxu0 0.0
  %1259 = vmatpush1.msra.mxu0 %v518
  %1260 = vmatprep.subr.mxu0 0.0
  %1261 = vmatpush1.msra.mxu0 %v519
  %1262 = vmatprep.subr.mxu0 0.0
  %1263 = vmatpush1.msra.mxu0 %v520
  %1264 = vmatprep.subr.mxu0 0.0
  %1265 = vmatpush1.msra.mxu0 %v521
  %1266 = vmatprep.subr.mxu0 0.0
  %1267 = vmatpush1.msra.mxu0 %v522
  %1268 = vmatprep.subr.mxu0 0.0
  %1269 = vmatpush1.msra.mxu0 %v523
  %1270 = vmatprep.subr.mxu0 0.0
  %1271 = vmatpush1.msra.mxu0 0.0
  %1272 = vmatprep.subr.mxu0 0.0
  %1273 = vmatpush1.msra.mxu0 0.0
  %1274 = vmatprep.subr.mxu0 0.0
  %1275 = vmatpush1.msra.mxu0 0.0
  %1276 = vmatprep.subr.mxu0 0.0
  %1277 = vmatpush1.msra.mxu0 0.0
  %1278 = vmatprep.subr.mxu0 0.0
  %1279 = vmatpush1.msra.mxu0 0.0
  %1280 = vmatprep.subr.mxu0 0.0
  %1281 = vmatpush1.msra.mxu0 0.0
  %1282 = vmatprep.subr.mxu0 0.0
  %1283 = vmatpush1.msra.mxu0 0.0
  %1284 = vmatprep.subr.mxu0 0.0
  %1285 = vmatpush1.msra.mxu0 0.0
  %1286 = vmatprep.subr.mxu0 0.0
  %1287 = vmatpush1.msra.mxu0 0.0
  %1288 = vmatprep.subr.mxu0 0.0
  %1289 = vmatpush1.msra.mxu0 0.0
  %1290 = vmatprep.subr.mxu0 0.0
  %1291 = vmatpush1.msra.mxu0 0.0
  %1292 = vmatprep.subr.mxu0 0.0
  %1293 = vmatpush1.msra.mxu0 0.0
  %1294 = vmatprep.subr.mxu0 0.0
  %1295 = vmatpush1.msra.mxu0 0.0
  %1296 = vmatprep.subr.mxu0 0.0
  %1297 = vmatpush1.msra.mxu0 0.0
  %1298 = vmatprep.subr.mxu0 0.0
  %1299 = vmatpush1.msra.mxu0 0.0
  %1300 = vmatprep.subr.mxu0 0.0
  %1301 = vmatpush1.msra.mxu0 0.0
  %1302 = vmatprep.subr.mxu0 0.0
  %1303 = vmatpush1.msra.mxu0 0.0
  %1304 = vmatprep.subr.mxu0 0.0
  %1305 = vmatpush1.msra.mxu0 0.0
  %1306 = vmatprep.subr.mxu0 0.0
  %1307 = vmatpush1.msra.mxu0 0.0
  %1308 = vmatprep.subr.mxu0 0.0
  %1309 = vmatpush1.msra.mxu0 0.0
  %1310 = vmatprep.subr.mxu0 0.0
  %1311 = vmatpush1.msra.mxu0 0.0
  %1312 = vmatprep.subr.mxu0 0.0
  %1313 = vmatpush1.msra.mxu0 0.0
  %1314 = vmatprep.subr.mxu0 0.0
  %1315 = vmatpush1.msra.mxu0 0.0
  %1316 = vmatprep.subr.mxu0 0.0
  %1317 = vmatpush1.msra.mxu0 0.0
  %1318 = vmatprep.mubr.f32.mxu0 0.0
  %1319 = vmatmul.mubr.f32.gmra.mrb[0].mxu0 %v1182
  %v1320 = vpop.f32.mrb[0].mxu0
  %v1321 = vadd.f32 %v529, %v1320
  %v1322 = vpop.f32.mrb[0].mxu0
  %1323 = vdwg.mxu0
  %v1324 = vadd.f32 %v1179, %v1251
  %v1325 = vxor.u32 %v1324, 2147483648
  %v1326 = vmul.f32 %v1325, 1.442695
  %v1327 = vpow.pop %v1326
  %v1328 = vadd.f32 %v1327, 1.0
  %v1329 = vrcp.pop %v1328
  %v1330 = vmul.f32 1.0, %v1329
  %1331 = vrot.lane.b32.xlu0 %v1330, 64
  %v1332 = vpop.permute.xlu0 %1331
  %v1333 = vmul.f32 %v1330, %v1321
  %v1334 = vadd.f32 %v1180, %v1333
  %v1335 = vtanh.pop %v1334
  %v1336 = vsub.f32 1.0, %v1332
  %v1337 = vmul.f32 %v1336, %v1335
  %v1338 = vmul.f32 %v1332, %v1177
  %v1339 = vadd.f32 %v1337, %v1338
  %1340 = vst.msk [vmem:[#allocation3 + $0x20] sm:$0xff] %vm448, %v1339
  %v1341 = vld [vmem:[#allocation2 + $0x50] sm:$0xff]
  %v1342 = vld [vmem:[#allocation2 + $0x58] sm:$0xff]
  %v1344 = vsel %vm448, %v1339, 0
  %1346 = vmatprep.subr.mxu0 0.0
  %1347 = vmatpush1.msra.mxu0 %v508
  %1348 = vmatprep.subr.mxu0 0.0
  %1349 = vmatpush1.msra.mxu0 %v509
  %1350 = vmatprep.subr.mxu0 0.0
  %1351 = vmatpush1.msra.mxu0 %v510
  %1352 = vmatprep.subr.mxu0 0.0
  %1353 = vmatpush1.msra.mxu0 %v511
  %1354 = vmatprep.subr.mxu0 0.0
  %1355 = vmatpush1.msra.mxu0 %v512
  %1356 = vmatprep.subr.mxu0 0.0
  %1357 = vmatpush1.msra.mxu0 %v513
  %1358 = vmatprep.subr.mxu0 0.0
  %1359 = vmatpush1.msra.mxu0 %v514
  %1360 = vmatprep.subr.mxu0 0.0
  %1361 = vmatpush1.msra.mxu0 %v515
  %1362 = vmatprep.subr.mxu0 0.0
  %1363 = vmatpush1.msra.mxu0 0.0
  %1364 = vmatprep.subr.mxu0 0.0
  %1365 = vmatpush1.msra.mxu0 0.0
  %1366 = vmatprep.subr.mxu0 0.0
  %1367 = vmatpush1.msra.mxu0 0.0
  %1368 = vmatprep.subr.mxu0 0.0
  %1369 = vmatpush1.msra.mxu0 0.0
  %1370 = vmatprep.subr.mxu0 0.0
  %1371 = vmatpush1.msra.mxu0 0.0
  %1372 = vmatprep.subr.mxu0 0.0
  %1373 = vmatpush1.msra.mxu0 0.0
  %1374 = vmatprep.subr.mxu0 0.0
  %1375 = vmatpush1.msra.mxu0 0.0
  %1376 = vmatprep.subr.mxu0 0.0
  %1377 = vmatpush1.msra.mxu0 0.0
  %1378 = vmatprep.subr.mxu0 0.0
  %1379 = vmatpush1.msra.mxu0 0.0
  %1380 = vmatprep.subr.mxu0 0.0
  %1381 = vmatpush1.msra.mxu0 0.0
  %1382 = vmatprep.subr.mxu0 0.0
  %1383 = vmatpush1.msra.mxu0 0.0
  %1384 = vmatprep.subr.mxu0 0.0
  %1385 = vmatpush1.msra.mxu0 0.0
  %1386 = vmatprep.subr.mxu0 0.0
  %1387 = vmatpush1.msra.mxu0 0.0
  %1388 = vmatprep.subr.mxu0 0.0
  %1389 = vmatpush1.msra.mxu0 0.0
  %1390 = vmatprep.subr.mxu0 0.0
  %1391 = vmatpush1.msra.mxu0 0.0
  %1392 = vmatprep.subr.mxu0 0.0
  %1393 = vmatpush1.msra.mxu0 0.0
  %1394 = vmatprep.subr.mxu0 0.0
  %1395 = vmatpush1.msra.mxu0 0.0
  %1396 = vmatprep.subr.mxu0 0.0
  %1397 = vmatpush1.msra.mxu0 0.0
  %1398 = vmatprep.subr.mxu0 0.0
  %1399 = vmatpush1.msra.mxu0 0.0
  %1400 = vmatprep.subr.mxu0 0.0
  %1401 = vmatpush1.msra.mxu0 0.0
  %1402 = vmatprep.subr.mxu0 0.0
  %1403 = vmatpush1.msra.mxu0 0.0
  %1404 = vmatprep.subr.mxu0 0.0
  %1405 = vmatpush1.msra.mxu0 0.0
  %1406 = vmatprep.subr.mxu0 0.0
  %1407 = vmatpush1.msra.mxu0 0.0
  %1408 = vmatprep.subr.mxu0 0.0
  %1409 = vmatpush1.msra.mxu0 0.0
  %1410 = vmatprep.mubr.f32.mxu0 0.0
  %1411 = vmatmul.mubr.f32.gmra.mrb[0].mxu0 %v1344
  %v1412 = vpop.f32.mrb[0].mxu0
  %v1413 = vadd.f32 0.0, %v1412
  %v1414 = vpop.f32.mrb[0].mxu0
  %1415 = vdwg.mxu0
  %1416 = vmatprep.subr.mxu0 0.0
  %1417 = vmatpush1.msra.mxu0 %v516
  %1418 = vmatprep.subr.mxu0 0.0
  %1419 = vmatpush1.msra.mxu0 %v517
  %1420 = vmatprep.subr.mxu0 0.0
  %1421 = vmatpush1.msra.mxu0 %v518
  %1422 = vmatprep.subr.mxu0 0.0
  %1423 = vmatpush1.msra.mxu0 %v519
  %1424 = vmatprep.subr.mxu0 0.0
  %1425 = vmatpush1.msra.mxu0 %v520
  %1426 = vmatprep.subr.mxu0 0.0
  %1427 = vmatpush1.msra.mxu0 %v521
  %1428 = vmatprep.subr.mxu0 0.0
  %1429 = vmatpush1.msra.mxu0 %v522
  %1430 = vmatprep.subr.mxu0 0.0
  %1431 = vmatpush1.msra.mxu0 %v523
  %1432 = vmatprep.subr.mxu0 0.0
  %1433 = vmatpush1.msra.mxu0 0.0
  %1434 = vmatprep.subr.mxu0 0.0
  %1435 = vmatpush1.msra.mxu0 0.0
  %1436 = vmatprep.subr.mxu0 0.0
  %1437 = vmatpush1.msra.mxu0 0.0
  %1438 = vmatprep.subr.mxu0 0.0
  %1439 = vmatpush1.msra.mxu0 0.0
  %1440 = vmatprep.subr.mxu0 0.0
  %1441 = vmatpush1.msra.mxu0 0.0
  %1442 = vmatprep.subr.mxu0 0.0
  %1443 = vmatpush1.msra.mxu0 0.0
  %1444 = vmatprep.subr.mxu0 0.0
  %1445 = vmatpush1.msra.mxu0 0.0
  %1446 = vmatprep.subr.mxu0 0.0
  %1447 = vmatpush1.msra.mxu0 0.0
  %1448 = vmatprep.subr.mxu0 0.0
  %1449 = vmatpush1.msra.mxu0 0.0
  %1450 = vmatprep.subr.mxu0 0.0
  %1451 = vmatpush1.msra.mxu0 0.0
  %1452 = vmatprep.subr.mxu0 0.0
  %1453 = vmatpush1.msra.mxu0 0.0
  %1454 = vmatprep.subr.mxu0 0.0
  %1455 = vmatpush1.msra.mxu0 0.0
  %1456 = vmatprep.subr.mxu0 0.0
  %1457 = vmatpush1.msra.mxu0 0.0
  %1458 = vmatprep.subr.mxu0 0.0
  %1459 = vmatpush1.msra.mxu0 0.0
  %1460 = vmatprep.subr.mxu0 0.0
  %1461 = vmatpush1.msra.mxu0 0.0
  %1462 = vmatprep.subr.mxu0 0.0
  %1463 = vmatpush1.msra.mxu0 0.0
  %1464 = vmatprep.subr.mxu0 0.0
  %1465 = vmatpush1.msra.mxu0 0.0
  %1466 = vmatprep.subr.mxu0 0.0
  %1467 = vmatpush1.msra.mxu0 0.0
  %1468 = vmatprep.subr.mxu0 0.0
  %1469 = vmatpush1.msra.mxu0 0.0
  %1470 = vmatprep.subr.mxu0 0.0
  %1471 = vmatpush1.msra.mxu0 0.0
  %1472 = vmatprep.subr.mxu0 0.0
  %1473 = vmatpush1.msra.mxu0 0.0
  %1474 = vmatprep.subr.mxu0 0.0
  %1475 = vmatpush1.msra.mxu0 0.0
  %1476 = vmatprep.subr.mxu0 0.0
  %1477 = vmatpush1.msra.mxu0 0.0
  %1478 = vmatprep.subr.mxu0 0.0
  %1479 = vmatpush1.msra.mxu0 0.0
  %1480 = vmatprep.mubr.f32.mxu0 0.0
  %1481 = vmatmul.mubr.f32.gmra.mrb[0].mxu0 %v1344
  %v1482 = vpop.f32.mrb[0].mxu0
  %v1483 = vadd.f32 %v529, %v1482
  %v1484 = vpop.f32.mrb[0].mxu0
  %1485 = vdwg.mxu0
  %v1486 = vadd.f32 %v1341, %v1413
  %v1487 = vxor.u32 %v1486, 2147483648
  %v1488 = vmul.f32 %v1487, 1.442695
  %v1489 = vpow.pop %v1488
  %v1490 = vadd.f32 %v1489, 1.0
  %v1491 = vrcp.pop %v1490
  %v1492 = vmul.f32 1.0, %v1491
  %1493 = vrot.lane.b32.xlu0 %v1492, 64
  %v1494 = vpop.permute.xlu0 %1493
  %v1495 = vmul.f32 %v1492, %v1483
  %v1496 = vadd.f32 %v1342, %v1495
  %v1497 = vtanh.pop %v1496
  %v1498 = vsub.f32 1.0, %v1494
  %v1499 = vmul.f32 %v1498, %v1497
  %v1500 = vmul.f32 %v1494, %v1339
  %v1501 = vadd.f32 %v1499, %v1500
  %1502 = vst.msk [vmem:[#allocation3 + $0x28] sm:$0xff] %vm448, %v1501
  %v1503 = vld [vmem:[#allocation2 + $0x60] sm:$0xff]
  %v1504 = vld [vmem:[#allocation2 + $0x68] sm:$0xff]
  %v1506 = vsel %vm448, %v1501, 0
  %1508 = vmatprep.subr.mxu0 0.0
  %1509 = vmatpush1.msra.mxu0 %v508
  %1510 = vmatprep.subr.mxu0 0.0
  %1511 = vmatpush1.msra.mxu0 %v509
  %1512 = vmatprep.subr.mxu0 0.0
  %1513 = vmatpush1.msra.mxu0 %v510
  %1514 = vmatprep.subr.mxu0 0.0
  %1515 = vmatpush1.msra.mxu0 %v511
  %1516 = vmatprep.subr.mxu0 0.0
  %1517 = vmatpush1.msra.mxu0 %v512
  %1518 = vmatprep.subr.mxu0 0.0
  %1519 = vmatpush1.msra.mxu0 %v513
  %1520 = vmatprep.subr.mxu0 0.0
  %1521 = vmatpush1.msra.mxu0 %v514
  %1522 = vmatprep.subr.mxu0 0.0
  %1523 = vmatpush1.msra.mxu0 %v515
  %1524 = vmatprep.subr.mxu0 0.0
  %1525 = vmatpush1.msra.mxu0 0.0
  %1526 = vmatprep.subr.mxu0 0.0
  %1527 = vmatpush1.msra.mxu0 0.0
  %1528 = vmatprep.subr.mxu0 0.0
  %1529 = vmatpush1.msra.mxu0 0.0
  %1530 = vmatprep.subr.mxu0 0.0
  %1531 = vmatpush1.msra.mxu0 0.0
  %1532 = vmatprep.subr.mxu0 0.0
  %1533 = vmatpush1.msra.mxu0 0.0
  %1534 = vmatprep.subr.mxu0 0.0
  %1535 = vmatpush1.msra.mxu0 0.0
  %1536 = vmatprep.subr.mxu0 0.0
  %1537 = vmatpush1.msra.mxu0 0.0
  %1538 = vmatprep.subr.mxu0 0.0
  %1539 = vmatpush1.msra.mxu0 0.0
  %1540 = vmatprep.subr.mxu0 0.0
  %1541 = vmatpush1.msra.mxu0 0.0
  %1542 = vmatprep.subr.mxu0 0.0
  %1543 = vmatpush1.msra.mxu0 0.0
  %1544 = vmatprep.subr.mxu0 0.0
  %1545 = vmatpush1.msra.mxu0 0.0
  %1546 = vmatprep.subr.mxu0 0.0
  %1547 = vmatpush1.msra.mxu0 0.0
  %1548 = vmatprep.subr.mxu0 0.0
  %1549 = vmatpush1.msra.mxu0 0.0
  %1550 = vmatprep.subr.mxu0 0.0
  %1551 = vmatpush1.msra.mxu0 0.0
  %1552 = vmatprep.subr.mxu0 0.0
  %1553 = vmatpush1.msra.mxu0 0.0
  %1554 = vmatprep.subr.mxu0 0.0
  %1555 = vmatpush1.msra.mxu0 0.0
  %1556 = vmatprep.subr.mxu0 0.0
  %1557 = vmatpush1.msra.mxu0 0.0
  %1558 = vmatprep.subr.mxu0 0.0
  %1559 = vmatpush1.msra.mxu0 0.0
  %1560 = vmatprep.subr.mxu0 0.0
  %1561 = vmatpush1.msra.mxu0 0.0
  %1562 = vmatprep.subr.mxu0 0.0
  %1563 = vmatpush1.msra.mxu0 0.0
  %1564 = vmatprep.subr.mxu0 0.0
  %1565 = vmatpush1.msra.mxu0 0.0
  %1566 = vmatprep.subr.mxu0 0.0
  %1567 = vmatpush1.msra.mxu0 0.0
  %1568 = vmatprep.subr.mxu0 0.0
  %1569 = vmatpush1.msra.mxu0 0.0
  %1570 = vmatprep.subr.mxu0 0.0
  %1571 = vmatpush1.msra.mxu0 0.0
  %1572 = vmatprep.mubr.f32.mxu0 0.0
  %1573 = vmatmul.mubr.f32.gmra.mrb[0].mxu0 %v1506
  %v1574 = vpop.f32.mrb[0].mxu0
  %v1575 = vadd.f32 0.0, %v1574
  %v1576 = vpop.f32.mrb[0].mxu0
  %1577 = vdwg.mxu0
  %1578 = vmatprep.subr.mxu0 0.0
  %1579 = vmatpush1.msra.mxu0 %v516
  %1580 = vmatprep.subr.mxu0 0.0
  %1581 = vmatpush1.msra.mxu0 %v517
  %1582 = vmatprep.subr.mxu0 0.0
  %1583 = vmatpush1.msra.mxu0 %v518
  %1584 = vmatprep.subr.mxu0 0.0
  %1585 = vmatpush1.msra.mxu0 %v519
  %1586 = vmatprep.subr.mxu0 0.0
  %1587 = vmatpush1.msra.mxu0 %v520
  %1588 = vmatprep.subr.mxu0 0.0
  %1589 = vmatpush1.msra.mxu0 %v521
  %1590 = vmatprep.subr.mxu0 0.0
  %1591 = vmatpush1.msra.mxu0 %v522
  %1592 = vmatprep.subr.mxu0 0.0
  %1593 = vmatpush1.msra.mxu0 %v523
  %1594 = vmatprep.subr.mxu0 0.0
  %1595 = vmatpush1.msra.mxu0 0.0
  %1596 = vmatprep.subr.mxu0 0.0
  %1597 = vmatpush1.msra.mxu0 0.0
  %1598 = vmatprep.subr.mxu0 0.0
  %1599 = vmatpush1.msra.mxu0 0.0
  %1600 = vmatprep.subr.mxu0 0.0
  %1601 = vmatpush1.msra.mxu0 0.0
  %1602 = vmatprep.subr.mxu0 0.0
  %1603 = vmatpush1.msra.mxu0 0.0
  %1604 = vmatprep.subr.mxu0 0.0
  %1605 = vmatpush1.msra.mxu0 0.0
  %1606 = vmatprep.subr.mxu0 0.0
  %1607 = vmatpush1.msra.mxu0 0.0
  %1608 = vmatprep.subr.mxu0 0.0
  %1609 = vmatpush1.msra.mxu0 0.0
  %1610 = vmatprep.subr.mxu0 0.0
  %1611 = vmatpush1.msra.mxu0 0.0
  %1612 = vmatprep.subr.mxu0 0.0
  %1613 = vmatpush1.msra.mxu0 0.0
  %1614 = vmatprep.subr.mxu0 0.0
  %1615 = vmatpush1.msra.mxu0 0.0
  %1616 = vmatprep.subr.mxu0 0.0
  %1617 = vmatpush1.msra.mxu0 0.0
  %1618 = vmatprep.subr.mxu0 0.0
  %1619 = vmatpush1.msra.mxu0 0.0
  %1620 = vmatprep.subr.mxu0 0.0
  %1621 = vmatpush1.msra.mxu0 0.0
  %1622 = vmatprep.subr.mxu0 0.0
  %1623 = vmatpush1.msra.mxu0 0.0
  %1624 = vmatprep.subr.mxu0 0.0
  %1625 = vmatpush1.msra.mxu0 0.0
  %1626 = vmatprep.subr.mxu0 0.0
  %1627 = vmatpush1.msra.mxu0 0.0
  %1628 = vmatprep.subr.mxu0 0.0
  %1629 = vmatpush1.msra.mxu0 0.0
  %1630 = vmatprep.subr.mxu0 0.0
  %1631 = vmatpush1.msra.mxu0 0.0
  %1632 = vmatprep.subr.mxu0 0.0
  %1633 = vmatpush1.msra.mxu0 0.0
  %1634 = vmatprep.subr.mxu0 0.0
  %1635 = vmatpush1.msra.mxu0 0.0
  %1636 = vmatprep.subr.mxu0 0.0
  %1637 = vmatpush1.msra.mxu0 0.0
  %1638 = vmatprep.subr.mxu0 0.0
  %1639 = vmatpush1.msra.mxu0 0.0
  %1640 = vmatprep.subr.mxu0 0.0
  %1641 = vmatpush1.msra.mxu0 0.0
  %1642 = vmatprep.mubr.f32.mxu0 0.0
  %1643 = vmatmul.mubr.f32.gmra.mrb[0].mxu0 %v1506
  %v1644 = vpop.f32.mrb[0].mxu0
  %v1645 = vadd.f32 %v529, %v1644
  %v1646 = vpop.f32.mrb[0].mxu0
  %1647 = vdwg.mxu0
  %v1648 = vadd.f32 %v1503, %v1575
  %v1649 = vxor.u32 %v1648, 2147483648
  %v1650 = vmul.f32 %v1649, 1.442695
  %v1651 = vpow.pop %v1650
  %v1652 = vadd.f32 %v1651, 1.0
  %v1653 = vrcp.pop %v1652
  %v1654 = vmul.f32 1.0, %v1653
  %1655 = vrot.lane.b32.xlu0 %v1654, 64
  %v1656 = vpop.permute.xlu0 %1655
  %v1657 = vmul.f32 %v1654, %v1645
  %v1658 = vadd.f32 %v1504, %v1657
  %v1659 = vtanh.pop %v1658
  %v1660 = vsub.f32 1.0, %v1656
  %v1661 = vmul.f32 %v1660, %v1659
  %v1662 = vmul.f32 %v1656, %v1501
  %v1663 = vadd.f32 %v1661, %v1662
  %1664 = vst.msk [vmem:[#allocation3 + $0x30] sm:$0xff] %vm448, %v1663
  %v1665 = vld [vmem:[#allocation2 + $0x70] sm:$0xff]
  %v1666 = vld [vmem:[#allocation2 + $0x78] sm:$0xff]
  %v1668 = vsel %vm448, %v1663, 0
  %1670 = vmatprep.subr.mxu0 0.0
  %1671 = vmatpush1.msra.mxu0 %v508
  %1672 = vmatprep.subr.mxu0 0.0
  %1673 = vmatpush1.msra.mxu0 %v509
  %1674 = vmatprep.subr.mxu0 0.0
  %1675 = vmatpush1.msra.mxu0 %v510
  %1676 = vmatprep.subr.mxu0 0.0
  %1677 = vmatpush1.msra.mxu0 %v511
  %1678 = vmatprep.subr.mxu0 0.0
  %1679 = vmatpush1.msra.mxu0 %v512
  %1680 = vmatprep.subr.mxu0 0.0
  %1681 = vmatpush1.msra.mxu0 %v513
  %1682 = vmatprep.subr.mxu0 0.0
  %1683 = vmatpush1.msra.mxu0 %v514
  %1684 = vmatprep.subr.mxu0 0.0
  %1685 = vmatpush1.msra.mxu0 %v515
  %1686 = vmatprep.subr.mxu0 0.0
  %1687 = vmatpush1.msra.mxu0 0.0
  %1688 = vmatprep.subr.mxu0 0.0
  %1689 = vmatpush1.msra.mxu0 0.0
  %1690 = vmatprep.subr.mxu0 0.0
  %1691 = vmatpush1.msra.mxu0 0.0
  %1692 = vmatprep.subr.mxu0 0.0
  %1693 = vmatpush1.msra.mxu0 0.0
  %1694 = vmatprep.subr.mxu0 0.0
  %1695 = vmatpush1.msra.mxu0 0.0
  %1696 = vmatprep.subr.mxu0 0.0
  %1697 = vmatpush1.msra.mxu0 0.0
  %1698 = vmatprep.subr.mxu0 0.0
  %1699 = vmatpush1.msra.mxu0 0.0
  %1700 = vmatprep.subr.mxu0 0.0
  %1701 = vmatpush1.msra.mxu0 0.0
  %1702 = vmatprep.subr.mxu0 0.0
  %1703 = vmatpush1.msra.mxu0 0.0
  %1704 = vmatprep.subr.mxu0 0.0
  %1705 = vmatpush1.msra.mxu0 0.0
  %1706 = vmatprep.subr.mxu0 0.0
  %1707 = vmatpush1.msra.mxu0 0.0
  %1708 = vmatprep.subr.mxu0 0.0
  %1709 = vmatpush1.msra.mxu0 0.0
  %1710 = vmatprep.subr.mxu0 0.0
  %1711 = vmatpush1.msra.mxu0 0.0
  %1712 = vmatprep.subr.mxu0 0.0
  %1713 = vmatpush1.msra.mxu0 0.0
  %1714 = vmatprep.subr.mxu0 0.0
  %1715 = vmatpush1.msra.mxu0 0.0
  %1716 = vmatprep.subr.mxu0 0.0
  %1717 = vmatpush1.msra.mxu0 0.0
  %1718 = vmatprep.subr.mxu0 0.0
  %1719 = vmatpush1.msra.mxu0 0.0
  %1720 = vmatprep.subr.mxu0 0.0
  %1721 = vmatpush1.msra.mxu0 0.0
  %1722 = vmatprep.subr.mxu0 0.0
  %1723 = vmatpush1.msra.mxu0 0.0
  %1724 = vmatprep.subr.mxu0 0.0
  %1725 = vmatpush1.msra.mxu0 0.0
  %1726 = vmatprep.subr.mxu0 0.0
  %1727 = vmatpush1.msra.mxu0 0.0
  %1728 = vmatprep.subr.mxu0 0.0
  %1729 = vmatpush1.msra.mxu0 0.0
  %1730 = vmatprep.subr.mxu0 0.0
  %1731 = vmatpush1.msra.mxu0 0.0
  %1732 = vmatprep.subr.mxu0 0.0
  %1733 = vmatpush1.msra.mxu0 0.0
  %1734 = vmatprep.mubr.f32.mxu0 0.0
  %1735 = vmatmul.mubr.f32.gmra.mrb[0].mxu0 %v1668
  %v1736 = vpop.f32.mrb[0].mxu0
  %v1737 = vadd.f32 0.0, %v1736
  %v1738 = vpop.f32.mrb[0].mxu0
  %1739 = vdwg.mxu0
  %1740 = vmatprep.subr.mxu0 0.0
  %1741 = vmatpush1.msra.mxu0 %v516
  %1742 = vmatprep.subr.mxu0 0.0
  %1743 = vmatpush1.msra.mxu0 %v517
  %1744 = vmatprep.subr.mxu0 0.0
  %1745 = vmatpush1.msra.mxu0 %v518
  %1746 = vmatprep.subr.mxu0 0.0
  %1747 = vmatpush1.msra.mxu0 %v519
  %1748 = vmatprep.subr.mxu0 0.0
  %1749 = vmatpush1.msra.mxu0 %v520
  %1750 = vmatprep.subr.mxu0 0.0
  %1751 = vmatpush1.msra.mxu0 %v521
  %1752 = vmatprep.subr.mxu0 0.0
  %1753 = vmatpush1.msra.mxu0 %v522
  %1754 = vmatprep.subr.mxu0 0.0
  %1755 = vmatpush1.msra.mxu0 %v523
  %1756 = vmatprep.subr.mxu0 0.0
  %1757 = vmatpush1.msra.mxu0 0.0
  %1758 = vmatprep.subr.mxu0 0.0
  %1759 = vmatpush1.msra.mxu0 0.0
  %1760 = vmatprep.subr.mxu0 0.0
  %1761 = vmatpush1.msra.mxu0 0.0
  %1762 = vmatprep.subr.mxu0 0.0
  %1763 = vmatpush1.msra.mxu0 0.0
  %1764 = vmatprep.subr.mxu0 0.0
  %1765 = vmatpush1.msra.mxu0 0.0
  %1766 = vmatprep.subr.mxu0 0.0
  %1767 = vmatpush1.msra.mxu0 0.0
  %1768 = vmatprep.subr.mxu0 0.0
  %1769 = vmatpush1.msra.mxu0 0.0
  %1770 = vmatprep.subr.mxu0 0.0
  %1771 = vmatpush1.msra.mxu0 0.0
  %1772 = vmatprep.subr.mxu0 0.0
  %1773 = vmatpush1.msra.mxu0 0.0
  %1774 = vmatprep.subr.mxu0 0.0
  %1775 = vmatpush1.msra.mxu0 0.0
  %1776 = vmatprep.subr.mxu0 0.0
  %1777 = vmatpush1.msra.mxu0 0.0
  %1778 = vmatprep.subr.mxu0 0.0
  %1779 = vmatpush1.msra.mxu0 0.0
  %1780 = vmatprep.subr.mxu0 0.0
  %1781 = vmatpush1.msra.mxu0 0.0
  %1782 = vmatprep.subr.mxu0 0.0
  %1783 = vmatpush1.msra.mxu0 0.0
  %1784 = vmatprep.subr.mxu0 0.0
  %1785 = vmatpush1.msra.mxu0 0.0
  %1786 = vmatprep.subr.mxu0 0.0
  %1787 = vmatpush1.msra.mxu0 0.0
  %1788 = vmatprep.subr.mxu0 0.0
  %1789 = vmatpush1.msra.mxu0 0.0
  %1790 = vmatprep.subr.mxu0 0.0
  %1791 = vmatpush1.msra.mxu0 0.0
  %1792 = vmatprep.subr.mxu0 0.0
  %1793 = vmatpush1.msra.mxu0 0.0
  %1794 = vmatprep.subr.mxu0 0.0
  %1795 = vmatpush1.msra.mxu0 0.0
  %1796 = vmatprep.subr.mxu0 0.0
  %1797 = vmatpush1.msra.mxu0 0.0
  %1798 = vmatprep.subr.mxu0 0.0
  %1799 = vmatpush1.msra.mxu0 0.0
  %1800 = vmatprep.subr.mxu0 0.0
  %1801 = vmatpush1.msra.mxu0 0.0
  %1802 = vmatprep.subr.mxu0 0.0
  %1803 = vmatpush1.msra.mxu0 0.0
  %1804 = vmatprep.mubr.f32.mxu0 0.0
  %1805 = vmatmul.mubr.f32.gmra.mrb[0].mxu0 %v1668
  %v1806 = vpop.f32.mrb[0].mxu0
  %v1807 = vadd.f32 %v529, %v1806
  %v1808 = vpop.f32.mrb[0].mxu0
  %1809 = vdwg.mxu0
  %v1810 = vadd.f32 %v1665, %v1737
  %v1811 = vxor.u32 %v1810, 2147483648
  %v1812 = vmul.f32 %v1811, 1.442695
  %v1813 = vpow.pop %v1812
  %v1814 = vadd.f32 %v1813, 1.0
  %v1815 = vrcp.pop %v1814
  %v1816 = vmul.f32 1.0, %v1815
  %1817 = vrot.lane.b32.xlu0 %v1816, 64
  %v1818 = vpop.permute.xlu0 %1817
  %v1819 = vmul.f32 %v1816, %v1807
  %v1820 = vadd.f32 %v1666, %v1819
  %v1821 = vtanh.pop %v1820
  %v1822 = vsub.f32 1.0, %v1818
  %v1823 = vmul.f32 %v1822, %v1821
  %v1824 = vmul.f32 %v1818, %v1663
  %v1825 = vadd.f32 %v1823, %v1824
  %1826 = vst.msk [vmem:[#allocation3 + $0x38] sm:$0xff] %vm448, %v1825
  %v1827 = vld [vmem:[#allocation2 + $0x80] sm:$0xff]
  %v1828 = vld [vmem:[#allocation2 + $0x88] sm:$0xff]
  %v1830 = vsel %vm448, %v1825, 0
  %1832 = vmatprep.subr.mxu0 0.0
  %1833 = vmatpush1.msra.mxu0 %v508
  %1834 = vmatprep.subr.mxu0 0.0
  %1835 = vmatpush1.msra.mxu0 %v509
  %1836 = vmatprep.subr.mxu0 0.0
  %1837 = vmatpush1.msra.mxu0 %v510
  %1838 = vmatprep.subr.mxu0 0.0
  %1839 = vmatpush1.msra.mxu0 %v511
  %1840 = vmatprep.subr.mxu0 0.0
  %1841 = vmatpush1.msra.mxu0 %v512
  %1842 = vmatprep.subr.mxu0 0.0
  %1843 = vmatpush1.msra.mxu0 %v513
  %1844 = vmatprep.subr.mxu0 0.0
  %1845 = vmatpush1.msra.mxu0 %v514
  %1846 = vmatprep.subr.mxu0 0.0
  %1847 = vmatpush1.msra.mxu0 %v515
  %1848 = vmatprep.subr.mxu0 0.0
  %1849 = vmatpush1.msra.mxu0 0.0
  %1850 = vmatprep.subr.mxu0 0.0
  %1851 = vmatpush1.msra.mxu0 0.0
  %1852 = vmatprep.subr.mxu0 0.0
  %1853 = vmatpush1.msra.mxu0 0.0
  %1854 = vmatprep.subr.mxu0 0.0
  %1855 = vmatpush1.msra.mxu0 0.0
  %1856 = vmatprep.subr.mxu0 0.0
  %1857 = vmatpush1.msra.mxu0 0.0
  %1858 = vmatprep.subr.mxu0 0.0
  %1859 = vmatpush1.msra.mxu0 0.0
  %1860 = vmatprep.subr.mxu0 0.0
  %1861 = vmatpush1.msra.mxu0 0.0
  %1862 = vmatprep.subr.mxu0 0.0
  %1863 = vmatpush1.msra.mxu0 0.0
  %1864 = vmatprep.subr.mxu0 0.0
  %1865 = vmatpush1.msra.mxu0 0.0
  %1866 = vmatprep.subr.mxu0 0.0
  %1867 = vmatpush1.msra.mxu0 0.0
  %1868 = vmatprep.subr.mxu0 0.0
  %1869 = vmatpush1.msra.mxu0 0.0
  %1870 = vmatprep.subr.mxu0 0.0
  %1871 = vmatpush1.msra.mxu0 0.0
  %1872 = vmatprep.subr.mxu0 0.0
  %1873 = vmatpush1.msra.mxu0 0.0
  %1874 = vmatprep.subr.mxu0 0.0
  %1875 = vmatpush1.msra.mxu0 0.0
  %1876 = vmatprep.subr.mxu0 0.0
  %1877 = vmatpush1.msra.mxu0 0.0
  %1878 = vmatprep.subr.mxu0 0.0
  %1879 = vmatpush1.msra.mxu0 0.0
  %1880 = vmatprep.subr.mxu0 0.0
  %1881 = vmatpush1.msra.mxu0 0.0
  %1882 = vmatprep.subr.mxu0 0.0
  %1883 = vmatpush1.msra.mxu0 0.0
  %1884 = vmatprep.subr.mxu0 0.0
  %1885 = vmatpush1.msra.mxu0 0.0
  %1886 = vmatprep.subr.mxu0 0.0
  %1887 = vmatpush1.msra.mxu0 0.0
  %1888 = vmatprep.subr.mxu0 0.0
  %1889 = vmatpush1.msra.mxu0 0.0
  %1890 = vmatprep.subr.mxu0 0.0
  %1891 = vmatpush1.msra.mxu0 0.0
  %1892 = vmatprep.subr.mxu0 0.0
  %1893 = vmatpush1.msra.mxu0 0.0
  %1894 = vmatprep.subr.mxu0 0.0
  %1895 = vmatpush1.msra.mxu0 0.0
  %1896 = vmatprep.mubr.f32.mxu0 0.0
  %1897 = vmatmul.mubr.f32.gmra.mrb[0].mxu0 %v1830
  %v1898 = vpop.f32.mrb[0].mxu0
  %v1899 = vadd.f32 0.0, %v1898
  %v1900 = vpop.f32.mrb[0].mxu0
  %1901 = vdwg.mxu0
  %1902 = vmatprep.subr.mxu0 0.0
  %1903 = vmatpush1.msra.mxu0 %v516
  %1904 = vmatprep.subr.mxu0 0.0
  %1905 = vmatpush1.msra.mxu0 %v517
  %1906 = vmatprep.subr.mxu0 0.0
  %1907 = vmatpush1.msra.mxu0 %v518
  %1908 = vmatprep.subr.mxu0 0.0
  %1909 = vmatpush1.msra.mxu0 %v519
  %1910 = vmatprep.subr.mxu0 0.0
  %1911 = vmatpush1.msra.mxu0 %v520
  %1912 = vmatprep.subr.mxu0 0.0
  %1913 = vmatpush1.msra.mxu0 %v521
  %1914 = vmatprep.subr.mxu0 0.0
  %1915 = vmatpush1.msra.mxu0 %v522
  %1916 = vmatprep.subr.mxu0 0.0
  %1917 = vmatpush1.msra.mxu0 %v523
  %1918 = vmatprep.subr.mxu0 0.0
  %1919 = vmatpush1.msra.mxu0 0.0
  %1920 = vmatprep.subr.mxu0 0.0
  %1921 = vmatpush1.msra.mxu0 0.0
  %1922 = vmatprep.subr.mxu0 0.0
  %1923 = vmatpush1.msra.mxu0 0.0
  %1924 = vmatprep.subr.mxu0 0.0
  %1925 = vmatpush1.msra.mxu0 0.0
  %1926 = vmatprep.subr.mxu0 0.0
  %1927 = vmatpush1.msra.mxu0 0.0
  %1928 = vmatprep.subr.mxu0 0.0
  %1929 = vmatpush1.msra.mxu0 0.0
  %1930 = vmatprep.subr.mxu0 0.0
  %1931 = vmatpush1.msra.mxu0 0.0
  %1932 = vmatprep.subr.mxu0 0.0
  %1933 = vmatpush1.msra.mxu0 0.0
  %1934 = vmatprep.subr.mxu0 0.0
  %1935 = vmatpush1.msra.mxu0 0.0
  %1936 = vmatprep.subr.mxu0 0.0
  %1937 = vmatpush1.msra.mxu0 0.0
  %1938 = vmatprep.subr.mxu0 0.0
  %1939 = vmatpush1.msra.mxu0 0.0
  %1940 = vmatprep.subr.mxu0 0.0
  %1941 = vmatpush1.msra.mxu0 0.0
  %1942 = vmatprep.subr.mxu0 0.0
  %1943 = vmatpush1.msra.mxu0 0.0
  %1944 = vmatprep.subr.mxu0 0.0
  %1945 = vmatpush1.msra.mxu0 0.0
  %1946 = vmatprep.subr.mxu0 0.0
  %1947 = vmatpush1.msra.mxu0 0.0
  %1948 = vmatprep.subr.mxu0 0.0
  %1949 = vmatpush1.msra.mxu0 0.0
  %1950 = vmatprep.subr.mxu0 0.0
  %1951 = vmatpush1.msra.mxu0 0.0
  %1952 = vmatprep.subr.mxu0 0.0
  %1953 = vmatpush1.msra.mxu0 0.0
  %1954 = vmatprep.subr.mxu0 0.0
  %1955 = vmatpush1.msra.mxu0 0.0
  %1956 = vmatprep.subr.mxu0 0.0
  %1957 = vmatpush1.msra.mxu0 0.0
  %1958 = vmatprep.subr.mxu0 0.0
  %1959 = vmatpush1.msra.mxu0 0.0
  %1960 = vmatprep.subr.mxu0 0.0
  %1961 = vmatpush1.msra.mxu0 0.0
  %1962 = vmatprep.subr.mxu0 0.0
  %1963 = vmatpush1.msra.mxu0 0.0
  %1964 = vmatprep.subr.mxu0 0.0
  %1965 = vmatpush1.msra.mxu0 0.0
  %1966 = vmatprep.mubr.f32.mxu0 0.0
  %1967 = vmatmul.mubr.f32.gmra.mrb[0].mxu0 %v1830
  %v1968 = vpop.f32.mrb[0].mxu0
  %v1969 = vadd.f32 %v529, %v1968
  %v1970 = vpop.f32.mrb[0].mxu0
  %1971 = vdwg.mxu0
  %v1972 = vadd.f32 %v1827, %v1899
  %v1973 = vxor.u32 %v1972, 2147483648
  %v1974 = vmul.f32 %v1973, 1.442695
  %v1975 = vpow.pop %v1974
  %v1976 = vadd.f32 %v1975, 1.0
  %v1977 = vrcp.pop %v1976
  %v1978 = vmul.f32 1.0, %v1977
  %1979 = vrot.lane.b32.xlu0 %v1978, 64
  %v1980 = vpop.permute.xlu0 %1979
  %v1981 = vmul.f32 %v1978, %v1969
  %v1982 = vadd.f32 %v1828, %v1981
  %v1983 = vtanh.pop %v1982
  %v1984 = vsub.f32 1.0, %v1980
  %v1985 = vmul.f32 %v1984, %v1983
  %v1986 = vmul.f32 %v1980, %v1825
  %v1987 = vadd.f32 %v1985, %v1986
  %1988 = vst.msk [vmem:[#allocation3 + $0x40] sm:$0xff] %vm448, %v1987
  %v1989 = vld [vmem:[#allocation2 + $0x90] sm:$0xff]
  %v1990 = vld [vmem:[#allocation2 + $0x98] sm:$0xff]
  %v1992 = vsel %vm448, %v1987, 0
  %1994 = vmatprep.subr.mxu0 0.0
  %1995 = vmatpush1.msra.mxu0 %v508
  %1996 = vmatprep.subr.mxu0 0.0
  %1997 = vmatpush1.msra.mxu0 %v509
  %1998 = vmatprep.subr.mxu0 0.0
  %1999 = vmatpush1.msra.mxu0 %v510
  %2000 = vmatprep.subr.mxu0 0.0
  %2001 = vmatpush1.msra.mxu0 %v511
  %2002 = vmatprep.subr.mxu0 0.0
  %2003 = vmatpush1.msra.mxu0 %v512
  %2004 = vmatprep.subr.mxu0 0.0
  %2005 = vmatpush1.msra.mxu0 %v513
  %2006 = vmatprep.subr.mxu0 0.0
  %2007 = vmatpush1.msra.mxu0 %v514
  %2008 = vmatprep.subr.mxu0 0.0
  %2009 = vmatpush1.msra.mxu0 %v515
  %2010 = vmatprep.subr.mxu0 0.0
  %2011 = vmatpush1.msra.mxu0 0.0
  %2012 = vmatprep.subr.mxu0 0.0
  %2013 = vmatpush1.msra.mxu0 0.0
  %2014 = vmatprep.subr.mxu0 0.0
  %2015 = vmatpush1.msra.mxu0 0.0
  %2016 = vmatprep.subr.mxu0 0.0
  %2017 = vmatpush1.msra.mxu0 0.0
  %2018 = vmatprep.subr.mxu0 0.0
  %2019 = vmatpush1.msra.mxu0 0.0
  %2020 = vmatprep.subr.mxu0 0.0
  %2021 = vmatpush1.msra.mxu0 0.0
  %2022 = vmatprep.subr.mxu0 0.0
  %2023 = vmatpush1.msra.mxu0 0.0
  %2024 = vmatprep.subr.mxu0 0.0
  %2025 = vmatpush1.msra.mxu0 0.0
  %2026 = vmatprep.subr.mxu0 0.0
  %2027 = vmatpush1.msra.mxu0 0.0
  %2028 = vmatprep.subr.mxu0 0.0
  %2029 = vmatpush1.msra.mxu0 0.0
  %2030 = vmatprep.subr.mxu0 0.0
  %2031 = vmatpush1.msra.mxu0 0.0
  %2032 = vmatprep.subr.mxu0 0.0
  %2033 = vmatpush1.msra.mxu0 0.0
  %2034 = vmatprep.subr.mxu0 0.0
  %2035 = vmatpush1.msra.mxu0 0.0
  %2036 = vmatprep.subr.mxu0 0.0
  %2037 = vmatpush1.msra.mxu0 0.0
  %2038 = vmatprep.subr.mxu0 0.0
  %2039 = vmatpush1.msra.mxu0 0.0
  %2040 = vmatprep.subr.mxu0 0.0
  %2041 = vmatpush1.msra.mxu0 0.0
  %2042 = vmatprep.subr.mxu0 0.0
  %2043 = vmatpush1.msra.mxu0 0.0
  %2044 = vmatprep.subr.mxu0 0.0
  %2045 = vmatpush1.msra.mxu0 0.0
  %2046 = vmatprep.subr.mxu0 0.0
  %2047 = vmatpush1.msra.mxu0 0.0
  %2048 = vmatprep.subr.mxu0 0.0
  %2049 = vmatpush1.msra.mxu0 0.0
  %2050 = vmatprep.subr.mxu0 0.0
  %2051 = vmatpush1.msra.mxu0 0.0
  %2052 = vmatprep.subr.mxu0 0.0
  %2053 = vmatpush1.msra.mxu0 0.0
  %2054 = vmatprep.subr.mxu0 0.0
  %2055 = vmatpush1.msra.mxu0 0.0
  %2056 = vmatprep.subr.mxu0 0.0
  %2057 = vmatpush1.msra.mxu0 0.0
  %2058 = vmatprep.mubr.f32.mxu0 0.0
  %2059 = vmatmul.mubr.f32.gmra.mrb[0].mxu0 %v1992
  %v2060 = vpop.f32.mrb[0].mxu0
  %v2061 = vadd.f32 0.0, %v2060
  %v2062 = vpop.f32.mrb[0].mxu0
  %2063 = vdwg.mxu0
  %2064 = vmatprep.subr.mxu0 0.0
  %2065 = vmatpush1.msra.mxu0 %v516
  %2066 = vmatprep.subr.mxu0 0.0
  %2067 = vmatpush1.msra.mxu0 %v517
  %2068 = vmatprep.subr.mxu0 0.0
  %2069 = vmatpush1.msra.mxu0 %v518
  %2070 = vmatprep.subr.mxu0 0.0
  %2071 = vmatpush1.msra.mxu0 %v519
  %2072 = vmatprep.subr.mxu0 0.0
  %2073 = vmatpush1.msra.mxu0 %v520
  %2074 = vmatprep.subr.mxu0 0.0
  %2075 = vmatpush1.msra.mxu0 %v521
  %2076 = vmatprep.subr.mxu0 0.0
  %2077 = vmatpush1.msra.mxu0 %v522
  %2078 = vmatprep.subr.mxu0 0.0
  %2079 = vmatpush1.msra.mxu0 %v523
  %2080 = vmatprep.subr.mxu0 0.0
  %2081 = vmatpush1.msra.mxu0 0.0
  %2082 = vmatprep.subr.mxu0 0.0
  %2083 = vmatpush1.msra.mxu0 0.0
  %2084 = vmatprep.subr.mxu0 0.0
  %2085 = vmatpush1.msra.mxu0 0.0
  %2086 = vmatprep.subr.mxu0 0.0
  %2087 = vmatpush1.msra.mxu0 0.0
  %2088 = vmatprep.subr.mxu0 0.0
  %2089 = vmatpush1.msra.mxu0 0.0
  %2090 = vmatprep.subr.mxu0 0.0
  %2091 = vmatpush1.msra.mxu0 0.0
  %2092 = vmatprep.subr.mxu0 0.0
  %2093 = vmatpush1.msra.mxu0 0.0
  %2094 = vmatprep.subr.mxu0 0.0
  %2095 = vmatpush1.msra.mxu0 0.0
  %2096 = vmatprep.subr.mxu0 0.0
  %2097 = vmatpush1.msra.mxu0 0.0
  %2098 = vmatprep.subr.mxu0 0.0
  %2099 = vmatpush1.msra.mxu0 0.0
  %2100 = vmatprep.subr.mxu0 0.0
  %2101 = vmatpush1.msra.mxu0 0.0
  %2102 = vmatprep.subr.mxu0 0.0
  %2103 = vmatpush1.msra.mxu0 0.0
  %2104 = vmatprep.subr.mxu0 0.0
  %2105 = vmatpush1.msra.mxu0 0.0
  %2106 = vmatprep.subr.mxu0 0.0
  %2107 = vmatpush1.msra.mxu0 0.0
  %2108 = vmatprep.subr.mxu0 0.0
  %2109 = vmatpush1.msra.mxu0 0.0
  %2110 = vmatprep.subr.mxu0 0.0
  %2111 = vmatpush1.msra.mxu0 0.0
  %2112 = vmatprep.subr.mxu0 0.0
  %2113 = vmatpush1.msra.mxu0 0.0
  %2114 = vmatprep.subr.mxu0 0.0
  %2115 = vmatpush1.msra.mxu0 0.0
  %2116 = vmatprep.subr.mxu0 0.0
  %2117 = vmatpush1.msra.mxu0 0.0
  %2118 = vmatprep.subr.mxu0 0.0
  %2119 = vmatpush1.msra.mxu0 0.0
  %2120 = vmatprep.subr.mxu0 0.0
  %2121 = vmatpush1.msra.mxu0 0.0
  %2122 = vmatprep.subr.mxu0 0.0
  %2123 = vmatpush1.msra.mxu0 0.0
  %2124 = vmatprep.subr.mxu0 0.0
  %2125 = vmatpush1.msra.mxu0 0.0
  %2126 = vmatprep.subr.mxu0 0.0
  %2127 = vmatpush1.msra.mxu0 0.0
  %2128 = vmatprep.mubr.f32.mxu0 0.0
  %2129 = vmatmul.mubr.f32.gmra.mrb[0].mxu0 %v1992
  %v2130 = vpop.f32.mrb[0].mxu0
  %v2131 = vadd.f32 %v529, %v2130
  %v2132 = vpop.f32.mrb[0].mxu0
  %2133 = vdwg.mxu0
  %v2134 = vadd.f32 %v1989, %v2061
  %v2135 = vxor.u32 %v2134, 2147483648
  %v2136 = vmul.f32 %v2135, 1.442695
  %v2137 = vpow.pop %v2136
  %v2138 = vadd.f32 %v2137, 1.0
  %v2139 = vrcp.pop %v2138
  %v2140 = vmul.f32 1.0, %v2139
  %2141 = vrot.lane.b32.xlu0 %v2140, 64
  %v2142 = vpop.permute.xlu0 %2141
  %v2143 = vmul.f32 %v2140, %v2131
  %v2144 = vadd.f32 %v1990, %v2143
  %v2145 = vtanh.pop %v2144
  %v2146 = vsub.f32 1.0, %v2142
  %v2147 = vmul.f32 %v2146, %v2145
  %v2148 = vmul.f32 %v2142, %v1987
  %v2149 = vadd.f32 %v2147, %v2148
  %2150 = vst.msk [vmem:[#allocation3 + $0x48] sm:$0xff] %vm448, %v2149
  %v2151 = vld [vmem:[#allocation2 + $0xa0] sm:$0xff]
  %v2152 = vld [vmem:[#allocation2 + $0xa8] sm:$0xff]
  %v2154 = vsel %vm448, %v2149, 0
  %2156 = vmatprep.subr.mxu0 0.0
  %2157 = vmatpush1.msra.mxu0 %v508
  %2158 = vmatprep.subr.mxu0 0.0
  %2159 = vmatpush1.msra.mxu0 %v509
  %2160 = vmatprep.subr.mxu0 0.0
  %2161 = vmatpush1.msra.mxu0 %v510
  %2162 = vmatprep.subr.mxu0 0.0
  %2163 = vmatpush1.msra.mxu0 %v511
  %2164 = vmatprep.subr.mxu0 0.0
  %2165 = vmatpush1.msra.mxu0 %v512
  %2166 = vmatprep.subr.mxu0 0.0
  %2167 = vmatpush1.msra.mxu0 %v513
  %2168 = vmatprep.subr.mxu0 0.0
  %2169 = vmatpush1.msra.mxu0 %v514
  %2170 = vmatprep.subr.mxu0 0.0
  %2171 = vmatpush1.msra.mxu0 %v515
  %2172 = vmatprep.subr.mxu0 0.0
  %2173 = vmatpush1.msra.mxu0 0.0
  %2174 = vmatprep.subr.mxu0 0.0
  %2175 = vmatpush1.msra.mxu0 0.0
  %2176 = vmatprep.subr.mxu0 0.0
  %2177 = vmatpush1.msra.mxu0 0.0
  %2178 = vmatprep.subr.mxu0 0.0
  %2179 = vmatpush1.msra.mxu0 0.0
  %2180 = vmatprep.subr.mxu0 0.0
  %2181 = vmatpush1.msra.mxu0 0.0
  %2182 = vmatprep.subr.mxu0 0.0
  %2183 = vmatpush1.msra.mxu0 0.0
  %2184 = vmatprep.subr.mxu0 0.0
  %2185 = vmatpush1.msra.mxu0 0.0
  %2186 = vmatprep.subr.mxu0 0.0
  %2187 = vmatpush1.msra.mxu0 0.0
  %2188 = vmatprep.subr.mxu0 0.0
  %2189 = vmatpush1.msra.mxu0 0.0
  %2190 = vmatprep.subr.mxu0 0.0
  %2191 = vmatpush1.msra.mxu0 0.0
  %2192 = vmatprep.subr.mxu0 0.0
  %2193 = vmatpush1.msra.mxu0 0.0
  %2194 = vmatprep.subr.mxu0 0.0
  %2195 = vmatpush1.msra.mxu0 0.0
  %2196 = vmatprep.subr.mxu0 0.0
  %2197 = vmatpush1.msra.mxu0 0.0
  %2198 = vmatprep.subr.mxu0 0.0
  %2199 = vmatpush1.msra.mxu0 0.0
  %2200 = vmatprep.subr.mxu0 0.0
  %2201 = vmatpush1.msra.mxu0 0.0
  %2202 = vmatprep.subr.mxu0 0.0
  %2203 = vmatpush1.msra.mxu0 0.0
  %2204 = vmatprep.subr.mxu0 0.0
  %2205 = vmatpush1.msra.mxu0 0.0
  %2206 = vmatprep.subr.mxu0 0.0
  %2207 = vmatpush1.msra.mxu0 0.0
  %2208 = vmatprep.subr.mxu0 0.0
  %2209 = vmatpush1.msra.mxu0 0.0
  %2210 = vmatprep.subr.mxu0 0.0
  %2211 = vmatpush1.msra.mxu0 0.0
  %2212 = vmatprep.subr.mxu0 0.0
  %2213 = vmatpush1.msra.mxu0 0.0
  %2214 = vmatprep.subr.mxu0 0.0
  %2215 = vmatpush1.msra.mxu0 0.0
  %2216 = vmatprep.subr.mxu0 0.0
  %2217 = vmatpush1.msra.mxu0 0.0
  %2218 = vmatprep.subr.mxu0 0.0
  %2219 = vmatpush1.msra.mxu0 0.0
  %2220 = vmatprep.mubr.f32.mxu0 0.0
  %2221 = vmatmul.mubr.f32.gmra.mrb[0].mxu0 %v2154
  %v2222 = vpop.f32.mrb[0].mxu0
  %v2223 = vadd.f32 0.0, %v2222
  %v2224 = vpop.f32.mrb[0].mxu0
  %2225 = vdwg.mxu0
  %2226 = vmatprep.subr.mxu0 0.0
  %2227 = vmatpush1.msra.mxu0 %v516
  %2228 = vmatprep.subr.mxu0 0.0
  %2229 = vmatpush1.msra.mxu0 %v517
  %2230 = vmatprep.subr.mxu0 0.0
  %2231 = vmatpush1.msra.mxu0 %v518
  %2232 = vmatprep.subr.mxu0 0.0
  %2233 = vmatpush1.msra.mxu0 %v519
  %2234 = vmatprep.subr.mxu0 0.0
  %2235 = vmatpush1.msra.mxu0 %v520
  %2236 = vmatprep.subr.mxu0 0.0
  %2237 = vmatpush1.msra.mxu0 %v521
  %2238 = vmatprep.subr.mxu0 0.0
  %2239 = vmatpush1.msra.mxu0 %v522
  %2240 = vmatprep.subr.mxu0 0.0
  %2241 = vmatpush1.msra.mxu0 %v523
  %2242 = vmatprep.subr.mxu0 0.0
  %2243 = vmatpush1.msra.mxu0 0.0
  %2244 = vmatprep.subr.mxu0 0.0
  %2245 = vmatpush1.msra.mxu0 0.0
  %2246 = vmatprep.subr.mxu0 0.0
  %2247 = vmatpush1.msra.mxu0 0.0
  %2248 = vmatprep.subr.mxu0 0.0
  %2249 = vmatpush1.msra.mxu0 0.0
  %2250 = vmatprep.subr.mxu0 0.0
  %2251 = vmatpush1.msra.mxu0 0.0
  %2252 = vmatprep.subr.mxu0 0.0
  %2253 = vmatpush1.msra.mxu0 0.0
  %2254 = vmatprep.subr.mxu0 0.0
  %2255 = vmatpush1.msra.mxu0 0.0
  %2256 = vmatprep.subr.mxu0 0.0
  %2257 = vmatpush1.msra.mxu0 0.0
  %2258 = vmatprep.subr.mxu0 0.0
  %2259 = vmatpush1.msra.mxu0 0.0
  %2260 = vmatprep.subr.mxu0 0.0
  %2261 = vmatpush1.msra.mxu0 0.0
  %2262 = vmatprep.subr.mxu0 0.0
  %2263 = vmatpush1.msra.mxu0 0.0
  %2264 = vmatprep.subr.mxu0 0.0
  %2265 = vmatpush1.msra.mxu0 0.0
  %2266 = vmatprep.subr.mxu0 0.0
  %2267 = vmatpush1.msra.mxu0 0.0
  %2268 = vmatprep.subr.mxu0 0.0
  %2269 = vmatpush1.msra.mxu0 0.0
  %2270 = vmatprep.subr.mxu0 0.0
  %2271 = vmatpush1.msra.mxu0 0.0
  %2272 = vmatprep.subr.mxu0 0.0
  %2273 = vmatpush1.msra.mxu0 0.0
  %2274 = vmatprep.subr.mxu0 0.0
  %2275 = vmatpush1.msra.mxu0 0.0
  %2276 = vmatprep.subr.mxu0 0.0
  %2277 = vmatpush1.msra.mxu0 0.0
  %2278 = vmatprep.subr.mxu0 0.0
  %2279 = vmatpush1.msra.mxu0 0.0
  %2280 = vmatprep.subr.mxu0 0.0
  %2281 = vmatpush1.msra.mxu0 0.0
  %2282 = vmatprep.subr.mxu0 0.0
  %2283 = vmatpush1.msra.mxu0 0.0
  %2284 = vmatprep.subr.mxu0 0.0
  %2285 = vmatpush1.msra.mxu0 0.0
  %2286 = vmatprep.subr.mxu0 0.0
  %2287 = vmatpush1.msra.mxu0 0.0
  %2288 = vmatprep.subr.mxu0 0.0
  %2289 = vmatpush1.msra.mxu0 0.0
  %2290 = vmatprep.mubr.f32.mxu0 0.0
  %2291 = vmatmul.mubr.f32.gmra.mrb[0].mxu0 %v2154
  %v2292 = vpop.f32.mrb[0].mxu0
  %v2293 = vadd.f32 %v529, %v2292
  %v2294 = vpop.f32.mrb[0].mxu0
  %2295 = vdwg.mxu0
  %v2296 = vadd.f32 %v2151, %v2223
  %v2297 = vxor.u32 %v2296, 2147483648
  %v2298 = vmul.f32 %v2297, 1.442695
  %v2299 = vpow.pop %v2298
  %v2300 = vadd.f32 %v2299, 1.0
  %v2301 = vrcp.pop %v2300
  %v2302 = vmul.f32 1.0, %v2301
  %2303 = vrot.lane.b32.xlu0 %v2302, 64
  %v2304 = vpop.permute.xlu0 %2303
  %v2305 = vmul.f32 %v2302, %v2293
  %v2306 = vadd.f32 %v2152, %v2305
  %v2307 = vtanh.pop %v2306
  %v2308 = vsub.f32 1.0, %v2304
  %v2309 = vmul.f32 %v2308, %v2307
  %v2310 = vmul.f32 %v2304, %v2149
  %v2311 = vadd.f32 %v2309, %v2310
  %2312 = vst.msk [vmem:[#allocation3 + $0x50] sm:$0xff] %vm448, %v2311
  %v2313 = vld [vmem:[#allocation2 + $0xb0] sm:$0xff]
  %v2314 = vld [vmem:[#allocation2 + $0xb8] sm:$0xff]
  %v2316 = vsel %vm448, %v2311, 0
  %2318 = vmatprep.subr.mxu0 0.0
  %2319 = vmatpush1.msra.mxu0 %v508
  %2320 = vmatprep.subr.mxu0 0.0
  %2321 = vmatpush1.msra.mxu0 %v509
  %2322 = vmatprep.subr.mxu0 0.0
  %2323 = vmatpush1.msra.mxu0 %v510
  %2324 = vmatprep.subr.mxu0 0.0
  %2325 = vmatpush1.msra.mxu0 %v511
  %2326 = vmatprep.subr.mxu0 0.0
  %2327 = vmatpush1.msra.mxu0 %v512
  %2328 = vmatprep.subr.mxu0 0.0
  %2329 = vmatpush1.msra.mxu0 %v513
  %2330 = vmatprep.subr.mxu0 0.0
  %2331 = vmatpush1.msra.mxu0 %v514
  %2332 = vmatprep.subr.mxu0 0.0
  %2333 = vmatpush1.msra.mxu0 %v515
  %2334 = vmatprep.subr.mxu0 0.0
  %2335 = vmatpush1.msra.mxu0 0.0
  %2336 = vmatprep.subr.mxu0 0.0
  %2337 = vmatpush1.msra.mxu0 0.0
  %2338 = vmatprep.subr.mxu0 0.0
  %2339 = vmatpush1.msra.mxu0 0.0
  %2340 = vmatprep.subr.mxu0 0.0
  %2341 = vmatpush1.msra.mxu0 0.0
  %2342 = vmatprep.subr.mxu0 0.0
  %2343 = vmatpush1.msra.mxu0 0.0
  %2344 = vmatprep.subr.mxu0 0.0
  %2345 = vmatpush1.msra.mxu0 0.0
  %2346 = vmatprep.subr.mxu0 0.0
  %2347 = vmatpush1.msra.mxu0 0.0
  %2348 = vmatprep.subr.mxu0 0.0
  %2349 = vmatpush1.msra.mxu0 0.0
  %2350 = vmatprep.subr.mxu0 0.0
  %2351 = vmatpush1.msra.mxu0 0.0
  %2352 = vmatprep.subr.mxu0 0.0
  %2353 = vmatpush1.msra.mxu0 0.0
  %2354 = vmatprep.subr.mxu0 0.0
  %2355 = vmatpush1.msra.mxu0 0.0
  %2356 = vmatprep.subr.mxu0 0.0
  %2357 = vmatpush1.msra.mxu0 0.0
  %2358 = vmatprep.subr.mxu0 0.0
  %2359 = vmatpush1.msra.mxu0 0.0
  %2360 = vmatprep.subr.mxu0 0.0
  %2361 = vmatpush1.msra.mxu0 0.0
  %2362 = vmatprep.subr.mxu0 0.0
  %2363 = vmatpush1.msra.mxu0 0.0
  %2364 = vmatprep.subr.mxu0 0.0
  %2365 = vmatpush1.msra.mxu0 0.0
  %2366 = vmatprep.subr.mxu0 0.0
  %2367 = vmatpush1.msra.mxu0 0.0
  %2368 = vmatprep.subr.mxu0 0.0
  %2369 = vmatpush1.msra.mxu0 0.0
  %2370 = vmatprep.subr.mxu0 0.0
  %2371 = vmatpush1.msra.mxu0 0.0
  %2372 = vmatprep.subr.mxu0 0.0
  %2373 = vmatpush1.msra.mxu0 0.0
  %2374 = vmatprep.subr.mxu0 0.0
  %2375 = vmatpush1.msra.mxu0 0.0
  %2376 = vmatprep.subr.mxu0 0.0
  %2377 = vmatpush1.msra.mxu0 0.0
  %2378 = vmatprep.subr.mxu0 0.0
  %2379 = vmatpush1.msra.mxu0 0.0
  %2380 = vmatprep.subr.mxu0 0.0
  %2381 = vmatpush1.msra.mxu0 0.0
  %2382 = vmatprep.mubr.f32.mxu0 0.0
  %2383 = vmatmul.mubr.f32.gmra.mrb[0].mxu0 %v2316
  %v2384 = vpop.f32.mrb[0].mxu0
  %v2385 = vadd.f32 0.0, %v2384
  %v2386 = vpop.f32.mrb[0].mxu0
  %2387 = vdwg.mxu0
  %2388 = vmatprep.subr.mxu0 0.0
  %2389 = vmatpush1.msra.mxu0 %v516
  %2390 = vmatprep.subr.mxu0 0.0
  %2391 = vmatpush1.msra.mxu0 %v517
  %2392 = vmatprep.subr.mxu0 0.0
  %2393 = vmatpush1.msra.mxu0 %v518
  %2394 = vmatprep.subr.mxu0 0.0
  %2395 = vmatpush1.msra.mxu0 %v519
  %2396 = vmatprep.subr.mxu0 0.0
  %2397 = vmatpush1.msra.mxu0 %v520
  %2398 = vmatprep.subr.mxu0 0.0
  %2399 = vmatpush1.msra.mxu0 %v521
  %2400 = vmatprep.subr.mxu0 0.0
  %2401 = vmatpush1.msra.mxu0 %v522
  %2402 = vmatprep.subr.mxu0 0.0
  %2403 = vmatpush1.msra.mxu0 %v523
  %2404 = vmatprep.subr.mxu0 0.0
  %2405 = vmatpush1.msra.mxu0 0.0
  %2406 = vmatprep.subr.mxu0 0.0
  %2407 = vmatpush1.msra.mxu0 0.0
  %2408 = vmatprep.subr.mxu0 0.0
  %2409 = vmatpush1.msra.mxu0 0.0
  %2410 = vmatprep.subr.mxu0 0.0
  %2411 = vmatpush1.msra.mxu0 0.0
  %2412 = vmatprep.subr.mxu0 0.0
  %2413 = vmatpush1.msra.mxu0 0.0
  %2414 = vmatprep.subr.mxu0 0.0
  %2415 = vmatpush1.msra.mxu0 0.0
  %2416 = vmatprep.subr.mxu0 0.0
  %2417 = vmatpush1.msra.mxu0 0.0
  %2418 = vmatprep.subr.mxu0 0.0
  %2419 = vmatpush1.msra.mxu0 0.0
  %2420 = vmatprep.subr.mxu0 0.0
  %2421 = vmatpush1.msra.mxu0 0.0
  %2422 = vmatprep.subr.mxu0 0.0
  %2423 = vmatpush1.msra.mxu0 0.0
  %2424 = vmatprep.subr.mxu0 0.0
  %2425 = vmatpush1.msra.mxu0 0.0
  %2426 = vmatprep.subr.mxu0 0.0
  %2427 = vmatpush1.msra.mxu0 0.0
  %2428 = vmatprep.subr.mxu0 0.0
  %2429 = vmatpush1.msra.mxu0 0.0
  %2430 = vmatprep.subr.mxu0 0.0
  %2431 = vmatpush1.msra.mxu0 0.0
  %2432 = vmatprep.subr.mxu0 0.0
  %2433 = vmatpush1.msra.mxu0 0.0
  %2434 = vmatprep.subr.mxu0 0.0
  %2435 = vmatpush1.msra.mxu0 0.0
  %2436 = vmatprep.subr.mxu0 0.0
  %2437 = vmatpush1.msra.mxu0 0.0
  %2438 = vmatprep.subr.mxu0 0.0
  %2439 = vmatpush1.msra.mxu0 0.0
  %2440 = vmatprep.subr.mxu0 0.0
  %2441 = vmatpush1.msra.mxu0 0.0
  %2442 = vmatprep.subr.mxu0 0.0
  %2443 = vmatpush1.msra.mxu0 0.0
  %2444 = vmatprep.subr.mxu0 0.0
  %2445 = vmatpush1.msra.mxu0 0.0
  %2446 = vmatprep.subr.mxu0 0.0
  %2447 = vmatpush1.msra.mxu0 0.0
  %2448 = vmatprep.subr.mxu0 0.0
  %2449 = vmatpush1.msra.mxu0 0.0
  %2450 = vmatprep.subr.mxu0 0.0
  %2451 = vmatpush1.msra.mxu0 0.0
  %2452 = vmatprep.mubr.f32.mxu0 0.0
  %2453 = vmatmul.mubr.f32.gmra.mrb[0].mxu0 %v2316
  %v2454 = vpop.f32.mrb[0].mxu0
  %v2455 = vadd.f32 %v529, %v2454
  %v2456 = vpop.f32.mrb[0].mxu0
  %2457 = vdwg.mxu0
  %v2458 = vadd.f32 %v2313, %v2385
  %v2459 = vxor.u32 %v2458, 2147483648
  %v2460 = vmul.f32 %v2459, 1.442695
  %v2461 = vpow.pop %v2460
  %v2462 = vadd.f32 %v2461, 1.0
  %v2463 = vrcp.pop %v2462
  %v2464 = vmul.f32 1.0, %v2463
  %2465 = vrot.lane.b32.xlu0 %v2464, 64
  %v2466 = vpop.permute.xlu0 %2465
  %v2467 = vmul.f32 %v2464, %v2455
  %v2468 = vadd.f32 %v2314, %v2467
  %v2469 = vtanh.pop %v2468
  %v2470 = vsub.f32 1.0, %v2466
  %v2471 = vmul.f32 %v2470, %v2469
  %v2472 = vmul.f32 %v2466, %v2311
  %v2473 = vadd.f32 %v2471, %v2472
  %2474 = vst.msk [vmem:[#allocation3 + $0x58] sm:$0xff] %vm448, %v2473
  %v2475 = vld [vmem:[#allocation2 + $0xc0] sm:$0xff]
  %v2476 = vld [vmem:[#allocation2 + $0xc8] sm:$0xff]
  %v2478 = vsel %vm448, %v2473, 0
  %2480 = vmatprep.subr.mxu0 0.0
  %2481 = vmatpush1.msra.mxu0 %v508
  %2482 = vmatprep.subr.mxu0 0.0
  %2483 = vmatpush1.msra.mxu0 %v509
  %2484 = vmatprep.subr.mxu0 0.0
  %2485 = vmatpush1.msra.mxu0 %v510
  %2486 = vmatprep.subr.mxu0 0.0
  %2487 = vmatpush1.msra.mxu0 %v511
  %2488 = vmatprep.subr.mxu0 0.0
  %2489 = vmatpush1.msra.mxu0 %v512
  %2490 = vmatprep.subr.mxu0 0.0
  %2491 = vmatpush1.msra.mxu0 %v513
  %2492 = vmatprep.subr.mxu0 0.0
  %2493 = vmatpush1.msra.mxu0 %v514
  %2494 = vmatprep.subr.mxu0 0.0
  %2495 = vmatpush1.msra.mxu0 %v515
  %2496 = vmatprep.subr.mxu0 0.0
  %2497 = vmatpush1.msra.mxu0 0.0
  %2498 = vmatprep.subr.mxu0 0.0
  %2499 = vmatpush1.msra.mxu0 0.0
  %2500 = vmatprep.subr.mxu0 0.0
  %2501 = vmatpush1.msra.mxu0 0.0
  %2502 = vmatprep.subr.mxu0 0.0
  %2503 = vmatpush1.msra.mxu0 0.0
  %2504 = vmatprep.subr.mxu0 0.0
  %2505 = vmatpush1.msra.mxu0 0.0
  %2506 = vmatprep.subr.mxu0 0.0
  %2507 = vmatpush1.msra.mxu0 0.0
  %2508 = vmatprep.subr.mxu0 0.0
  %2509 = vmatpush1.msra.mxu0 0.0
  %2510 = vmatprep.subr.mxu0 0.0
  %2511 = vmatpush1.msra.mxu0 0.0
  %2512 = vmatprep.subr.mxu0 0.0
  %2513 = vmatpush1.msra.mxu0 0.0
  %2514 = vmatprep.subr.mxu0 0.0
  %2515 = vmatpush1.msra.mxu0 0.0
  %2516 = vmatprep.subr.mxu0 0.0
  %2517 = vmatpush1.msra.mxu0 0.0
  %2518 = vmatprep.subr.mxu0 0.0
  %2519 = vmatpush1.msra.mxu0 0.0
  %2520 = vmatprep.subr.mxu0 0.0
  %2521 = vmatpush1.msra.mxu0 0.0
  %2522 = vmatprep.subr.mxu0 0.0
  %2523 = vmatpush1.msra.mxu0 0.0
  %2524 = vmatprep.subr.mxu0 0.0
  %2525 = vmatpush1.msra.mxu0 0.0
  %2526 = vmatprep.subr.mxu0 0.0
  %2527 = vmatpush1.msra.mxu0 0.0
  %2528 = vmatprep.subr.mxu0 0.0
  %2529 = vmatpush1.msra.mxu0 0.0
  %2530 = vmatprep.subr.mxu0 0.0
  %2531 = vmatpush1.msra.mxu0 0.0
  %2532 = vmatprep.subr.mxu0 0.0
  %2533 = vmatpush1.msra.mxu0 0.0
  %2534 = vmatprep.subr.mxu0 0.0
  %2535 = vmatpush1.msra.mxu0 0.0
  %2536 = vmatprep.subr.mxu0 0.0
  %2537 = vmatpush1.msra.mxu0 0.0
  %2538 = vmatprep.subr.mxu0 0.0
  %2539 = vmatpush1.msra.mxu0 0.0
  %2540 = vmatprep.subr.mxu0 0.0
  %2541 = vmatpush1.msra.mxu0 0.0
  %2542 = vmatprep.subr.mxu0 0.0
  %2543 = vmatpush1.msra.mxu0 0.0
  %2544 = vmatprep.mubr.f32.mxu0 0.0
  %2545 = vmatmul.mubr.f32.gmra.mrb[0].mxu0 %v2478
  %v2546 = vpop.f32.mrb[0].mxu0
  %v2547 = vadd.f32 0.0, %v2546
  %v2548 = vpop.f32.mrb[0].mxu0
  %2549 = vdwg.mxu0
  %2550 = vmatprep.subr.mxu0 0.0
  %2551 = vmatpush1.msra.mxu0 %v516
  %2552 = vmatprep.subr.mxu0 0.0
  %2553 = vmatpush1.msra.mxu0 %v517
  %2554 = vmatprep.subr.mxu0 0.0
  %2555 = vmatpush1.msra.mxu0 %v518
  %2556 = vmatprep.subr.mxu0 0.0
  %2557 = vmatpush1.msra.mxu0 %v519
  %2558 = vmatprep.subr.mxu0 0.0
  %2559 = vmatpush1.msra.mxu0 %v520
  %2560 = vmatprep.subr.mxu0 0.0
  %2561 = vmatpush1.msra.mxu0 %v521
  %2562 = vmatprep.subr.mxu0 0.0
  %2563 = vmatpush1.msra.mxu0 %v522
  %2564 = vmatprep.subr.mxu0 0.0
  %2565 = vmatpush1.msra.mxu0 %v523
  %2566 = vmatprep.subr.mxu0 0.0
  %2567 = vmatpush1.msra.mxu0 0.0
  %2568 = vmatprep.subr.mxu0 0.0
  %2569 = vmatpush1.msra.mxu0 0.0
  %2570 = vmatprep.subr.mxu0 0.0
  %2571 = vmatpush1.msra.mxu0 0.0
  %2572 = vmatprep.subr.mxu0 0.0
  %2573 = vmatpush1.msra.mxu0 0.0
  %2574 = vmatprep.subr.mxu0 0.0
  %2575 = vmatpush1.msra.mxu0 0.0
  %2576 = vmatprep.subr.mxu0 0.0
  %2577 = vmatpush1.msra.mxu0 0.0
  %2578 = vmatprep.subr.mxu0 0.0
  %2579 = vmatpush1.msra.mxu0 0.0
  %2580 = vmatprep.subr.mxu0 0.0
  %2581 = vmatpush1.msra.mxu0 0.0
  %2582 = vmatprep.subr.mxu0 0.0
  %2583 = vmatpush1.msra.mxu0 0.0
  %2584 = vmatprep.subr.mxu0 0.0
  %2585 = vmatpush1.msra.mxu0 0.0
  %2586 = vmatprep.subr.mxu0 0.0
  %2587 = vmatpush1.msra.mxu0 0.0
  %2588 = vmatprep.subr.mxu0 0.0
  %2589 = vmatpush1.msra.mxu0 0.0
  %2590 = vmatprep.subr.mxu0 0.0
  %2591 = vmatpush1.msra.mxu0 0.0
  %2592 = vmatprep.subr.mxu0 0.0
  %2593 = vmatpush1.msra.mxu0 0.0
  %2594 = vmatprep.subr.mxu0 0.0
  %2595 = vmatpush1.msra.mxu0 0.0
  %2596 = vmatprep.subr.mxu0 0.0
  %2597 = vmatpush1.msra.mxu0 0.0
  %2598 = vmatprep.subr.mxu0 0.0
  %2599 = vmatpush1.msra.mxu0 0.0
  %2600 = vmatprep.subr.mxu0 0.0
  %2601 = vmatpush1.msra.mxu0 0.0
  %2602 = vmatprep.subr.mxu0 0.0
  %2603 = vmatpush1.msra.mxu0 0.0
  %2604 = vmatprep.subr.mxu0 0.0
  %2605 = vmatpush1.msra.mxu0 0.0
  %2606 = vmatprep.subr.mxu0 0.0
  %2607 = vmatpush1.msra.mxu0 0.0
  %2608 = vmatprep.subr.mxu0 0.0
  %2609 = vmatpush1.msra.mxu0 0.0
  %2610 = vmatprep.subr.mxu0 0.0
  %2611 = vmatpush1.msra.mxu0 0.0
  %2612 = vmatprep.subr.mxu0 0.0
  %2613 = vmatpush1.msra.mxu0 0.0
  %2614 = vmatprep.mubr.f32.mxu0 0.0
  %2615 = vmatmul.mubr.f32.gmra.mrb[0].mxu0 %v2478
  %v2616 = vpop.f32.mrb[0].mxu0
  %v2617 = vadd.f32 %v529, %v2616
  %v2618 = vpop.f32.mrb[0].mxu0
  %2619 = vdwg.mxu0
  %v2620 = vadd.f32 %v2475, %v2547
  %v2621 = vxor.u32 %v2620, 2147483648
  %v2622 = vmul.f32 %v2621, 1.442695
  %v2623 = vpow.pop %v2622
  %v2624 = vadd.f32 %v2623, 1.0
  %v2625 = vrcp.pop %v2624
  %v2626 = vmul.f32 1.0, %v2625
  %2627 = vrot.lane.b32.xlu0 %v2626, 64
  %v2628 = vpop.permute.xlu0 %2627
  %v2629 = vmul.f32 %v2626, %v2617
  %v2630 = vadd.f32 %v2476, %v2629
  %v2631 = vtanh.pop %v2630
  %v2632 = vsub.f32 1.0, %v2628
  %v2633 = vmul.f32 %v2632, %v2631
  %v2634 = vmul.f32 %v2628, %v2473
  %v2635 = vadd.f32 %v2633, %v2634
  %2636 = vst.msk [vmem:[#allocation3 + $0x60] sm:$0xff] %vm448, %v2635
  %v2637 = vld [vmem:[#allocation2 + $0xd0] sm:$0xff]
  %v2638 = vld [vmem:[#allocation2 + $0xd8] sm:$0xff]
  %v2640 = vsel %vm448, %v2635, 0
  %2642 = vmatprep.subr.mxu0 0.0
  %2643 = vmatpush1.msra.mxu0 %v508
  %2644 = vmatprep.subr.mxu0 0.0
  %2645 = vmatpush1.msra.mxu0 %v509
  %2646 = vmatprep.subr.mxu0 0.0
  %2647 = vmatpush1.msra.mxu0 %v510
  %2648 = vmatprep.subr.mxu0 0.0
  %2649 = vmatpush1.msra.mxu0 %v511
  %2650 = vmatprep.subr.mxu0 0.0
  %2651 = vmatpush1.msra.mxu0 %v512
  %2652 = vmatprep.subr.mxu0 0.0
  %2653 = vmatpush1.msra.mxu0 %v513
  %2654 = vmatprep.subr.mxu0 0.0
  %2655 = vmatpush1.msra.mxu0 %v514
  %2656 = vmatprep.subr.mxu0 0.0
  %2657 = vmatpush1.msra.mxu0 %v515
  %2658 = vmatprep.subr.mxu0 0.0
  %2659 = vmatpush1.msra.mxu0 0.0
  %2660 = vmatprep.subr.mxu0 0.0
  %2661 = vmatpush1.msra.mxu0 0.0
  %2662 = vmatprep.subr.mxu0 0.0
  %2663 = vmatpush1.msra.mxu0 0.0
  %2664 = vmatprep.subr.mxu0 0.0
  %2665 = vmatpush1.msra.mxu0 0.0
  %2666 = vmatprep.subr.mxu0 0.0
  %2667 = vmatpush1.msra.mxu0 0.0
  %2668 = vmatprep.subr.mxu0 0.0
  %2669 = vmatpush1.msra.mxu0 0.0
  %2670 = vmatprep.subr.mxu0 0.0
  %2671 = vmatpush1.msra.mxu0 0.0
  %2672 = vmatprep.subr.mxu0 0.0
  %2673 = vmatpush1.msra.mxu0 0.0
  %2674 = vmatprep.subr.mxu0 0.0
  %2675 = vmatpush1.msra.mxu0 0.0
  %2676 = vmatprep.subr.mxu0 0.0
  %2677 = vmatpush1.msra.mxu0 0.0
  %2678 = vmatprep.subr.mxu0 0.0
  %2679 = vmatpush1.msra.mxu0 0.0
  %2680 = vmatprep.subr.mxu0 0.0
  %2681 = vmatpush1.msra.mxu0 0.0
  %2682 = vmatprep.subr.mxu0 0.0
  %2683 = vmatpush1.msra.mxu0 0.0
  %2684 = vmatprep.subr.mxu0 0.0
  %2685 = vmatpush1.msra.mxu0 0.0
  %2686 = vmatprep.subr.mxu0 0.0
  %2687 = vmatpush1.msra.mxu0 0.0
  %2688 = vmatprep.subr.mxu0 0.0
  %2689 = vmatpush1.msra.mxu0 0.0
  %2690 = vmatprep.subr.mxu0 0.0
  %2691 = vmatpush1.msra.mxu0 0.0
  %2692 = vmatprep.subr.mxu0 0.0
  %2693 = vmatpush1.msra.mxu0 0.0
  %2694 = vmatprep.subr.mxu0 0.0
  %2695 = vmatpush1.msra.mxu0 0.0
  %2696 = vmatprep.subr.mxu0 0.0
  %2697 = vmatpush1.msra.mxu0 0.0
  %2698 = vmatprep.subr.mxu0 0.0
  %2699 = vmatpush1.msra.mxu0 0.0
  %2700 = vmatprep.subr.mxu0 0.0
  %2701 = vmatpush1.msra.mxu0 0.0
  %2702 = vmatprep.subr.mxu0 0.0
  %2703 = vmatpush1.msra.mxu0 0.0
  %2704 = vmatprep.subr.mxu0 0.0
  %2705 = vmatpush1.msra.mxu0 0.0
  %2706 = vmatprep.mubr.f32.mxu0 0.0
  %2707 = vmatmul.mubr.f32.gmra.mrb[0].mxu0 %v2640
  %v2708 = vpop.f32.mrb[0].mxu0
  %v2709 = vadd.f32 0.0, %v2708
  %v2710 = vpop.f32.mrb[0].mxu0
  %2711 = vdwg.mxu0
  %2712 = vmatprep.subr.mxu0 0.0
  %2713 = vmatpush1.msra.mxu0 %v516
  %2714 = vmatprep.subr.mxu0 0.0
  %2715 = vmatpush1.msra.mxu0 %v517
  %2716 = vmatprep.subr.mxu0 0.0
  %2717 = vmatpush1.msra.mxu0 %v518
  %2718 = vmatprep.subr.mxu0 0.0
  %2719 = vmatpush1.msra.mxu0 %v519
  %2720 = vmatprep.subr.mxu0 0.0
  %2721 = vmatpush1.msra.mxu0 %v520
  %2722 = vmatprep.subr.mxu0 0.0
  %2723 = vmatpush1.msra.mxu0 %v521
  %2724 = vmatprep.subr.mxu0 0.0
  %2725 = vmatpush1.msra.mxu0 %v522
  %2726 = vmatprep.subr.mxu0 0.0
  %2727 = vmatpush1.msra.mxu0 %v523
  %2728 = vmatprep.subr.mxu0 0.0
  %2729 = vmatpush1.msra.mxu0 0.0
  %2730 = vmatprep.subr.mxu0 0.0
  %2731 = vmatpush1.msra.mxu0 0.0
  %2732 = vmatprep.subr.mxu0 0.0
  %2733 = vmatpush1.msra.mxu0 0.0
  %2734 = vmatprep.subr.mxu0 0.0
  %2735 = vmatpush1.msra.mxu0 0.0
  %2736 = vmatprep.subr.mxu0 0.0
  %2737 = vmatpush1.msra.mxu0 0.0
  %2738 = vmatprep.subr.mxu0 0.0
  %2739 = vmatpush1.msra.mxu0 0.0
  %2740 = vmatprep.subr.mxu0 0.0
  %2741 = vmatpush1.msra.mxu0 0.0
  %2742 = vmatprep.subr.mxu0 0.0
  %2743 = vmatpush1.msra.mxu0 0.0
  %2744 = vmatprep.subr.mxu0 0.0
  %2745 = vmatpush1.msra.mxu0 0.0
  %2746 = vmatprep.subr.mxu0 0.0
  %2747 = vmatpush1.msra.mxu0 0.0
  %2748 = vmatprep.subr.mxu0 0.0
  %2749 = vmatpush1.msra.mxu0 0.0
  %2750 = vmatprep.subr.mxu0 0.0
  %2751 = vmatpush1.msra.mxu0 0.0
  %2752 = vmatprep.subr.mxu0 0.0
  %2753 = vmatpush1.msra.mxu0 0.0
  %2754 = vmatprep.subr.mxu0 0.0
  %2755 = vmatpush1.msra.mxu0 0.0
  %2756 = vmatprep.subr.mxu0 0.0
  %2757 = vmatpush1.msra.mxu0 0.0
  %2758 = vmatprep.subr.mxu0 0.0
  %2759 = vmatpush1.msra.mxu0 0.0
  %2760 = vmatprep.subr.mxu0 0.0
  %2761 = vmatpush1.msra.mxu0 0.0
  %2762 = vmatprep.subr.mxu0 0.0
  %2763 = vmatpush1.msra.mxu0 0.0
  %2764 = vmatprep.subr.mxu0 0.0
  %2765 = vmatpush1.msra.mxu0 0.0
  %2766 = vmatprep.subr.mxu0 0.0
  %2767 = vmatpush1.msra.mxu0 0.0
  %2768 = vmatprep.subr.mxu0 0.0
  %2769 = vmatpush1.msra.mxu0 0.0
  %2770 = vmatprep.subr.mxu0 0.0
  %2771 = vmatpush1.msra.mxu0 0.0
  %2772 = vmatprep.subr.mxu0 0.0
  %2773 = vmatpush1.msra.mxu0 0.0
  %2774 = vmatprep.subr.mxu0 0.0
  %2775 = vmatpush1.msra.mxu0 0.0
  %2776 = vmatprep.mubr.f32.mxu0 0.0
  %2777 = vmatmul.mubr.f32.gmra.mrb[0].mxu0 %v2640
  %v2778 = vpop.f32.mrb[0].mxu0
  %v2779 = vadd.f32 %v529, %v2778
  %v2780 = vpop.f32.mrb[0].mxu0
  %2781 = vdwg.mxu0
  %v2782 = vadd.f32 %v2637, %v2709
  %v2783 = vxor.u32 %v2782, 2147483648
  %v2784 = vmul.f32 %v2783, 1.442695
  %v2785 = vpow.pop %v2784
  %v2786 = vadd.f32 %v2785, 1.0
  %v2787 = vrcp.pop %v2786
  %v2788 = vmul.f32 1.0, %v2787
  %2789 = vrot.lane.b32.xlu0 %v2788, 64
  %v2790 = vpop.permute.xlu0 %2789
  %v2791 = vmul.f32 %v2788, %v2779
  %v2792 = vadd.f32 %v2638, %v2791
  %v2793 = vtanh.pop %v2792
  %v2794 = vsub.f32 1.0, %v2790
  %v2795 = vmul.f32 %v2794, %v2793
  %v2796 = vmul.f32 %v2790, %v2635
  %v2797 = vadd.f32 %v2795, %v2796
  %2798 = vst.msk [vmem:[#allocation3 + $0x68] sm:$0xff] %vm448, %v2797
  %v2799 = vld [vmem:[#allocation2 + $0xe0] sm:$0xff]
  %v2800 = vld [vmem:[#allocation2 + $0xe8] sm:$0xff]
  %v2802 = vsel %vm448, %v2797, 0
  %2804 = vmatprep.subr.mxu0 0.0
  %2805 = vmatpush1.msra.mxu0 %v508
  %2806 = vmatprep.subr.mxu0 0.0
  %2807 = vmatpush1.msra.mxu0 %v509
  %2808 = vmatprep.subr.mxu0 0.0
  %2809 = vmatpush1.msra.mxu0 %v510
  %2810 = vmatprep.subr.mxu0 0.0
  %2811 = vmatpush1.msra.mxu0 %v511
  %2812 = vmatprep.subr.mxu0 0.0
  %2813 = vmatpush1.msra.mxu0 %v512
  %2814 = vmatprep.subr.mxu0 0.0
  %2815 = vmatpush1.msra.mxu0 %v513
  %2816 = vmatprep.subr.mxu0 0.0
  %2817 = vmatpush1.msra.mxu0 %v514
  %2818 = vmatprep.subr.mxu0 0.0
  %2819 = vmatpush1.msra.mxu0 %v515
  %2820 = vmatprep.subr.mxu0 0.0
  %2821 = vmatpush1.msra.mxu0 0.0
  %2822 = vmatprep.subr.mxu0 0.0
  %2823 = vmatpush1.msra.mxu0 0.0
  %2824 = vmatprep.subr.mxu0 0.0
  %2825 = vmatpush1.msra.mxu0 0.0
  %2826 = vmatprep.subr.mxu0 0.0
  %2827 = vmatpush1.msra.mxu0 0.0
  %2828 = vmatprep.subr.mxu0 0.0
  %2829 = vmatpush1.msra.mxu0 0.0
  %2830 = vmatprep.subr.mxu0 0.0
  %2831 = vmatpush1.msra.mxu0 0.0
  %2832 = vmatprep.subr.mxu0 0.0
  %2833 = vmatpush1.msra.mxu0 0.0
  %2834 = vmatprep.subr.mxu0 0.0
  %2835 = vmatpush1.msra.mxu0 0.0
  %2836 = vmatprep.subr.mxu0 0.0
  %2837 = vmatpush1.msra.mxu0 0.0
  %2838 = vmatprep.subr.mxu0 0.0
  %2839 = vmatpush1.msra.mxu0 0.0
  %2840 = vmatprep.subr.mxu0 0.0
  %2841 = vmatpush1.msra.mxu0 0.0
  %2842 = vmatprep.subr.mxu0 0.0
  %2843 = vmatpush1.msra.mxu0 0.0
  %2844 = vmatprep.subr.mxu0 0.0
  %2845 = vmatpush1.msra.mxu0 0.0
  %2846 = vmatprep.subr.mxu0 0.0
  %2847 = vmatpush1.msra.mxu0 0.0
  %2848 = vmatprep.subr.mxu0 0.0
  %2849 = vmatpush1.msra.mxu0 0.0
  %2850 = vmatprep.subr.mxu0 0.0
  %2851 = vmatpush1.msra.mxu0 0.0
  %2852 = vmatprep.subr.mxu0 0.0
  %2853 = vmatpush1.msra.mxu0 0.0
  %2854 = vmatprep.subr.mxu0 0.0
  %2855 = vmatpush1.msra.mxu0 0.0
  %2856 = vmatprep.subr.mxu0 0.0
  %2857 = vmatpush1.msra.mxu0 0.0
  %2858 = vmatprep.subr.mxu0 0.0
  %2859 = vmatpush1.msra.mxu0 0.0
  %2860 = vmatprep.subr.mxu0 0.0
  %2861 = vmatpush1.msra.mxu0 0.0
  %2862 = vmatprep.subr.mxu0 0.0
  %2863 = vmatpush1.msra.mxu0 0.0
  %2864 = vmatprep.subr.mxu0 0.0
  %2865 = vmatpush1.msra.mxu0 0.0
  %2866 = vmatprep.subr.mxu0 0.0
  %2867 = vmatpush1.msra.mxu0 0.0
  %2868 = vmatprep.mubr.f32.mxu0 0.0
  %2869 = vmatmul.mubr.f32.gmra.mrb[0].mxu0 %v2802
  %v2870 = vpop.f32.mrb[0].mxu0
  %v2871 = vadd.f32 0.0, %v2870
  %v2872 = vpop.f32.mrb[0].mxu0
  %2873 = vdwg.mxu0
  %2874 = vmatprep.subr.mxu0 0.0
  %2875 = vmatpush1.msra.mxu0 %v516
  %2876 = vmatprep.subr.mxu0 0.0
  %2877 = vmatpush1.msra.mxu0 %v517
  %2878 = vmatprep.subr.mxu0 0.0
  %2879 = vmatpush1.msra.mxu0 %v518
  %2880 = vmatprep.subr.mxu0 0.0
  %2881 = vmatpush1.msra.mxu0 %v519
  %2882 = vmatprep.subr.mxu0 0.0
  %2883 = vmatpush1.msra.mxu0 %v520
  %2884 = vmatprep.subr.mxu0 0.0
  %2885 = vmatpush1.msra.mxu0 %v521
  %2886 = vmatprep.subr.mxu0 0.0
  %2887 = vmatpush1.msra.mxu0 %v522
  %2888 = vmatprep.subr.mxu0 0.0
  %2889 = vmatpush1.msra.mxu0 %v523
  %2890 = vmatprep.subr.mxu0 0.0
  %2891 = vmatpush1.msra.mxu0 0.0
  %2892 = vmatprep.subr.mxu0 0.0
  %2893 = vmatpush1.msra.mxu0 0.0
  %2894 = vmatprep.subr.mxu0 0.0
  %2895 = vmatpush1.msra.mxu0 0.0
  %2896 = vmatprep.subr.mxu0 0.0
  %2897 = vmatpush1.msra.mxu0 0.0
  %2898 = vmatprep.subr.mxu0 0.0
  %2899 = vmatpush1.msra.mxu0 0.0
  %2900 = vmatprep.subr.mxu0 0.0
  %2901 = vmatpush1.msra.mxu0 0.0
  %2902 = vmatprep.subr.mxu0 0.0
  %2903 = vmatpush1.msra.mxu0 0.0
  %2904 = vmatprep.subr.mxu0 0.0
  %2905 = vmatpush1.msra.mxu0 0.0
  %2906 = vmatprep.subr.mxu0 0.0
  %2907 = vmatpush1.msra.mxu0 0.0
  %2908 = vmatprep.subr.mxu0 0.0
  %2909 = vmatpush1.msra.mxu0 0.0
  %2910 = vmatprep.subr.mxu0 0.0
  %2911 = vmatpush1.msra.mxu0 0.0
  %2912 = vmatprep.subr.mxu0 0.0
  %2913 = vmatpush1.msra.mxu0 0.0
  %2914 = vmatprep.subr.mxu0 0.0
  %2915 = vmatpush1.msra.mxu0 0.0
  %2916 = vmatprep.subr.mxu0 0.0
  %2917 = vmatpush1.msra.mxu0 0.0
  %2918 = vmatprep.subr.mxu0 0.0
  %2919 = vmatpush1.msra.mxu0 0.0
  %2920 = vmatprep.subr.mxu0 0.0
  %2921 = vmatpush1.msra.mxu0 0.0
  %2922 = vmatprep.subr.mxu0 0.0
  %2923 = vmatpush1.msra.mxu0 0.0
  %2924 = vmatprep.subr.mxu0 0.0
  %2925 = vmatpush1.msra.mxu0 0.0
  %2926 = vmatprep.subr.mxu0 0.0
  %2927 = vmatpush1.msra.mxu0 0.0
  %2928 = vmatprep.subr.mxu0 0.0
  %2929 = vmatpush1.msra.mxu0 0.0
  %2930 = vmatprep.subr.mxu0 0.0
  %2931 = vmatpush1.msra.mxu0 0.0
  %2932 = vmatprep.subr.mxu0 0.0
  %2933 = vmatpush1.msra.mxu0 0.0
  %2934 = vmatprep.subr.mxu0 0.0
  %2935 = vmatpush1.msra.mxu0 0.0
  %2936 = vmatprep.subr.mxu0 0.0
  %2937 = vmatpush1.msra.mxu0 0.0
  %2938 = vmatprep.mubr.f32.mxu0 0.0
  %2939 = vmatmul.mubr.f32.gmra.mrb[0].mxu0 %v2802
  %v2940 = vpop.f32.mrb[0].mxu0
  %v2941 = vadd.f32 %v529, %v2940
  %v2942 = vpop.f32.mrb[0].mxu0
  %2943 = vdwg.mxu0
  %v2944 = vadd.f32 %v2799, %v2871
  %v2945 = vxor.u32 %v2944, 2147483648
  %v2946 = vmul.f32 %v2945, 1.442695
  %v2947 = vpow.pop %v2946
  %v2948 = vadd.f32 %v2947, 1.0
  %v2949 = vrcp.pop %v2948
  %v2950 = vmul.f32 1.0, %v2949
  %2951 = vrot.lane.b32.xlu0 %v2950, 64
  %v2952 = vpop.permute.xlu0 %2951
  %v2953 = vmul.f32 %v2950, %v2941
  %v2954 = vadd.f32 %v2800, %v2953
  %v2955 = vtanh.pop %v2954
  %v2956 = vsub.f32 1.0, %v2952
  %v2957 = vmul.f32 %v2956, %v2955
  %v2958 = vmul.f32 %v2952, %v2797
  %v2959 = vadd.f32 %v2957, %v2958
  %2960 = vst.msk [vmem:[#allocation3 + $0x70] sm:$0xff] %vm448, %v2959
  %v2961 = vld [vmem:[#allocation2 + $0xf0] sm:$0xff]
  %v2962 = vld [vmem:[#allocation2 + $0xf8] sm:$0xff]
  %v2964 = vsel %vm448, %v2959, 0
  %2966 = vmatprep.subr.mxu0 0.0
  %2967 = vmatpush1.msra.mxu0 %v508
  %2968 = vmatprep.subr.mxu0 0.0
  %2969 = vmatpush1.msra.mxu0 %v509
  %2970 = vmatprep.subr.mxu0 0.0
  %2971 = vmatpush1.msra.mxu0 %v510
  %2972 = vmatprep.subr.mxu0 0.0
  %2973 = vmatpush1.msra.mxu0 %v511
  %2974 = vmatprep.subr.mxu0 0.0
  %2975 = vmatpush1.msra.mxu0 %v512
  %2976 = vmatprep.subr.mxu0 0.0
  %2977 = vmatpush1.msra.mxu0 %v513
  %2978 = vmatprep.subr.mxu0 0.0
  %2979 = vmatpush1.msra.mxu0 %v514
  %2980 = vmatprep.subr.mxu0 0.0
  %2981 = vmatpush1.msra.mxu0 %v515
  %2982 = vmatprep.subr.mxu0 0.0
  %2983 = vmatpush1.msra.mxu0 0.0
  %2984 = vmatprep.subr.mxu0 0.0
  %2985 = vmatpush1.msra.mxu0 0.0
  %2986 = vmatprep.subr.mxu0 0.0
  %2987 = vmatpush1.msra.mxu0 0.0
  %2988 = vmatprep.subr.mxu0 0.0
  %2989 = vmatpush1.msra.mxu0 0.0
  %2990 = vmatprep.subr.mxu0 0.0
  %2991 = vmatpush1.msra.mxu0 0.0
  %2992 = vmatprep.subr.mxu0 0.0
  %2993 = vmatpush1.msra.mxu0 0.0
  %2994 = vmatprep.subr.mxu0 0.0
  %2995 = vmatpush1.msra.mxu0 0.0
  %2996 = vmatprep.subr.mxu0 0.0
  %2997 = vmatpush1.msra.mxu0 0.0
  %2998 = vmatprep.subr.mxu0 0.0
  %2999 = vmatpush1.msra.mxu0 0.0
  %3000 = vmatprep.subr.mxu0 0.0
  %3001 = vmatpush1.msra.mxu0 0.0
  %3002 = vmatprep.subr.mxu0 0.0
  %3003 = vmatpush1.msra.mxu0 0.0
  %3004 = vmatprep.subr.mxu0 0.0
  %3005 = vmatpush1.msra.mxu0 0.0
  %3006 = vmatprep.subr.mxu0 0.0
  %3007 = vmatpush1.msra.mxu0 0.0
  %3008 = vmatprep.subr.mxu0 0.0
  %3009 = vmatpush1.msra.mxu0 0.0
  %3010 = vmatprep.subr.mxu0 0.0
  %3011 = vmatpush1.msra.mxu0 0.0
  %3012 = vmatprep.subr.mxu0 0.0
  %3013 = vmatpush1.msra.mxu0 0.0
  %3014 = vmatprep.subr.mxu0 0.0
  %3015 = vmatpush1.msra.mxu0 0.0
  %3016 = vmatprep.subr.mxu0 0.0
  %3017 = vmatpush1.msra.mxu0 0.0
  %3018 = vmatprep.subr.mxu0 0.0
  %3019 = vmatpush1.msra.mxu0 0.0
  %3020 = vmatprep.subr.mxu0 0.0
  %3021 = vmatpush1.msra.mxu0 0.0
  %3022 = vmatprep.subr.mxu0 0.0
  %3023 = vmatpush1.msra.mxu0 0.0
  %3024 = vmatprep.subr.mxu0 0.0
  %3025 = vmatpush1.msra.mxu0 0.0
  %3026 = vmatprep.subr.mxu0 0.0
  %3027 = vmatpush1.msra.mxu0 0.0
  %3028 = vmatprep.subr.mxu0 0.0
  %3029 = vmatpush1.msra.mxu0 0.0
  %3030 = vmatprep.mubr.f32.mxu0 0.0
  %3031 = vmatmul.mubr.f32.gmra.mrb[0].mxu0 %v2964
  %v3032 = vpop.f32.mrb[0].mxu0
  %v3033 = vadd.f32 0.0, %v3032
  %v3034 = vpop.f32.mrb[0].mxu0
  %3035 = vdwg.mxu0
  %3036 = vmatprep.subr.mxu0 0.0
  %3037 = vmatpush1.msra.mxu0 %v516
  %3038 = vmatprep.subr.mxu0 0.0
  %3039 = vmatpush1.msra.mxu0 %v517
  %3040 = vmatprep.subr.mxu0 0.0
  %3041 = vmatpush1.msra.mxu0 %v518
  %3042 = vmatprep.subr.mxu0 0.0
  %3043 = vmatpush1.msra.mxu0 %v519
  %3044 = vmatprep.subr.mxu0 0.0
  %3045 = vmatpush1.msra.mxu0 %v520
  %3046 = vmatprep.subr.mxu0 0.0
  %3047 = vmatpush1.msra.mxu0 %v521
  %3048 = vmatprep.subr.mxu0 0.0
  %3049 = vmatpush1.msra.mxu0 %v522
  %3050 = vmatprep.subr.mxu0 0.0
  %3051 = vmatpush1.msra.mxu0 %v523
  %3052 = vmatprep.subr.mxu0 0.0
  %3053 = vmatpush1.msra.mxu0 0.0
  %3054 = vmatprep.subr.mxu0 0.0
  %3055 = vmatpush1.msra.mxu0 0.0
  %3056 = vmatprep.subr.mxu0 0.0
  %3057 = vmatpush1.msra.mxu0 0.0
  %3058 = vmatprep.subr.mxu0 0.0
  %3059 = vmatpush1.msra.mxu0 0.0
  %3060 = vmatprep.subr.mxu0 0.0
  %3061 = vmatpush1.msra.mxu0 0.0
  %3062 = vmatprep.subr.mxu0 0.0
  %3063 = vmatpush1.msra.mxu0 0.0
  %3064 = vmatprep.subr.mxu0 0.0
  %3065 = vmatpush1.msra.mxu0 0.0
  %3066 = vmatprep.subr.mxu0 0.0
  %3067 = vmatpush1.msra.mxu0 0.0
  %3068 = vmatprep.subr.mxu0 0.0
  %3069 = vmatpush1.msra.mxu0 0.0
  %3070 = vmatprep.subr.mxu0 0.0
  %3071 = vmatpush1.msra.mxu0 0.0
  %3072 = vmatprep.subr.mxu0 0.0
  %3073 = vmatpush1.msra.mxu0 0.0
  %3074 = vmatprep.subr.mxu0 0.0
  %3075 = vmatpush1.msra.mxu0 0.0
  %3076 = vmatprep.subr.mxu0 0.0
  %3077 = vmatpush1.msra.mxu0 0.0
  %3078 = vmatprep.subr.mxu0 0.0
  %3079 = vmatpush1.msra.mxu0 0.0
  %3080 = vmatprep.subr.mxu0 0.0
  %3081 = vmatpush1.msra.mxu0 0.0
  %3082 = vmatprep.subr.mxu0 0.0
  %3083 = vmatpush1.msra.mxu0 0.0
  %3084 = vmatprep.subr.mxu0 0.0
  %3085 = vmatpush1.msra.mxu0 0.0
  %3086 = vmatprep.subr.mxu0 0.0
  %3087 = vmatpush1.msra.mxu0 0.0
  %3088 = vmatprep.subr.mxu0 0.0
  %3089 = vmatpush1.msra.mxu0 0.0
  %3090 = vmatprep.subr.mxu0 0.0
  %3091 = vmatpush1.msra.mxu0 0.0
  %3092 = vmatprep.subr.mxu0 0.0
  %3093 = vmatpush1.msra.mxu0 0.0
  %3094 = vmatprep.subr.mxu0 0.0
  %3095 = vmatpush1.msra.mxu0 0.0
  %3096 = vmatprep.subr.mxu0 0.0
  %3097 = vmatpush1.msra.mxu0 0.0
  %3098 = vmatprep.subr.mxu0 0.0
  %3099 = vmatpush1.msra.mxu0 0.0
  %3100 = vmatprep.mubr.f32.mxu0 0.0
  %3101 = vmatmul.mubr.f32.gmra.mrb[0].mxu0 %v2964
  %v3102 = vpop.f32.mrb[0].mxu0
  %v3103 = vadd.f32 %v529, %v3102
  %v3104 = vpop.f32.mrb[0].mxu0
  %3105 = vdwg.mxu0
  %v3106 = vadd.f32 %v2961, %v3033
  %v3107 = vxor.u32 %v3106, 2147483648
  %v3108 = vmul.f32 %v3107, 1.442695
  %v3109 = vpow.pop %v3108
  %v3110 = vadd.f32 %v3109, 1.0
  %v3111 = vrcp.pop %v3110
  %v3112 = vmul.f32 1.0, %v3111
  %3113 = vrot.lane.b32.xlu0 %v3112, 64
  %v3114 = vpop.permute.xlu0 %3113
  %v3115 = vmul.f32 %v3112, %v3103
  %v3116 = vadd.f32 %v2962, %v3115
  %v3117 = vtanh.pop %v3116
  %v3118 = vsub.f32 1.0, %v3114
  %v3119 = vmul.f32 %v3118, %v3117
  %v3120 = vmul.f32 %v3114, %v2959
  %v3121 = vadd.f32 %v3119, %v3120
  %3122 = vst.msk [vmem:[#allocation3 + $0x78] sm:$0xff] %vm448, %v3121
  %v3123 = vld [vmem:[#allocation2 + $0x100] sm:$0xff]
  %v3124 = vld [vmem:[#allocation2 + $0x108] sm:$0xff]
  %v3126 = vsel %vm448, %v3121, 0
  %3128 = vmatprep.subr.mxu0 0.0
  %3129 = vmatpush1.msra.mxu0 %v508
  %3130 = vmatprep.subr.mxu0 0.0
  %3131 = vmatpush1.msra.mxu0 %v509
  %3132 = vmatprep.subr.mxu0 0.0
  %3133 = vmatpush1.msra.mxu0 %v510
  %3134 = vmatprep.subr.mxu0 0.0
  %3135 = vmatpush1.msra.mxu0 %v511
  %3136 = vmatprep.subr.mxu0 0.0
  %3137 = vmatpush1.msra.mxu0 %v512
  %3138 = vmatprep.subr.mxu0 0.0
  %3139 = vmatpush1.msra.mxu0 %v513
  %3140 = vmatprep.subr.mxu0 0.0
  %3141 = vmatpush1.msra.mxu0 %v514
  %3142 = vmatprep.subr.mxu0 0.0
  %3143 = vmatpush1.msra.mxu0 %v515
  %3144 = vmatprep.subr.mxu0 0.0
  %3145 = vmatpush1.msra.mxu0 0.0
  %3146 = vmatprep.subr.mxu0 0.0
  %3147 = vmatpush1.msra.mxu0 0.0
  %3148 = vmatprep.subr.mxu0 0.0
  %3149 = vmatpush1.msra.mxu0 0.0
  %3150 = vmatprep.subr.mxu0 0.0
  %3151 = vmatpush1.msra.mxu0 0.0
  %3152 = vmatprep.subr.mxu0 0.0
  %3153 = vmatpush1.msra.mxu0 0.0
  %3154 = vmatprep.subr.mxu0 0.0
  %3155 = vmatpush1.msra.mxu0 0.0
  %3156 = vmatprep.subr.mxu0 0.0
  %3157 = vmatpush1.msra.mxu0 0.0
  %3158 = vmatprep.subr.mxu0 0.0
  %3159 = vmatpush1.msra.mxu0 0.0
  %3160 = vmatprep.subr.mxu0 0.0
  %3161 = vmatpush1.msra.mxu0 0.0
  %3162 = vmatprep.subr.mxu0 0.0
  %3163 = vmatpush1.msra.mxu0 0.0
  %3164 = vmatprep.subr.mxu0 0.0
  %3165 = vmatpush1.msra.mxu0 0.0
  %3166 = vmatprep.subr.mxu0 0.0
  %3167 = vmatpush1.msra.mxu0 0.0
  %3168 = vmatprep.subr.mxu0 0.0
  %3169 = vmatpush1.msra.mxu0 0.0
  %3170 = vmatprep.subr.mxu0 0.0
  %3171 = vmatpush1.msra.mxu0 0.0
  %3172 = vmatprep.subr.mxu0 0.0
  %3173 = vmatpush1.msra.mxu0 0.0
  %3174 = vmatprep.subr.mxu0 0.0
  %3175 = vmatpush1.msra.mxu0 0.0
  %3176 = vmatprep.subr.mxu0 0.0
  %3177 = vmatpush1.msra.mxu0 0.0
  %3178 = vmatprep.subr.mxu0 0.0
  %3179 = vmatpush1.msra.mxu0 0.0
  %3180 = vmatprep.subr.mxu0 0.0
  %3181 = vmatpush1.msra.mxu0 0.0
  %3182 = vmatprep.subr.mxu0 0.0
  %3183 = vmatpush1.msra.mxu0 0.0
  %3184 = vmatprep.subr.mxu0 0.0
  %3185 = vmatpush1.msra.mxu0 0.0
  %3186 = vmatprep.subr.mxu0 0.0
  %3187 = vmatpush1.msra.mxu0 0.0
  %3188 = vmatprep.subr.mxu0 0.0
  %3189 = vmatpush1.msra.mxu0 0.0
  %3190 = vmatprep.subr.mxu0 0.0
  %3191 = vmatpush1.msra.mxu0 0.0
  %3192 = vmatprep.mubr.f32.mxu0 0.0
  %3193 = vmatmul.mubr.f32.gmra.mrb[0].mxu0 %v3126
  %v3194 = vpop.f32.mrb[0].mxu0
  %v3195 = vadd.f32 0.0, %v3194
  %v3196 = vpop.f32.mrb[0].mxu0
  %3197 = vdwg.mxu0
  %3198 = vmatprep.subr.mxu0 0.0
  %3199 = vmatpush1.msra.mxu0 %v516
  %3200 = vmatprep.subr.mxu0 0.0
  %3201 = vmatpush1.msra.mxu0 %v517
  %3202 = vmatprep.subr.mxu0 0.0
  %3203 = vmatpush1.msra.mxu0 %v518
  %3204 = vmatprep.subr.mxu0 0.0
  %3205 = vmatpush1.msra.mxu0 %v519
  %3206 = vmatprep.subr.mxu0 0.0
  %3207 = vmatpush1.msra.mxu0 %v520
  %3208 = vmatprep.subr.mxu0 0.0
  %3209 = vmatpush1.msra.mxu0 %v521
  %3210 = vmatprep.subr.mxu0 0.0
  %3211 = vmatpush1.msra.mxu0 %v522
  %3212 = vmatprep.subr.mxu0 0.0
  %3213 = vmatpush1.msra.mxu0 %v523
  %3214 = vmatprep.subr.mxu0 0.0
  %3215 = vmatpush1.msra.mxu0 0.0
  %3216 = vmatprep.subr.mxu0 0.0
  %3217 = vmatpush1.msra.mxu0 0.0
  %3218 = vmatprep.subr.mxu0 0.0
  %3219 = vmatpush1.msra.mxu0 0.0
  %3220 = vmatprep.subr.mxu0 0.0
  %3221 = vmatpush1.msra.mxu0 0.0
  %3222 = vmatprep.subr.mxu0 0.0
  %3223 = vmatpush1.msra.mxu0 0.0
  %3224 = vmatprep.subr.mxu0 0.0
  %3225 = vmatpush1.msra.mxu0 0.0
  %3226 = vmatprep.subr.mxu0 0.0
  %3227 = vmatpush1.msra.mxu0 0.0
  %3228 = vmatprep.subr.mxu0 0.0
  %3229 = vmatpush1.msra.mxu0 0.0
  %3230 = vmatprep.subr.mxu0 0.0
  %3231 = vmatpush1.msra.mxu0 0.0
  %3232 = vmatprep.subr.mxu0 0.0
  %3233 = vmatpush1.msra.mxu0 0.0
  %3234 = vmatprep.subr.mxu0 0.0
  %3235 = vmatpush1.msra.mxu0 0.0
  %3236 = vmatprep.subr.mxu0 0.0
  %3237 = vmatpush1.msra.mxu0 0.0
  %3238 = vmatprep.subr.mxu0 0.0
  %3239 = vmatpush1.msra.mxu0 0.0
  %3240 = vmatprep.subr.mxu0 0.0
  %3241 = vmatpush1.msra.mxu0 0.0
  %3242 = vmatprep.subr.mxu0 0.0
  %3243 = vmatpush1.msra.mxu0 0.0
  %3244 = vmatprep.subr.mxu0 0.0
  %3245 = vmatpush1.msra.mxu0 0.0
  %3246 = vmatprep.subr.mxu0 0.0
  %3247 = vmatpush1.msra.mxu0 0.0
  %3248 = vmatprep.subr.mxu0 0.0
  %3249 = vmatpush1.msra.mxu0 0.0
  %3250 = vmatprep.subr.mxu0 0.0
  %3251 = vmatpush1.msra.mxu0 0.0
  %3252 = vmatprep.subr.mxu0 0.0
  %3253 = vmatpush1.msra.mxu0 0.0
  %3254 = vmatprep.subr.mxu0 0.0
  %3255 = vmatpush1.msra.mxu0 0.0
  %3256 = vmatprep.subr.mxu0 0.0
  %3257 = vmatpush1.msra.mxu0 0.0
  %3258 = vmatprep.subr.mxu0 0.0
  %3259 = vmatpush1.msra.mxu0 0.0
  %3260 = vmatprep.subr.mxu0 0.0
  %3261 = vmatpush1.msra.mxu0 0.0
  %3262 = vmatprep.mubr.f32.mxu0 0.0
  %3263 = vmatmul.mubr.f32.gmra.mrb[0].mxu0 %v3126
  %v3264 = vpop.f32.mrb[0].mxu0
  %v3265 = vadd.f32 %v529, %v3264
  %v3266 = vpop.f32.mrb[0].mxu0
  %3267 = vdwg.mxu0
  %v3268 = vadd.f32 %v3123, %v3195
  %v3269 = vxor.u32 %v3268, 2147483648
  %v3270 = vmul.f32 %v3269, 1.442695
  %v3271 = vpow.pop %v3270
  %v3272 = vadd.f32 %v3271, 1.0
  %v3273 = vrcp.pop %v3272
  %v3274 = vmul.f32 1.0, %v3273
  %3275 = vrot.lane.b32.xlu0 %v3274, 64
  %v3276 = vpop.permute.xlu0 %3275
  %v3277 = vmul.f32 %v3274, %v3265
  %v3278 = vadd.f32 %v3124, %v3277
  %v3279 = vtanh.pop %v3278
  %v3280 = vsub.f32 1.0, %v3276
  %v3281 = vmul.f32 %v3280, %v3279
  %v3282 = vmul.f32 %v3276, %v3121
  %v3283 = vadd.f32 %v3281, %v3282
  %3284 = vst.msk [vmem:[#allocation3 + $0x80] sm:$0xff] %vm448, %v3283
  %v3285 = vld [vmem:[#allocation2 + $0x110] sm:$0xff]
  %v3286 = vld [vmem:[#allocation2 + $0x118] sm:$0xff]
  %v3288 = vsel %vm448, %v3283, 0
  %3290 = vmatprep.subr.mxu0 0.0
  %3291 = vmatpush1.msra.mxu0 %v508
  %3292 = vmatprep.subr.mxu0 0.0
  %3293 = vmatpush1.msra.mxu0 %v509
  %3294 = vmatprep.subr.mxu0 0.0
  %3295 = vmatpush1.msra.mxu0 %v510
  %3296 = vmatprep.subr.mxu0 0.0
  %3297 = vmatpush1.msra.mxu0 %v511
  %3298 = vmatprep.subr.mxu0 0.0
  %3299 = vmatpush1.msra.mxu0 %v512
  %3300 = vmatprep.subr.mxu0 0.0
  %3301 = vmatpush1.msra.mxu0 %v513
  %3302 = vmatprep.subr.mxu0 0.0
  %3303 = vmatpush1.msra.mxu0 %v514
  %3304 = vmatprep.subr.mxu0 0.0
  %3305 = vmatpush1.msra.mxu0 %v515
  %3306 = vmatprep.subr.mxu0 0.0
  %3307 = vmatpush1.msra.mxu0 0.0
  %3308 = vmatprep.subr.mxu0 0.0
  %3309 = vmatpush1.msra.mxu0 0.0
  %3310 = vmatprep.subr.mxu0 0.0
  %3311 = vmatpush1.msra.mxu0 0.0
  %3312 = vmatprep.subr.mxu0 0.0
  %3313 = vmatpush1.msra.mxu0 0.0
  %3314 = vmatprep.subr.mxu0 0.0
  %3315 = vmatpush1.msra.mxu0 0.0
  %3316 = vmatprep.subr.mxu0 0.0
  %3317 = vmatpush1.msra.mxu0 0.0
  %3318 = vmatprep.subr.mxu0 0.0
  %3319 = vmatpush1.msra.mxu0 0.0
  %3320 = vmatprep.subr.mxu0 0.0
  %3321 = vmatpush1.msra.mxu0 0.0
  %3322 = vmatprep.subr.mxu0 0.0
  %3323 = vmatpush1.msra.mxu0 0.0
  %3324 = vmatprep.subr.mxu0 0.0
  %3325 = vmatpush1.msra.mxu0 0.0
  %3326 = vmatprep.subr.mxu0 0.0
  %3327 = vmatpush1.msra.mxu0 0.0
  %3328 = vmatprep.subr.mxu0 0.0
  %3329 = vmatpush1.msra.mxu0 0.0
  %3330 = vmatprep.subr.mxu0 0.0
  %3331 = vmatpush1.msra.mxu0 0.0
  %3332 = vmatprep.subr.mxu0 0.0
  %3333 = vmatpush1.msra.mxu0 0.0
  %3334 = vmatprep.subr.mxu0 0.0
  %3335 = vmatpush1.msra.mxu0 0.0
  %3336 = vmatprep.subr.mxu0 0.0
  %3337 = vmatpush1.msra.mxu0 0.0
  %3338 = vmatprep.subr.mxu0 0.0
  %3339 = vmatpush1.msra.mxu0 0.0
  %3340 = vmatprep.subr.mxu0 0.0
  %3341 = vmatpush1.msra.mxu0 0.0
  %3342 = vmatprep.subr.mxu0 0.0
  %3343 = vmatpush1.msra.mxu0 0.0
  %3344 = vmatprep.subr.mxu0 0.0
  %3345 = vmatpush1.msra.mxu0 0.0
  %3346 = vmatprep.subr.mxu0 0.0
  %3347 = vmatpush1.msra.mxu0 0.0
  %3348 = vmatprep.subr.mxu0 0.0
  %3349 = vmatpush1.msra.mxu0 0.0
  %3350 = vmatprep.subr.mxu0 0.0
  %3351 = vmatpush1.msra.mxu0 0.0
  %3352 = vmatprep.subr.mxu0 0.0
  %3353 = vmatpush1.msra.mxu0 0.0
  %3354 = vmatprep.mubr.f32.mxu0 0.0
  %3355 = vmatmul.mubr.f32.gmra.mrb[0].mxu0 %v3288
  %v3356 = vpop.f32.mrb[0].mxu0
  %v3357 = vadd.f32 0.0, %v3356
  %v3358 = vpop.f32.mrb[0].mxu0
  %3359 = vdwg.mxu0
  %3360 = vmatprep.subr.mxu0 0.0
  %3361 = vmatpush1.msra.mxu0 %v516
  %3362 = vmatprep.subr.mxu0 0.0
  %3363 = vmatpush1.msra.mxu0 %v517
  %3364 = vmatprep.subr.mxu0 0.0
  %3365 = vmatpush1.msra.mxu0 %v518
  %3366 = vmatprep.subr.mxu0 0.0
  %3367 = vmatpush1.msra.mxu0 %v519
  %3368 = vmatprep.subr.mxu0 0.0
  %3369 = vmatpush1.msra.mxu0 %v520
  %3370 = vmatprep.subr.mxu0 0.0
  %3371 = vmatpush1.msra.mxu0 %v521
  %3372 = vmatprep.subr.mxu0 0.0
  %3373 = vmatpush1.msra.mxu0 %v522
  %3374 = vmatprep.subr.mxu0 0.0
  %3375 = vmatpush1.msra.mxu0 %v523
  %3376 = vmatprep.subr.mxu0 0.0
  %3377 = vmatpush1.msra.mxu0 0.0
  %3378 = vmatprep.subr.mxu0 0.0
  %3379 = vmatpush1.msra.mxu0 0.0
  %3380 = vmatprep.subr.mxu0 0.0
  %3381 = vmatpush1.msra.mxu0 0.0
  %3382 = vmatprep.subr.mxu0 0.0
  %3383 = vmatpush1.msra.mxu0 0.0
  %3384 = vmatprep.subr.mxu0 0.0
  %3385 = vmatpush1.msra.mxu0 0.0
  %3386 = vmatprep.subr.mxu0 0.0
  %3387 = vmatpush1.msra.mxu0 0.0
  %3388 = vmatprep.subr.mxu0 0.0
  %3389 = vmatpush1.msra.mxu0 0.0
  %3390 = vmatprep.subr.mxu0 0.0
  %3391 = vmatpush1.msra.mxu0 0.0
  %3392 = vmatprep.subr.mxu0 0.0
  %3393 = vmatpush1.msra.mxu0 0.0
  %3394 = vmatprep.subr.mxu0 0.0
  %3395 = vmatpush1.msra.mxu0 0.0
  %3396 = vmatprep.subr.mxu0 0.0
  %3397 = vmatpush1.msra.mxu0 0.0
  %3398 = vmatprep.subr.mxu0 0.0
  %3399 = vmatpush1.msra.mxu0 0.0
  %3400 = vmatprep.subr.mxu0 0.0
  %3401 = vmatpush1.msra.mxu0 0.0
  %3402 = vmatprep.subr.mxu0 0.0
  %3403 = vmatpush1.msra.mxu0 0.0
  %3404 = vmatprep.subr.mxu0 0.0
  %3405 = vmatpush1.msra.mxu0 0.0
  %3406 = vmatprep.subr.mxu0 0.0
  %3407 = vmatpush1.msra.mxu0 0.0
  %3408 = vmatprep.subr.mxu0 0.0
  %3409 = vmatpush1.msra.mxu0 0.0
  %3410 = vmatprep.subr.mxu0 0.0
  %3411 = vmatpush1.msra.mxu0 0.0
  %3412 = vmatprep.subr.mxu0 0.0
  %3413 = vmatpush1.msra.mxu0 0.0
  %3414 = vmatprep.subr.mxu0 0.0
  %3415 = vmatpush1.msra.mxu0 0.0
  %3416 = vmatprep.subr.mxu0 0.0
  %3417 = vmatpush1.msra.mxu0 0.0
  %3418 = vmatprep.subr.mxu0 0.0
  %3419 = vmatpush1.msra.mxu0 0.0
  %3420 = vmatprep.subr.mxu0 0.0
  %3421 = vmatpush1.msra.mxu0 0.0
  %3422 = vmatprep.subr.mxu0 0.0
  %3423 = vmatpush1.msra.mxu0 0.0
  %3424 = vmatprep.mubr.f32.mxu0 0.0
  %3425 = vmatmul.mubr.f32.gmra.mrb[0].mxu0 %v3288
  %v3426 = vpop.f32.mrb[0].mxu0
  %v3427 = vadd.f32 %v529, %v3426
  %v3428 = vpop.f32.mrb[0].mxu0
  %3429 = vdwg.mxu0
  %v3430 = vadd.f32 %v3285, %v3357
  %v3431 = vxor.u32 %v3430, 2147483648
  %v3432 = vmul.f32 %v3431, 1.442695
  %v3433 = vpow.pop %v3432
  %v3434 = vadd.f32 %v3433, 1.0
  %v3435 = vrcp.pop %v3434
  %v3436 = vmul.f32 1.0, %v3435
  %3437 = vrot.lane.b32.xlu0 %v3436, 64
  %v3438 = vpop.permute.xlu0 %3437
  %v3439 = vmul.f32 %v3436, %v3427
  %v3440 = vadd.f32 %v3286, %v3439
  %v3441 = vtanh.pop %v3440
  %v3442 = vsub.f32 1.0, %v3438
  %v3443 = vmul.f32 %v3442, %v3441
  %v3444 = vmul.f32 %v3438, %v3283
  %v3445 = vadd.f32 %v3443, %v3444
  %3446 = vst.msk [vmem:[#allocation3 + $0x88] sm:$0xff] %vm448, %v3445
  %v3447 = vld [vmem:[#allocation2 + $0x120] sm:$0xff]
  %v3448 = vld [vmem:[#allocation2 + $0x128] sm:$0xff]
  %v3450 = vsel %vm448, %v3445, 0
  %3452 = vmatprep.subr.mxu0 0.0
  %3453 = vmatpush1.msra.mxu0 %v508
  %3454 = vmatprep.subr.mxu0 0.0
  %3455 = vmatpush1.msra.mxu0 %v509
  %3456 = vmatprep.subr.mxu0 0.0
  %3457 = vmatpush1.msra.mxu0 %v510
  %3458 = vmatprep.subr.mxu0 0.0
  %3459 = vmatpush1.msra.mxu0 %v511
  %3460 = vmatprep.subr.mxu0 0.0
  %3461 = vmatpush1.msra.mxu0 %v512
  %3462 = vmatprep.subr.mxu0 0.0
  %3463 = vmatpush1.msra.mxu0 %v513
  %3464 = vmatprep.subr.mxu0 0.0
  %3465 = vmatpush1.msra.mxu0 %v514
  %3466 = vmatprep.subr.mxu0 0.0
  %3467 = vmatpush1.msra.mxu0 %v515
  %3468 = vmatprep.subr.mxu0 0.0
  %3469 = vmatpush1.msra.mxu0 0.0
  %3470 = vmatprep.subr.mxu0 0.0
  %3471 = vmatpush1.msra.mxu0 0.0
  %3472 = vmatprep.subr.mxu0 0.0
  %3473 = vmatpush1.msra.mxu0 0.0
  %3474 = vmatprep.subr.mxu0 0.0
  %3475 = vmatpush1.msra.mxu0 0.0
  %3476 = vmatprep.subr.mxu0 0.0
  %3477 = vmatpush1.msra.mxu0 0.0
  %3478 = vmatprep.subr.mxu0 0.0
  %3479 = vmatpush1.msra.mxu0 0.0
  %3480 = vmatprep.subr.mxu0 0.0
  %3481 = vmatpush1.msra.mxu0 0.0
  %3482 = vmatprep.subr.mxu0 0.0
  %3483 = vmatpush1.msra.mxu0 0.0
  %3484 = vmatprep.subr.mxu0 0.0
  %3485 = vmatpush1.msra.mxu0 0.0
  %3486 = vmatprep.subr.mxu0 0.0
  %3487 = vmatpush1.msra.mxu0 0.0
  %3488 = vmatprep.subr.mxu0 0.0
  %3489 = vmatpush1.msra.mxu0 0.0
  %3490 = vmatprep.subr.mxu0 0.0
  %3491 = vmatpush1.msra.mxu0 0.0
  %3492 = vmatprep.subr.mxu0 0.0
  %3493 = vmatpush1.msra.mxu0 0.0
  %3494 = vmatprep.subr.mxu0 0.0
  %3495 = vmatpush1.msra.mxu0 0.0
  %3496 = vmatprep.subr.mxu0 0.0
  %3497 = vmatpush1.msra.mxu0 0.0
  %3498 = vmatprep.subr.mxu0 0.0
  %3499 = vmatpush1.msra.mxu0 0.0
  %3500 = vmatprep.subr.mxu0 0.0
  %3501 = vmatpush1.msra.mxu0 0.0
  %3502 = vmatprep.subr.mxu0 0.0
  %3503 = vmatpush1.msra.mxu0 0.0
  %3504 = vmatprep.subr.mxu0 0.0
  %3505 = vmatpush1.msra.mxu0 0.0
  %3506 = vmatprep.subr.mxu0 0.0
  %3507 = vmatpush1.msra.mxu0 0.0
  %3508 = vmatprep.subr.mxu0 0.0
  %3509 = vmatpush1.msra.mxu0 0.0
  %3510 = vmatprep.subr.mxu0 0.0
  %3511 = vmatpush1.msra.mxu0 0.0
  %3512 = vmatprep.subr.mxu0 0.0
  %3513 = vmatpush1.msra.mxu0 0.0
  %3514 = vmatprep.subr.mxu0 0.0
  %3515 = vmatpush1.msra.mxu0 0.0
  %3516 = vmatprep.mubr.f32.mxu0 0.0
  %3517 = vmatmul.mubr.f32.gmra.mrb[0].mxu0 %v3450
  %v3518 = vpop.f32.mrb[0].mxu0
  %v3519 = vadd.f32 0.0, %v3518
  %v3520 = vpop.f32.mrb[0].mxu0
  %3521 = vdwg.mxu0
  %3522 = vmatprep.subr.mxu0 0.0
  %3523 = vmatpush1.msra.mxu0 %v516
  %3524 = vmatprep.subr.mxu0 0.0
  %3525 = vmatpush1.msra.mxu0 %v517
  %3526 = vmatprep.subr.mxu0 0.0
  %3527 = vmatpush1.msra.mxu0 %v518
  %3528 = vmatprep.subr.mxu0 0.0
  %3529 = vmatpush1.msra.mxu0 %v519
  %3530 = vmatprep.subr.mxu0 0.0
  %3531 = vmatpush1.msra.mxu0 %v520
  %3532 = vmatprep.subr.mxu0 0.0
  %3533 = vmatpush1.msra.mxu0 %v521
  %3534 = vmatprep.subr.mxu0 0.0
  %3535 = vmatpush1.msra.mxu0 %v522
  %3536 = vmatprep.subr.mxu0 0.0
  %3537 = vmatpush1.msra.mxu0 %v523
  %3538 = vmatprep.subr.mxu0 0.0
  %3539 = vmatpush1.msra.mxu0 0.0
  %3540 = vmatprep.subr.mxu0 0.0
  %3541 = vmatpush1.msra.mxu0 0.0
  %3542 = vmatprep.subr.mxu0 0.0
  %3543 = vmatpush1.msra.mxu0 0.0
  %3544 = vmatprep.subr.mxu0 0.0
  %3545 = vmatpush1.msra.mxu0 0.0
  %3546 = vmatprep.subr.mxu0 0.0
  %3547 = vmatpush1.msra.mxu0 0.0
  %3548 = vmatprep.subr.mxu0 0.0
  %3549 = vmatpush1.msra.mxu0 0.0
  %3550 = vmatprep.subr.mxu0 0.0
  %3551 = vmatpush1.msra.mxu0 0.0
  %3552 = vmatprep.subr.mxu0 0.0
  %3553 = vmatpush1.msra.mxu0 0.0
  %3554 = vmatprep.subr.mxu0 0.0
  %3555 = vmatpush1.msra.mxu0 0.0
  %3556 = vmatprep.subr.mxu0 0.0
  %3557 = vmatpush1.msra.mxu0 0.0
  %3558 = vmatprep.subr.mxu0 0.0
  %3559 = vmatpush1.msra.mxu0 0.0
  %3560 = vmatprep.subr.mxu0 0.0
  %3561 = vmatpush1.msra.mxu0 0.0
  %3562 = vmatprep.subr.mxu0 0.0
  %3563 = vmatpush1.msra.mxu0 0.0
  %3564 = vmatprep.subr.mxu0 0.0
  %3565 = vmatpush1.msra.mxu0 0.0
  %3566 = vmatprep.subr.mxu0 0.0
  %3567 = vmatpush1.msra.mxu0 0.0
  %3568 = vmatprep.subr.mxu0 0.0
  %3569 = vmatpush1.msra.mxu0 0.0
  %3570 = vmatprep.subr.mxu0 0.0
  %3571 = vmatpush1.msra.mxu0 0.0
  %3572 = vmatprep.subr.mxu0 0.0
  %3573 = vmatpush1.msra.mxu0 0.0
  %3574 = vmatprep.subr.mxu0 0.0
  %3575 = vmatpush1.msra.mxu0 0.0
  %3576 = vmatprep.subr.mxu0 0.0
  %3577 = vmatpush1.msra.mxu0 0.0
  %3578 = vmatprep.subr.mxu0 0.0
  %3579 = vmatpush1.msra.mxu0 0.0
  %3580 = vmatprep.subr.mxu0 0.0
  %3581 = vmatpush1.msra.mxu0 0.0
  %3582 = vmatprep.subr.mxu0 0.0
  %3583 = vmatpush1.msra.mxu0 0.0
  %3584 = vmatprep.subr.mxu0 0.0
  %3585 = vmatpush1.msra.mxu0 0.0
  %3586 = vmatprep.mubr.f32.mxu0 0.0
  %3587 = vmatmul.mubr.f32.gmra.mrb[0].mxu0 %v3450
  %v3588 = vpop.f32.mrb[0].mxu0
  %v3589 = vadd.f32 %v529, %v3588
  %v3590 = vpop.f32.mrb[0].mxu0
  %3591 = vdwg.mxu0
  %v3592 = vadd.f32 %v3447, %v3519
  %v3593 = vxor.u32 %v3592, 2147483648
  %v3594 = vmul.f32 %v3593, 1.442695
  %v3595 = vpow.pop %v3594
  %v3596 = vadd.f32 %v3595, 1.0
  %v3597 = vrcp.pop %v3596
  %v3598 = vmul.f32 1.0, %v3597
  %3599 = vrot.lane.b32.xlu0 %v3598, 64
  %v3600 = vpop.permute.xlu0 %3599
  %v3601 = vmul.f32 %v3598, %v3589
  %v3602 = vadd.f32 %v3448, %v3601
  %v3603 = vtanh.pop %v3602
  %v3604 = vsub.f32 1.0, %v3600
  %v3605 = vmul.f32 %v3604, %v3603
  %v3606 = vmul.f32 %v3600, %v3445
  %v3607 = vadd.f32 %v3605, %v3606
  %3608 = vst.msk [vmem:[#allocation3 + $0x90] sm:$0xff] %vm448, %v3607
  %v3609 = vld [vmem:[#allocation2 + $0x130] sm:$0xff]
  %v3610 = vld [vmem:[#allocation2 + $0x138] sm:$0xff]
  %v3612 = vsel %vm448, %v3607, 0
  %3614 = vmatprep.subr.mxu0 0.0
  %3615 = vmatpush1.msra.mxu0 %v508
  %3616 = vmatprep.subr.mxu0 0.0
  %3617 = vmatpush1.msra.mxu0 %v509
  %3618 = vmatprep.subr.mxu0 0.0
  %3619 = vmatpush1.msra.mxu0 %v510
  %3620 = vmatprep.subr.mxu0 0.0
  %3621 = vmatpush1.msra.mxu0 %v511
  %3622 = vmatprep.subr.mxu0 0.0
  %3623 = vmatpush1.msra.mxu0 %v512
  %3624 = vmatprep.subr.mxu0 0.0
  %3625 = vmatpush1.msra.mxu0 %v513
  %3626 = vmatprep.subr.mxu0 0.0
  %3627 = vmatpush1.msra.mxu0 %v514
  %3628 = vmatprep.subr.mxu0 0.0
  %3629 = vmatpush1.msra.mxu0 %v515
  %3630 = vmatprep.subr.mxu0 0.0
  %3631 = vmatpush1.msra.mxu0 0.0
  %3632 = vmatprep.subr.mxu0 0.0
  %3633 = vmatpush1.msra.mxu0 0.0
  %3634 = vmatprep.subr.mxu0 0.0
  %3635 = vmatpush1.msra.mxu0 0.0
  %3636 = vmatprep.subr.mxu0 0.0
  %3637 = vmatpush1.msra.mxu0 0.0
  %3638 = vmatprep.subr.mxu0 0.0
  %3639 = vmatpush1.msra.mxu0 0.0
  %3640 = vmatprep.subr.mxu0 0.0
  %3641 = vmatpush1.msra.mxu0 0.0
  %3642 = vmatprep.subr.mxu0 0.0
  %3643 = vmatpush1.msra.mxu0 0.0
  %3644 = vmatprep.subr.mxu0 0.0
  %3645 = vmatpush1.msra.mxu0 0.0
  %3646 = vmatprep.subr.mxu0 0.0
  %3647 = vmatpush1.msra.mxu0 0.0
  %3648 = vmatprep.subr.mxu0 0.0
  %3649 = vmatpush1.msra.mxu0 0.0
  %3650 = vmatprep.subr.mxu0 0.0
  %3651 = vmatpush1.msra.mxu0 0.0
  %3652 = vmatprep.subr.mxu0 0.0
  %3653 = vmatpush1.msra.mxu0 0.0
  %3654 = vmatprep.subr.mxu0 0.0
  %3655 = vmatpush1.msra.mxu0 0.0
  %3656 = vmatprep.subr.mxu0 0.0
  %3657 = vmatpush1.msra.mxu0 0.0
  %3658 = vmatprep.subr.mxu0 0.0
  %3659 = vmatpush1.msra.mxu0 0.0
  %3660 = vmatprep.subr.mxu0 0.0
  %3661 = vmatpush1.msra.mxu0 0.0
  %3662 = vmatprep.subr.mxu0 0.0
  %3663 = vmatpush1.msra.mxu0 0.0
  %3664 = vmatprep.subr.mxu0 0.0
  %3665 = vmatpush1.msra.mxu0 0.0
  %3666 = vmatprep.subr.mxu0 0.0
  %3667 = vmatpush1.msra.mxu0 0.0
  %3668 = vmatprep.subr.mxu0 0.0
  %3669 = vmatpush1.msra.mxu0 0.0
  %3670 = vmatprep.subr.mxu0 0.0
  %3671 = vmatpush1.msra.mxu0 0.0
  %3672 = vmatprep.subr.mxu0 0.0
  %3673 = vmatpush1.msra.mxu0 0.0
  %3674 = vmatprep.subr.mxu0 0.0
  %3675 = vmatpush1.msra.mxu0 0.0
  %3676 = vmatprep.subr.mxu0 0.0
  %3677 = vmatpush1.msra.mxu0 0.0
  %3678 = vmatprep.mubr.f32.mxu0 0.0
  %3679 = vmatmul.mubr.f32.gmra.mrb[0].mxu0 %v3612
  %v3680 = vpop.f32.mrb[0].mxu0
  %v3681 = vadd.f32 0.0, %v3680
  %v3682 = vpop.f32.mrb[0].mxu0
  %3683 = vdwg.mxu0
  %3684 = vmatprep.subr.mxu0 0.0
  %3685 = vmatpush1.msra.mxu0 %v516
  %3686 = vmatprep.subr.mxu0 0.0
  %3687 = vmatpush1.msra.mxu0 %v517
  %3688 = vmatprep.subr.mxu0 0.0
  %3689 = vmatpush1.msra.mxu0 %v518
  %3690 = vmatprep.subr.mxu0 0.0
  %3691 = vmatpush1.msra.mxu0 %v519
  %3692 = vmatprep.subr.mxu0 0.0
  %3693 = vmatpush1.msra.mxu0 %v520
  %3694 = vmatprep.subr.mxu0 0.0
  %3695 = vmatpush1.msra.mxu0 %v521
  %3696 = vmatprep.subr.mxu0 0.0
  %3697 = vmatpush1.msra.mxu0 %v522
  %3698 = vmatprep.subr.mxu0 0.0
  %3699 = vmatpush1.msra.mxu0 %v523
  %3700 = vmatprep.subr.mxu0 0.0
  %3701 = vmatpush1.msra.mxu0 0.0
  %3702 = vmatprep.subr.mxu0 0.0
  %3703 = vmatpush1.msra.mxu0 0.0
  %3704 = vmatprep.subr.mxu0 0.0
  %3705 = vmatpush1.msra.mxu0 0.0
  %3706 = vmatprep.subr.mxu0 0.0
  %3707 = vmatpush1.msra.mxu0 0.0
  %3708 = vmatprep.subr.mxu0 0.0
  %3709 = vmatpush1.msra.mxu0 0.0
  %3710 = vmatprep.subr.mxu0 0.0
  %3711 = vmatpush1.msra.mxu0 0.0
  %3712 = vmatprep.subr.mxu0 0.0
  %3713 = vmatpush1.msra.mxu0 0.0
  %3714 = vmatprep.subr.mxu0 0.0
  %3715 = vmatpush1.msra.mxu0 0.0
  %3716 = vmatprep.subr.mxu0 0.0
  %3717 = vmatpush1.msra.mxu0 0.0
  %3718 = vmatprep.subr.mxu0 0.0
  %3719 = vmatpush1.msra.mxu0 0.0
  %3720 = vmatprep.subr.mxu0 0.0
  %3721 = vmatpush1.msra.mxu0 0.0
  %3722 = vmatprep.subr.mxu0 0.0
  %3723 = vmatpush1.msra.mxu0 0.0
  %3724 = vmatprep.subr.mxu0 0.0
  %3725 = vmatpush1.msra.mxu0 0.0
  %3726 = vmatprep.subr.mxu0 0.0
  %3727 = vmatpush1.msra.mxu0 0.0
  %3728 = vmatprep.subr.mxu0 0.0
  %3729 = vmatpush1.msra.mxu0 0.0
  %3730 = vmatprep.subr.mxu0 0.0
  %3731 = vmatpush1.msra.mxu0 0.0
  %3732 = vmatprep.subr.mxu0 0.0
  %3733 = vmatpush1.msra.mxu0 0.0
  %3734 = vmatprep.subr.mxu0 0.0
  %3735 = vmatpush1.msra.mxu0 0.0
  %3736 = vmatprep.subr.mxu0 0.0
  %3737 = vmatpush1.msra.mxu0 0.0
  %3738 = vmatprep.subr.mxu0 0.0
  %3739 = vmatpush1.msra.mxu0 0.0
  %3740 = vmatprep.subr.mxu0 0.0
  %3741 = vmatpush1.msra.mxu0 0.0
  %3742 = vmatprep.subr.mxu0 0.0
  %3743 = vmatpush1.msra.mxu0 0.0
  %3744 = vmatprep.subr.mxu0 0.0
  %3745 = vmatpush1.msra.mxu0 0.0
  %3746 = vmatprep.subr.mxu0 0.0
  %3747 = vmatpush1.msra.mxu0 0.0
  %3748 = vmatprep.mubr.f32.mxu0 0.0
  %3749 = vmatmul.mubr.f32.gmra.mrb[0].mxu0 %v3612
  %v3750 = vpop.f32.mrb[0].mxu0
  %v3751 = vadd.f32 %v529, %v3750
  %v3752 = vpop.f32.mrb[0].mxu0
  %3753 = vdwg.mxu0
  %v3754 = vadd.f32 %v3609, %v3681
  %v3755 = vxor.u32 %v3754, 2147483648
  %v3756 = vmul.f32 %v3755, 1.442695
  %v3757 = vpow.pop %v3756
  %v3758 = vadd.f32 %v3757, 1.0
  %v3759 = vrcp.pop %v3758
  %v3760 = vmul.f32 1.0, %v3759
  %3761 = vrot.lane.b32.xlu0 %v3760, 64
  %v3762 = vpop.permute.xlu0 %3761
  %v3763 = vmul.f32 %v3760, %v3751
  %v3764 = vadd.f32 %v3610, %v3763
  %v3765 = vtanh.pop %v3764
  %v3766 = vsub.f32 1.0, %v3762
  %v3767 = vmul.f32 %v3766, %v3765
  %v3768 = vmul.f32 %v3762, %v3607
  %v3769 = vadd.f32 %v3767, %v3768
  %3770 = vst.msk [vmem:[#allocation3 + $0x98] sm:$0xff] %vm448, %v3769
  %v3771 = vld [vmem:[#allocation2 + $0x140] sm:$0xff]
  %v3772 = vld [vmem:[#allocation2 + $0x148] sm:$0xff]
  %v3774 = vsel %vm448, %v3769, 0
  %3776 = vmatprep.subr.mxu0 0.0
  %3777 = vmatpush1.msra.mxu0 %v508
  %3778 = vmatprep.subr.mxu0 0.0
  %3779 = vmatpush1.msra.mxu0 %v509
  %3780 = vmatprep.subr.mxu0 0.0
  %3781 = vmatpush1.msra.mxu0 %v510
  %3782 = vmatprep.subr.mxu0 0.0
  %3783 = vmatpush1.msra.mxu0 %v511
  %3784 = vmatprep.subr.mxu0 0.0
  %3785 = vmatpush1.msra.mxu0 %v512
  %3786 = vmatprep.subr.mxu0 0.0
  %3787 = vmatpush1.msra.mxu0 %v513
  %3788 = vmatprep.subr.mxu0 0.0
  %3789 = vmatpush1.msra.mxu0 %v514
  %3790 = vmatprep.subr.mxu0 0.0
  %3791 = vmatpush1.msra.mxu0 %v515
  %3792 = vmatprep.subr.mxu0 0.0
  %3793 = vmatpush1.msra.mxu0 0.0
  %3794 = vmatprep.subr.mxu0 0.0
  %3795 = vmatpush1.msra.mxu0 0.0
  %3796 = vmatprep.subr.mxu0 0.0
  %3797 = vmatpush1.msra.mxu0 0.0
  %3798 = vmatprep.subr.mxu0 0.0
  %3799 = vmatpush1.msra.mxu0 0.0
  %3800 = vmatprep.subr.mxu0 0.0
  %3801 = vmatpush1.msra.mxu0 0.0
  %3802 = vmatprep.subr.mxu0 0.0
  %3803 = vmatpush1.msra.mxu0 0.0
  %3804 = vmatprep.subr.mxu0 0.0
  %3805 = vmatpush1.msra.mxu0 0.0
  %3806 = vmatprep.subr.mxu0 0.0
  %3807 = vmatpush1.msra.mxu0 0.0
  %3808 = vmatprep.subr.mxu0 0.0
  %3809 = vmatpush1.msra.mxu0 0.0
  %3810 = vmatprep.subr.mxu0 0.0
  %3811 = vmatpush1.msra.mxu0 0.0
  %3812 = vmatprep.subr.mxu0 0.0
  %3813 = vmatpush1.msra.mxu0 0.0
  %3814 = vmatprep.subr.mxu0 0.0
  %3815 = vmatpush1.msra.mxu0 0.0
  %3816 = vmatprep.subr.mxu0 0.0
  %3817 = vmatpush1.msra.mxu0 0.0
  %3818 = vmatprep.subr.mxu0 0.0
  %3819 = vmatpush1.msra.mxu0 0.0
  %3820 = vmatprep.subr.mxu0 0.0
  %3821 = vmatpush1.msra.mxu0 0.0
  %3822 = vmatprep.subr.mxu0 0.0
  %3823 = vmatpush1.msra.mxu0 0.0
  %3824 = vmatprep.subr.mxu0 0.0
  %3825 = vmatpush1.msra.mxu0 0.0
  %3826 = vmatprep.subr.mxu0 0.0
  %3827 = vmatpush1.msra.mxu0 0.0
  %3828 = vmatprep.subr.mxu0 0.0
  %3829 = vmatpush1.msra.mxu0 0.0
  %3830 = vmatprep.subr.mxu0 0.0
  %3831 = vmatpush1.msra.mxu0 0.0
  %3832 = vmatprep.subr.mxu0 0.0
  %3833 = vmatpush1.msra.mxu0 0.0
  %3834 = vmatprep.subr.mxu0 0.0
  %3835 = vmatpush1.msra.mxu0 0.0
  %3836 = vmatprep.subr.mxu0 0.0
  %3837 = vmatpush1.msra.mxu0 0.0
  %3838 = vmatprep.subr.mxu0 0.0
  %3839 = vmatpush1.msra.mxu0 0.0
  %3840 = vmatprep.mubr.f32.mxu0 0.0
  %3841 = vmatmul.mubr.f32.gmra.mrb[0].mxu0 %v3774
  %v3842 = vpop.f32.mrb[0].mxu0
  %v3843 = vadd.f32 0.0, %v3842
  %v3844 = vpop.f32.mrb[0].mxu0
  %3845 = vdwg.mxu0
  %3846 = vmatprep.subr.mxu0 0.0
  %3847 = vmatpush1.msra.mxu0 %v516
  %3848 = vmatprep.subr.mxu0 0.0
  %3849 = vmatpush1.msra.mxu0 %v517
  %3850 = vmatprep.subr.mxu0 0.0
  %3851 = vmatpush1.msra.mxu0 %v518
  %3852 = vmatprep.subr.mxu0 0.0
  %3853 = vmatpush1.msra.mxu0 %v519
  %3854 = vmatprep.subr.mxu0 0.0
  %3855 = vmatpush1.msra.mxu0 %v520
  %3856 = vmatprep.subr.mxu0 0.0
  %3857 = vmatpush1.msra.mxu0 %v521
  %3858 = vmatprep.subr.mxu0 0.0
  %3859 = vmatpush1.msra.mxu0 %v522
  %3860 = vmatprep.subr.mxu0 0.0
  %3861 = vmatpush1.msra.mxu0 %v523
  %3862 = vmatprep.subr.mxu0 0.0
  %3863 = vmatpush1.msra.mxu0 0.0
  %3864 = vmatprep.subr.mxu0 0.0
  %3865 = vmatpush1.msra.mxu0 0.0
  %3866 = vmatprep.subr.mxu0 0.0
  %3867 = vmatpush1.msra.mxu0 0.0
  %3868 = vmatprep.subr.mxu0 0.0
  %3869 = vmatpush1.msra.mxu0 0.0
  %3870 = vmatprep.subr.mxu0 0.0
  %3871 = vmatpush1.msra.mxu0 0.0
  %3872 = vmatprep.subr.mxu0 0.0
  %3873 = vmatpush1.msra.mxu0 0.0
  %3874 = vmatprep.subr.mxu0 0.0
  %3875 = vmatpush1.msra.mxu0 0.0
  %3876 = vmatprep.subr.mxu0 0.0
  %3877 = vmatpush1.msra.mxu0 0.0
  %3878 = vmatprep.subr.mxu0 0.0
  %3879 = vmatpush1.msra.mxu0 0.0
  %3880 = vmatprep.subr.mxu0 0.0
  %3881 = vmatpush1.msra.mxu0 0.0
  %3882 = vmatprep.subr.mxu0 0.0
  %3883 = vmatpush1.msra.mxu0 0.0
  %3884 = vmatprep.subr.mxu0 0.0
  %3885 = vmatpush1.msra.mxu0 0.0
  %3886 = vmatprep.subr.mxu0 0.0
  %3887 = vmatpush1.msra.mxu0 0.0
  %3888 = vmatprep.subr.mxu0 0.0
  %3889 = vmatpush1.msra.mxu0 0.0
  %3890 = vmatprep.subr.mxu0 0.0
  %3891 = vmatpush1.msra.mxu0 0.0
  %3892 = vmatprep.subr.mxu0 0.0
  %3893 = vmatpush1.msra.mxu0 0.0
  %3894 = vmatprep.subr.mxu0 0.0
  %3895 = vmatpush1.msra.mxu0 0.0
  %3896 = vmatprep.subr.mxu0 0.0
  %3897 = vmatpush1.msra.mxu0 0.0
  %3898 = vmatprep.subr.mxu0 0.0
  %3899 = vmatpush1.msra.mxu0 0.0
  %3900 = vmatprep.subr.mxu0 0.0
  %3901 = vmatpush1.msra.mxu0 0.0
  %3902 = vmatprep.subr.mxu0 0.0
  %3903 = vmatpush1.msra.mxu0 0.0
  %3904 = vmatprep.subr.mxu0 0.0
  %3905 = vmatpush1.msra.mxu0 0.0
  %3906 = vmatprep.subr.mxu0 0.0
  %3907 = vmatpush1.msra.mxu0 0.0
  %3908 = vmatprep.subr.mxu0 0.0
  %3909 = vmatpush1.msra.mxu0 0.0
  %3910 = vmatprep.mubr.f32.mxu0 0.0
  %3911 = vmatmul.mubr.f32.gmra.mrb[0].mxu0 %v3774
  %v3912 = vpop.f32.mrb[0].mxu0
  %v3913 = vadd.f32 %v529, %v3912
  %v3914 = vpop.f32.mrb[0].mxu0
  %3915 = vdwg.mxu0
  %v3916 = vadd.f32 %v3771, %v3843
  %v3917 = vxor.u32 %v3916, 2147483648
  %v3918 = vmul.f32 %v3917, 1.442695
  %v3919 = vpow.pop %v3918
  %v3920 = vadd.f32 %v3919, 1.0
  %v3921 = vrcp.pop %v3920
  %v3922 = vmul.f32 1.0, %v3921
  %3923 = vrot.lane.b32.xlu0 %v3922, 64
  %v3924 = vpop.permute.xlu0 %3923
  %v3925 = vmul.f32 %v3922, %v3913
  %v3926 = vadd.f32 %v3772, %v3925
  %v3927 = vtanh.pop %v3926
  %v3928 = vsub.f32 1.0, %v3924
  %v3929 = vmul.f32 %v3928, %v3927
  %v3930 = vmul.f32 %v3924, %v3769
  %v3931 = vadd.f32 %v3929, %v3930
  %3932 = vst.msk [vmem:[#allocation3 + $0xa0] sm:$0xff] %vm448, %v3931
  %v3933 = vld [vmem:[#allocation2 + $0x150] sm:$0xff]
  %v3934 = vld [vmem:[#allocation2 + $0x158] sm:$0xff]
  %v3936 = vsel %vm448, %v3931, 0
  %3938 = vmatprep.subr.mxu0 0.0
  %3939 = vmatpush1.msra.mxu0 %v508
  %3940 = vmatprep.subr.mxu0 0.0
  %3941 = vmatpush1.msra.mxu0 %v509
  %3942 = vmatprep.subr.mxu0 0.0
  %3943 = vmatpush1.msra.mxu0 %v510
  %3944 = vmatprep.subr.mxu0 0.0
  %3945 = vmatpush1.msra.mxu0 %v511
  %3946 = vmatprep.subr.mxu0 0.0
  %3947 = vmatpush1.msra.mxu0 %v512
  %3948 = vmatprep.subr.mxu0 0.0
  %3949 = vmatpush1.msra.mxu0 %v513
  %3950 = vmatprep.subr.mxu0 0.0
  %3951 = vmatpush1.msra.mxu0 %v514
  %3952 = vmatprep.subr.mxu0 0.0
  %3953 = vmatpush1.msra.mxu0 %v515
  %3954 = vmatprep.subr.mxu0 0.0
  %3955 = vmatpush1.msra.mxu0 0.0
  %3956 = vmatprep.subr.mxu0 0.0
  %3957 = vmatpush1.msra.mxu0 0.0
  %3958 = vmatprep.subr.mxu0 0.0
  %3959 = vmatpush1.msra.mxu0 0.0
  %3960 = vmatprep.subr.mxu0 0.0
  %3961 = vmatpush1.msra.mxu0 0.0
  %3962 = vmatprep.subr.mxu0 0.0
  %3963 = vmatpush1.msra.mxu0 0.0
  %3964 = vmatprep.subr.mxu0 0.0
  %3965 = vmatpush1.msra.mxu0 0.0
  %3966 = vmatprep.subr.mxu0 0.0
  %3967 = vmatpush1.msra.mxu0 0.0
  %3968 = vmatprep.subr.mxu0 0.0
  %3969 = vmatpush1.msra.mxu0 0.0
  %3970 = vmatprep.subr.mxu0 0.0
  %3971 = vmatpush1.msra.mxu0 0.0
  %3972 = vmatprep.subr.mxu0 0.0
  %3973 = vmatpush1.msra.mxu0 0.0
  %3974 = vmatprep.subr.mxu0 0.0
  %3975 = vmatpush1.msra.mxu0 0.0
  %3976 = vmatprep.subr.mxu0 0.0
  %3977 = vmatpush1.msra.mxu0 0.0
  %3978 = vmatprep.subr.mxu0 0.0
  %3979 = vmatpush1.msra.mxu0 0.0
  %3980 = vmatprep.subr.mxu0 0.0
  %3981 = vmatpush1.msra.mxu0 0.0
  %3982 = vmatprep.subr.mxu0 0.0
  %3983 = vmatpush1.msra.mxu0 0.0
  %3984 = vmatprep.subr.mxu0 0.0
  %3985 = vmatpush1.msra.mxu0 0.0
  %3986 = vmatprep.subr.mxu0 0.0
  %3987 = vmatpush1.msra.mxu0 0.0
  %3988 = vmatprep.subr.mxu0 0.0
  %3989 = vmatpush1.msra.mxu0 0.0
  %3990 = vmatprep.subr.mxu0 0.0
  %3991 = vmatpush1.msra.mxu0 0.0
  %3992 = vmatprep.subr.mxu0 0.0
  %3993 = vmatpush1.msra.mxu0 0.0
  %3994 = vmatprep.subr.mxu0 0.0
  %3995 = vmatpush1.msra.mxu0 0.0
  %3996 = vmatprep.subr.mxu0 0.0
  %3997 = vmatpush1.msra.mxu0 0.0
  %3998 = vmatprep.subr.mxu0 0.0
  %3999 = vmatpush1.msra.mxu0 0.0
  %4000 = vmatprep.subr.mxu0 0.0
  %4001 = vmatpush1.msra.mxu0 0.0
  %4002 = vmatprep.mubr.f32.mxu0 0.0
  %4003 = vmatmul.mubr.f32.gmra.mrb[0].mxu0 %v3936
  %v4004 = vpop.f32.mrb[0].mxu0
  %v4005 = vadd.f32 0.0, %v4004
  %v4006 = vpop.f32.mrb[0].mxu0
  %4007 = vdwg.mxu0
  %4008 = vmatprep.subr.mxu0 0.0
  %4009 = vmatpush1.msra.mxu0 %v516
  %4010 = vmatprep.subr.mxu0 0.0
  %4011 = vmatpush1.msra.mxu0 %v517
  %4012 = vmatprep.subr.mxu0 0.0
  %4013 = vmatpush1.msra.mxu0 %v518
  %4014 = vmatprep.subr.mxu0 0.0
  %4015 = vmatpush1.msra.mxu0 %v519
  %4016 = vmatprep.subr.mxu0 0.0
  %4017 = vmatpush1.msra.mxu0 %v520
  %4018 = vmatprep.subr.mxu0 0.0
  %4019 = vmatpush1.msra.mxu0 %v521
  %4020 = vmatprep.subr.mxu0 0.0
  %4021 = vmatpush1.msra.mxu0 %v522
  %4022 = vmatprep.subr.mxu0 0.0
  %4023 = vmatpush1.msra.mxu0 %v523
  %4024 = vmatprep.subr.mxu0 0.0
  %4025 = vmatpush1.msra.mxu0 0.0
  %4026 = vmatprep.subr.mxu0 0.0
  %4027 = vmatpush1.msra.mxu0 0.0
  %4028 = vmatprep.subr.mxu0 0.0
  %4029 = vmatpush1.msra.mxu0 0.0
  %4030 = vmatprep.subr.mxu0 0.0
  %4031 = vmatpush1.msra.mxu0 0.0
  %4032 = vmatprep.subr.mxu0 0.0
  %4033 = vmatpush1.msra.mxu0 0.0
  %4034 = vmatprep.subr.mxu0 0.0
  %4035 = vmatpush1.msra.mxu0 0.0
  %4036 = vmatprep.subr.mxu0 0.0
  %4037 = vmatpush1.msra.mxu0 0.0
  %4038 = vmatprep.subr.mxu0 0.0
  %4039 = vmatpush1.msra.mxu0 0.0
  %4040 = vmatprep.subr.mxu0 0.0
  %4041 = vmatpush1.msra.mxu0 0.0
  %4042 = vmatprep.subr.mxu0 0.0
  %4043 = vmatpush1.msra.mxu0 0.0
  %4044 = vmatprep.subr.mxu0 0.0
  %4045 = vmatpush1.msra.mxu0 0.0
  %4046 = vmatprep.subr.mxu0 0.0
  %4047 = vmatpush1.msra.mxu0 0.0
  %4048 = vmatprep.subr.mxu0 0.0
  %4049 = vmatpush1.msra.mxu0 0.0
  %4050 = vmatprep.subr.mxu0 0.0
  %4051 = vmatpush1.msra.mxu0 0.0
  %4052 = vmatprep.subr.mxu0 0.0
  %4053 = vmatpush1.msra.mxu0 0.0
  %4054 = vmatprep.subr.mxu0 0.0
  %4055 = vmatpush1.msra.mxu0 0.0
  %4056 = vmatprep.subr.mxu0 0.0
  %4057 = vmatpush1.msra.mxu0 0.0
  %4058 = vmatprep.subr.mxu0 0.0
  %4059 = vmatpush1.msra.mxu0 0.0
  %4060 = vmatprep.subr.mxu0 0.0
  %4061 = vmatpush1.msra.mxu0 0.0
  %4062 = vmatprep.subr.mxu0 0.0
  %4063 = vmatpush1.msra.mxu0 0.0
  %4064 = vmatprep.subr.mxu0 0.0
  %4065 = vmatpush1.msra.mxu0 0.0
  %4066 = vmatprep.subr.mxu0 0.0
  %4067 = vmatpush1.msra.mxu0 0.0
  %4068 = vmatprep.subr.mxu0 0.0
  %4069 = vmatpush1.msra.mxu0 0.0
  %4070 = vmatprep.subr.mxu0 0.0
  %4071 = vmatpush1.msra.mxu0 0.0
  %4072 = vmatprep.mubr.f32.mxu0 0.0
  %4073 = vmatmul.mubr.f32.gmra.mrb[0].mxu0 %v3936
  %v4074 = vpop.f32.mrb[0].mxu0
  %v4075 = vadd.f32 %v529, %v4074
  %v4076 = vpop.f32.mrb[0].mxu0
  %4077 = vdwg.mxu0
  %v4078 = vadd.f32 %v3933, %v4005
  %v4079 = vxor.u32 %v4078, 2147483648
  %v4080 = vmul.f32 %v4079, 1.442695
  %v4081 = vpow.pop %v4080
  %v4082 = vadd.f32 %v4081, 1.0
  %v4083 = vrcp.pop %v4082
  %v4084 = vmul.f32 1.0, %v4083
  %4085 = vrot.lane.b32.xlu0 %v4084, 64
  %v4086 = vpop.permute.xlu0 %4085
  %v4087 = vmul.f32 %v4084, %v4075
  %v4088 = vadd.f32 %v3934, %v4087
  %v4089 = vtanh.pop %v4088
  %v4090 = vsub.f32 1.0, %v4086
  %v4091 = vmul.f32 %v4090, %v4089
  %v4092 = vmul.f32 %v4086, %v3931
  %v4093 = vadd.f32 %v4091, %v4092
  %4094 = vst.msk [vmem:[#allocation3 + $0xa8] sm:$0xff] %vm448, %v4093
  %v4095 = vld [vmem:[#allocation2 + $0x160] sm:$0xff]
  %v4096 = vld [vmem:[#allocation2 + $0x168] sm:$0xff]
  %v4098 = vsel %vm448, %v4093, 0
  %4100 = vmatprep.subr.mxu0 0.0
  %4101 = vmatpush1.msra.mxu0 %v508
  %4102 = vmatprep.subr.mxu0 0.0
  %4103 = vmatpush1.msra.mxu0 %v509
  %4104 = vmatprep.subr.mxu0 0.0
  %4105 = vmatpush1.msra.mxu0 %v510
  %4106 = vmatprep.subr.mxu0 0.0
  %4107 = vmatpush1.msra.mxu0 %v511
  %4108 = vmatprep.subr.mxu0 0.0
  %4109 = vmatpush1.msra.mxu0 %v512
  %4110 = vmatprep.subr.mxu0 0.0
  %4111 = vmatpush1.msra.mxu0 %v513
  %4112 = vmatprep.subr.mxu0 0.0
  %4113 = vmatpush1.msra.mxu0 %v514
  %4114 = vmatprep.subr.mxu0 0.0
  %4115 = vmatpush1.msra.mxu0 %v515
  %4116 = vmatprep.subr.mxu0 0.0
  %4117 = vmatpush1.msra.mxu0 0.0
  %4118 = vmatprep.subr.mxu0 0.0
  %4119 = vmatpush1.msra.mxu0 0.0
  %4120 = vmatprep.subr.mxu0 0.0
  %4121 = vmatpush1.msra.mxu0 0.0
  %4122 = vmatprep.subr.mxu0 0.0
  %4123 = vmatpush1.msra.mxu0 0.0
  %4124 = vmatprep.subr.mxu0 0.0
  %4125 = vmatpush1.msra.mxu0 0.0
  %4126 = vmatprep.subr.mxu0 0.0
  %4127 = vmatpush1.msra.mxu0 0.0
  %4128 = vmatprep.subr.mxu0 0.0
  %4129 = vmatpush1.msra.mxu0 0.0
  %4130 = vmatprep.subr.mxu0 0.0
  %4131 = vmatpush1.msra.mxu0 0.0
  %4132 = vmatprep.subr.mxu0 0.0
  %4133 = vmatpush1.msra.mxu0 0.0
  %4134 = vmatprep.subr.mxu0 0.0
  %4135 = vmatpush1.msra.mxu0 0.0
  %4136 = vmatprep.subr.mxu0 0.0
  %4137 = vmatpush1.msra.mxu0 0.0
  %4138 = vmatprep.subr.mxu0 0.0
  %4139 = vmatpush1.msra.mxu0 0.0
  %4140 = vmatprep.subr.mxu0 0.0
  %4141 = vmatpush1.msra.mxu0 0.0
  %4142 = vmatprep.subr.mxu0 0.0
  %4143 = vmatpush1.msra.mxu0 0.0
  %4144 = vmatprep.subr.mxu0 0.0
  %4145 = vmatpush1.msra.mxu0 0.0
  %4146 = vmatprep.subr.mxu0 0.0
  %4147 = vmatpush1.msra.mxu0 0.0
  %4148 = vmatprep.subr.mxu0 0.0
  %4149 = vmatpush1.msra.mxu0 0.0
  %4150 = vmatprep.subr.mxu0 0.0
  %4151 = vmatpush1.msra.mxu0 0.0
  %4152 = vmatprep.subr.mxu0 0.0
  %4153 = vmatpush1.msra.mxu0 0.0
  %4154 = vmatprep.subr.mxu0 0.0
  %4155 = vmatpush1.msra.mxu0 0.0
  %4156 = vmatprep.subr.mxu0 0.0
  %4157 = vmatpush1.msra.mxu0 0.0
  %4158 = vmatprep.subr.mxu0 0.0
  %4159 = vmatpush1.msra.mxu0 0.0
  %4160 = vmatprep.subr.mxu0 0.0
  %4161 = vmatpush1.msra.mxu0 0.0
  %4162 = vmatprep.subr.mxu0 0.0
  %4163 = vmatpush1.msra.mxu0 0.0
  %4164 = vmatprep.mubr.f32.mxu0 0.0
  %4165 = vmatmul.mubr.f32.gmra.mrb[0].mxu0 %v4098
  %v4166 = vpop.f32.mrb[0].mxu0
  %v4167 = vadd.f32 0.0, %v4166
  %v4168 = vpop.f32.mrb[0].mxu0
  %4169 = vdwg.mxu0
  %4170 = vmatprep.subr.mxu0 0.0
  %4171 = vmatpush1.msra.mxu0 %v516
  %4172 = vmatprep.subr.mxu0 0.0
  %4173 = vmatpush1.msra.mxu0 %v517
  %4174 = vmatprep.subr.mxu0 0.0
  %4175 = vmatpush1.msra.mxu0 %v518
  %4176 = vmatprep.subr.mxu0 0.0
  %4177 = vmatpush1.msra.mxu0 %v519
  %4178 = vmatprep.subr.mxu0 0.0
  %4179 = vmatpush1.msra.mxu0 %v520
  %4180 = vmatprep.subr.mxu0 0.0
  %4181 = vmatpush1.msra.mxu0 %v521
  %4182 = vmatprep.subr.mxu0 0.0
  %4183 = vmatpush1.msra.mxu0 %v522
  %4184 = vmatprep.subr.mxu0 0.0
  %4185 = vmatpush1.msra.mxu0 %v523
  %4186 = vmatprep.subr.mxu0 0.0
  %4187 = vmatpush1.msra.mxu0 0.0
  %4188 = vmatprep.subr.mxu0 0.0
  %4189 = vmatpush1.msra.mxu0 0.0
  %4190 = vmatprep.subr.mxu0 0.0
  %4191 = vmatpush1.msra.mxu0 0.0
  %4192 = vmatprep.subr.mxu0 0.0
  %4193 = vmatpush1.msra.mxu0 0.0
  %4194 = vmatprep.subr.mxu0 0.0
  %4195 = vmatpush1.msra.mxu0 0.0
  %4196 = vmatprep.subr.mxu0 0.0
  %4197 = vmatpush1.msra.mxu0 0.0
  %4198 = vmatprep.subr.mxu0 0.0
  %4199 = vmatpush1.msra.mxu0 0.0
  %4200 = vmatprep.subr.mxu0 0.0
  %4201 = vmatpush1.msra.mxu0 0.0
  %4202 = vmatprep.subr.mxu0 0.0
  %4203 = vmatpush1.msra.mxu0 0.0
  %4204 = vmatprep.subr.mxu0 0.0
  %4205 = vmatpush1.msra.mxu0 0.0
  %4206 = vmatprep.subr.mxu0 0.0
  %4207 = vmatpush1.msra.mxu0 0.0
  %4208 = vmatprep.subr.mxu0 0.0
  %4209 = vmatpush1.msra.mxu0 0.0
  %4210 = vmatprep.subr.mxu0 0.0
  %4211 = vmatpush1.msra.mxu0 0.0
  %4212 = vmatprep.subr.mxu0 0.0
  %4213 = vmatpush1.msra.mxu0 0.0
  %4214 = vmatprep.subr.mxu0 0.0
  %4215 = vmatpush1.msra.mxu0 0.0
  %4216 = vmatprep.subr.mxu0 0.0
  %4217 = vmatpush1.msra.mxu0 0.0
  %4218 = vmatprep.subr.mxu0 0.0
  %4219 = vmatpush1.msra.mxu0 0.0
  %4220 = vmatprep.subr.mxu0 0.0
  %4221 = vmatpush1.msra.mxu0 0.0
  %4222 = vmatprep.subr.mxu0 0.0
  %4223 = vmatpush1.msra.mxu0 0.0
  %4224 = vmatprep.subr.mxu0 0.0
  %4225 = vmatpush1.msra.mxu0 0.0
  %4226 = vmatprep.subr.mxu0 0.0
  %4227 = vmatpush1.msra.mxu0 0.0
  %4228 = vmatprep.subr.mxu0 0.0
  %4229 = vmatpush1.msra.mxu0 0.0
  %4230 = vmatprep.subr.mxu0 0.0
  %4231 = vmatpush1.msra.mxu0 0.0
  %4232 = vmatprep.subr.mxu0 0.0
  %4233 = vmatpush1.msra.mxu0 0.0
  %4234 = vmatprep.mubr.f32.mxu0 0.0
  %4235 = vmatmul.mubr.f32.gmra.mrb[0].mxu0 %v4098
  %v4236 = vpop.f32.mrb[0].mxu0
  %v4237 = vadd.f32 %v529, %v4236
  %v4238 = vpop.f32.mrb[0].mxu0
  %4239 = vdwg.mxu0
  %v4240 = vadd.f32 %v4095, %v4167
  %v4241 = vxor.u32 %v4240, 2147483648
  %v4242 = vmul.f32 %v4241, 1.442695
  %v4243 = vpow.pop %v4242
  %v4244 = vadd.f32 %v4243, 1.0
  %v4245 = vrcp.pop %v4244
  %v4246 = vmul.f32 1.0, %v4245
  %4247 = vrot.lane.b32.xlu0 %v4246, 64
  %v4248 = vpop.permute.xlu0 %4247
  %v4249 = vmul.f32 %v4246, %v4237
  %v4250 = vadd.f32 %v4096, %v4249
  %v4251 = vtanh.pop %v4250
  %v4252 = vsub.f32 1.0, %v4248
  %v4253 = vmul.f32 %v4252, %v4251
  %v4254 = vmul.f32 %v4248, %v4093
  %v4255 = vadd.f32 %v4253, %v4254
  %4256 = vst.msk [vmem:[#allocation3 + $0xb0] sm:$0xff] %vm448, %v4255
  %v4257 = vld [vmem:[#allocation2 + $0x170] sm:$0xff]
  %v4258 = vld [vmem:[#allocation2 + $0x178] sm:$0xff]
  %v4260 = vsel %vm448, %v4255, 0
  %4262 = vmatprep.subr.mxu0 0.0
  %4263 = vmatpush1.msra.mxu0 %v508
  %4264 = vmatprep.subr.mxu0 0.0
  %4265 = vmatpush1.msra.mxu0 %v509
  %4266 = vmatprep.subr.mxu0 0.0
  %4267 = vmatpush1.msra.mxu0 %v510
  %4268 = vmatprep.subr.mxu0 0.0
  %4269 = vmatpush1.msra.mxu0 %v511
  %4270 = vmatprep.subr.mxu0 0.0
  %4271 = vmatpush1.msra.mxu0 %v512
  %4272 = vmatprep.subr.mxu0 0.0
  %4273 = vmatpush1.msra.mxu0 %v513
  %4274 = vmatprep.subr.mxu0 0.0
  %4275 = vmatpush1.msra.mxu0 %v514
  %4276 = vmatprep.subr.mxu0 0.0
  %4277 = vmatpush1.msra.mxu0 %v515
  %4278 = vmatprep.subr.mxu0 0.0
  %4279 = vmatpush1.msra.mxu0 0.0
  %4280 = vmatprep.subr.mxu0 0.0
  %4281 = vmatpush1.msra.mxu0 0.0
  %4282 = vmatprep.subr.mxu0 0.0
  %4283 = vmatpush1.msra.mxu0 0.0
  %4284 = vmatprep.subr.mxu0 0.0
  %4285 = vmatpush1.msra.mxu0 0.0
  %4286 = vmatprep.subr.mxu0 0.0
  %4287 = vmatpush1.msra.mxu0 0.0
  %4288 = vmatprep.subr.mxu0 0.0
  %4289 = vmatpush1.msra.mxu0 0.0
  %4290 = vmatprep.subr.mxu0 0.0
  %4291 = vmatpush1.msra.mxu0 0.0
  %4292 = vmatprep.subr.mxu0 0.0
  %4293 = vmatpush1.msra.mxu0 0.0
  %4294 = vmatprep.subr.mxu0 0.0
  %4295 = vmatpush1.msra.mxu0 0.0
  %4296 = vmatprep.subr.mxu0 0.0
  %4297 = vmatpush1.msra.mxu0 0.0
  %4298 = vmatprep.subr.mxu0 0.0
  %4299 = vmatpush1.msra.mxu0 0.0
  %4300 = vmatprep.subr.mxu0 0.0
  %4301 = vmatpush1.msra.mxu0 0.0
  %4302 = vmatprep.subr.mxu0 0.0
  %4303 = vmatpush1.msra.mxu0 0.0
  %4304 = vmatprep.subr.mxu0 0.0
  %4305 = vmatpush1.msra.mxu0 0.0
  %4306 = vmatprep.subr.mxu0 0.0
  %4307 = vmatpush1.msra.mxu0 0.0
  %4308 = vmatprep.subr.mxu0 0.0
  %4309 = vmatpush1.msra.mxu0 0.0
  %4310 = vmatprep.subr.mxu0 0.0
  %4311 = vmatpush1.msra.mxu0 0.0
  %4312 = vmatprep.subr.mxu0 0.0
  %4313 = vmatpush1.msra.mxu0 0.0
  %4314 = vmatprep.subr.mxu0 0.0
  %4315 = vmatpush1.msra.mxu0 0.0
  %4316 = vmatprep.subr.mxu0 0.0
  %4317 = vmatpush1.msra.mxu0 0.0
  %4318 = vmatprep.subr.mxu0 0.0
  %4319 = vmatpush1.msra.mxu0 0.0
  %4320 = vmatprep.subr.mxu0 0.0
  %4321 = vmatpush1.msra.mxu0 0.0
  %4322 = vmatprep.subr.mxu0 0.0
  %4323 = vmatpush1.msra.mxu0 0.0
  %4324 = vmatprep.subr.mxu0 0.0
  %4325 = vmatpush1.msra.mxu0 0.0
  %4326 = vmatprep.mubr.f32.mxu0 0.0
  %4327 = vmatmul.mubr.f32.gmra.mrb[0].mxu0 %v4260
  %v4328 = vpop.f32.mrb[0].mxu0
  %v4329 = vadd.f32 0.0, %v4328
  %v4330 = vpop.f32.mrb[0].mxu0
  %4331 = vdwg.mxu0
  %4332 = vmatprep.subr.mxu0 0.0
  %4333 = vmatpush1.msra.mxu0 %v516
  %4334 = vmatprep.subr.mxu0 0.0
  %4335 = vmatpush1.msra.mxu0 %v517
  %4336 = vmatprep.subr.mxu0 0.0
  %4337 = vmatpush1.msra.mxu0 %v518
  %4338 = vmatprep.subr.mxu0 0.0
  %4339 = vmatpush1.msra.mxu0 %v519
  %4340 = vmatprep.subr.mxu0 0.0
  %4341 = vmatpush1.msra.mxu0 %v520
  %4342 = vmatprep.subr.mxu0 0.0
  %4343 = vmatpush1.msra.mxu0 %v521
  %4344 = vmatprep.subr.mxu0 0.0
  %4345 = vmatpush1.msra.mxu0 %v522
  %4346 = vmatprep.subr.mxu0 0.0
  %4347 = vmatpush1.msra.mxu0 %v523
  %4348 = vmatprep.subr.mxu0 0.0
  %4349 = vmatpush1.msra.mxu0 0.0
  %4350 = vmatprep.subr.mxu0 0.0
  %4351 = vmatpush1.msra.mxu0 0.0
  %4352 = vmatprep.subr.mxu0 0.0
  %4353 = vmatpush1.msra.mxu0 0.0
  %4354 = vmatprep.subr.mxu0 0.0
  %4355 = vmatpush1.msra.mxu0 0.0
  %4356 = vmatprep.subr.mxu0 0.0
  %4357 = vmatpush1.msra.mxu0 0.0
  %4358 = vmatprep.subr.mxu0 0.0
  %4359 = vmatpush1.msra.mxu0 0.0
  %4360 = vmatprep.subr.mxu0 0.0
  %4361 = vmatpush1.msra.mxu0 0.0
  %4362 = vmatprep.subr.mxu0 0.0
  %4363 = vmatpush1.msra.mxu0 0.0
  %4364 = vmatprep.subr.mxu0 0.0
  %4365 = vmatpush1.msra.mxu0 0.0
  %4366 = vmatprep.subr.mxu0 0.0
  %4367 = vmatpush1.msra.mxu0 0.0
  %4368 = vmatprep.subr.mxu0 0.0
  %4369 = vmatpush1.msra.mxu0 0.0
  %4370 = vmatprep.subr.mxu0 0.0
  %4371 = vmatpush1.msra.mxu0 0.0
  %4372 = vmatprep.subr.mxu0 0.0
  %4373 = vmatpush1.msra.mxu0 0.0
  %4374 = vmatprep.subr.mxu0 0.0
  %4375 = vmatpush1.msra.mxu0 0.0
  %4376 = vmatprep.subr.mxu0 0.0
  %4377 = vmatpush1.msra.mxu0 0.0
  %4378 = vmatprep.subr.mxu0 0.0
  %4379 = vmatpush1.msra.mxu0 0.0
  %4380 = vmatprep.subr.mxu0 0.0
  %4381 = vmatpush1.msra.mxu0 0.0
  %4382 = vmatprep.subr.mxu0 0.0
  %4383 = vmatpush1.msra.mxu0 0.0
  %4384 = vmatprep.subr.mxu0 0.0
  %4385 = vmatpush1.msra.mxu0 0.0
  %4386 = vmatprep.subr.mxu0 0.0
  %4387 = vmatpush1.msra.mxu0 0.0
  %4388 = vmatprep.subr.mxu0 0.0
  %4389 = vmatpush1.msra.mxu0 0.0
  %4390 = vmatprep.subr.mxu0 0.0
  %4391 = vmatpush1.msra.mxu0 0.0
  %4392 = vmatprep.subr.mxu0 0.0
  %4393 = vmatpush1.msra.mxu0 0.0
  %4394 = vmatprep.subr.mxu0 0.0
  %4395 = vmatpush1.msra.mxu0 0.0
  %4396 = vmatprep.mubr.f32.mxu0 0.0
  %4397 = vmatmul.mubr.f32.gmra.mrb[0].mxu0 %v4260
  %v4398 = vpop.f32.mrb[0].mxu0
  %v4399 = vadd.f32 %v529, %v4398
  %v4400 = vpop.f32.mrb[0].mxu0
  %4401 = vdwg.mxu0
  %v4402 = vadd.f32 %v4257, %v4329
  %v4403 = vxor.u32 %v4402, 2147483648
  %v4404 = vmul.f32 %v4403, 1.442695
  %v4405 = vpow.pop %v4404
  %v4406 = vadd.f32 %v4405, 1.0
  %v4407 = vrcp.pop %v4406
  %v4408 = vmul.f32 1.0, %v4407
  %4409 = vrot.lane.b32.xlu0 %v4408, 64
  %v4410 = vpop.permute.xlu0 %4409
  %v4411 = vmul.f32 %v4408, %v4399
  %v4412 = vadd.f32 %v4258, %v4411
  %v4413 = vtanh.pop %v4412
  %v4414 = vsub.f32 1.0, %v4410
  %v4415 = vmul.f32 %v4414, %v4413
  %v4416 = vmul.f32 %v4410, %v4255
  %v4417 = vadd.f32 %v4415, %v4416
  %4418 = vst.msk [vmem:[#allocation3 + $0xb8] sm:$0xff] %vm448, %v4417
  %v4419 = vld [vmem:[#allocation2 + $0x180] sm:$0xff]
  %v4420 = vld [vmem:[#allocation2 + $0x188] sm:$0xff]
  %v4422 = vsel %vm448, %v4417, 0
  %4424 = vmatprep.subr.mxu0 0.0
  %4425 = vmatpush1.msra.mxu0 %v508
  %4426 = vmatprep.subr.mxu0 0.0
  %4427 = vmatpush1.msra.mxu0 %v509
  %4428 = vmatprep.subr.mxu0 0.0
  %4429 = vmatpush1.msra.mxu0 %v510
  %4430 = vmatprep.subr.mxu0 0.0
  %4431 = vmatpush1.msra.mxu0 %v511
  %4432 = vmatprep.subr.mxu0 0.0
  %4433 = vmatpush1.msra.mxu0 %v512
  %4434 = vmatprep.subr.mxu0 0.0
  %4435 = vmatpush1.msra.mxu0 %v513
  %4436 = vmatprep.subr.mxu0 0.0
  %4437 = vmatpush1.msra.mxu0 %v514
  %4438 = vmatprep.subr.mxu0 0.0
  %4439 = vmatpush1.msra.mxu0 %v515
  %4440 = vmatprep.subr.mxu0 0.0
  %4441 = vmatpush1.msra.mxu0 0.0
  %4442 = vmatprep.subr.mxu0 0.0
  %4443 = vmatpush1.msra.mxu0 0.0
  %4444 = vmatprep.subr.mxu0 0.0
  %4445 = vmatpush1.msra.mxu0 0.0
  %4446 = vmatprep.subr.mxu0 0.0
  %4447 = vmatpush1.msra.mxu0 0.0
  %4448 = vmatprep.subr.mxu0 0.0
  %4449 = vmatpush1.msra.mxu0 0.0
  %4450 = vmatprep.subr.mxu0 0.0
  %4451 = vmatpush1.msra.mxu0 0.0
  %4452 = vmatprep.subr.mxu0 0.0
  %4453 = vmatpush1.msra.mxu0 0.0
  %4454 = vmatprep.subr.mxu0 0.0
  %4455 = vmatpush1.msra.mxu0 0.0
  %4456 = vmatprep.subr.mxu0 0.0
  %4457 = vmatpush1.msra.mxu0 0.0
  %4458 = vmatprep.subr.mxu0 0.0
  %4459 = vmatpush1.msra.mxu0 0.0
  %4460 = vmatprep.subr.mxu0 0.0
  %4461 = vmatpush1.msra.mxu0 0.0
  %4462 = vmatprep.subr.mxu0 0.0
  %4463 = vmatpush1.msra.mxu0 0.0
  %4464 = vmatprep.subr.mxu0 0.0
  %4465 = vmatpush1.msra.mxu0 0.0
  %4466 = vmatprep.subr.mxu0 0.0
  %4467 = vmatpush1.msra.mxu0 0.0
  %4468 = vmatprep.subr.mxu0 0.0
  %4469 = vmatpush1.msra.mxu0 0.0
  %4470 = vmatprep.subr.mxu0 0.0
  %4471 = vmatpush1.msra.mxu0 0.0
  %4472 = vmatprep.subr.mxu0 0.0
  %4473 = vmatpush1.msra.mxu0 0.0
  %4474 = vmatprep.subr.mxu0 0.0
  %4475 = vmatpush1.msra.mxu0 0.0
  %4476 = vmatprep.subr.mxu0 0.0
  %4477 = vmatpush1.msra.mxu0 0.0
  %4478 = vmatprep.subr.mxu0 0.0
  %4479 = vmatpush1.msra.mxu0 0.0
  %4480 = vmatprep.subr.mxu0 0.0
  %4481 = vmatpush1.msra.mxu0 0.0
  %4482 = vmatprep.subr.mxu0 0.0
  %4483 = vmatpush1.msra.mxu0 0.0
  %4484 = vmatprep.subr.mxu0 0.0
  %4485 = vmatpush1.msra.mxu0 0.0
  %4486 = vmatprep.subr.mxu0 0.0
  %4487 = vmatpush1.msra.mxu0 0.0
  %4488 = vmatprep.mubr.f32.mxu0 0.0
  %4489 = vmatmul.mubr.f32.gmra.mrb[0].mxu0 %v4422
  %v4490 = vpop.f32.mrb[0].mxu0
  %v4491 = vadd.f32 0.0, %v4490
  %v4492 = vpop.f32.mrb[0].mxu0
  %4493 = vdwg.mxu0
  %4494 = vmatprep.subr.mxu0 0.0
  %4495 = vmatpush1.msra.mxu0 %v516
  %4496 = vmatprep.subr.mxu0 0.0
  %4497 = vmatpush1.msra.mxu0 %v517
  %4498 = vmatprep.subr.mxu0 0.0
  %4499 = vmatpush1.msra.mxu0 %v518
  %4500 = vmatprep.subr.mxu0 0.0
  %4501 = vmatpush1.msra.mxu0 %v519
  %4502 = vmatprep.subr.mxu0 0.0
  %4503 = vmatpush1.msra.mxu0 %v520
  %4504 = vmatprep.subr.mxu0 0.0
  %4505 = vmatpush1.msra.mxu0 %v521
  %4506 = vmatprep.subr.mxu0 0.0
  %4507 = vmatpush1.msra.mxu0 %v522
  %4508 = vmatprep.subr.mxu0 0.0
  %4509 = vmatpush1.msra.mxu0 %v523
  %4510 = vmatprep.subr.mxu0 0.0
  %4511 = vmatpush1.msra.mxu0 0.0
  %4512 = vmatprep.subr.mxu0 0.0
  %4513 = vmatpush1.msra.mxu0 0.0
  %4514 = vmatprep.subr.mxu0 0.0
  %4515 = vmatpush1.msra.mxu0 0.0
  %4516 = vmatprep.subr.mxu0 0.0
  %4517 = vmatpush1.msra.mxu0 0.0
  %4518 = vmatprep.subr.mxu0 0.0
  %4519 = vmatpush1.msra.mxu0 0.0
  %4520 = vmatprep.subr.mxu0 0.0
  %4521 = vmatpush1.msra.mxu0 0.0
  %4522 = vmatprep.subr.mxu0 0.0
  %4523 = vmatpush1.msra.mxu0 0.0
  %4524 = vmatprep.subr.mxu0 0.0
  %4525 = vmatpush1.msra.mxu0 0.0
  %4526 = vmatprep.subr.mxu0 0.0
  %4527 = vmatpush1.msra.mxu0 0.0
  %4528 = vmatprep.subr.mxu0 0.0
  %4529 = vmatpush1.msra.mxu0 0.0
  %4530 = vmatprep.subr.mxu0 0.0
  %4531 = vmatpush1.msra.mxu0 0.0
  %4532 = vmatprep.subr.mxu0 0.0
  %4533 = vmatpush1.msra.mxu0 0.0
  %4534 = vmatprep.subr.mxu0 0.0
  %4535 = vmatpush1.msra.mxu0 0.0
  %4536 = vmatprep.subr.mxu0 0.0
  %4537 = vmatpush1.msra.mxu0 0.0
  %4538 = vmatprep.subr.mxu0 0.0
  %4539 = vmatpush1.msra.mxu0 0.0
  %4540 = vmatprep.subr.mxu0 0.0
  %4541 = vmatpush1.msra.mxu0 0.0
  %4542 = vmatprep.subr.mxu0 0.0
  %4543 = vmatpush1.msra.mxu0 0.0
  %4544 = vmatprep.subr.mxu0 0.0
  %4545 = vmatpush1.msra.mxu0 0.0
  %4546 = vmatprep.subr.mxu0 0.0
  %4547 = vmatpush1.msra.mxu0 0.0
  %4548 = vmatprep.subr.mxu0 0.0
  %4549 = vmatpush1.msra.mxu0 0.0
  %4550 = vmatprep.subr.mxu0 0.0
  %4551 = vmatpush1.msra.mxu0 0.0
  %4552 = vmatprep.subr.mxu0 0.0
  %4553 = vmatpush1.msra.mxu0 0.0
  %4554 = vmatprep.subr.mxu0 0.0
  %4555 = vmatpush1.msra.mxu0 0.0
  %4556 = vmatprep.subr.mxu0 0.0
  %4557 = vmatpush1.msra.mxu0 0.0
  %4558 = vmatprep.mubr.f32.mxu0 0.0
  %4559 = vmatmul.mubr.f32.gmra.mrb[0].mxu0 %v4422
  %v4560 = vpop.f32.mrb[0].mxu0
  %v4561 = vadd.f32 %v529, %v4560
  %v4562 = vpop.f32.mrb[0].mxu0
  %4563 = vdwg.mxu0
  %v4564 = vadd.f32 %v4419, %v4491
  %v4565 = vxor.u32 %v4564, 2147483648
  %v4566 = vmul.f32 %v4565, 1.442695
  %v4567 = vpow.pop %v4566
  %v4568 = vadd.f32 %v4567, 1.0
  %v4569 = vrcp.pop %v4568
  %v4570 = vmul.f32 1.0, %v4569
  %4571 = vrot.lane.b32.xlu0 %v4570, 64
  %v4572 = vpop.permute.xlu0 %4571
  %v4573 = vmul.f32 %v4570, %v4561
  %v4574 = vadd.f32 %v4420, %v4573
  %v4575 = vtanh.pop %v4574
  %v4576 = vsub.f32 1.0, %v4572
  %v4577 = vmul.f32 %v4576, %v4575
  %v4578 = vmul.f32 %v4572, %v4417
  %v4579 = vadd.f32 %v4577, %v4578
  %4580 = vst.msk [vmem:[#allocation3 + $0xc0] sm:$0xff] %vm448, %v4579
  %v4581 = vld [vmem:[#allocation2 + $0x190] sm:$0xff]
  %v4582 = vld [vmem:[#allocation2 + $0x198] sm:$0xff]
  %v4584 = vsel %vm448, %v4579, 0
  %4586 = vmatprep.subr.mxu0 0.0
  %4587 = vmatpush1.msra.mxu0 %v508
  %4588 = vmatprep.subr.mxu0 0.0
  %4589 = vmatpush1.msra.mxu0 %v509
  %4590 = vmatprep.subr.mxu0 0.0
  %4591 = vmatpush1.msra.mxu0 %v510
  %4592 = vmatprep.subr.mxu0 0.0
  %4593 = vmatpush1.msra.mxu0 %v511
  %4594 = vmatprep.subr.mxu0 0.0
  %4595 = vmatpush1.msra.mxu0 %v512
  %4596 = vmatprep.subr.mxu0 0.0
  %4597 = vmatpush1.msra.mxu0 %v513
  %4598 = vmatprep.subr.mxu0 0.0
  %4599 = vmatpush1.msra.mxu0 %v514
  %4600 = vmatprep.subr.mxu0 0.0
  %4601 = vmatpush1.msra.mxu0 %v515
  %4602 = vmatprep.subr.mxu0 0.0
  %4603 = vmatpush1.msra.mxu0 0.0
  %4604 = vmatprep.subr.mxu0 0.0
  %4605 = vmatpush1.msra.mxu0 0.0
  %4606 = vmatprep.subr.mxu0 0.0
  %4607 = vmatpush1.msra.mxu0 0.0
  %4608 = vmatprep.subr.mxu0 0.0
  %4609 = vmatpush1.msra.mxu0 0.0
  %4610 = vmatprep.subr.mxu0 0.0
  %4611 = vmatpush1.msra.mxu0 0.0
  %4612 = vmatprep.subr.mxu0 0.0
  %4613 = vmatpush1.msra.mxu0 0.0
  %4614 = vmatprep.subr.mxu0 0.0
  %4615 = vmatpush1.msra.mxu0 0.0
  %4616 = vmatprep.subr.mxu0 0.0
  %4617 = vmatpush1.msra.mxu0 0.0
  %4618 = vmatprep.subr.mxu0 0.0
  %4619 = vmatpush1.msra.mxu0 0.0
  %4620 = vmatprep.subr.mxu0 0.0
  %4621 = vmatpush1.msra.mxu0 0.0
  %4622 = vmatprep.subr.mxu0 0.0
  %4623 = vmatpush1.msra.mxu0 0.0
  %4624 = vmatprep.subr.mxu0 0.0
  %4625 = vmatpush1.msra.mxu0 0.0
  %4626 = vmatprep.subr.mxu0 0.0
  %4627 = vmatpush1.msra.mxu0 0.0
  %4628 = vmatprep.subr.mxu0 0.0
  %4629 = vmatpush1.msra.mxu0 0.0
  %4630 = vmatprep.subr.mxu0 0.0
  %4631 = vmatpush1.msra.mxu0 0.0
  %4632 = vmatprep.subr.mxu0 0.0
  %4633 = vmatpush1.msra.mxu0 0.0
  %4634 = vmatprep.subr.mxu0 0.0
  %4635 = vmatpush1.msra.mxu0 0.0
  %4636 = vmatprep.subr.mxu0 0.0
  %4637 = vmatpush1.msra.mxu0 0.0
  %4638 = vmatprep.subr.mxu0 0.0
  %4639 = vmatpush1.msra.mxu0 0.0
  %4640 = vmatprep.subr.mxu0 0.0
  %4641 = vmatpush1.msra.mxu0 0.0
  %4642 = vmatprep.subr.mxu0 0.0
  %4643 = vmatpush1.msra.mxu0 0.0
  %4644 = vmatprep.subr.mxu0 0.0
  %4645 = vmatpush1.msra.mxu0 0.0
  %4646 = vmatprep.subr.mxu0 0.0
  %4647 = vmatpush1.msra.mxu0 0.0
  %4648 = vmatprep.subr.mxu0 0.0
  %4649 = vmatpush1.msra.mxu0 0.0
  %4650 = vmatprep.mubr.f32.mxu0 0.0
  %4651 = vmatmul.mubr.f32.gmra.mrb[0].mxu0 %v4584
  %v4652 = vpop.f32.mrb[0].mxu0
  %v4653 = vadd.f32 0.0, %v4652
  %v4654 = vpop.f32.mrb[0].mxu0
  %4655 = vdwg.mxu0
  %4656 = vmatprep.subr.mxu0 0.0
  %4657 = vmatpush1.msra.mxu0 %v516
  %4658 = vmatprep.subr.mxu0 0.0
  %4659 = vmatpush1.msra.mxu0 %v517
  %4660 = vmatprep.subr.mxu0 0.0
  %4661 = vmatpush1.msra.mxu0 %v518
  %4662 = vmatprep.subr.mxu0 0.0
  %4663 = vmatpush1.msra.mxu0 %v519
  %4664 = vmatprep.subr.mxu0 0.0
  %4665 = vmatpush1.msra.mxu0 %v520
  %4666 = vmatprep.subr.mxu0 0.0
  %4667 = vmatpush1.msra.mxu0 %v521
  %4668 = vmatprep.subr.mxu0 0.0
  %4669 = vmatpush1.msra.mxu0 %v522
  %4670 = vmatprep.subr.mxu0 0.0
  %4671 = vmatpush1.msra.mxu0 %v523
  %4672 = vmatprep.subr.mxu0 0.0
  %4673 = vmatpush1.msra.mxu0 0.0
  %4674 = vmatprep.subr.mxu0 0.0
  %4675 = vmatpush1.msra.mxu0 0.0
  %4676 = vmatprep.subr.mxu0 0.0
  %4677 = vmatpush1.msra.mxu0 0.0
  %4678 = vmatprep.subr.mxu0 0.0
  %4679 = vmatpush1.msra.mxu0 0.0
  %4680 = vmatprep.subr.mxu0 0.0
  %4681 = vmatpush1.msra.mxu0 0.0
  %4682 = vmatprep.subr.mxu0 0.0
  %4683 = vmatpush1.msra.mxu0 0.0
  %4684 = vmatprep.subr.mxu0 0.0
  %4685 = vmatpush1.msra.mxu0 0.0
  %4686 = vmatprep.subr.mxu0 0.0
  %4687 = vmatpush1.msra.mxu0 0.0
  %4688 = vmatprep.subr.mxu0 0.0
  %4689 = vmatpush1.msra.mxu0 0.0
  %4690 = vmatprep.subr.mxu0 0.0
  %4691 = vmatpush1.msra.mxu0 0.0
  %4692 = vmatprep.subr.mxu0 0.0
  %4693 = vmatpush1.msra.mxu0 0.0
  %4694 = vmatprep.subr.mxu0 0.0
  %4695 = vmatpush1.msra.mxu0 0.0
  %4696 = vmatprep.subr.mxu0 0.0
  %4697 = vmatpush1.msra.mxu0 0.0
  %4698 = vmatprep.subr.mxu0 0.0
  %4699 = vmatpush1.msra.mxu0 0.0
  %4700 = vmatprep.subr.mxu0 0.0
  %4701 = vmatpush1.msra.mxu0 0.0
  %4702 = vmatprep.subr.mxu0 0.0
  %4703 = vmatpush1.msra.mxu0 0.0
  %4704 = vmatprep.subr.mxu0 0.0
  %4705 = vmatpush1.msra.mxu0 0.0
  %4706 = vmatprep.subr.mxu0 0.0
  %4707 = vmatpush1.msra.mxu0 0.0
  %4708 = vmatprep.subr.mxu0 0.0
  %4709 = vmatpush1.msra.mxu0 0.0
  %4710 = vmatprep.subr.mxu0 0.0
  %4711 = vmatpush1.msra.mxu0 0.0
  %4712 = vmatprep.subr.mxu0 0.0
  %4713 = vmatpush1.msra.mxu0 0.0
  %4714 = vmatprep.subr.mxu0 0.0
  %4715 = vmatpush1.msra.mxu0 0.0
  %4716 = vmatprep.subr.mxu0 0.0
  %4717 = vmatpush1.msra.mxu0 0.0
  %4718 = vmatprep.subr.mxu0 0.0
  %4719 = vmatpush1.msra.mxu0 0.0
  %4720 = vmatprep.mubr.f32.mxu0 0.0
  %4721 = vmatmul.mubr.f32.gmra.mrb[0].mxu0 %v4584
  %v4722 = vpop.f32.mrb[0].mxu0
  %v4723 = vadd.f32 %v529, %v4722
  %v4724 = vpop.f32.mrb[0].mxu0
  %4725 = vdwg.mxu0
  %v4726 = vadd.f32 %v4581, %v4653
  %v4727 = vxor.u32 %v4726, 2147483648
  %v4728 = vmul.f32 %v4727, 1.442695
  %v4729 = vpow.pop %v4728
  %v4730 = vadd.f32 %v4729, 1.0
  %v4731 = vrcp.pop %v4730
  %v4732 = vmul.f32 1.0, %v4731
  %4733 = vrot.lane.b32.xlu0 %v4732, 64
  %v4734 = vpop.permute.xlu0 %4733
  %v4735 = vmul.f32 %v4732, %v4723
  %v4736 = vadd.f32 %v4582, %v4735
  %v4737 = vtanh.pop %v4736
  %v4738 = vsub.f32 1.0, %v4734
  %v4739 = vmul.f32 %v4738, %v4737
  %v4740 = vmul.f32 %v4734, %v4579
  %v4741 = vadd.f32 %v4739, %v4740
  %4742 = vst.msk [vmem:[#allocation3 + $0xc8] sm:$0xff] %vm448, %v4741
  %v4743 = vld [vmem:[#allocation2 + $0x1a0] sm:$0xff]
  %v4744 = vld [vmem:[#allocation2 + $0x1a8] sm:$0xff]
  %v4746 = vsel %vm448, %v4741, 0
  %4748 = vmatprep.subr.mxu0 0.0
  %4749 = vmatpush1.msra.mxu0 %v508
  %4750 = vmatprep.subr.mxu0 0.0
  %4751 = vmatpush1.msra.mxu0 %v509
  %4752 = vmatprep.subr.mxu0 0.0
  %4753 = vmatpush1.msra.mxu0 %v510
  %4754 = vmatprep.subr.mxu0 0.0
  %4755 = vmatpush1.msra.mxu0 %v511
  %4756 = vmatprep.subr.mxu0 0.0
  %4757 = vmatpush1.msra.mxu0 %v512
  %4758 = vmatprep.subr.mxu0 0.0
  %4759 = vmatpush1.msra.mxu0 %v513
  %4760 = vmatprep.subr.mxu0 0.0
  %4761 = vmatpush1.msra.mxu0 %v514
  %4762 = vmatprep.subr.mxu0 0.0
  %4763 = vmatpush1.msra.mxu0 %v515
  %4764 = vmatprep.subr.mxu0 0.0
  %4765 = vmatpush1.msra.mxu0 0.0
  %4766 = vmatprep.subr.mxu0 0.0
  %4767 = vmatpush1.msra.mxu0 0.0
  %4768 = vmatprep.subr.mxu0 0.0
  %4769 = vmatpush1.msra.mxu0 0.0
  %4770 = vmatprep.subr.mxu0 0.0
  %4771 = vmatpush1.msra.mxu0 0.0
  %4772 = vmatprep.subr.mxu0 0.0
  %4773 = vmatpush1.msra.mxu0 0.0
  %4774 = vmatprep.subr.mxu0 0.0
  %4775 = vmatpush1.msra.mxu0 0.0
  %4776 = vmatprep.subr.mxu0 0.0
  %4777 = vmatpush1.msra.mxu0 0.0
  %4778 = vmatprep.subr.mxu0 0.0
  %4779 = vmatpush1.msra.mxu0 0.0
  %4780 = vmatprep.subr.mxu0 0.0
  %4781 = vmatpush1.msra.mxu0 0.0
  %4782 = vmatprep.subr.mxu0 0.0
  %4783 = vmatpush1.msra.mxu0 0.0
  %4784 = vmatprep.subr.mxu0 0.0
  %4785 = vmatpush1.msra.mxu0 0.0
  %4786 = vmatprep.subr.mxu0 0.0
  %4787 = vmatpush1.msra.mxu0 0.0
  %4788 = vmatprep.subr.mxu0 0.0
  %4789 = vmatpush1.msra.mxu0 0.0
  %4790 = vmatprep.subr.mxu0 0.0
  %4791 = vmatpush1.msra.mxu0 0.0
  %4792 = vmatprep.subr.mxu0 0.0
  %4793 = vmatpush1.msra.mxu0 0.0
  %4794 = vmatprep.subr.mxu0 0.0
  %4795 = vmatpush1.msra.mxu0 0.0
  %4796 = vmatprep.subr.mxu0 0.0
  %4797 = vmatpush1.msra.mxu0 0.0
  %4798 = vmatprep.subr.mxu0 0.0
  %4799 = vmatpush1.msra.mxu0 0.0
  %4800 = vmatprep.subr.mxu0 0.0
  %4801 = vmatpush1.msra.mxu0 0.0
  %4802 = vmatprep.subr.mxu0 0.0
  %4803 = vmatpush1.msra.mxu0 0.0
  %4804 = vmatprep.subr.mxu0 0.0
  %4805 = vmatpush1.msra.mxu0 0.0
  %4806 = vmatprep.subr.mxu0 0.0
  %4807 = vmatpush1.msra.mxu0 0.0
  %4808 = vmatprep.subr.mxu0 0.0
  %4809 = vmatpush1.msra.mxu0 0.0
  %4810 = vmatprep.subr.mxu0 0.0
  %4811 = vmatpush1.msra.mxu0 0.0
  %4812 = vmatprep.mubr.f32.mxu0 0.0
  %4813 = vmatmul.mubr.f32.gmra.mrb[0].mxu0 %v4746
  %v4814 = vpop.f32.mrb[0].mxu0
  %v4815 = vadd.f32 0.0, %v4814
  %v4816 = vpop.f32.mrb[0].mxu0
  %4817 = vdwg.mxu0
  %4818 = vmatprep.subr.mxu0 0.0
  %4819 = vmatpush1.msra.mxu0 %v516
  %4820 = vmatprep.subr.mxu0 0.0
  %4821 = vmatpush1.msra.mxu0 %v517
  %4822 = vmatprep.subr.mxu0 0.0
  %4823 = vmatpush1.msra.mxu0 %v518
  %4824 = vmatprep.subr.mxu0 0.0
  %4825 = vmatpush1.msra.mxu0 %v519
  %4826 = vmatprep.subr.mxu0 0.0
  %4827 = vmatpush1.msra.mxu0 %v520
  %4828 = vmatprep.subr.mxu0 0.0
  %4829 = vmatpush1.msra.mxu0 %v521
  %4830 = vmatprep.subr.mxu0 0.0
  %4831 = vmatpush1.msra.mxu0 %v522
  %4832 = vmatprep.subr.mxu0 0.0
  %4833 = vmatpush1.msra.mxu0 %v523
  %4834 = vmatprep.subr.mxu0 0.0
  %4835 = vmatpush1.msra.mxu0 0.0
  %4836 = vmatprep.subr.mxu0 0.0
  %4837 = vmatpush1.msra.mxu0 0.0
  %4838 = vmatprep.subr.mxu0 0.0
  %4839 = vmatpush1.msra.mxu0 0.0
  %4840 = vmatprep.subr.mxu0 0.0
  %4841 = vmatpush1.msra.mxu0 0.0
  %4842 = vmatprep.subr.mxu0 0.0
  %4843 = vmatpush1.msra.mxu0 0.0
  %4844 = vmatprep.subr.mxu0 0.0
  %4845 = vmatpush1.msra.mxu0 0.0
  %4846 = vmatprep.subr.mxu0 0.0
  %4847 = vmatpush1.msra.mxu0 0.0
  %4848 = vmatprep.subr.mxu0 0.0
  %4849 = vmatpush1.msra.mxu0 0.0
  %4850 = vmatprep.subr.mxu0 0.0
  %4851 = vmatpush1.msra.mxu0 0.0
  %4852 = vmatprep.subr.mxu0 0.0
  %4853 = vmatpush1.msra.mxu0 0.0
  %4854 = vmatprep.subr.mxu0 0.0
  %4855 = vmatpush1.msra.mxu0 0.0
  %4856 = vmatprep.subr.mxu0 0.0
  %4857 = vmatpush1.msra.mxu0 0.0
  %4858 = vmatprep.subr.mxu0 0.0
  %4859 = vmatpush1.msra.mxu0 0.0
  %4860 = vmatprep.subr.mxu0 0.0
  %4861 = vmatpush1.msra.mxu0 0.0
  %4862 = vmatprep.subr.mxu0 0.0
  %4863 = vmatpush1.msra.mxu0 0.0
  %4864 = vmatprep.subr.mxu0 0.0
  %4865 = vmatpush1.msra.mxu0 0.0
  %4866 = vmatprep.subr.mxu0 0.0
  %4867 = vmatpush1.msra.mxu0 0.0
  %4868 = vmatprep.subr.mxu0 0.0
  %4869 = vmatpush1.msra.mxu0 0.0
  %4870 = vmatprep.subr.mxu0 0.0
  %4871 = vmatpush1.msra.mxu0 0.0
  %4872 = vmatprep.subr.mxu0 0.0
  %4873 = vmatpush1.msra.mxu0 0.0
  %4874 = vmatprep.subr.mxu0 0.0
  %4875 = vmatpush1.msra.mxu0 0.0
  %4876 = vmatprep.subr.mxu0 0.0
  %4877 = vmatpush1.msra.mxu0 0.0
  %4878 = vmatprep.subr.mxu0 0.0
  %4879 = vmatpush1.msra.mxu0 0.0
  %4880 = vmatprep.subr.mxu0 0.0
  %4881 = vmatpush1.msra.mxu0 0.0
  %4882 = vmatprep.mubr.f32.mxu0 0.0
  %4883 = vmatmul.mubr.f32.gmra.mrb[0].mxu0 %v4746
  %v4884 = vpop.f32.mrb[0].mxu0
  %v4885 = vadd.f32 %v529, %v4884
  %v4886 = vpop.f32.mrb[0].mxu0
  %4887 = vdwg.mxu0
  %v4888 = vadd.f32 %v4743, %v4815
  %v4889 = vxor.u32 %v4888, 2147483648
  %v4890 = vmul.f32 %v4889, 1.442695
  %v4891 = vpow.pop %v4890
  %v4892 = vadd.f32 %v4891, 1.0
  %v4893 = vrcp.pop %v4892
  %v4894 = vmul.f32 1.0, %v4893
  %4895 = vrot.lane.b32.xlu0 %v4894, 64
  %v4896 = vpop.permute.xlu0 %4895
  %v4897 = vmul.f32 %v4894, %v4885
  %v4898 = vadd.f32 %v4744, %v4897
  %v4899 = vtanh.pop %v4898
  %v4900 = vsub.f32 1.0, %v4896
  %v4901 = vmul.f32 %v4900, %v4899
  %v4902 = vmul.f32 %v4896, %v4741
  %v4903 = vadd.f32 %v4901, %v4902
  %4904 = vst.msk [vmem:[#allocation3 + $0xd0] sm:$0xff] %vm448, %v4903
  %v4905 = vld [vmem:[#allocation2 + $0x1b0] sm:$0xff]
  %v4906 = vld [vmem:[#allocation2 + $0x1b8] sm:$0xff]
  %v4908 = vsel %vm448, %v4903, 0
  %4910 = vmatprep.subr.mxu0 0.0
  %4911 = vmatpush1.msra.mxu0 %v508
  %4912 = vmatprep.subr.mxu0 0.0
  %4913 = vmatpush1.msra.mxu0 %v509
  %4914 = vmatprep.subr.mxu0 0.0
  %4915 = vmatpush1.msra.mxu0 %v510
  %4916 = vmatprep.subr.mxu0 0.0
  %4917 = vmatpush1.msra.mxu0 %v511
  %4918 = vmatprep.subr.mxu0 0.0
  %4919 = vmatpush1.msra.mxu0 %v512
  %4920 = vmatprep.subr.mxu0 0.0
  %4921 = vmatpush1.msra.mxu0 %v513
  %4922 = vmatprep.subr.mxu0 0.0
  %4923 = vmatpush1.msra.mxu0 %v514
  %4924 = vmatprep.subr.mxu0 0.0
  %4925 = vmatpush1.msra.mxu0 %v515
  %4926 = vmatprep.subr.mxu0 0.0
  %4927 = vmatpush1.msra.mxu0 0.0
  %4928 = vmatprep.subr.mxu0 0.0
  %4929 = vmatpush1.msra.mxu0 0.0
  %4930 = vmatprep.subr.mxu0 0.0
  %4931 = vmatpush1.msra.mxu0 0.0
  %4932 = vmatprep.subr.mxu0 0.0
  %4933 = vmatpush1.msra.mxu0 0.0
  %4934 = vmatprep.subr.mxu0 0.0
  %4935 = vmatpush1.msra.mxu0 0.0
  %4936 = vmatprep.subr.mxu0 0.0
  %4937 = vmatpush1.msra.mxu0 0.0
  %4938 = vmatprep.subr.mxu0 0.0
  %4939 = vmatpush1.msra.mxu0 0.0
  %4940 = vmatprep.subr.mxu0 0.0
  %4941 = vmatpush1.msra.mxu0 0.0
  %4942 = vmatprep.subr.mxu0 0.0
  %4943 = vmatpush1.msra.mxu0 0.0
  %4944 = vmatprep.subr.mxu0 0.0
  %4945 = vmatpush1.msra.mxu0 0.0
  %4946 = vmatprep.subr.mxu0 0.0
  %4947 = vmatpush1.msra.mxu0 0.0
  %4948 = vmatprep.subr.mxu0 0.0
  %4949 = vmatpush1.msra.mxu0 0.0
  %4950 = vmatprep.subr.mxu0 0.0
  %4951 = vmatpush1.msra.mxu0 0.0
  %4952 = vmatprep.subr.mxu0 0.0
  %4953 = vmatpush1.msra.mxu0 0.0
  %4954 = vmatprep.subr.mxu0 0.0
  %4955 = vmatpush1.msra.mxu0 0.0
  %4956 = vmatprep.subr.mxu0 0.0
  %4957 = vmatpush1.msra.mxu0 0.0
  %4958 = vmatprep.subr.mxu0 0.0
  %4959 = vmatpush1.msra.mxu0 0.0
  %4960 = vmatprep.subr.mxu0 0.0
  %4961 = vmatpush1.msra.mxu0 0.0
  %4962 = vmatprep.subr.mxu0 0.0
  %4963 = vmatpush1.msra.mxu0 0.0
  %4964 = vmatprep.subr.mxu0 0.0
  %4965 = vmatpush1.msra.mxu0 0.0
  %4966 = vmatprep.subr.mxu0 0.0
  %4967 = vmatpush1.msra.mxu0 0.0
  %4968 = vmatprep.subr.mxu0 0.0
  %4969 = vmatpush1.msra.mxu0 0.0
  %4970 = vmatprep.subr.mxu0 0.0
  %4971 = vmatpush1.msra.mxu0 0.0
  %4972 = vmatprep.subr.mxu0 0.0
  %4973 = vmatpush1.msra.mxu0 0.0
  %4974 = vmatprep.mubr.f32.mxu0 0.0
  %4975 = vmatmul.mubr.f32.gmra.mrb[0].mxu0 %v4908
  %v4976 = vpop.f32.mrb[0].mxu0
  %v4977 = vadd.f32 0.0, %v4976
  %v4978 = vpop.f32.mrb[0].mxu0
  %4979 = vdwg.mxu0
  %4980 = vmatprep.subr.mxu0 0.0
  %4981 = vmatpush1.msra.mxu0 %v516
  %4982 = vmatprep.subr.mxu0 0.0
  %4983 = vmatpush1.msra.mxu0 %v517
  %4984 = vmatprep.subr.mxu0 0.0
  %4985 = vmatpush1.msra.mxu0 %v518
  %4986 = vmatprep.subr.mxu0 0.0
  %4987 = vmatpush1.msra.mxu0 %v519
  %4988 = vmatprep.subr.mxu0 0.0
  %4989 = vmatpush1.msra.mxu0 %v520
  %4990 = vmatprep.subr.mxu0 0.0
  %4991 = vmatpush1.msra.mxu0 %v521
  %4992 = vmatprep.subr.mxu0 0.0
  %4993 = vmatpush1.msra.mxu0 %v522
  %4994 = vmatprep.subr.mxu0 0.0
  %4995 = vmatpush1.msra.mxu0 %v523
  %4996 = vmatprep.subr.mxu0 0.0
  %4997 = vmatpush1.msra.mxu0 0.0
  %4998 = vmatprep.subr.mxu0 0.0
  %4999 = vmatpush1.msra.mxu0 0.0
  %5000 = vmatprep.subr.mxu0 0.0
  %5001 = vmatpush1.msra.mxu0 0.0
  %5002 = vmatprep.subr.mxu0 0.0
  %5003 = vmatpush1.msra.mxu0 0.0
  %5004 = vmatprep.subr.mxu0 0.0
  %5005 = vmatpush1.msra.mxu0 0.0
  %5006 = vmatprep.subr.mxu0 0.0
  %5007 = vmatpush1.msra.mxu0 0.0
  %5008 = vmatprep.subr.mxu0 0.0
  %5009 = vmatpush1.msra.mxu0 0.0
  %5010 = vmatprep.subr.mxu0 0.0
  %5011 = vmatpush1.msra.mxu0 0.0
  %5012 = vmatprep.subr.mxu0 0.0
  %5013 = vmatpush1.msra.mxu0 0.0
  %5014 = vmatprep.subr.mxu0 0.0
  %5015 = vmatpush1.msra.mxu0 0.0
  %5016 = vmatprep.subr.mxu0 0.0
  %5017 = vmatpush1.msra.mxu0 0.0
  %5018 = vmatprep.subr.mxu0 0.0
  %5019 = vmatpush1.msra.mxu0 0.0
  %5020 = vmatprep.subr.mxu0 0.0
  %5021 = vmatpush1.msra.mxu0 0.0
  %5022 = vmatprep.subr.mxu0 0.0
  %5023 = vmatpush1.msra.mxu0 0.0
  %5024 = vmatprep.subr.mxu0 0.0
  %5025 = vmatpush1.msra.mxu0 0.0
  %5026 = vmatprep.subr.mxu0 0.0
  %5027 = vmatpush1.msra.mxu0 0.0
  %5028 = vmatprep.subr.mxu0 0.0
  %5029 = vmatpush1.msra.mxu0 0.0
  %5030 = vmatprep.subr.mxu0 0.0
  %5031 = vmatpush1.msra.mxu0 0.0
  %5032 = vmatprep.subr.mxu0 0.0
  %5033 = vmatpush1.msra.mxu0 0.0
  %5034 = vmatprep.subr.mxu0 0.0
  %5035 = vmatpush1.msra.mxu0 0.0
  %5036 = vmatprep.subr.mxu0 0.0
  %5037 = vmatpush1.msra.mxu0 0.0
  %5038 = vmatprep.subr.mxu0 0.0
  %5039 = vmatpush1.msra.mxu0 0.0
  %5040 = vmatprep.subr.mxu0 0.0
  %5041 = vmatpush1.msra.mxu0 0.0
  %5042 = vmatprep.subr.mxu0 0.0
  %5043 = vmatpush1.msra.mxu0 0.0
  %5044 = vmatprep.mubr.f32.mxu0 0.0
  %5045 = vmatmul.mubr.f32.gmra.mrb[0].mxu0 %v4908
  %v5046 = vpop.f32.mrb[0].mxu0
  %v5047 = vadd.f32 %v529, %v5046
  %v5048 = vpop.f32.mrb[0].mxu0
  %5049 = vdwg.mxu0
  %v5050 = vadd.f32 %v4905, %v4977
  %v5051 = vxor.u32 %v5050, 2147483648
  %v5052 = vmul.f32 %v5051, 1.442695
  %v5053 = vpow.pop %v5052
  %v5054 = vadd.f32 %v5053, 1.0
  %v5055 = vrcp.pop %v5054
  %v5056 = vmul.f32 1.0, %v5055
  %5057 = vrot.lane.b32.xlu0 %v5056, 64
  %v5058 = vpop.permute.xlu0 %5057
  %v5059 = vmul.f32 %v5056, %v5047
  %v5060 = vadd.f32 %v4906, %v5059
  %v5061 = vtanh.pop %v5060
  %v5062 = vsub.f32 1.0, %v5058
  %v5063 = vmul.f32 %v5062, %v5061
  %v5064 = vmul.f32 %v5058, %v4903
  %v5065 = vadd.f32 %v5063, %v5064
  %5066 = vst.msk [vmem:[#allocation3 + $0xd8] sm:$0xff] %vm448, %v5065
  %v5067 = vld [vmem:[#allocation2 + $0x1c0] sm:$0xff]
  %v5068 = vld [vmem:[#allocation2 + $0x1c8] sm:$0xff]
  %v5070 = vsel %vm448, %v5065, 0
  %5072 = vmatprep.subr.mxu0 0.0
  %5073 = vmatpush1.msra.mxu0 %v508
  %5074 = vmatprep.subr.mxu0 0.0
  %5075 = vmatpush1.msra.mxu0 %v509
  %5076 = vmatprep.subr.mxu0 0.0
  %5077 = vmatpush1.msra.mxu0 %v510
  %5078 = vmatprep.subr.mxu0 0.0
  %5079 = vmatpush1.msra.mxu0 %v511
  %5080 = vmatprep.subr.mxu0 0.0
  %5081 = vmatpush1.msra.mxu0 %v512
  %5082 = vmatprep.subr.mxu0 0.0
  %5083 = vmatpush1.msra.mxu0 %v513
  %5084 = vmatprep.subr.mxu0 0.0
  %5085 = vmatpush1.msra.mxu0 %v514
  %5086 = vmatprep.subr.mxu0 0.0
  %5087 = vmatpush1.msra.mxu0 %v515
  %5088 = vmatprep.subr.mxu0 0.0
  %5089 = vmatpush1.msra.mxu0 0.0
  %5090 = vmatprep.subr.mxu0 0.0
  %5091 = vmatpush1.msra.mxu0 0.0
  %5092 = vmatprep.subr.mxu0 0.0
  %5093 = vmatpush1.msra.mxu0 0.0
  %5094 = vmatprep.subr.mxu0 0.0
  %5095 = vmatpush1.msra.mxu0 0.0
  %5096 = vmatprep.subr.mxu0 0.0
  %5097 = vmatpush1.msra.mxu0 0.0
  %5098 = vmatprep.subr.mxu0 0.0
  %5099 = vmatpush1.msra.mxu0 0.0
  %5100 = vmatprep.subr.mxu0 0.0
  %5101 = vmatpush1.msra.mxu0 0.0
  %5102 = vmatprep.subr.mxu0 0.0
  %5103 = vmatpush1.msra.mxu0 0.0
  %5104 = vmatprep.subr.mxu0 0.0
  %5105 = vmatpush1.msra.mxu0 0.0
  %5106 = vmatprep.subr.mxu0 0.0
  %5107 = vmatpush1.msra.mxu0 0.0
  %5108 = vmatprep.subr.mxu0 0.0
  %5109 = vmatpush1.msra.mxu0 0.0
  %5110 = vmatprep.subr.mxu0 0.0
  %5111 = vmatpush1.msra.mxu0 0.0
  %5112 = vmatprep.subr.mxu0 0.0
  %5113 = vmatpush1.msra.mxu0 0.0
  %5114 = vmatprep.subr.mxu0 0.0
  %5115 = vmatpush1.msra.mxu0 0.0
  %5116 = vmatprep.subr.mxu0 0.0
  %5117 = vmatpush1.msra.mxu0 0.0
  %5118 = vmatprep.subr.mxu0 0.0
  %5119 = vmatpush1.msra.mxu0 0.0
  %5120 = vmatprep.subr.mxu0 0.0
  %5121 = vmatpush1.msra.mxu0 0.0
  %5122 = vmatprep.subr.mxu0 0.0
  %5123 = vmatpush1.msra.mxu0 0.0
  %5124 = vmatprep.subr.mxu0 0.0
  %5125 = vmatpush1.msra.mxu0 0.0
  %5126 = vmatprep.subr.mxu0 0.0
  %5127 = vmatpush1.msra.mxu0 0.0
  %5128 = vmatprep.subr.mxu0 0.0
  %5129 = vmatpush1.msra.mxu0 0.0
  %5130 = vmatprep.subr.mxu0 0.0
  %5131 = vmatpush1.msra.mxu0 0.0
  %5132 = vmatprep.subr.mxu0 0.0
  %5133 = vmatpush1.msra.mxu0 0.0
  %5134 = vmatprep.subr.mxu0 0.0
  %5135 = vmatpush1.msra.mxu0 0.0
  %5136 = vmatprep.mubr.f32.mxu0 0.0
  %5137 = vmatmul.mubr.f32.gmra.mrb[0].mxu0 %v5070
  %v5138 = vpop.f32.mrb[0].mxu0
  %v5139 = vadd.f32 0.0, %v5138
  %v5140 = vpop.f32.mrb[0].mxu0
  %5141 = vdwg.mxu0
  %5142 = vmatprep.subr.mxu0 0.0
  %5143 = vmatpush1.msra.mxu0 %v516
  %5144 = vmatprep.subr.mxu0 0.0
  %5145 = vmatpush1.msra.mxu0 %v517
  %5146 = vmatprep.subr.mxu0 0.0
  %5147 = vmatpush1.msra.mxu0 %v518
  %5148 = vmatprep.subr.mxu0 0.0
  %5149 = vmatpush1.msra.mxu0 %v519
  %5150 = vmatprep.subr.mxu0 0.0
  %5151 = vmatpush1.msra.mxu0 %v520
  %5152 = vmatprep.subr.mxu0 0.0
  %5153 = vmatpush1.msra.mxu0 %v521
  %5154 = vmatprep.subr.mxu0 0.0
  %5155 = vmatpush1.msra.mxu0 %v522
  %5156 = vmatprep.subr.mxu0 0.0
  %5157 = vmatpush1.msra.mxu0 %v523
  %5158 = vmatprep.subr.mxu0 0.0
  %5159 = vmatpush1.msra.mxu0 0.0
  %5160 = vmatprep.subr.mxu0 0.0
  %5161 = vmatpush1.msra.mxu0 0.0
  %5162 = vmatprep.subr.mxu0 0.0
  %5163 = vmatpush1.msra.mxu0 0.0
  %5164 = vmatprep.subr.mxu0 0.0
  %5165 = vmatpush1.msra.mxu0 0.0
  %5166 = vmatprep.subr.mxu0 0.0
  %5167 = vmatpush1.msra.mxu0 0.0
  %5168 = vmatprep.subr.mxu0 0.0
  %5169 = vmatpush1.msra.mxu0 0.0
  %5170 = vmatprep.subr.mxu0 0.0
  %5171 = vmatpush1.msra.mxu0 0.0
  %5172 = vmatprep.subr.mxu0 0.0
  %5173 = vmatpush1.msra.mxu0 0.0
  %5174 = vmatprep.subr.mxu0 0.0
  %5175 = vmatpush1.msra.mxu0 0.0
  %5176 = vmatprep.subr.mxu0 0.0
  %5177 = vmatpush1.msra.mxu0 0.0
  %5178 = vmatprep.subr.mxu0 0.0
  %5179 = vmatpush1.msra.mxu0 0.0
  %5180 = vmatprep.subr.mxu0 0.0
  %5181 = vmatpush1.msra.mxu0 0.0
  %5182 = vmatprep.subr.mxu0 0.0
  %5183 = vmatpush1.msra.mxu0 0.0
  %5184 = vmatprep.subr.mxu0 0.0
  %5185 = vmatpush1.msra.mxu0 0.0
  %5186 = vmatprep.subr.mxu0 0.0
  %5187 = vmatpush1.msra.mxu0 0.0
  %5188 = vmatprep.subr.mxu0 0.0
  %5189 = vmatpush1.msra.mxu0 0.0
  %5190 = vmatprep.subr.mxu0 0.0
  %5191 = vmatpush1.msra.mxu0 0.0
  %5192 = vmatprep.subr.mxu0 0.0
  %5193 = vmatpush1.msra.mxu0 0.0
  %5194 = vmatprep.subr.mxu0 0.0
  %5195 = vmatpush1.msra.mxu0 0.0
  %5196 = vmatprep.subr.mxu0 0.0
  %5197 = vmatpush1.msra.mxu0 0.0
  %5198 = vmatprep.subr.mxu0 0.0
  %5199 = vmatpush1.msra.mxu0 0.0
  %5200 = vmatprep.subr.mxu0 0.0
  %5201 = vmatpush1.msra.mxu0 0.0
  %5202 = vmatprep.subr.mxu0 0.0
  %5203 = vmatpush1.msra.mxu0 0.0
  %5204 = vmatprep.subr.mxu0 0.0
  %5205 = vmatpush1.msra.mxu0 0.0
  %5206 = vmatprep.mubr.f32.mxu0 0.0
  %5207 = vmatmul.mubr.f32.gmra.mrb[0].mxu0 %v5070
  %v5208 = vpop.f32.mrb[0].mxu0
  %v5209 = vadd.f32 %v529, %v5208
  %v5210 = vpop.f32.mrb[0].mxu0
  %5211 = vdwg.mxu0
  %v5212 = vadd.f32 %v5067, %v5139
  %v5213 = vxor.u32 %v5212, 2147483648
  %v5214 = vmul.f32 %v5213, 1.442695
  %v5215 = vpow.pop %v5214
  %v5216 = vadd.f32 %v5215, 1.0
  %v5217 = vrcp.pop %v5216
  %v5218 = vmul.f32 1.0, %v5217
  %5219 = vrot.lane.b32.xlu0 %v5218, 64
  %v5220 = vpop.permute.xlu0 %5219
  %v5221 = vmul.f32 %v5218, %v5209
  %v5222 = vadd.f32 %v5068, %v5221
  %v5223 = vtanh.pop %v5222
  %v5224 = vsub.f32 1.0, %v5220
  %v5225 = vmul.f32 %v5224, %v5223
  %v5226 = vmul.f32 %v5220, %v5065
  %v5227 = vadd.f32 %v5225, %v5226
  %5228 = vst.msk [vmem:[#allocation3 + $0xe0] sm:$0xff] %vm448, %v5227
  %v5229 = vld [vmem:[#allocation2 + $0x1d0] sm:$0xff]
  %v5230 = vld [vmem:[#allocation2 + $0x1d8] sm:$0xff]
  %v5232 = vsel %vm448, %v5227, 0
  %5234 = vmatprep.subr.mxu0 0.0
  %5235 = vmatpush1.msra.mxu0 %v508
  %5236 = vmatprep.subr.mxu0 0.0
  %5237 = vmatpush1.msra.mxu0 %v509
  %5238 = vmatprep.subr.mxu0 0.0
  %5239 = vmatpush1.msra.mxu0 %v510
  %5240 = vmatprep.subr.mxu0 0.0
  %5241 = vmatpush1.msra.mxu0 %v511
  %5242 = vmatprep.subr.mxu0 0.0
  %5243 = vmatpush1.msra.mxu0 %v512
  %5244 = vmatprep.subr.mxu0 0.0
  %5245 = vmatpush1.msra.mxu0 %v513
  %5246 = vmatprep.subr.mxu0 0.0
  %5247 = vmatpush1.msra.mxu0 %v514
  %5248 = vmatprep.subr.mxu0 0.0
  %5249 = vmatpush1.msra.mxu0 %v515
  %5250 = vmatprep.subr.mxu0 0.0
  %5251 = vmatpush1.msra.mxu0 0.0
  %5252 = vmatprep.subr.mxu0 0.0
  %5253 = vmatpush1.msra.mxu0 0.0
  %5254 = vmatprep.subr.mxu0 0.0
  %5255 = vmatpush1.msra.mxu0 0.0
  %5256 = vmatprep.subr.mxu0 0.0
  %5257 = vmatpush1.msra.mxu0 0.0
  %5258 = vmatprep.subr.mxu0 0.0
  %5259 = vmatpush1.msra.mxu0 0.0
  %5260 = vmatprep.subr.mxu0 0.0
  %5261 = vmatpush1.msra.mxu0 0.0
  %5262 = vmatprep.subr.mxu0 0.0
  %5263 = vmatpush1.msra.mxu0 0.0
  %5264 = vmatprep.subr.mxu0 0.0
  %5265 = vmatpush1.msra.mxu0 0.0
  %5266 = vmatprep.subr.mxu0 0.0
  %5267 = vmatpush1.msra.mxu0 0.0
  %5268 = vmatprep.subr.mxu0 0.0
  %5269 = vmatpush1.msra.mxu0 0.0
  %5270 = vmatprep.subr.mxu0 0.0
  %5271 = vmatpush1.msra.mxu0 0.0
  %5272 = vmatprep.subr.mxu0 0.0
  %5273 = vmatpush1.msra.mxu0 0.0
  %5274 = vmatprep.subr.mxu0 0.0
  %5275 = vmatpush1.msra.mxu0 0.0
  %5276 = vmatprep.subr.mxu0 0.0
  %5277 = vmatpush1.msra.mxu0 0.0
  %5278 = vmatprep.subr.mxu0 0.0
  %5279 = vmatpush1.msra.mxu0 0.0
  %5280 = vmatprep.subr.mxu0 0.0
  %5281 = vmatpush1.msra.mxu0 0.0
  %5282 = vmatprep.subr.mxu0 0.0
  %5283 = vmatpush1.msra.mxu0 0.0
  %5284 = vmatprep.subr.mxu0 0.0
  %5285 = vmatpush1.msra.mxu0 0.0
  %5286 = vmatprep.subr.mxu0 0.0
  %5287 = vmatpush1.msra.mxu0 0.0
  %5288 = vmatprep.subr.mxu0 0.0
  %5289 = vmatpush1.msra.mxu0 0.0
  %5290 = vmatprep.subr.mxu0 0.0
  %5291 = vmatpush1.msra.mxu0 0.0
  %5292 = vmatprep.subr.mxu0 0.0
  %5293 = vmatpush1.msra.mxu0 0.0
  %5294 = vmatprep.subr.mxu0 0.0
  %5295 = vmatpush1.msra.mxu0 0.0
  %5296 = vmatprep.subr.mxu0 0.0
  %5297 = vmatpush1.msra.mxu0 0.0
  %5298 = vmatprep.mubr.f32.mxu0 0.0
  %5299 = vmatmul.mubr.f32.gmra.mrb[0].mxu0 %v5232
  %v5300 = vpop.f32.mrb[0].mxu0
  %v5301 = vadd.f32 0.0, %v5300
  %v5302 = vpop.f32.mrb[0].mxu0
  %5303 = vdwg.mxu0
  %5304 = vmatprep.subr.mxu0 0.0
  %5305 = vmatpush1.msra.mxu0 %v516
  %5306 = vmatprep.subr.mxu0 0.0
  %5307 = vmatpush1.msra.mxu0 %v517
  %5308 = vmatprep.subr.mxu0 0.0
  %5309 = vmatpush1.msra.mxu0 %v518
  %5310 = vmatprep.subr.mxu0 0.0
  %5311 = vmatpush1.msra.mxu0 %v519
  %5312 = vmatprep.subr.mxu0 0.0
  %5313 = vmatpush1.msra.mxu0 %v520
  %5314 = vmatprep.subr.mxu0 0.0
  %5315 = vmatpush1.msra.mxu0 %v521
  %5316 = vmatprep.subr.mxu0 0.0
  %5317 = vmatpush1.msra.mxu0 %v522
  %5318 = vmatprep.subr.mxu0 0.0
  %5319 = vmatpush1.msra.mxu0 %v523
  %5320 = vmatprep.subr.mxu0 0.0
  %5321 = vmatpush1.msra.mxu0 0.0
  %5322 = vmatprep.subr.mxu0 0.0
  %5323 = vmatpush1.msra.mxu0 0.0
  %5324 = vmatprep.subr.mxu0 0.0
  %5325 = vmatpush1.msra.mxu0 0.0
  %5326 = vmatprep.subr.mxu0 0.0
  %5327 = vmatpush1.msra.mxu0 0.0
  %5328 = vmatprep.subr.mxu0 0.0
  %5329 = vmatpush1.msra.mxu0 0.0
  %5330 = vmatprep.subr.mxu0 0.0
  %5331 = vmatpush1.msra.mxu0 0.0
  %5332 = vmatprep.subr.mxu0 0.0
  %5333 = vmatpush1.msra.mxu0 0.0
  %5334 = vmatprep.subr.mxu0 0.0
  %5335 = vmatpush1.msra.mxu0 0.0
  %5336 = vmatprep.subr.mxu0 0.0
  %5337 = vmatpush1.msra.mxu0 0.0
  %5338 = vmatprep.subr.mxu0 0.0
  %5339 = vmatpush1.msra.mxu0 0.0
  %5340 = vmatprep.subr.mxu0 0.0
  %5341 = vmatpush1.msra.mxu0 0.0
  %5342 = vmatprep.subr.mxu0 0.0
  %5343 = vmatpush1.msra.mxu0 0.0
  %5344 = vmatprep.subr.mxu0 0.0
  %5345 = vmatpush1.msra.mxu0 0.0
  %5346 = vmatprep.subr.mxu0 0.0
  %5347 = vmatpush1.msra.mxu0 0.0
  %5348 = vmatprep.subr.mxu0 0.0
  %5349 = vmatpush1.msra.mxu0 0.0
  %5350 = vmatprep.subr.mxu0 0.0
  %5351 = vmatpush1.msra.mxu0 0.0
  %5352 = vmatprep.subr.mxu0 0.0
  %5353 = vmatpush1.msra.mxu0 0.0
  %5354 = vmatprep.subr.mxu0 0.0
  %5355 = vmatpush1.msra.mxu0 0.0
  %5356 = vmatprep.subr.mxu0 0.0
  %5357 = vmatpush1.msra.mxu0 0.0
  %5358 = vmatprep.subr.mxu0 0.0
  %5359 = vmatpush1.msra.mxu0 0.0
  %5360 = vmatprep.subr.mxu0 0.0
  %5361 = vmatpush1.msra.mxu0 0.0
  %5362 = vmatprep.subr.mxu0 0.0
  %5363 = vmatpush1.msra.mxu0 0.0
  %5364 = vmatprep.subr.mxu0 0.0
  %5365 = vmatpush1.msra.mxu0 0.0
  %5366 = vmatprep.subr.mxu0 0.0
  %5367 = vmatpush1.msra.mxu0 0.0
  %5368 = vmatprep.mubr.f32.mxu0 0.0
  %5369 = vmatmul.mubr.f32.gmra.mrb[0].mxu0 %v5232
  %v5370 = vpop.f32.mrb[0].mxu0
  %v5371 = vadd.f32 %v529, %v5370
  %v5372 = vpop.f32.mrb[0].mxu0
  %5373 = vdwg.mxu0
  %v5374 = vadd.f32 %v5229, %v5301
  %v5375 = vxor.u32 %v5374, 2147483648
  %v5376 = vmul.f32 %v5375, 1.442695
  %v5377 = vpow.pop %v5376
  %v5378 = vadd.f32 %v5377, 1.0
  %v5379 = vrcp.pop %v5378
  %v5380 = vmul.f32 1.0, %v5379
  %5381 = vrot.lane.b32.xlu0 %v5380, 64
  %v5382 = vpop.permute.xlu0 %5381
  %v5383 = vmul.f32 %v5380, %v5371
  %v5384 = vadd.f32 %v5230, %v5383
  %v5385 = vtanh.pop %v5384
  %v5386 = vsub.f32 1.0, %v5382
  %v5387 = vmul.f32 %v5386, %v5385
  %v5388 = vmul.f32 %v5382, %v5227
  %v5389 = vadd.f32 %v5387, %v5388
  %5390 = vst.msk [vmem:[#allocation3 + $0xe8] sm:$0xff] %vm448, %v5389
  %v5391 = vld [vmem:[#allocation3] sm:$0xff]
  %v5392 = vld [vmem:[#allocation3 + $0x8] sm:$0xff]
  %v5393 = vld [vmem:[#allocation3 + $0x10] sm:$0xff]
  %v5394 = vld [vmem:[#allocation3 + $0x18] sm:$0xff]
  %v5395 = vld [vmem:[#allocation3 + $0x20] sm:$0xff]
  %v5396 = vld [vmem:[#allocation3 + $0x28] sm:$0xff]
  %v5397 = vld [vmem:[#allocation3 + $0x30] sm:$0xff]
  %v5398 = vld [vmem:[#allocation3 + $0x38] sm:$0xff]
  %v5399 = vld [vmem:[#allocation3 + $0x40] sm:$0xff]
  %v5400 = vld [vmem:[#allocation3 + $0x48] sm:$0xff]
  %v5401 = vld [vmem:[#allocation3 + $0x50] sm:$0xff]
  %v5402 = vld [vmem:[#allocation3 + $0x58] sm:$0xff]
  %v5403 = vld [vmem:[#allocation3 + $0x60] sm:$0xff]
  %v5404 = vld [vmem:[#allocation3 + $0x68] sm:$0xff]
  %v5405 = vld [vmem:[#allocation3 + $0x70] sm:$0xff]
  %v5406 = vld [vmem:[#allocation3 + $0x78] sm:$0xff]
  %v5407 = vld [vmem:[#allocation3 + $0x80] sm:$0xff]
  %v5408 = vld [vmem:[#allocation3 + $0x88] sm:$0xff]
  %v5409 = vld [vmem:[#allocation3 + $0x90] sm:$0xff]
  %v5410 = vld [vmem:[#allocation3 + $0x98] sm:$0xff]
  %v5411 = vld [vmem:[#allocation3 + $0xa0] sm:$0xff]
  %v5412 = vld [vmem:[#allocation3 + $0xa8] sm:$0xff]
  %v5413 = vld [vmem:[#allocation3 + $0xb0] sm:$0xff]
  %v5414 = vld [vmem:[#allocation3 + $0xb8] sm:$0xff]
  %v5415 = vld [vmem:[#allocation3 + $0xc0] sm:$0xff]
  %v5416 = vld [vmem:[#allocation3 + $0xc8] sm:$0xff]
  %v5417 = vld [vmem:[#allocation3 + $0xd0] sm:$0xff]
  %v5418 = vld [vmem:[#allocation3 + $0xd8] sm:$0xff]
  %v5419 = vld [vmem:[#allocation3 + $0xe0] sm:$0xff]
  %v5420 = vld [vmem:[#allocation3 + $0xe8] sm:$0xff]
  %v5421 = vld [vmem:[%s7] sm:$0xff]
  %v5422 = vld [vmem:[%s7 + $0x8] sm:$0xff]
  %v5423 = vld [vmem:[%s7 + $0x10] sm:$0xff]
  %v5424 = vld [vmem:[%s7 + $0x18] sm:$0xff]
  %v5425 = vld [vmem:[%s7 + $0x20] sm:$0xff]
  %v5426 = vld [vmem:[%s7 + $0x28] sm:$0xff]
  %v5427 = vld [vmem:[%s7 + $0x30] sm:$0xff]
  %v5428 = vld [vmem:[%s7 + $0x38] sm:$0xff]
  %v5429 = vld [vmem:[%s8] sm:$0x1]
  %v5431 = vlaneseq
  %v5432 = vshrl.u32 %v5431, 7
  %v5433 = vsub.s32 0, %v5432
  %v5434 = vrot.slane %v5429, %v5433
  %v5437 = vsel %vm448, %v5391, 0
  %v5440 = vsel %vm448, %v5392, 0
  %v5443 = vsel %vm448, %v5393, 0
  %v5446 = vsel %vm448, %v5394, 0
  %v5449 = vsel %vm448, %v5395, 0
  %v5452 = vsel %vm448, %v5396, 0
  %v5455 = vsel %vm448, %v5397, 0
  %v5458 = vsel %vm448, %v5398, 0
  %v5461 = vsel %vm448, %v5399, 0
  %v5464 = vsel %vm448, %v5400, 0
  %v5467 = vsel %vm448, %v5401, 0
  %v5470 = vsel %vm448, %v5402, 0
  %v5473 = vsel %vm448, %v5403, 0
  %v5476 = vsel %vm448, %v5404, 0
  %v5479 = vsel %vm448, %v5405, 0
  %v5482 = vsel %vm448, %v5406, 0
  %v5485 = vsel %vm448, %v5407, 0
  %v5488 = vsel %vm448, %v5408, 0
  %v5491 = vsel %vm448, %v5409, 0
  %v5494 = vsel %vm448, %v5410, 0
  %v5497 = vsel %vm448, %v5411, 0
  %v5500 = vsel %vm448, %v5412, 0
  %v5503 = vsel %vm448, %v5413, 0
  %v5506 = vsel %vm448, %v5414, 0
  %v5509 = vsel %vm448, %v5415, 0
  %v5512 = vsel %vm448, %v5416, 0
  %v5515 = vsel %vm448, %v5417, 0
  %v5518 = vsel %vm448, %v5418, 0
  %v5521 = vsel %vm448, %v5419, 0
  %v5524 = vsel %vm448, %v5420, 0
  %5526 = vmatprep.subr.mxu0 0.0
  %5527 = vmatpush1.msra.mxu0 %v5421
  %5528 = vmatprep.subr.mxu0 0.0
  %5529 = vmatpush1.msra.mxu0 %v5422
  %5530 = vmatprep.subr.mxu0 0.0
  %5531 = vmatpush1.msra.mxu0 %v5423
  %5532 = vmatprep.subr.mxu0 0.0
  %5533 = vmatpush1.msra.mxu0 %v5424
  %5534 = vmatprep.subr.mxu0 0.0
  %5535 = vmatpush1.msra.mxu0 %v5425
  %5536 = vmatprep.subr.mxu0 0.0
  %5537 = vmatpush1.msra.mxu0 %v5426
  %5538 = vmatprep.subr.mxu0 0.0
  %5539 = vmatpush1.msra.mxu0 %v5427
  %5540 = vmatprep.subr.mxu0 0.0
  %5541 = vmatpush1.msra.mxu0 %v5428
  %5542 = vmatprep.subr.mxu0 0.0
  %5543 = vmatpush1.msra.mxu0 0.0
  %5544 = vmatprep.subr.mxu0 0.0
  %5545 = vmatpush1.msra.mxu0 0.0
  %5546 = vmatprep.subr.mxu0 0.0
  %5547 = vmatpush1.msra.mxu0 0.0
  %5548 = vmatprep.subr.mxu0 0.0
  %5549 = vmatpush1.msra.mxu0 0.0
  %5550 = vmatprep.subr.mxu0 0.0
  %5551 = vmatpush1.msra.mxu0 0.0
  %5552 = vmatprep.subr.mxu0 0.0
  %5553 = vmatpush1.msra.mxu0 0.0
  %5554 = vmatprep.subr.mxu0 0.0
  %5555 = vmatpush1.msra.mxu0 0.0
  %5556 = vmatprep.subr.mxu0 0.0
  %5557 = vmatpush1.msra.mxu0 0.0
  %5558 = vmatprep.subr.mxu0 0.0
  %5559 = vmatpush1.msra.mxu0 0.0
  %5560 = vmatprep.subr.mxu0 0.0
  %5561 = vmatpush1.msra.mxu0 0.0
  %5562 = vmatprep.subr.mxu0 0.0
  %5563 = vmatpush1.msra.mxu0 0.0
  %5564 = vmatprep.subr.mxu0 0.0
  %5565 = vmatpush1.msra.mxu0 0.0
  %5566 = vmatprep.subr.mxu0 0.0
  %5567 = vmatpush1.msra.mxu0 0.0
  %5568 = vmatprep.subr.mxu0 0.0
  %5569 = vmatpush1.msra.mxu0 0.0
  %5570 = vmatprep.subr.mxu0 0.0
  %5571 = vmatpush1.msra.mxu0 0.0
  %5572 = vmatprep.subr.mxu0 0.0
  %5573 = vmatpush1.msra.mxu0 0.0
  %5574 = vmatprep.subr.mxu0 0.0
  %5575 = vmatpush1.msra.mxu0 0.0
  %5576 = vmatprep.subr.mxu0 0.0
  %5577 = vmatpush1.msra.mxu0 0.0
  %5578 = vmatprep.subr.mxu0 0.0
  %5579 = vmatpush1.msra.mxu0 0.0
  %5580 = vmatprep.subr.mxu0 0.0
  %5581 = vmatpush1.msra.mxu0 0.0
  %5582 = vmatprep.subr.mxu0 0.0
  %5583 = vmatpush1.msra.mxu0 0.0
  %5584 = vmatprep.subr.mxu0 0.0
  %5585 = vmatpush1.msra.mxu0 0.0
  %5586 = vmatprep.subr.mxu0 0.0
  %5587 = vmatpush1.msra.mxu0 0.0
  %5588 = vmatprep.subr.mxu0 0.0
  %5589 = vmatpush1.msra.mxu0 0.0
  %5590 = vmatprep.mubr.f32.mxu0 0.0
  %5591 = vmatmul.mubr.f32.gmra.mrb[0].mxu0 %v5437
  %v5592 = vpop.f32.mrb[0].mxu0
  %v5593 = vadd.f32 %v5434, %v5592
  %v5594 = vpop.f32.mrb[0].mxu0
  %5595 = vmatprep.mubr.f32.mxu0 0.0
  %5596 = vmatmul.mubr.f32.gmra.mrb[0].mxu0 %v5440
  %v5597 = vpop.f32.mrb[0].mxu0
  %v5598 = vadd.f32 %v5434, %v5597
  %v5599 = vpop.f32.mrb[0].mxu0
  %5600 = vmatprep.mubr.f32.mxu0 0.0
  %5601 = vmatmul.mubr.f32.gmra.mrb[0].mxu0 %v5443
  %v5602 = vpop.f32.mrb[0].mxu0
  %v5603 = vadd.f32 %v5434, %v5602
  %v5604 = vpop.f32.mrb[0].mxu0
  %5605 = vmatprep.mubr.f32.mxu0 0.0
  %5606 = vmatmul.mubr.f32.gmra.mrb[0].mxu0 %v5446
  %v5607 = vpop.f32.mrb[0].mxu0
  %v5608 = vadd.f32 %v5434, %v5607
  %v5609 = vpop.f32.mrb[0].mxu0
  %5610 = vmatprep.mubr.f32.mxu0 0.0
  %5611 = vmatmul.mubr.f32.gmra.mrb[0].mxu0 %v5449
  %v5612 = vpop.f32.mrb[0].mxu0
  %v5613 = vadd.f32 %v5434, %v5612
  %v5614 = vpop.f32.mrb[0].mxu0
  %5615 = vmatprep.mubr.f32.mxu0 0.0
  %5616 = vmatmul.mubr.f32.gmra.mrb[0].mxu0 %v5452
  %v5617 = vpop.f32.mrb[0].mxu0
  %v5618 = vadd.f32 %v5434, %v5617
  %v5619 = vpop.f32.mrb[0].mxu0
  %5620 = vmatprep.mubr.f32.mxu0 0.0
  %5621 = vmatmul.mubr.f32.gmra.mrb[0].mxu0 %v5455
  %v5622 = vpop.f32.mrb[0].mxu0
  %v5623 = vadd.f32 %v5434, %v5622
  %v5624 = vpop.f32.mrb[0].mxu0
  %5625 = vmatprep.mubr.f32.mxu0 0.0
  %5626 = vmatmul.mubr.f32.gmra.mrb[0].mxu0 %v5458
  %v5627 = vpop.f32.mrb[0].mxu0
  %v5628 = vadd.f32 %v5434, %v5627
  %v5629 = vpop.f32.mrb[0].mxu0
  %5630 = vmatprep.mubr.f32.mxu0 0.0
  %5631 = vmatmul.mubr.f32.gmra.mrb[0].mxu0 %v5461
  %v5632 = vpop.f32.mrb[0].mxu0
  %v5633 = vadd.f32 %v5434, %v5632
  %v5634 = vpop.f32.mrb[0].mxu0
  %5635 = vmatprep.mubr.f32.mxu0 0.0
  %5636 = vmatmul.mubr.f32.gmra.mrb[0].mxu0 %v5464
  %v5637 = vpop.f32.mrb[0].mxu0
  %v5638 = vadd.f32 %v5434, %v5637
  %v5639 = vpop.f32.mrb[0].mxu0
  %5640 = vmatprep.mubr.f32.mxu0 0.0
  %5641 = vmatmul.mubr.f32.gmra.mrb[0].mxu0 %v5467
  %v5642 = vpop.f32.mrb[0].mxu0
  %v5643 = vadd.f32 %v5434, %v5642
  %v5644 = vpop.f32.mrb[0].mxu0
  %5645 = vmatprep.mubr.f32.mxu0 0.0
  %5646 = vmatmul.mubr.f32.gmra.mrb[0].mxu0 %v5470
  %v5647 = vpop.f32.mrb[0].mxu0
  %v5648 = vadd.f32 %v5434, %v5647
  %v5649 = vpop.f32.mrb[0].mxu0
  %5650 = vmatprep.mubr.f32.mxu0 0.0
  %5651 = vmatmul.mubr.f32.gmra.mrb[0].mxu0 %v5473
  %v5652 = vpop.f32.mrb[0].mxu0
  %v5653 = vadd.f32 %v5434, %v5652
  %v5654 = vpop.f32.mrb[0].mxu0
  %5655 = vmatprep.mubr.f32.mxu0 0.0
  %5656 = vmatmul.mubr.f32.gmra.mrb[0].mxu0 %v5476
  %v5657 = vpop.f32.mrb[0].mxu0
  %v5658 = vadd.f32 %v5434, %v5657
  %v5659 = vpop.f32.mrb[0].mxu0
  %5660 = vmatprep.mubr.f32.mxu0 0.0
  %5661 = vmatmul.mubr.f32.gmra.mrb[0].mxu0 %v5479
  %v5662 = vpop.f32.mrb[0].mxu0
  %v5663 = vadd.f32 %v5434, %v5662
  %v5664 = vpop.f32.mrb[0].mxu0
  %5665 = vmatprep.mubr.f32.mxu0 0.0
  %5666 = vmatmul.mubr.f32.gmra.mrb[0].mxu0 %v5482
  %v5667 = vpop.f32.mrb[0].mxu0
  %v5668 = vadd.f32 %v5434, %v5667
  %v5669 = vpop.f32.mrb[0].mxu0
  %5670 = vmatprep.mubr.f32.mxu0 0.0
  %5671 = vmatmul.mubr.f32.gmra.mrb[0].mxu0 %v5485
  %v5672 = vpop.f32.mrb[0].mxu0
  %v5673 = vadd.f32 %v5434, %v5672
  %v5674 = vpop.f32.mrb[0].mxu0
  %5675 = vmatprep.mubr.f32.mxu0 0.0
  %5676 = vmatmul.mubr.f32.gmra.mrb[0].mxu0 %v5488
  %v5677 = vpop.f32.mrb[0].mxu0
  %v5678 = vadd.f32 %v5434, %v5677
  %v5679 = vpop.f32.mrb[0].mxu0
  %5680 = vmatprep.mubr.f32.mxu0 0.0
  %5681 = vmatmul.mubr.f32.gmra.mrb[0].mxu0 %v5491
  %v5682 = vpop.f32.mrb[0].mxu0
  %v5683 = vadd.f32 %v5434, %v5682
  %v5684 = vpop.f32.mrb[0].mxu0
  %5685 = vmatprep.mubr.f32.mxu0 0.0
  %5686 = vmatmul.mubr.f32.gmra.mrb[0].mxu0 %v5494
  %v5687 = vpop.f32.mrb[0].mxu0
  %v5688 = vadd.f32 %v5434, %v5687
  %v5689 = vpop.f32.mrb[0].mxu0
  %5690 = vmatprep.mubr.f32.mxu0 0.0
  %5691 = vmatmul.mubr.f32.gmra.mrb[0].mxu0 %v5497
  %v5692 = vpop.f32.mrb[0].mxu0
  %v5693 = vadd.f32 %v5434, %v5692
  %v5694 = vpop.f32.mrb[0].mxu0
  %5695 = vmatprep.mubr.f32.mxu0 0.0
  %5696 = vmatmul.mubr.f32.gmra.mrb[0].mxu0 %v5500
  %v5697 = vpop.f32.mrb[0].mxu0
  %v5698 = vadd.f32 %v5434, %v5697
  %v5699 = vpop.f32.mrb[0].mxu0
  %5700 = vmatprep.mubr.f32.mxu0 0.0
  %5701 = vmatmul.mubr.f32.gmra.mrb[0].mxu0 %v5503
  %v5702 = vpop.f32.mrb[0].mxu0
  %v5703 = vadd.f32 %v5434, %v5702
  %v5704 = vpop.f32.mrb[0].mxu0
  %5705 = vmatprep.mubr.f32.mxu0 0.0
  %5706 = vmatmul.mubr.f32.gmra.mrb[0].mxu0 %v5506
  %v5707 = vpop.f32.mrb[0].mxu0
  %v5708 = vadd.f32 %v5434, %v5707
  %v5709 = vpop.f32.mrb[0].mxu0
  %5710 = vmatprep.mubr.f32.mxu0 0.0
  %5711 = vmatmul.mubr.f32.gmra.mrb[0].mxu0 %v5509
  %v5712 = vpop.f32.mrb[0].mxu0
  %v5713 = vadd.f32 %v5434, %v5712
  %v5714 = vpop.f32.mrb[0].mxu0
  %5715 = vmatprep.mubr.f32.mxu0 0.0
  %5716 = vmatmul.mubr.f32.gmra.mrb[0].mxu0 %v5512
  %v5717 = vpop.f32.mrb[0].mxu0
  %v5718 = vadd.f32 %v5434, %v5717
  %v5719 = vpop.f32.mrb[0].mxu0
  %5720 = vmatprep.mubr.f32.mxu0 0.0
  %5721 = vmatmul.mubr.f32.gmra.mrb[0].mxu0 %v5515
  %v5722 = vpop.f32.mrb[0].mxu0
  %v5723 = vadd.f32 %v5434, %v5722
  %v5724 = vpop.f32.mrb[0].mxu0
  %5725 = vmatprep.mubr.f32.mxu0 0.0
  %5726 = vmatmul.mubr.f32.gmra.mrb[0].mxu0 %v5518
  %v5727 = vpop.f32.mrb[0].mxu0
  %v5728 = vadd.f32 %v5434, %v5727
  %v5729 = vpop.f32.mrb[0].mxu0
  %5730 = vmatprep.mubr.f32.mxu0 0.0
  %5731 = vmatmul.mubr.f32.gmra.mrb[0].mxu0 %v5521
  %v5732 = vpop.f32.mrb[0].mxu0
  %v5733 = vadd.f32 %v5434, %v5732
  %v5734 = vpop.f32.mrb[0].mxu0
  %5735 = vmatprep.mubr.f32.mxu0 0.0
  %5736 = vmatmul.mubr.f32.gmra.mrb[0].mxu0 %v5524
  %v5737 = vpop.f32.mrb[0].mxu0
  %v5738 = vadd.f32 %v5434, %v5737
  %v5739 = vpop.f32.mrb[0].mxu0
  %5740 = vdwg.mxu0
  %5741 = vrot.lane.b32.xlu0 %v5593, 114
  %v5742 = vpop.permute.xlu0 %5741
  %5743 = vrot.lane.b32.xlu0 %v5598, 114
  %v5744 = vpop.permute.xlu0 %5743
  %5745 = vrot.lane.b32.xlu0 %v5603, 114
  %v5746 = vpop.permute.xlu0 %5745
  %5747 = vrot.lane.b32.xlu0 %v5608, 114
  %v5748 = vpop.permute.xlu0 %5747
  %5749 = vrot.lane.b32.xlu0 %v5613, 114
  %v5750 = vpop.permute.xlu0 %5749
  %5751 = vrot.lane.b32.xlu0 %v5618, 114
  %v5752 = vpop.permute.xlu0 %5751
  %5753 = vrot.lane.b32.xlu0 %v5623, 114
  %v5754 = vpop.permute.xlu0 %5753
  %5755 = vrot.lane.b32.xlu0 %v5628, 114
  %v5756 = vpop.permute.xlu0 %5755
  %5757 = vrot.lane.b32.xlu0 %v5633, 114
  %v5758 = vpop.permute.xlu0 %5757
  %5759 = vrot.lane.b32.xlu0 %v5638, 114
  %v5760 = vpop.permute.xlu0 %5759
  %5761 = vrot.lane.b32.xlu0 %v5643, 114
  %v5762 = vpop.permute.xlu0 %5761
  %5763 = vrot.lane.b32.xlu0 %v5648, 114
  %v5764 = vpop.permute.xlu0 %5763
  %5765 = vrot.lane.b32.xlu0 %v5653, 114
  %v5766 = vpop.permute.xlu0 %5765
  %5767 = vrot.lane.b32.xlu0 %v5658, 114
  %v5768 = vpop.permute.xlu0 %5767
  %5769 = vrot.lane.b32.xlu0 %v5663, 114
  %v5770 = vpop.permute.xlu0 %5769
  %5771 = vrot.lane.b32.xlu0 %v5668, 114
  %v5772 = vpop.permute.xlu0 %5771
  %5773 = vrot.lane.b32.xlu0 %v5673, 114
  %v5774 = vpop.permute.xlu0 %5773
  %5775 = vrot.lane.b32.xlu0 %v5678, 114
  %v5776 = vpop.permute.xlu0 %5775
  %5777 = vrot.lane.b32.xlu0 %v5683, 114
  %v5778 = vpop.permute.xlu0 %5777
  %5779 = vrot.lane.b32.xlu0 %v5688, 114
  %v5780 = vpop.permute.xlu0 %5779
  %5781 = vrot.lane.b32.xlu0 %v5693, 114
  %v5782 = vpop.permute.xlu0 %5781
  %5783 = vrot.lane.b32.xlu0 %v5698, 114
  %v5784 = vpop.permute.xlu0 %5783
  %5785 = vrot.lane.b32.xlu0 %v5703, 114
  %v5786 = vpop.permute.xlu0 %5785
  %5787 = vrot.lane.b32.xlu0 %v5708, 114
  %v5788 = vpop.permute.xlu0 %5787
  %5789 = vrot.lane.b32.xlu0 %v5713, 114
  %v5790 = vpop.permute.xlu0 %5789
  %5791 = vrot.lane.b32.xlu0 %v5718, 114
  %v5792 = vpop.permute.xlu0 %5791
  %5793 = vrot.lane.b32.xlu0 %v5723, 114
  %v5794 = vpop.permute.xlu0 %5793
  %5795 = vrot.lane.b32.xlu0 %v5728, 114
  %v5796 = vpop.permute.xlu0 %5795
  %5797 = vrot.lane.b32.xlu0 %v5733, 114
  %v5798 = vpop.permute.xlu0 %5797
  %5799 = vrot.lane.b32.xlu0 %v5738, 114
  %v5800 = vpop.permute.xlu0 %5799
  %5801 = vrot.lane.b32.xlu0 %v5593, 100
  %v5802 = vpop.permute.xlu0 %5801
  %5803 = vrot.lane.b32.xlu0 %v5598, 100
  %v5804 = vpop.permute.xlu0 %5803
  %5805 = vrot.lane.b32.xlu0 %v5603, 100
  %v5806 = vpop.permute.xlu0 %5805
  %5807 = vrot.lane.b32.xlu0 %v5608, 100
  %v5808 = vpop.permute.xlu0 %5807
  %5809 = vrot.lane.b32.xlu0 %v5613, 100
  %v5810 = vpop.permute.xlu0 %5809
  %5811 = vrot.lane.b32.xlu0 %v5618, 100
  %v5812 = vpop.permute.xlu0 %5811
  %5813 = vrot.lane.b32.xlu0 %v5623, 100
  %v5814 = vpop.permute.xlu0 %5813
  %5815 = vrot.lane.b32.xlu0 %v5628, 100
  %v5816 = vpop.permute.xlu0 %5815
  %5817 = vrot.lane.b32.xlu0 %v5633, 100
  %v5818 = vpop.permute.xlu0 %5817
  %5819 = vrot.lane.b32.xlu0 %v5638, 100
  %v5820 = vpop.permute.xlu0 %5819
  %5821 = vrot.lane.b32.xlu0 %v5643, 100
  %v5822 = vpop.permute.xlu0 %5821
  %5823 = vrot.lane.b32.xlu0 %v5648, 100
  %v5824 = vpop.permute.xlu0 %5823
  %5825 = vrot.lane.b32.xlu0 %v5653, 100
  %v5826 = vpop.permute.xlu0 %5825
  %5827 = vrot.lane.b32.xlu0 %v5658, 100
  %v5828 = vpop.permute.xlu0 %5827
  %5829 = vrot.lane.b32.xlu0 %v5663, 100
  %v5830 = vpop.permute.xlu0 %5829
  %5831 = vrot.lane.b32.xlu0 %v5668, 100
  %v5832 = vpop.permute.xlu0 %5831
  %5833 = vrot.lane.b32.xlu0 %v5673, 100
  %v5834 = vpop.permute.xlu0 %5833
  %5835 = vrot.lane.b32.xlu0 %v5678, 100
  %v5836 = vpop.permute.xlu0 %5835
  %5837 = vrot.lane.b32.xlu0 %v5683, 100
  %v5838 = vpop.permute.xlu0 %5837
  %5839 = vrot.lane.b32.xlu0 %v5688, 100
  %v5840 = vpop.permute.xlu0 %5839
  %5841 = vrot.lane.b32.xlu0 %v5693, 100
  %v5842 = vpop.permute.xlu0 %5841
  %5843 = vrot.lane.b32.xlu0 %v5698, 100
  %v5844 = vpop.permute.xlu0 %5843
  %5845 = vrot.lane.b32.xlu0 %v5703, 100
  %v5846 = vpop.permute.xlu0 %5845
  %5847 = vrot.lane.b32.xlu0 %v5708, 100
  %v5848 = vpop.permute.xlu0 %5847
  %5849 = vrot.lane.b32.xlu0 %v5713, 100
  %v5850 = vpop.permute.xlu0 %5849
  %5851 = vrot.lane.b32.xlu0 %v5718, 100
  %v5852 = vpop.permute.xlu0 %5851
  %5853 = vrot.lane.b32.xlu0 %v5723, 100
  %v5854 = vpop.permute.xlu0 %5853
  %5855 = vrot.lane.b32.xlu0 %v5728, 100
  %v5856 = vpop.permute.xlu0 %5855
  %5857 = vrot.lane.b32.xlu0 %v5733, 100
  %v5858 = vpop.permute.xlu0 %5857
  %5859 = vrot.lane.b32.xlu0 %v5738, 100
  %v5860 = vpop.permute.xlu0 %5859
  %vm5861 = vcmp.gt.f32.partialorder %v5742, 20.0
  %vm5862 = vcmp.gt.f32.partialorder %v5744, 20.0
  %vm5863 = vcmp.gt.f32.partialorder %v5746, 20.0
  %vm5864 = vcmp.gt.f32.partialorder %v5748, 20.0
  %vm5865 = vcmp.gt.f32.partialorder %v5750, 20.0
  %vm5866 = vcmp.gt.f32.partialorder %v5752, 20.0
  %vm5867 = vcmp.gt.f32.partialorder %v5754, 20.0
  %vm5868 = vcmp.gt.f32.partialorder %v5756, 20.0
  %vm5869 = vcmp.gt.f32.partialorder %v5758, 20.0
  %vm5870 = vcmp.gt.f32.partialorder %v5760, 20.0
  %vm5871 = vcmp.gt.f32.partialorder %v5762, 20.0
  %vm5872 = vcmp.gt.f32.partialorder %v5764, 20.0
  %vm5873 = vcmp.gt.f32.partialorder %v5766, 20.0
  %vm5874 = vcmp.gt.f32.partialorder %v5768, 20.0
  %vm5875 = vcmp.gt.f32.partialorder %v5770, 20.0
  %vm5876 = vcmp.gt.f32.partialorder %v5772, 20.0
  %vm5877 = vcmp.gt.f32.partialorder %v5774, 20.0
  %vm5878 = vcmp.gt.f32.partialorder %v5776, 20.0
  %vm5879 = vcmp.gt.f32.partialorder %v5778, 20.0
  %vm5880 = vcmp.gt.f32.partialorder %v5780, 20.0
  %vm5881 = vcmp.gt.f32.partialorder %v5782, 20.0
  %vm5882 = vcmp.gt.f32.partialorder %v5784, 20.0
  %vm5883 = vcmp.gt.f32.partialorder %v5786, 20.0
  %vm5884 = vcmp.gt.f32.partialorder %v5788, 20.0
  %vm5885 = vcmp.gt.f32.partialorder %v5790, 20.0
  %vm5886 = vcmp.gt.f32.partialorder %v5792, 20.0
  %vm5887 = vcmp.gt.f32.partialorder %v5794, 20.0
  %vm5888 = vcmp.gt.f32.partialorder %v5796, 20.0
  %vm5889 = vcmp.gt.f32.partialorder %v5798, 20.0
  %vm5890 = vcmp.gt.f32.partialorder %v5800, 20.0
  %v5891 = vmin.f32 %v5742, 20.0
  %v5892 = vmin.f32 %v5744, 20.0
  %v5893 = vmin.f32 %v5746, 20.0
  %v5894 = vmin.f32 %v5748, 20.0
  %v5895 = vmin.f32 %v5750, 20.0
  %v5896 = vmin.f32 %v5752, 20.0
  %v5897 = vmin.f32 %v5754, 20.0
  %v5898 = vmin.f32 %v5756, 20.0
  %v5899 = vmin.f32 %v5758, 20.0
  %v5900 = vmin.f32 %v5760, 20.0
  %v5901 = vmin.f32 %v5762, 20.0
  %v5902 = vmin.f32 %v5764, 20.0
  %v5903 = vmin.f32 %v5766, 20.0
  %v5904 = vmin.f32 %v5768, 20.0
  %v5905 = vmin.f32 %v5770, 20.0
  %v5906 = vmin.f32 %v5772, 20.0
  %v5907 = vmin.f32 %v5774, 20.0
  %v5908 = vmin.f32 %v5776, 20.0
  %v5909 = vmin.f32 %v5778, 20.0
  %v5910 = vmin.f32 %v5780, 20.0
  %v5911 = vmin.f32 %v5782, 20.0
  %v5912 = vmin.f32 %v5784, 20.0
  %v5913 = vmin.f32 %v5786, 20.0
  %v5914 = vmin.f32 %v5788, 20.0
  %v5915 = vmin.f32 %v5790, 20.0
  %v5916 = vmin.f32 %v5792, 20.0
  %v5917 = vmin.f32 %v5794, 20.0
  %v5918 = vmin.f32 %v5796, 20.0
  %v5919 = vmin.f32 %v5798, 20.0
  %v5920 = vmin.f32 %v5800, 20.0
  %v5921 = vmul.f32 %v5891, 1.442695
  %v5922 = vpow.pop %v5921
  %v5923 = vmul.f32 %v5892, 1.442695
  %v5924 = vpow.pop %v5923
  %v5925 = vmul.f32 %v5893, 1.442695
  %v5926 = vpow.pop %v5925
  %v5927 = vmul.f32 %v5894, 1.442695
  %v5928 = vpow.pop %v5927
  %v5929 = vmul.f32 %v5895, 1.442695
  %v5930 = vpow.pop %v5929
  %v5931 = vmul.f32 %v5896, 1.442695
  %v5932 = vpow.pop %v5931
  %v5933 = vmul.f32 %v5897, 1.442695
  %v5934 = vpow.pop %v5933
  %v5935 = vmul.f32 %v5898, 1.442695
  %v5936 = vpow.pop %v5935
  %v5937 = vmul.f32 %v5899, 1.442695
  %v5938 = vpow.pop %v5937
  %v5939 = vmul.f32 %v5900, 1.442695
  %v5940 = vpow.pop %v5939
  %v5941 = vmul.f32 %v5901, 1.442695
  %v5942 = vpow.pop %v5941
  %v5943 = vmul.f32 %v5902, 1.442695
  %v5944 = vpow.pop %v5943
  %v5945 = vmul.f32 %v5903, 1.442695
  %v5946 = vpow.pop %v5945
  %v5947 = vmul.f32 %v5904, 1.442695
  %v5948 = vpow.pop %v5947
  %v5949 = vmul.f32 %v5905, 1.442695
  %v5950 = vpow.pop %v5949
  %v5951 = vmul.f32 %v5906, 1.442695
  %v5952 = vpow.pop %v5951
  %v5953 = vmul.f32 %v5907, 1.442695
  %v5954 = vpow.pop %v5953
  %v5955 = vmul.f32 %v5908, 1.442695
  %v5956 = vpow.pop %v5955
  %v5957 = vmul.f32 %v5909, 1.442695
  %v5958 = vpow.pop %v5957
  %v5959 = vmul.f32 %v5910, 1.442695
  %v5960 = vpow.pop %v5959
  %v5961 = vmul.f32 %v5911, 1.442695
  %v5962 = vpow.pop %v5961
  %v5963 = vmul.f32 %v5912, 1.442695
  %v5964 = vpow.pop %v5963
  %v5965 = vmul.f32 %v5913, 1.442695
  %v5966 = vpow.pop %v5965
  %v5967 = vmul.f32 %v5914, 1.442695
  %v5968 = vpow.pop %v5967
  %v5969 = vmul.f32 %v5915, 1.442695
  %v5970 = vpow.pop %v5969
  %v5971 = vmul.f32 %v5916, 1.442695
  %v5972 = vpow.pop %v5971
  %v5973 = vmul.f32 %v5917, 1.442695
  %v5974 = vpow.pop %v5973
  %v5975 = vmul.f32 %v5918, 1.442695
  %v5976 = vpow.pop %v5975
  %v5977 = vmul.f32 %v5919, 1.442695
  %v5978 = vpow.pop %v5977
  %v5979 = vmul.f32 %v5920, 1.442695
  %v5980 = vpow.pop %v5979
  %v5981 = vadd.f32 %v5922, 1.0
  %v5982 = vlog2.pop %v5981
  %v5983 = vmul.f32 %v5982, 0.6931472
  %v5984 = vmul.f32 -0.5, %v5922
  %v5985 = vadd.f32 %v5984, 1.0
  %v5986 = vmul.f32 %v5985, %v5922
  %v5987 = vand.u32 2147483647, %v5922
  %vm5988 = vcmp.lt.f32.partialorder %v5987, 0.0004427343
  %v5989 = vsel %vm5988, %v5986, %v5983
  %v5990 = vadd.f32 %v5924, 1.0
  %v5991 = vlog2.pop %v5990
  %v5992 = vmul.f32 %v5991, 0.6931472
  %v5993 = vmul.f32 -0.5, %v5924
  %v5994 = vadd.f32 %v5993, 1.0
  %v5995 = vmul.f32 %v5994, %v5924
  %v5996 = vand.u32 2147483647, %v5924
  %vm5997 = vcmp.lt.f32.partialorder %v5996, 0.0004427343
  %v5998 = vsel %vm5997, %v5995, %v5992
  %v5999 = vadd.f32 %v5926, 1.0
  %v6000 = vlog2.pop %v5999
  %v6001 = vmul.f32 %v6000, 0.6931472
  %v6002 = vmul.f32 -0.5, %v5926
  %v6003 = vadd.f32 %v6002, 1.0
  %v6004 = vmul.f32 %v6003, %v5926
  %v6005 = vand.u32 2147483647, %v5926
  %vm6006 = vcmp.lt.f32.partialorder %v6005, 0.0004427343
  %v6007 = vsel %vm6006, %v6004, %v6001
  %v6008 = vadd.f32 %v5928, 1.0
  %v6009 = vlog2.pop %v6008
  %v6010 = vmul.f32 %v6009, 0.6931472
  %v6011 = vmul.f32 -0.5, %v5928
  %v6012 = vadd.f32 %v6011, 1.0
  %v6013 = vmul.f32 %v6012, %v5928
  %v6014 = vand.u32 2147483647, %v5928
  %vm6015 = vcmp.lt.f32.partialorder %v6014, 0.0004427343
  %v6016 = vsel %vm6015, %v6013, %v6010
  %v6017 = vadd.f32 %v5930, 1.0
  %v6018 = vlog2.pop %v6017
  %v6019 = vmul.f32 %v6018, 0.6931472
  %v6020 = vmul.f32 -0.5, %v5930
  %v6021 = vadd.f32 %v6020, 1.0
  %v6022 = vmul.f32 %v6021, %v5930
  %v6023 = vand.u32 2147483647, %v5930
  %vm6024 = vcmp.lt.f32.partialorder %v6023, 0.0004427343
  %v6025 = vsel %vm6024, %v6022, %v6019
  %v6026 = vadd.f32 %v5932, 1.0
  %v6027 = vlog2.pop %v6026
  %v6028 = vmul.f32 %v6027, 0.6931472
  %v6029 = vmul.f32 -0.5, %v5932
  %v6030 = vadd.f32 %v6029, 1.0
  %v6031 = vmul.f32 %v6030, %v5932
  %v6032 = vand.u32 2147483647, %v5932
  %vm6033 = vcmp.lt.f32.partialorder %v6032, 0.0004427343
  %v6034 = vsel %vm6033, %v6031, %v6028
  %v6035 = vadd.f32 %v5934, 1.0
  %v6036 = vlog2.pop %v6035
  %v6037 = vmul.f32 %v6036, 0.6931472
  %v6038 = vmul.f32 -0.5, %v5934
  %v6039 = vadd.f32 %v6038, 1.0
  %v6040 = vmul.f32 %v6039, %v5934
  %v6041 = vand.u32 2147483647, %v5934
  %vm6042 = vcmp.lt.f32.partialorder %v6041, 0.0004427343
  %v6043 = vsel %vm6042, %v6040, %v6037
  %v6044 = vadd.f32 %v5936, 1.0
  %v6045 = vlog2.pop %v6044
  %v6046 = vmul.f32 %v6045, 0.6931472
  %v6047 = vmul.f32 -0.5, %v5936
  %v6048 = vadd.f32 %v6047, 1.0
  %v6049 = vmul.f32 %v6048, %v5936
  %v6050 = vand.u32 2147483647, %v5936
  %vm6051 = vcmp.lt.f32.partialorder %v6050, 0.0004427343
  %v6052 = vsel %vm6051, %v6049, %v6046
  %v6053 = vadd.f32 %v5938, 1.0
  %v6054 = vlog2.pop %v6053
  %v6055 = vmul.f32 %v6054, 0.6931472
  %v6056 = vmul.f32 -0.5, %v5938
  %v6057 = vadd.f32 %v6056, 1.0
  %v6058 = vmul.f32 %v6057, %v5938
  %v6059 = vand.u32 2147483647, %v5938
  %vm6060 = vcmp.lt.f32.partialorder %v6059, 0.0004427343
  %v6061 = vsel %vm6060, %v6058, %v6055
  %v6062 = vadd.f32 %v5940, 1.0
  %v6063 = vlog2.pop %v6062
  %v6064 = vmul.f32 %v6063, 0.6931472
  %v6065 = vmul.f32 -0.5, %v5940
  %v6066 = vadd.f32 %v6065, 1.0
  %v6067 = vmul.f32 %v6066, %v5940
  %v6068 = vand.u32 2147483647, %v5940
  %vm6069 = vcmp.lt.f32.partialorder %v6068, 0.0004427343
  %v6070 = vsel %vm6069, %v6067, %v6064
  %v6071 = vadd.f32 %v5942, 1.0
  %v6072 = vlog2.pop %v6071
  %v6073 = vmul.f32 %v6072, 0.6931472
  %v6074 = vmul.f32 -0.5, %v5942
  %v6075 = vadd.f32 %v6074, 1.0
  %v6076 = vmul.f32 %v6075, %v5942
  %v6077 = vand.u32 2147483647, %v5942
  %vm6078 = vcmp.lt.f32.partialorder %v6077, 0.0004427343
  %v6079 = vsel %vm6078, %v6076, %v6073
  %v6080 = vadd.f32 %v5944, 1.0
  %v6081 = vlog2.pop %v6080
  %v6082 = vmul.f32 %v6081, 0.6931472
  %v6083 = vmul.f32 -0.5, %v5944
  %v6084 = vadd.f32 %v6083, 1.0
  %v6085 = vmul.f32 %v6084, %v5944
  %v6086 = vand.u32 2147483647, %v5944
  %vm6087 = vcmp.lt.f32.partialorder %v6086, 0.0004427343
  %v6088 = vsel %vm6087, %v6085, %v6082
  %v6089 = vadd.f32 %v5946, 1.0
  %v6090 = vlog2.pop %v6089
  %v6091 = vmul.f32 %v6090, 0.6931472
  %v6092 = vmul.f32 -0.5, %v5946
  %v6093 = vadd.f32 %v6092, 1.0
  %v6094 = vmul.f32 %v6093, %v5946
  %v6095 = vand.u32 2147483647, %v5946
  %vm6096 = vcmp.lt.f32.partialorder %v6095, 0.0004427343
  %v6097 = vsel %vm6096, %v6094, %v6091
  %v6098 = vadd.f32 %v5948, 1.0
  %v6099 = vlog2.pop %v6098
  %v6100 = vmul.f32 %v6099, 0.6931472
  %v6101 = vmul.f32 -0.5, %v5948
  %v6102 = vadd.f32 %v6101, 1.0
  %v6103 = vmul.f32 %v6102, %v5948
  %v6104 = vand.u32 2147483647, %v5948
  %vm6105 = vcmp.lt.f32.partialorder %v6104, 0.0004427343
  %v6106 = vsel %vm6105, %v6103, %v6100
  %v6107 = vadd.f32 %v5950, 1.0
  %v6108 = vlog2.pop %v6107
  %v6109 = vmul.f32 %v6108, 0.6931472
  %v6110 = vmul.f32 -0.5, %v5950
  %v6111 = vadd.f32 %v6110, 1.0
  %v6112 = vmul.f32 %v6111, %v5950
  %v6113 = vand.u32 2147483647, %v5950
  %vm6114 = vcmp.lt.f32.partialorder %v6113, 0.0004427343
  %v6115 = vsel %vm6114, %v6112, %v6109
  %v6116 = vadd.f32 %v5952, 1.0
  %v6117 = vlog2.pop %v6116
  %v6118 = vmul.f32 %v6117, 0.6931472
  %v6119 = vmul.f32 -0.5, %v5952
  %v6120 = vadd.f32 %v6119, 1.0
  %v6121 = vmul.f32 %v6120, %v5952
  %v6122 = vand.u32 2147483647, %v5952
  %vm6123 = vcmp.lt.f32.partialorder %v6122, 0.0004427343
  %v6124 = vsel %vm6123, %v6121, %v6118
  %v6125 = vadd.f32 %v5954, 1.0
  %v6126 = vlog2.pop %v6125
  %v6127 = vmul.f32 %v6126, 0.6931472
  %v6128 = vmul.f32 -0.5, %v5954
  %v6129 = vadd.f32 %v6128, 1.0
  %v6130 = vmul.f32 %v6129, %v5954
  %v6131 = vand.u32 2147483647, %v5954
  %vm6132 = vcmp.lt.f32.partialorder %v6131, 0.0004427343
  %v6133 = vsel %vm6132, %v6130, %v6127
  %v6134 = vadd.f32 %v5956, 1.0
  %v6135 = vlog2.pop %v6134
  %v6136 = vmul.f32 %v6135, 0.6931472
  %v6137 = vmul.f32 -0.5, %v5956
  %v6138 = vadd.f32 %v6137, 1.0
  %v6139 = vmul.f32 %v6138, %v5956
  %v6140 = vand.u32 2147483647, %v5956
  %vm6141 = vcmp.lt.f32.partialorder %v6140, 0.0004427343
  %v6142 = vsel %vm6141, %v6139, %v6136
  %v6143 = vadd.f32 %v5958, 1.0
  %v6144 = vlog2.pop %v6143
  %v6145 = vmul.f32 %v6144, 0.6931472
  %v6146 = vmul.f32 -0.5, %v5958
  %v6147 = vadd.f32 %v6146, 1.0
  %v6148 = vmul.f32 %v6147, %v5958
  %v6149 = vand.u32 2147483647, %v5958
  %vm6150 = vcmp.lt.f32.partialorder %v6149, 0.0004427343
  %v6151 = vsel %vm6150, %v6148, %v6145
  %v6152 = vadd.f32 %v5960, 1.0
  %v6153 = vlog2.pop %v6152
  %v6154 = vmul.f32 %v6153, 0.6931472
  %v6155 = vmul.f32 -0.5, %v5960
  %v6156 = vadd.f32 %v6155, 1.0
  %v6157 = vmul.f32 %v6156, %v5960
  %v6158 = vand.u32 2147483647, %v5960
  %vm6159 = vcmp.lt.f32.partialorder %v6158, 0.0004427343
  %v6160 = vsel %vm6159, %v6157, %v6154
  %v6161 = vadd.f32 %v5962, 1.0
  %v6162 = vlog2.pop %v6161
  %v6163 = vmul.f32 %v6162, 0.6931472
  %v6164 = vmul.f32 -0.5, %v5962
  %v6165 = vadd.f32 %v6164, 1.0
  %v6166 = vmul.f32 %v6165, %v5962
  %v6167 = vand.u32 2147483647, %v5962
  %vm6168 = vcmp.lt.f32.partialorder %v6167, 0.0004427343
  %v6169 = vsel %vm6168, %v6166, %v6163
  %v6170 = vadd.f32 %v5964, 1.0
  %v6171 = vlog2.pop %v6170
  %v6172 = vmul.f32 %v6171, 0.6931472
  %v6173 = vmul.f32 -0.5, %v5964
  %v6174 = vadd.f32 %v6173, 1.0
  %v6175 = vmul.f32 %v6174, %v5964
  %v6176 = vand.u32 2147483647, %v5964
  %vm6177 = vcmp.lt.f32.partialorder %v6176, 0.0004427343
  %v6178 = vsel %vm6177, %v6175, %v6172
  %v6179 = vadd.f32 %v5966, 1.0
  %v6180 = vlog2.pop %v6179
  %v6181 = vmul.f32 %v6180, 0.6931472
  %v6182 = vmul.f32 -0.5, %v5966
  %v6183 = vadd.f32 %v6182, 1.0
  %v6184 = vmul.f32 %v6183, %v5966
  %v6185 = vand.u32 2147483647, %v5966
  %vm6186 = vcmp.lt.f32.partialorder %v6185, 0.0004427343
  %v6187 = vsel %vm6186, %v6184, %v6181
  %v6188 = vadd.f32 %v5968, 1.0
  %v6189 = vlog2.pop %v6188
  %v6190 = vmul.f32 %v6189, 0.6931472
  %v6191 = vmul.f32 -0.5, %v5968
  %v6192 = vadd.f32 %v6191, 1.0
  %v6193 = vmul.f32 %v6192, %v5968
  %v6194 = vand.u32 2147483647, %v5968
  %vm6195 = vcmp.lt.f32.partialorder %v6194, 0.0004427343
  %v6196 = vsel %vm6195, %v6193, %v6190
  %v6197 = vadd.f32 %v5970, 1.0
  %v6198 = vlog2.pop %v6197
  %v6199 = vmul.f32 %v6198, 0.6931472
  %v6200 = vmul.f32 -0.5, %v5970
  %v6201 = vadd.f32 %v6200, 1.0
  %v6202 = vmul.f32 %v6201, %v5970
  %v6203 = vand.u32 2147483647, %v5970
  %vm6204 = vcmp.lt.f32.partialorder %v6203, 0.0004427343
  %v6205 = vsel %vm6204, %v6202, %v6199
  %v6206 = vadd.f32 %v5972, 1.0
  %v6207 = vlog2.pop %v6206
  %v6208 = vmul.f32 %v6207, 0.6931472
  %v6209 = vmul.f32 -0.5, %v5972
  %v6210 = vadd.f32 %v6209, 1.0
  %v6211 = vmul.f32 %v6210, %v5972
  %v6212 = vand.u32 2147483647, %v5972
  %vm6213 = vcmp.lt.f32.partialorder %v6212, 0.0004427343
  %v6214 = vsel %vm6213, %v6211, %v6208
  %v6215 = vadd.f32 %v5974, 1.0
  %v6216 = vlog2.pop %v6215
  %v6217 = vmul.f32 %v6216, 0.6931472
  %v6218 = vmul.f32 -0.5, %v5974
  %v6219 = vadd.f32 %v6218, 1.0
  %v6220 = vmul.f32 %v6219, %v5974
  %v6221 = vand.u32 2147483647, %v5974
  %vm6222 = vcmp.lt.f32.partialorder %v6221, 0.0004427343
  %v6223 = vsel %vm6222, %v6220, %v6217
  %v6224 = vadd.f32 %v5976, 1.0
  %v6225 = vlog2.pop %v6224
  %v6226 = vmul.f32 %v6225, 0.6931472
  %v6227 = vmul.f32 -0.5, %v5976
  %v6228 = vadd.f32 %v6227, 1.0
  %v6229 = vmul.f32 %v6228, %v5976
  %v6230 = vand.u32 2147483647, %v5976
  %vm6231 = vcmp.lt.f32.partialorder %v6230, 0.0004427343
  %v6232 = vsel %vm6231, %v6229, %v6226
  %v6233 = vadd.f32 %v5978, 1.0
  %v6234 = vlog2.pop %v6233
  %v6235 = vmul.f32 %v6234, 0.6931472
  %v6236 = vmul.f32 -0.5, %v5978
  %v6237 = vadd.f32 %v6236, 1.0
  %v6238 = vmul.f32 %v6237, %v5978
  %v6239 = vand.u32 2147483647, %v5978
  %vm6240 = vcmp.lt.f32.partialorder %v6239, 0.0004427343
  %v6241 = vsel %vm6240, %v6238, %v6235
  %v6242 = vadd.f32 %v5980, 1.0
  %v6243 = vlog2.pop %v6242
  %v6244 = vmul.f32 %v6243, 0.6931472
  %v6245 = vmul.f32 -0.5, %v5980
  %v6246 = vadd.f32 %v6245, 1.0
  %v6247 = vmul.f32 %v6246, %v5980
  %v6248 = vand.u32 2147483647, %v5980
  %vm6249 = vcmp.lt.f32.partialorder %v6248, 0.0004427343
  %v6250 = vsel %vm6249, %v6247, %v6244
  %v6251 = vsel %vm5861, %v5742, %v5989
  %v6252 = vsel %vm5862, %v5744, %v5998
  %v6253 = vsel %vm5863, %v5746, %v6007
  %v6254 = vsel %vm5864, %v5748, %v6016
  %v6255 = vsel %vm5865, %v5750, %v6025
  %v6256 = vsel %vm5866, %v5752, %v6034
  %v6257 = vsel %vm5867, %v5754, %v6043
  %v6258 = vsel %vm5868, %v5756, %v6052
  %v6259 = vsel %vm5869, %v5758, %v6061
  %v6260 = vsel %vm5870, %v5760, %v6070
  %v6261 = vsel %vm5871, %v5762, %v6079
  %v6262 = vsel %vm5872, %v5764, %v6088
  %v6263 = vsel %vm5873, %v5766, %v6097
  %v6264 = vsel %vm5874, %v5768, %v6106
  %v6265 = vsel %vm5875, %v5770, %v6115
  %v6266 = vsel %vm5876, %v5772, %v6124
  %v6267 = vsel %vm5877, %v5774, %v6133
  %v6268 = vsel %vm5878, %v5776, %v6142
  %v6269 = vsel %vm5879, %v5778, %v6151
  %v6270 = vsel %vm5880, %v5780, %v6160
  %v6271 = vsel %vm5881, %v5782, %v6169
  %v6272 = vsel %vm5882, %v5784, %v6178
  %v6273 = vsel %vm5883, %v5786, %v6187
  %v6274 = vsel %vm5884, %v5788, %v6196
  %v6275 = vsel %vm5885, %v5790, %v6205
  %v6276 = vsel %vm5886, %v5792, %v6214
  %v6277 = vsel %vm5887, %v5794, %v6223
  %v6278 = vsel %vm5888, %v5796, %v6232
  %v6279 = vsel %vm5889, %v5798, %v6241
  %v6280 = vsel %vm5890, %v5800, %v6250
  %v6281 = vxor.u32 %v5802, 2147483648
  %v6282 = vxor.u32 %v5804, 2147483648
  %v6283 = vxor.u32 %v5806, 2147483648
  %v6284 = vxor.u32 %v5808, 2147483648
  %v6285 = vxor.u32 %v5810, 2147483648
  %v6286 = vxor.u32 %v5812, 2147483648
  %v6287 = vxor.u32 %v5814, 2147483648
  %v6288 = vxor.u32 %v5816, 2147483648
  %v6289 = vxor.u32 %v5818, 2147483648
  %v6290 = vxor.u32 %v5820, 2147483648
  %v6291 = vxor.u32 %v5822, 2147483648
  %v6292 = vxor.u32 %v5824, 2147483648
  %v6293 = vxor.u32 %v5826, 2147483648
  %v6294 = vxor.u32 %v5828, 2147483648
  %v6295 = vxor.u32 %v5830, 2147483648
  %v6296 = vxor.u32 %v5832, 2147483648
  %v6297 = vxor.u32 %v5834, 2147483648
  %v6298 = vxor.u32 %v5836, 2147483648
  %v6299 = vxor.u32 %v5838, 2147483648
  %v6300 = vxor.u32 %v5840, 2147483648
  %v6301 = vxor.u32 %v5842, 2147483648
  %v6302 = vxor.u32 %v5844, 2147483648
  %v6303 = vxor.u32 %v5846, 2147483648
  %v6304 = vxor.u32 %v5848, 2147483648
  %v6305 = vxor.u32 %v5850, 2147483648
  %v6306 = vxor.u32 %v5852, 2147483648
  %v6307 = vxor.u32 %v5854, 2147483648
  %v6308 = vxor.u32 %v5856, 2147483648
  %v6309 = vxor.u32 %v5858, 2147483648
  %v6310 = vxor.u32 %v5860, 2147483648
  %v6311 = vmul.f32 %v6281, 1.442695
  %v6312 = vpow.pop %v6311
  %v6313 = vmul.f32 %v6282, 1.442695
  %v6314 = vpow.pop %v6313
  %v6315 = vmul.f32 %v6283, 1.442695
  %v6316 = vpow.pop %v6315
  %v6317 = vmul.f32 %v6284, 1.442695
  %v6318 = vpow.pop %v6317
  %v6319 = vmul.f32 %v6285, 1.442695
  %v6320 = vpow.pop %v6319
  %v6321 = vmul.f32 %v6286, 1.442695
  %v6322 = vpow.pop %v6321
  %v6323 = vmul.f32 %v6287, 1.442695
  %v6324 = vpow.pop %v6323
  %v6325 = vmul.f32 %v6288, 1.442695
  %v6326 = vpow.pop %v6325
  %v6327 = vmul.f32 %v6289, 1.442695
  %v6328 = vpow.pop %v6327
  %v6329 = vmul.f32 %v6290, 1.442695
  %v6330 = vpow.pop %v6329
  %v6331 = vmul.f32 %v6291, 1.442695
  %v6332 = vpow.pop %v6331
  %v6333 = vmul.f32 %v6292, 1.442695
  %v6334 = vpow.pop %v6333
  %v6335 = vmul.f32 %v6293, 1.442695
  %v6336 = vpow.pop %v6335
  %v6337 = vmul.f32 %v6294, 1.442695
  %v6338 = vpow.pop %v6337
  %v6339 = vmul.f32 %v6295, 1.442695
  %v6340 = vpow.pop %v6339
  %v6341 = vmul.f32 %v6296, 1.442695
  %v6342 = vpow.pop %v6341
  %v6343 = vmul.f32 %v6297, 1.442695
  %v6344 = vpow.pop %v6343
  %v6345 = vmul.f32 %v6298, 1.442695
  %v6346 = vpow.pop %v6345
  %v6347 = vmul.f32 %v6299, 1.442695
  %v6348 = vpow.pop %v6347
  %v6349 = vmul.f32 %v6300, 1.442695
  %v6350 = vpow.pop %v6349
  %v6351 = vmul.f32 %v6301, 1.442695
  %v6352 = vpow.pop %v6351
  %v6353 = vmul.f32 %v6302, 1.442695
  %v6354 = vpow.pop %v6353
  %v6355 = vmul.f32 %v6303, 1.442695
  %v6356 = vpow.pop %v6355
  %v6357 = vmul.f32 %v6304, 1.442695
  %v6358 = vpow.pop %v6357
  %v6359 = vmul.f32 %v6305, 1.442695
  %v6360 = vpow.pop %v6359
  %v6361 = vmul.f32 %v6306, 1.442695
  %v6362 = vpow.pop %v6361
  %v6363 = vmul.f32 %v6307, 1.442695
  %v6364 = vpow.pop %v6363
  %v6365 = vmul.f32 %v6308, 1.442695
  %v6366 = vpow.pop %v6365
  %v6367 = vmul.f32 %v6309, 1.442695
  %v6368 = vpow.pop %v6367
  %v6369 = vmul.f32 %v6310, 1.442695
  %v6370 = vpow.pop %v6369
  %v6371 = vadd.f32 %v6312, 1.0
  %v6372 = vadd.f32 %v6314, 1.0
  %v6373 = vadd.f32 %v6316, 1.0
  %v6374 = vadd.f32 %v6318, 1.0
  %v6375 = vadd.f32 %v6320, 1.0
  %v6376 = vadd.f32 %v6322, 1.0
  %v6377 = vadd.f32 %v6324, 1.0
  %v6378 = vadd.f32 %v6326, 1.0
  %v6379 = vadd.f32 %v6328, 1.0
  %v6380 = vadd.f32 %v6330, 1.0
  %v6381 = vadd.f32 %v6332, 1.0
  %v6382 = vadd.f32 %v6334, 1.0
  %v6383 = vadd.f32 %v6336, 1.0
  %v6384 = vadd.f32 %v6338, 1.0
  %v6385 = vadd.f32 %v6340, 1.0
  %v6386 = vadd.f32 %v6342, 1.0
  %v6387 = vadd.f32 %v6344, 1.0
  %v6388 = vadd.f32 %v6346, 1.0
  %v6389 = vadd.f32 %v6348, 1.0
  %v6390 = vadd.f32 %v6350, 1.0
  %v6391 = vadd.f32 %v6352, 1.0
  %v6392 = vadd.f32 %v6354, 1.0
  %v6393 = vadd.f32 %v6356, 1.0
  %v6394 = vadd.f32 %v6358, 1.0
  %v6395 = vadd.f32 %v6360, 1.0
  %v6396 = vadd.f32 %v6362, 1.0
  %v6397 = vadd.f32 %v6364, 1.0
  %v6398 = vadd.f32 %v6366, 1.0
  %v6399 = vadd.f32 %v6368, 1.0
  %v6400 = vadd.f32 %v6370, 1.0
  %v6401 = vrcp.pop %v6371
  %v6402 = vmul.f32 1.0, %v6401
  %v6403 = vrcp.pop %v6372
  %v6404 = vmul.f32 1.0, %v6403
  %v6405 = vrcp.pop %v6373
  %v6406 = vmul.f32 1.0, %v6405
  %v6407 = vrcp.pop %v6374
  %v6408 = vmul.f32 1.0, %v6407
  %v6409 = vrcp.pop %v6375
  %v6410 = vmul.f32 1.0, %v6409
  %v6411 = vrcp.pop %v6376
  %v6412 = vmul.f32 1.0, %v6411
  %v6413 = vrcp.pop %v6377
  %v6414 = vmul.f32 1.0, %v6413
  %v6415 = vrcp.pop %v6378
  %v6416 = vmul.f32 1.0, %v6415
  %v6417 = vrcp.pop %v6379
  %v6418 = vmul.f32 1.0, %v6417
  %v6419 = vrcp.pop %v6380
  %v6420 = vmul.f32 1.0, %v6419
  %v6421 = vrcp.pop %v6381
  %v6422 = vmul.f32 1.0, %v6421
  %v6423 = vrcp.pop %v6382
  %v6424 = vmul.f32 1.0, %v6423
  %v6425 = vrcp.pop %v6383
  %v6426 = vmul.f32 1.0, %v6425
  %v6427 = vrcp.pop %v6384
  %v6428 = vmul.f32 1.0, %v6427
  %v6429 = vrcp.pop %v6385
  %v6430 = vmul.f32 1.0, %v6429
  %v6431 = vrcp.pop %v6386
  %v6432 = vmul.f32 1.0, %v6431
  %v6433 = vrcp.pop %v6387
  %v6434 = vmul.f32 1.0, %v6433
  %v6435 = vrcp.pop %v6388
  %v6436 = vmul.f32 1.0, %v6435
  %v6437 = vrcp.pop %v6389
  %v6438 = vmul.f32 1.0, %v6437
  %v6439 = vrcp.pop %v6390
  %v6440 = vmul.f32 1.0, %v6439
  %v6441 = vrcp.pop %v6391
  %v6442 = vmul.f32 1.0, %v6441
  %v6443 = vrcp.pop %v6392
  %v6444 = vmul.f32 1.0, %v6443
  %v6445 = vrcp.pop %v6393
  %v6446 = vmul.f32 1.0, %v6445
  %v6447 = vrcp.pop %v6394
  %v6448 = vmul.f32 1.0, %v6447
  %v6449 = vrcp.pop %v6395
  %v6450 = vmul.f32 1.0, %v6449
  %v6451 = vrcp.pop %v6396
  %v6452 = vmul.f32 1.0, %v6451
  %v6453 = vrcp.pop %v6397
  %v6454 = vmul.f32 1.0, %v6453
  %v6455 = vrcp.pop %v6398
  %v6456 = vmul.f32 1.0, %v6455
  %v6457 = vrcp.pop %v6399
  %v6458 = vmul.f32 1.0, %v6457
  %v6459 = vrcp.pop %v6400
  %v6460 = vmul.f32 1.0, %v6459
  %v6461 = vld [vmem:[%s1] sm:$0xff]
  %v6462 = vld [vmem:[%s1 + $0x8] sm:$0xff]
  %v6463 = vld [vmem:[%s1 + $0x10] sm:$0xff]
  %v6464 = vld [vmem:[%s1 + $0x18] sm:$0xff]
  %v6465 = vld [vmem:[%s1 + $0x20] sm:$0xff]
  %v6466 = vld [vmem:[%s1 + $0x28] sm:$0xff]
  %v6467 = vld [vmem:[%s1 + $0x30] sm:$0xff]
  %v6468 = vld [vmem:[%s1 + $0x38] sm:$0xff]
  %v6469 = vld [vmem:[%s1 + $0x40] sm:$0xff]
  %v6470 = vld [vmem:[%s1 + $0x48] sm:$0xff]
  %v6471 = vld [vmem:[%s1 + $0x50] sm:$0xff]
  %v6472 = vld [vmem:[%s1 + $0x58] sm:$0xff]
  %v6473 = vld [vmem:[%s1 + $0x60] sm:$0xff]
  %v6474 = vld [vmem:[%s1 + $0x68] sm:$0xff]
  %v6475 = vld [vmem:[%s1 + $0x70] sm:$0xff]
  %v6476 = vld [vmem:[%s1 + $0x78] sm:$0xff]
  %v6477 = vld [vmem:[%s1 + $0x80] sm:$0xff]
  %v6478 = vld [vmem:[%s1 + $0x88] sm:$0xff]
  %v6479 = vld [vmem:[%s1 + $0x90] sm:$0xff]
  %v6480 = vld [vmem:[%s1 + $0x98] sm:$0xff]
  %v6481 = vld [vmem:[%s1 + $0xa0] sm:$0xff]
  %v6482 = vld [vmem:[%s1 + $0xa8] sm:$0xff]
  %v6483 = vld [vmem:[%s1 + $0xb0] sm:$0xff]
  %v6484 = vld [vmem:[%s1 + $0xb8] sm:$0xff]
  %v6485 = vld [vmem:[%s1 + $0xc0] sm:$0xff]
  %v6486 = vld [vmem:[%s1 + $0xc8] sm:$0xff]
  %v6487 = vld [vmem:[%s1 + $0xd0] sm:$0xff]
  %v6488 = vld [vmem:[%s1 + $0xd8] sm:$0xff]
  %v6489 = vld [vmem:[%s1 + $0xe0] sm:$0xff]
  %v6490 = vld [vmem:[%s1 + $0xe8] sm:$0xff]
  %v6491 = vmul.f32 %v6402, %v6461
  %v6492 = vmul.f32 %v6404, %v6462
  %v6493 = vmul.f32 %v6406, %v6463
  %v6494 = vmul.f32 %v6408, %v6464
  %v6495 = vmul.f32 %v6410, %v6465
  %v6496 = vmul.f32 %v6412, %v6466
  %v6497 = vmul.f32 %v6414, %v6467
  %v6498 = vmul.f32 %v6416, %v6468
  %v6499 = vmul.f32 %v6418, %v6469
  %v6500 = vmul.f32 %v6420, %v6470
  %v6501 = vmul.f32 %v6422, %v6471
  %v6502 = vmul.f32 %v6424, %v6472
  %v6503 = vmul.f32 %v6426, %v6473
  %v6504 = vmul.f32 %v6428, %v6474
  %v6505 = vmul.f32 %v6430, %v6475
  %v6506 = vmul.f32 %v6432, %v6476
  %v6507 = vmul.f32 %v6434, %v6477
  %v6508 = vmul.f32 %v6436, %v6478
  %v6509 = vmul.f32 %v6438, %v6479
  %v6510 = vmul.f32 %v6440, %v6480
  %v6511 = vmul.f32 %v6442, %v6481
  %v6512 = vmul.f32 %v6444, %v6482
  %v6513 = vmul.f32 %v6446, %v6483
  %v6514 = vmul.f32 %v6448, %v6484
  %v6515 = vmul.f32 %v6450, %v6485
  %v6516 = vmul.f32 %v6452, %v6486
  %v6517 = vmul.f32 %v6454, %v6487
  %v6518 = vmul.f32 %v6456, %v6488
  %v6519 = vmul.f32 %v6458, %v6489
  %v6520 = vmul.f32 %v6460, %v6490
  %v6521 = vmul.f32 %v6251, %v6491
  %v6522 = vmul.f32 %v6252, %v6492
  %v6523 = vmul.f32 %v6253, %v6493
  %v6524 = vmul.f32 %v6254, %v6494
  %v6525 = vmul.f32 %v6255, %v6495
  %v6526 = vmul.f32 %v6256, %v6496
  %v6527 = vmul.f32 %v6257, %v6497
  %v6528 = vmul.f32 %v6258, %v6498
  %v6529 = vmul.f32 %v6259, %v6499
  %v6530 = vmul.f32 %v6260, %v6500
  %v6531 = vmul.f32 %v6261, %v6501
  %v6532 = vmul.f32 %v6262, %v6502
  %v6533 = vmul.f32 %v6263, %v6503
  %v6534 = vmul.f32 %v6264, %v6504
  %v6535 = vmul.f32 %v6265, %v6505
  %v6536 = vmul.f32 %v6266, %v6506
  %v6537 = vmul.f32 %v6267, %v6507
  %v6538 = vmul.f32 %v6268, %v6508
  %v6539 = vmul.f32 %v6269, %v6509
  %v6540 = vmul.f32 %v6270, %v6510
  %v6541 = vmul.f32 %v6271, %v6511
  %v6542 = vmul.f32 %v6272, %v6512
  %v6543 = vmul.f32 %v6273, %v6513
  %v6544 = vmul.f32 %v6274, %v6514
  %v6545 = vmul.f32 %v6275, %v6515
  %v6546 = vmul.f32 %v6276, %v6516
  %v6547 = vmul.f32 %v6277, %v6517
  %v6548 = vmul.f32 %v6278, %v6518
  %v6549 = vmul.f32 %v6279, %v6519
  %v6550 = vmul.f32 %v6280, %v6520
  %v6551 = vadd.f32 %v5593, %v6521
  %v6552 = vadd.f32 %v5598, %v6522
  %v6553 = vadd.f32 %v5603, %v6523
  %v6554 = vadd.f32 %v5608, %v6524
  %v6555 = vadd.f32 %v5613, %v6525
  %v6556 = vadd.f32 %v5618, %v6526
  %v6557 = vadd.f32 %v5623, %v6527
  %v6558 = vadd.f32 %v5628, %v6528
  %v6559 = vadd.f32 %v5633, %v6529
  %v6560 = vadd.f32 %v5638, %v6530
  %v6561 = vadd.f32 %v5643, %v6531
  %v6562 = vadd.f32 %v5648, %v6532
  %v6563 = vadd.f32 %v5653, %v6533
  %v6564 = vadd.f32 %v5658, %v6534
  %v6565 = vadd.f32 %v5663, %v6535
  %v6566 = vadd.f32 %v5668, %v6536
  %v6567 = vadd.f32 %v5673, %v6537
  %v6568 = vadd.f32 %v5678, %v6538
  %v6569 = vadd.f32 %v5683, %v6539
  %v6570 = vadd.f32 %v5688, %v6540
  %v6571 = vadd.f32 %v5693, %v6541
  %v6572 = vadd.f32 %v5698, %v6542
  %v6573 = vadd.f32 %v5703, %v6543
  %v6574 = vadd.f32 %v5708, %v6544
  %v6575 = vadd.f32 %v5713, %v6545
  %v6576 = vadd.f32 %v5718, %v6546
  %v6577 = vadd.f32 %v5723, %v6547
  %v6578 = vadd.f32 %v5728, %v6548
  %v6579 = vadd.f32 %v5733, %v6549
  %v6580 = vadd.f32 %v5738, %v6550
  %6581 = vst.msk [vmem:[#allocation4] sm:$0xff] %vm104, %v6551
  %6582 = vst.msk [vmem:[#allocation4 + $0x8] sm:$0xff] %vm104, %v6552
  %6583 = vst.msk [vmem:[#allocation4 + $0x10] sm:$0xff] %vm104, %v6553
  %6584 = vst.msk [vmem:[#allocation4 + $0x18] sm:$0xff] %vm104, %v6554
  %6585 = vst.msk [vmem:[#allocation4 + $0x20] sm:$0xff] %vm104, %v6555
  %6586 = vst.msk [vmem:[#allocation4 + $0x28] sm:$0xff] %vm104, %v6556
  %6587 = vst.msk [vmem:[#allocation4 + $0x30] sm:$0xff] %vm104, %v6557
  %6588 = vst.msk [vmem:[#allocation4 + $0x38] sm:$0xff] %vm104, %v6558
  %6589 = vst.msk [vmem:[#allocation4 + $0x40] sm:$0xff] %vm104, %v6559
  %6590 = vst.msk [vmem:[#allocation4 + $0x48] sm:$0xff] %vm104, %v6560
  %6591 = vst.msk [vmem:[#allocation4 + $0x50] sm:$0xff] %vm104, %v6561
  %6592 = vst.msk [vmem:[#allocation4 + $0x58] sm:$0xff] %vm104, %v6562
  %6593 = vst.msk [vmem:[#allocation4 + $0x60] sm:$0xff] %vm104, %v6563
  %6594 = vst.msk [vmem:[#allocation4 + $0x68] sm:$0xff] %vm104, %v6564
  %6595 = vst.msk [vmem:[#allocation4 + $0x70] sm:$0xff] %vm104, %v6565
  %6596 = vst.msk [vmem:[#allocation4 + $0x78] sm:$0xff] %vm104, %v6566
  %6597 = vst.msk [vmem:[#allocation4 + $0x80] sm:$0xff] %vm104, %v6567
  %6598 = vst.msk [vmem:[#allocation4 + $0x88] sm:$0xff] %vm104, %v6568
  %6599 = vst.msk [vmem:[#allocation4 + $0x90] sm:$0xff] %vm104, %v6569
  %6600 = vst.msk [vmem:[#allocation4 + $0x98] sm:$0xff] %vm104, %v6570
  %6601 = vst.msk [vmem:[#allocation4 + $0xa0] sm:$0xff] %vm104, %v6571
  %6602 = vst.msk [vmem:[#allocation4 + $0xa8] sm:$0xff] %vm104, %v6572
  %6603 = vst.msk [vmem:[#allocation4 + $0xb0] sm:$0xff] %vm104, %v6573
  %6604 = vst.msk [vmem:[#allocation4 + $0xb8] sm:$0xff] %vm104, %v6574
  %6605 = vst.msk [vmem:[#allocation4 + $0xc0] sm:$0xff] %vm104, %v6575
  %6606 = vst.msk [vmem:[#allocation4 + $0xc8] sm:$0xff] %vm104, %v6576
  %6607 = vst.msk [vmem:[#allocation4 + $0xd0] sm:$0xff] %vm104, %v6577
  %6608 = vst.msk [vmem:[#allocation4 + $0xd8] sm:$0xff] %vm104, %v6578
  %6609 = vst.msk [vmem:[#allocation4 + $0xe0] sm:$0xff] %vm104, %v6579
  %6610 = vst.msk [vmem:[#allocation4 + $0xe8] sm:$0xff] %vm104, %v6580
  %v6611 = vld [vmem:[#allocation4] sm:$0xff]
  %v6612 = vld [vmem:[%s9] sm:$0xff]
  %v6613 = vld [vmem:[%s9 + $0x8] sm:$0xff]
  %v6614 = vld [vmem:[%s9 + $0x10] sm:$0x3f]
  %v6615 = vld [vmem:[%s9 + $0x18] sm:$0x3f]
  %v6616 = vld [vmem:[#allocation4 + $0x8] sm:$0xff]
  %s6617 = scalar_lea.vmem %s9, 32
  %v6618 = vld [vmem:[%s6617] sm:$0xff]
  %v6619 = vld [vmem:[%s6617 + $0x8] sm:$0xff]
  %v6620 = vld [vmem:[%s6617 + $0x10] sm:$0x3f]
  %v6621 = vld [vmem:[%s6617 + $0x18] sm:$0x3f]
  %v6622 = vld [vmem:[#allocation4 + $0x10] sm:$0xff]
  %s6623 = scalar_lea.vmem %s9, 64
  %v6624 = vld [vmem:[%s6623] sm:$0xff]
  %v6625 = vld [vmem:[%s6623 + $0x8] sm:$0xff]
  %v6626 = vld [vmem:[%s6623 + $0x10] sm:$0x3f]
  %v6627 = vld [vmem:[%s6623 + $0x18] sm:$0x3f]
  %v6628 = vld [vmem:[#allocation4 + $0x18] sm:$0xff]
  %s6629 = scalar_lea.vmem %s9, 96
  %v6630 = vld [vmem:[%s6629] sm:$0xff]
  %v6631 = vld [vmem:[%s6629 + $0x8] sm:$0xff]
  %v6632 = vld [vmem:[%s6629 + $0x10] sm:$0x3f]
  %v6633 = vld [vmem:[%s6629 + $0x18] sm:$0x3f]
  %v6635 = vsel %vm104, %v6628, 0
  %v6638 = vsel %vm195, %v6632, 0
  %v6641 = vsel %vm195, %v6633, 0
  %6643 = vmatprep.subr.mxu0 %v6631
  %6644 = vmatpush1.msra.mxu0 %v6630
  %6645 = vmatprep.subr.mxu0 %v6641
  %6646 = vmatpush1.msra.mxu0 %v6638
  %6647 = vmatprep.subr.mxu0 0.0
  %6648 = vmatpush1.msra.mxu0 0.0
  %6649 = vmatprep.subr.mxu0 0.0
  %6650 = vmatpush1.msra.mxu0 0.0
  %6651 = vmatprep.subr.mxu0 0.0
  %6652 = vmatpush1.msra.mxu0 0.0
  %6653 = vmatprep.subr.mxu0 0.0
  %6654 = vmatpush1.msra.mxu0 0.0
  %6655 = vmatprep.subr.mxu0 0.0
  %6656 = vmatpush1.msra.mxu0 0.0
  %6657 = vmatprep.subr.mxu0 0.0
  %6658 = vmatpush1.msra.mxu0 0.0
  %6659 = vmatprep.subr.mxu0 0.0
  %6660 = vmatpush1.msra.mxu0 0.0
  %6661 = vmatprep.subr.mxu0 0.0
  %6662 = vmatpush1.msra.mxu0 0.0
  %6663 = vmatprep.subr.mxu0 0.0
  %6664 = vmatpush1.msra.mxu0 0.0
  %6665 = vmatprep.subr.mxu0 0.0
  %6666 = vmatpush1.msra.mxu0 0.0
  %6667 = vmatprep.subr.mxu0 0.0
  %6668 = vmatpush1.msra.mxu0 0.0
  %6669 = vmatprep.subr.mxu0 0.0
  %6670 = vmatpush1.msra.mxu0 0.0
  %6671 = vmatprep.subr.mxu0 0.0
  %6672 = vmatpush1.msra.mxu0 0.0
  %6673 = vmatprep.subr.mxu0 0.0
  %6674 = vmatpush1.msra.mxu0 0.0
  %6675 = vmatprep.subr.mxu0 0.0
  %6676 = vmatpush1.msra.mxu0 0.0
  %6677 = vmatprep.subr.mxu0 0.0
  %6678 = vmatpush1.msra.mxu0 0.0
  %6679 = vmatprep.subr.mxu0 0.0
  %6680 = vmatpush1.msra.mxu0 0.0
  %6681 = vmatprep.subr.mxu0 0.0
  %6682 = vmatpush1.msra.mxu0 0.0
  %6683 = vmatprep.subr.mxu0 0.0
  %6684 = vmatpush1.msra.mxu0 0.0
  %6685 = vmatprep.subr.mxu0 0.0
  %6686 = vmatpush1.msra.mxu0 0.0
  %6687 = vmatprep.subr.mxu0 0.0
  %6688 = vmatpush1.msra.mxu0 0.0
  %6689 = vmatprep.subr.mxu0 0.0
  %6690 = vmatpush1.msra.mxu0 0.0
  %6691 = vmatprep.subr.mxu0 0.0
  %6692 = vmatpush1.msra.mxu0 0.0
  %6693 = vmatprep.subr.mxu0 0.0
  %6694 = vmatpush1.msra.mxu0 0.0
  %6695 = vmatprep.subr.mxu0 0.0
  %6696 = vmatpush1.msra.mxu0 0.0
  %6697 = vmatprep.subr.mxu0 0.0
  %6698 = vmatpush1.msra.mxu0 0.0
  %6699 = vmatprep.subr.mxu0 0.0
  %6700 = vmatpush1.msra.mxu0 0.0
  %6701 = vmatprep.subr.mxu0 0.0
  %6702 = vmatpush1.msra.mxu0 0.0
  %6703 = vmatprep.subr.mxu0 0.0
  %6704 = vmatpush1.msra.mxu0 0.0
  %6705 = vmatprep.subr.mxu0 0.0
  %6706 = vmatpush1.msra.mxu0 0.0
  %6707 = vmatprep.mubr.f32.mxu0 0.0
  %6708 = vmatmul.mubr.f32.gmra.mrb[0].mxu0 %v6635
  %v6709 = vpop.f32.mrb[0].mxu0
  %v6710 = vadd.f32 0.0, %v6709
  %v6711 = vpop.f32.mrb[0].mxu0
  %v6712 = vadd.f32 0.0, %v6711
  %6713 = vdwg.mxu0
  %v6715 = vsel %vm104, %v6611, 0
  %v6718 = vsel %vm195, %v6614, 0
  %v6721 = vsel %vm195, %v6615, 0
  %6723 = vmatprep.subr.mxu0 %v6613
  %6724 = vmatpush1.msra.mxu0 %v6612
  %6725 = vmatprep.subr.mxu0 %v6721
  %6726 = vmatpush1.msra.mxu0 %v6718
  %6727 = vmatprep.subr.mxu0 0.0
  %6728 = vmatpush1.msra.mxu0 0.0
  %6729 = vmatprep.subr.mxu0 0.0
  %6730 = vmatpush1.msra.mxu0 0.0
  %6731 = vmatprep.subr.mxu0 0.0
  %6732 = vmatpush1.msra.mxu0 0.0
  %6733 = vmatprep.subr.mxu0 0.0
  %6734 = vmatpush1.msra.mxu0 0.0
  %6735 = vmatprep.subr.mxu0 0.0
  %6736 = vmatpush1.msra.mxu0 0.0
  %6737 = vmatprep.subr.mxu0 0.0
  %6738 = vmatpush1.msra.mxu0 0.0
  %6739 = vmatprep.subr.mxu0 0.0
  %6740 = vmatpush1.msra.mxu0 0.0
  %6741 = vmatprep.subr.mxu0 0.0
  %6742 = vmatpush1.msra.mxu0 0.0
  %6743 = vmatprep.subr.mxu0 0.0
  %6744 = vmatpush1.msra.mxu0 0.0
  %6745 = vmatprep.subr.mxu0 0.0
  %6746 = vmatpush1.msra.mxu0 0.0
  %6747 = vmatprep.subr.mxu0 0.0
  %6748 = vmatpush1.msra.mxu0 0.0
  %6749 = vmatprep.subr.mxu0 0.0
  %6750 = vmatpush1.msra.mxu0 0.0
  %6751 = vmatprep.subr.mxu0 0.0
  %6752 = vmatpush1.msra.mxu0 0.0
  %6753 = vmatprep.subr.mxu0 0.0
  %6754 = vmatpush1.msra.mxu0 0.0
  %6755 = vmatprep.subr.mxu0 0.0
  %6756 = vmatpush1.msra.mxu0 0.0
  %6757 = vmatprep.subr.mxu0 0.0
  %6758 = vmatpush1.msra.mxu0 0.0
  %6759 = vmatprep.subr.mxu0 0.0
  %6760 = vmatpush1.msra.mxu0 0.0
  %6761 = vmatprep.subr.mxu0 0.0
  %6762 = vmatpush1.msra.mxu0 0.0
  %6763 = vmatprep.subr.mxu0 0.0
  %6764 = vmatpush1.msra.mxu0 0.0
  %6765 = vmatprep.subr.mxu0 0.0
  %6766 = vmatpush1.msra.mxu0 0.0
  %6767 = vmatprep.subr.mxu0 0.0
  %6768 = vmatpush1.msra.mxu0 0.0
  %6769 = vmatprep.subr.mxu0 0.0
  %6770 = vmatpush1.msra.mxu0 0.0
  %6771 = vmatprep.subr.mxu0 0.0
  %6772 = vmatpush1.msra.mxu0 0.0
  %6773 = vmatprep.subr.mxu0 0.0
  %6774 = vmatpush1.msra.mxu0 0.0
  %6775 = vmatprep.subr.mxu0 0.0
  %6776 = vmatpush1.msra.mxu0 0.0
  %6777 = vmatprep.subr.mxu0 0.0
  %6778 = vmatpush1.msra.mxu0 0.0
  %6779 = vmatprep.subr.mxu0 0.0
  %6780 = vmatpush1.msra.mxu0 0.0
  %6781 = vmatprep.subr.mxu0 0.0
  %6782 = vmatpush1.msra.mxu0 0.0
  %6783 = vmatprep.subr.mxu0 0.0
  %6784 = vmatpush1.msra.mxu0 0.0
  %6785 = vmatprep.subr.mxu0 0.0
  %6786 = vmatpush1.msra.mxu0 0.0
  %6787 = vmatprep.mubr.f32.mxu0 0.0
  %6788 = vmatmul.mubr.f32.gmra.mrb[0].mxu0 %v6715
  %v6789 = vpop.f32.mrb[0].mxu0
  %v6790 = vadd.f32 %v6710, %v6789
  %v6791 = vpop.f32.mrb[0].mxu0
  %v6792 = vadd.f32 %v6712, %v6791
  %6793 = vdwg.mxu0
  %v6794 = vld [vmem:[#allocation4 + $0x20] sm:$0xff]
  %s6795 = scalar_lea.vmem %s9, 128
  %v6796 = vld [vmem:[%s6795] sm:$0xff]
  %v6797 = vld [vmem:[%s6795 + $0x8] sm:$0xff]
  %v6798 = vld [vmem:[%s6795 + $0x10] sm:$0x3f]
  %v6799 = vld [vmem:[%s6795 + $0x18] sm:$0x3f]
  %v6801 = vsel %vm104, %v6794, 0
  %v6804 = vsel %vm195, %v6798, 0
  %v6807 = vsel %vm195, %v6799, 0
  %6809 = vmatprep.subr.mxu0 %v6797
  %6810 = vmatpush1.msra.mxu0 %v6796
  %6811 = vmatprep.subr.mxu0 %v6807
  %6812 = vmatpush1.msra.mxu0 %v6804
  %6813 = vmatprep.subr.mxu0 0.0
  %6814 = vmatpush1.msra.mxu0 0.0
  %6815 = vmatprep.subr.mxu0 0.0
  %6816 = vmatpush1.msra.mxu0 0.0
  %6817 = vmatprep.subr.mxu0 0.0
  %6818 = vmatpush1.msra.mxu0 0.0
  %6819 = vmatprep.subr.mxu0 0.0
  %6820 = vmatpush1.msra.mxu0 0.0
  %6821 = vmatprep.subr.mxu0 0.0
  %6822 = vmatpush1.msra.mxu0 0.0
  %6823 = vmatprep.subr.mxu0 0.0
  %6824 = vmatpush1.msra.mxu0 0.0
  %6825 = vmatprep.subr.mxu0 0.0
  %6826 = vmatpush1.msra.mxu0 0.0
  %6827 = vmatprep.subr.mxu0 0.0
  %6828 = vmatpush1.msra.mxu0 0.0
  %6829 = vmatprep.subr.mxu0 0.0
  %6830 = vmatpush1.msra.mxu0 0.0
  %6831 = vmatprep.subr.mxu0 0.0
  %6832 = vmatpush1.msra.mxu0 0.0
  %6833 = vmatprep.subr.mxu0 0.0
  %6834 = vmatpush1.msra.mxu0 0.0
  %6835 = vmatprep.subr.mxu0 0.0
  %6836 = vmatpush1.msra.mxu0 0.0
  %6837 = vmatprep.subr.mxu0 0.0
  %6838 = vmatpush1.msra.mxu0 0.0
  %6839 = vmatprep.subr.mxu0 0.0
  %6840 = vmatpush1.msra.mxu0 0.0
  %6841 = vmatprep.subr.mxu0 0.0
  %6842 = vmatpush1.msra.mxu0 0.0
  %6843 = vmatprep.subr.mxu0 0.0
  %6844 = vmatpush1.msra.mxu0 0.0
  %6845 = vmatprep.subr.mxu0 0.0
  %6846 = vmatpush1.msra.mxu0 0.0
  %6847 = vmatprep.subr.mxu0 0.0
  %6848 = vmatpush1.msra.mxu0 0.0
  %6849 = vmatprep.subr.mxu0 0.0
  %6850 = vmatpush1.msra.mxu0 0.0
  %6851 = vmatprep.subr.mxu0 0.0
  %6852 = vmatpush1.msra.mxu0 0.0
  %6853 = vmatprep.subr.mxu0 0.0
  %6854 = vmatpush1.msra.mxu0 0.0
  %6855 = vmatprep.subr.mxu0 0.0
  %6856 = vmatpush1.msra.mxu0 0.0
  %6857 = vmatprep.subr.mxu0 0.0
  %6858 = vmatpush1.msra.mxu0 0.0
  %6859 = vmatprep.subr.mxu0 0.0
  %6860 = vmatpush1.msra.mxu0 0.0
  %6861 = vmatprep.subr.mxu0 0.0
  %6862 = vmatpush1.msra.mxu0 0.0
  %6863 = vmatprep.subr.mxu0 0.0
  %6864 = vmatpush1.msra.mxu0 0.0
  %6865 = vmatprep.subr.mxu0 0.0
  %6866 = vmatpush1.msra.mxu0 0.0
  %6867 = vmatprep.subr.mxu0 0.0
  %6868 = vmatpush1.msra.mxu0 0.0
  %6869 = vmatprep.subr.mxu0 0.0
  %6870 = vmatpush1.msra.mxu0 0.0
  %6871 = vmatprep.subr.mxu0 0.0
  %6872 = vmatpush1.msra.mxu0 0.0
  %6873 = vmatprep.mubr.f32.mxu0 0.0
  %6874 = vmatmul.mubr.f32.gmra.mrb[0].mxu0 %v6801
  %v6875 = vpop.f32.mrb[0].mxu0
  %v6876 = vadd.f32 0.0, %v6875
  %v6877 = vpop.f32.mrb[0].mxu0
  %v6878 = vadd.f32 0.0, %v6877
  %6879 = vdwg.mxu0
  %v6881 = vsel %vm104, %v6616, 0
  %v6884 = vsel %vm195, %v6620, 0
  %v6887 = vsel %vm195, %v6621, 0
  %6889 = vmatprep.subr.mxu0 %v6619
  %6890 = vmatpush1.msra.mxu0 %v6618
  %6891 = vmatprep.subr.mxu0 %v6887
  %6892 = vmatpush1.msra.mxu0 %v6884
  %6893 = vmatprep.subr.mxu0 0.0
  %6894 = vmatpush1.msra.mxu0 0.0
  %6895 = vmatprep.subr.mxu0 0.0
  %6896 = vmatpush1.msra.mxu0 0.0
  %6897 = vmatprep.subr.mxu0 0.0
  %6898 = vmatpush1.msra.mxu0 0.0
  %6899 = vmatprep.subr.mxu0 0.0
  %6900 = vmatpush1.msra.mxu0 0.0
  %6901 = vmatprep.subr.mxu0 0.0
  %6902 = vmatpush1.msra.mxu0 0.0
  %6903 = vmatprep.subr.mxu0 0.0
  %6904 = vmatpush1.msra.mxu0 0.0
  %6905 = vmatprep.subr.mxu0 0.0
  %6906 = vmatpush1.msra.mxu0 0.0
  %6907 = vmatprep.subr.mxu0 0.0
  %6908 = vmatpush1.msra.mxu0 0.0
  %6909 = vmatprep.subr.mxu0 0.0
  %6910 = vmatpush1.msra.mxu0 0.0
  %6911 = vmatprep.subr.mxu0 0.0
  %6912 = vmatpush1.msra.mxu0 0.0
  %6913 = vmatprep.subr.mxu0 0.0
  %6914 = vmatpush1.msra.mxu0 0.0
  %6915 = vmatprep.subr.mxu0 0.0
  %6916 = vmatpush1.msra.mxu0 0.0
  %6917 = vmatprep.subr.mxu0 0.0
  %6918 = vmatpush1.msra.mxu0 0.0
  %6919 = vmatprep.subr.mxu0 0.0
  %6920 = vmatpush1.msra.mxu0 0.0
  %6921 = vmatprep.subr.mxu0 0.0
  %6922 = vmatpush1.msra.mxu0 0.0
  %6923 = vmatprep.subr.mxu0 0.0
  %6924 = vmatpush1.msra.mxu0 0.0
  %6925 = vmatprep.subr.mxu0 0.0
  %6926 = vmatpush1.msra.mxu0 0.0
  %6927 = vmatprep.subr.mxu0 0.0
  %6928 = vmatpush1.msra.mxu0 0.0
  %6929 = vmatprep.subr.mxu0 0.0
  %6930 = vmatpush1.msra.mxu0 0.0
  %6931 = vmatprep.subr.mxu0 0.0
  %6932 = vmatpush1.msra.mxu0 0.0
  %6933 = vmatprep.subr.mxu0 0.0
  %6934 = vmatpush1.msra.mxu0 0.0
  %6935 = vmatprep.subr.mxu0 0.0
  %6936 = vmatpush1.msra.mxu0 0.0
  %6937 = vmatprep.subr.mxu0 0.0
  %6938 = vmatpush1.msra.mxu0 0.0
  %6939 = vmatprep.subr.mxu0 0.0
  %6940 = vmatpush1.msra.mxu0 0.0
  %6941 = vmatprep.subr.mxu0 0.0
  %6942 = vmatpush1.msra.mxu0 0.0
  %6943 = vmatprep.subr.mxu0 0.0
  %6944 = vmatpush1.msra.mxu0 0.0
  %6945 = vmatprep.subr.mxu0 0.0
  %6946 = vmatpush1.msra.mxu0 0.0
  %6947 = vmatprep.subr.mxu0 0.0
  %6948 = vmatpush1.msra.mxu0 0.0
  %6949 = vmatprep.subr.mxu0 0.0
  %6950 = vmatpush1.msra.mxu0 0.0
  %6951 = vmatprep.subr.mxu0 0.0
  %6952 = vmatpush1.msra.mxu0 0.0
  %6953 = vmatprep.mubr.f32.mxu0 0.0
  %6954 = vmatmul.mubr.f32.gmra.mrb[0].mxu0 %v6881
  %v6955 = vpop.f32.mrb[0].mxu0
  %v6956 = vadd.f32 %v6876, %v6955
  %v6957 = vpop.f32.mrb[0].mxu0
  %v6958 = vadd.f32 %v6878, %v6957
  %6959 = vdwg.mxu0
  %v6960 = vld [vmem:[#allocation4 + $0x28] sm:$0xff]
  %s6961 = scalar_lea.vmem %s9, 160
  %v6962 = vld [vmem:[%s6961] sm:$0xff]
  %v6963 = vld [vmem:[%s6961 + $0x8] sm:$0xff]
  %v6964 = vld [vmem:[%s6961 + $0x10] sm:$0x3f]
  %v6965 = vld [vmem:[%s6961 + $0x18] sm:$0x3f]
  %v6967 = vsel %vm104, %v6960, 0
  %v6970 = vsel %vm195, %v6964, 0
  %v6973 = vsel %vm195, %v6965, 0
  %6975 = vmatprep.subr.mxu0 %v6963
  %6976 = vmatpush1.msra.mxu0 %v6962
  %6977 = vmatprep.subr.mxu0 %v6973
  %6978 = vmatpush1.msra.mxu0 %v6970
  %6979 = vmatprep.subr.mxu0 0.0
  %6980 = vmatpush1.msra.mxu0 0.0
  %6981 = vmatprep.subr.mxu0 0.0
  %6982 = vmatpush1.msra.mxu0 0.0
  %6983 = vmatprep.subr.mxu0 0.0
  %6984 = vmatpush1.msra.mxu0 0.0
  %6985 = vmatprep.subr.mxu0 0.0
  %6986 = vmatpush1.msra.mxu0 0.0
  %6987 = vmatprep.subr.mxu0 0.0
  %6988 = vmatpush1.msra.mxu0 0.0
  %6989 = vmatprep.subr.mxu0 0.0
  %6990 = vmatpush1.msra.mxu0 0.0
  %6991 = vmatprep.subr.mxu0 0.0
  %6992 = vmatpush1.msra.mxu0 0.0
  %6993 = vmatprep.subr.mxu0 0.0
  %6994 = vmatpush1.msra.mxu0 0.0
  %6995 = vmatprep.subr.mxu0 0.0
  %6996 = vmatpush1.msra.mxu0 0.0
  %6997 = vmatprep.subr.mxu0 0.0
  %6998 = vmatpush1.msra.mxu0 0.0
  %6999 = vmatprep.subr.mxu0 0.0
  %7000 = vmatpush1.msra.mxu0 0.0
  %7001 = vmatprep.subr.mxu0 0.0
  %7002 = vmatpush1.msra.mxu0 0.0
  %7003 = vmatprep.subr.mxu0 0.0
  %7004 = vmatpush1.msra.mxu0 0.0
  %7005 = vmatprep.subr.mxu0 0.0
  %7006 = vmatpush1.msra.mxu0 0.0
  %7007 = vmatprep.subr.mxu0 0.0
  %7008 = vmatpush1.msra.mxu0 0.0
  %7009 = vmatprep.subr.mxu0 0.0
  %7010 = vmatpush1.msra.mxu0 0.0
  %7011 = vmatprep.subr.mxu0 0.0
  %7012 = vmatpush1.msra.mxu0 0.0
  %7013 = vmatprep.subr.mxu0 0.0
  %7014 = vmatpush1.msra.mxu0 0.0
  %7015 = vmatprep.subr.mxu0 0.0
  %7016 = vmatpush1.msra.mxu0 0.0
  %7017 = vmatprep.subr.mxu0 0.0
  %7018 = vmatpush1.msra.mxu0 0.0
  %7019 = vmatprep.subr.mxu0 0.0
  %7020 = vmatpush1.msra.mxu0 0.0
  %7021 = vmatprep.subr.mxu0 0.0
  %7022 = vmatpush1.msra.mxu0 0.0
  %7023 = vmatprep.subr.mxu0 0.0
  %7024 = vmatpush1.msra.mxu0 0.0
  %7025 = vmatprep.subr.mxu0 0.0
  %7026 = vmatpush1.msra.mxu0 0.0
  %7027 = vmatprep.subr.mxu0 0.0
  %7028 = vmatpush1.msra.mxu0 0.0
  %7029 = vmatprep.subr.mxu0 0.0
  %7030 = vmatpush1.msra.mxu0 0.0
  %7031 = vmatprep.subr.mxu0 0.0
  %7032 = vmatpush1.msra.mxu0 0.0
  %7033 = vmatprep.subr.mxu0 0.0
  %7034 = vmatpush1.msra.mxu0 0.0
  %7035 = vmatprep.subr.mxu0 0.0
  %7036 = vmatpush1.msra.mxu0 0.0
  %7037 = vmatprep.subr.mxu0 0.0
  %7038 = vmatpush1.msra.mxu0 0.0
  %7039 = vmatprep.mubr.f32.mxu0 0.0
  %7040 = vmatmul.mubr.f32.gmra.mrb[0].mxu0 %v6967
  %v7041 = vpop.f32.mrb[0].mxu0
  %v7042 = vadd.f32 0.0, %v7041
  %v7043 = vpop.f32.mrb[0].mxu0
  %v7044 = vadd.f32 0.0, %v7043
  %7045 = vdwg.mxu0
  %v7047 = vsel %vm104, %v6622, 0
  %v7050 = vsel %vm195, %v6626, 0
  %v7053 = vsel %vm195, %v6627, 0
  %7055 = vmatprep.subr.mxu0 %v6625
  %7056 = vmatpush1.msra.mxu0 %v6624
  %7057 = vmatprep.subr.mxu0 %v7053
  %7058 = vmatpush1.msra.mxu0 %v7050
  %7059 = vmatprep.subr.mxu0 0.0
  %7060 = vmatpush1.msra.mxu0 0.0
  %7061 = vmatprep.subr.mxu0 0.0
  %7062 = vmatpush1.msra.mxu0 0.0
  %7063 = vmatprep.subr.mxu0 0.0
  %7064 = vmatpush1.msra.mxu0 0.0
  %7065 = vmatprep.subr.mxu0 0.0
  %7066 = vmatpush1.msra.mxu0 0.0
  %7067 = vmatprep.subr.mxu0 0.0
  %7068 = vmatpush1.msra.mxu0 0.0
  %7069 = vmatprep.subr.mxu0 0.0
  %7070 = vmatpush1.msra.mxu0 0.0
  %7071 = vmatprep.subr.mxu0 0.0
  %7072 = vmatpush1.msra.mxu0 0.0
  %7073 = vmatprep.subr.mxu0 0.0
  %7074 = vmatpush1.msra.mxu0 0.0
  %7075 = vmatprep.subr.mxu0 0.0
  %7076 = vmatpush1.msra.mxu0 0.0
  %7077 = vmatprep.subr.mxu0 0.0
  %7078 = vmatpush1.msra.mxu0 0.0
  %7079 = vmatprep.subr.mxu0 0.0
  %7080 = vmatpush1.msra.mxu0 0.0
  %7081 = vmatprep.subr.mxu0 0.0
  %7082 = vmatpush1.msra.mxu0 0.0
  %7083 = vmatprep.subr.mxu0 0.0
  %7084 = vmatpush1.msra.mxu0 0.0
  %7085 = vmatprep.subr.mxu0 0.0
  %7086 = vmatpush1.msra.mxu0 0.0
  %7087 = vmatprep.subr.mxu0 0.0
  %7088 = vmatpush1.msra.mxu0 0.0
  %7089 = vmatprep.subr.mxu0 0.0
  %7090 = vmatpush1.msra.mxu0 0.0
  %7091 = vmatprep.subr.mxu0 0.0
  %7092 = vmatpush1.msra.mxu0 0.0
  %7093 = vmatprep.subr.mxu0 0.0
  %7094 = vmatpush1.msra.mxu0 0.0
  %7095 = vmatprep.subr.mxu0 0.0
  %7096 = vmatpush1.msra.mxu0 0.0
  %7097 = vmatprep.subr.mxu0 0.0
  %7098 = vmatpush1.msra.mxu0 0.0
  %7099 = vmatprep.subr.mxu0 0.0
  %7100 = vmatpush1.msra.mxu0 0.0
  %7101 = vmatprep.subr.mxu0 0.0
  %7102 = vmatpush1.msra.mxu0 0.0
  %7103 = vmatprep.subr.mxu0 0.0
  %7104 = vmatpush1.msra.mxu0 0.0
  %7105 = vmatprep.subr.mxu0 0.0
  %7106 = vmatpush1.msra.mxu0 0.0
  %7107 = vmatprep.subr.mxu0 0.0
  %7108 = vmatpush1.msra.mxu0 0.0
  %7109 = vmatprep.subr.mxu0 0.0
  %7110 = vmatpush1.msra.mxu0 0.0
  %7111 = vmatprep.subr.mxu0 0.0
  %7112 = vmatpush1.msra.mxu0 0.0
  %7113 = vmatprep.subr.mxu0 0.0
  %7114 = vmatpush1.msra.mxu0 0.0
  %7115 = vmatprep.subr.mxu0 0.0
  %7116 = vmatpush1.msra.mxu0 0.0
  %7117 = vmatprep.subr.mxu0 0.0
  %7118 = vmatpush1.msra.mxu0 0.0
  %7119 = vmatprep.mubr.f32.mxu0 0.0
  %7120 = vmatmul.mubr.f32.gmra.mrb[0].mxu0 %v7047
  %v7121 = vpop.f32.mrb[0].mxu0
  %v7122 = vadd.f32 %v7042, %v7121
  %v7123 = vpop.f32.mrb[0].mxu0
  %v7124 = vadd.f32 %v7044, %v7123
  %7125 = vdwg.mxu0
  %v7126 = vld [vmem:[#allocation4 + $0x30] sm:$0xff]
  %s7127 = scalar_lea.vmem %s9, 192
  %v7128 = vld [vmem:[%s7127] sm:$0xff]
  %v7129 = vld [vmem:[%s7127 + $0x8] sm:$0xff]
  %v7130 = vld [vmem:[%s7127 + $0x10] sm:$0x3f]
  %v7131 = vld [vmem:[%s7127 + $0x18] sm:$0x3f]
  %v7133 = vsel %vm104, %v7126, 0
  %v7136 = vsel %vm195, %v7130, 0
  %v7139 = vsel %vm195, %v7131, 0
  %7141 = vmatprep.subr.mxu0 %v7129
  %7142 = vmatpush1.msra.mxu0 %v7128
  %7143 = vmatprep.subr.mxu0 %v7139
  %7144 = vmatpush1.msra.mxu0 %v7136
  %7145 = vmatprep.subr.mxu0 0.0
  %7146 = vmatpush1.msra.mxu0 0.0
  %7147 = vmatprep.subr.mxu0 0.0
  %7148 = vmatpush1.msra.mxu0 0.0
  %7149 = vmatprep.subr.mxu0 0.0
  %7150 = vmatpush1.msra.mxu0 0.0
  %7151 = vmatprep.subr.mxu0 0.0
  %7152 = vmatpush1.msra.mxu0 0.0
  %7153 = vmatprep.subr.mxu0 0.0
  %7154 = vmatpush1.msra.mxu0 0.0
  %7155 = vmatprep.subr.mxu0 0.0
  %7156 = vmatpush1.msra.mxu0 0.0
  %7157 = vmatprep.subr.mxu0 0.0
  %7158 = vmatpush1.msra.mxu0 0.0
  %7159 = vmatprep.subr.mxu0 0.0
  %7160 = vmatpush1.msra.mxu0 0.0
  %7161 = vmatprep.subr.mxu0 0.0
  %7162 = vmatpush1.msra.mxu0 0.0
  %7163 = vmatprep.subr.mxu0 0.0
  %7164 = vmatpush1.msra.mxu0 0.0
  %7165 = vmatprep.subr.mxu0 0.0
  %7166 = vmatpush1.msra.mxu0 0.0
  %7167 = vmatprep.subr.mxu0 0.0
  %7168 = vmatpush1.msra.mxu0 0.0
  %7169 = vmatprep.subr.mxu0 0.0
  %7170 = vmatpush1.msra.mxu0 0.0
  %7171 = vmatprep.subr.mxu0 0.0
  %7172 = vmatpush1.msra.mxu0 0.0
  %7173 = vmatprep.subr.mxu0 0.0
  %7174 = vmatpush1.msra.mxu0 0.0
  %7175 = vmatprep.subr.mxu0 0.0
  %7176 = vmatpush1.msra.mxu0 0.0
  %7177 = vmatprep.subr.mxu0 0.0
  %7178 = vmatpush1.msra.mxu0 0.0
  %7179 = vmatprep.subr.mxu0 0.0
  %7180 = vmatpush1.msra.mxu0 0.0
  %7181 = vmatprep.subr.mxu0 0.0
  %7182 = vmatpush1.msra.mxu0 0.0
  %7183 = vmatprep.subr.mxu0 0.0
  %7184 = vmatpush1.msra.mxu0 0.0
  %7185 = vmatprep.subr.mxu0 0.0
  %7186 = vmatpush1.msra.mxu0 0.0
  %7187 = vmatprep.subr.mxu0 0.0
  %7188 = vmatpush1.msra.mxu0 0.0
  %7189 = vmatprep.subr.mxu0 0.0
  %7190 = vmatpush1.msra.mxu0 0.0
  %7191 = vmatprep.subr.mxu0 0.0
  %7192 = vmatpush1.msra.mxu0 0.0
  %7193 = vmatprep.subr.mxu0 0.0
  %7194 = vmatpush1.msra.mxu0 0.0
  %7195 = vmatprep.subr.mxu0 0.0
  %7196 = vmatpush1.msra.mxu0 0.0
  %7197 = vmatprep.subr.mxu0 0.0
  %7198 = vmatpush1.msra.mxu0 0.0
  %7199 = vmatprep.subr.mxu0 0.0
  %7200 = vmatpush1.msra.mxu0 0.0
  %7201 = vmatprep.subr.mxu0 0.0
  %7202 = vmatpush1.msra.mxu0 0.0
  %7203 = vmatprep.subr.mxu0 0.0
  %7204 = vmatpush1.msra.mxu0 0.0
  %7205 = vmatprep.mubr.f32.mxu0 0.0
  %7206 = vmatmul.mubr.f32.gmra.mrb[0].mxu0 %v7133
  %v7207 = vpop.f32.mrb[0].mxu0
  %v7208 = vadd.f32 0.0, %v7207
  %v7209 = vpop.f32.mrb[0].mxu0
  %v7210 = vadd.f32 0.0, %v7209
  %7211 = vdwg.mxu0
  %v7212 = vadd.f32 %v6790, %v7208
  %v7213 = vadd.f32 %v6792, %v7210
  %v7214 = vld [vmem:[#allocation4 + $0x38] sm:$0xff]
  %s7215 = scalar_lea.vmem %s9, 224
  %v7216 = vld [vmem:[%s7215] sm:$0xff]
  %v7217 = vld [vmem:[%s7215 + $0x8] sm:$0xff]
  %v7218 = vld [vmem:[%s7215 + $0x10] sm:$0x3f]
  %v7219 = vld [vmem:[%s7215 + $0x18] sm:$0x3f]
  %v7221 = vsel %vm104, %v7214, 0
  %v7224 = vsel %vm195, %v7218, 0
  %v7227 = vsel %vm195, %v7219, 0
  %7229 = vmatprep.subr.mxu0 %v7217
  %7230 = vmatpush1.msra.mxu0 %v7216
  %7231 = vmatprep.subr.mxu0 %v7227
  %7232 = vmatpush1.msra.mxu0 %v7224
  %7233 = vmatprep.subr.mxu0 0.0
  %7234 = vmatpush1.msra.mxu0 0.0
  %7235 = vmatprep.subr.mxu0 0.0
  %7236 = vmatpush1.msra.mxu0 0.0
  %7237 = vmatprep.subr.mxu0 0.0
  %7238 = vmatpush1.msra.mxu0 0.0
  %7239 = vmatprep.subr.mxu0 0.0
  %7240 = vmatpush1.msra.mxu0 0.0
  %7241 = vmatprep.subr.mxu0 0.0
  %7242 = vmatpush1.msra.mxu0 0.0
  %7243 = vmatprep.subr.mxu0 0.0
  %7244 = vmatpush1.msra.mxu0 0.0
  %7245 = vmatprep.subr.mxu0 0.0
  %7246 = vmatpush1.msra.mxu0 0.0
  %7247 = vmatprep.subr.mxu0 0.0
  %7248 = vmatpush1.msra.mxu0 0.0
  %7249 = vmatprep.subr.mxu0 0.0
  %7250 = vmatpush1.msra.mxu0 0.0
  %7251 = vmatprep.subr.mxu0 0.0
  %7252 = vmatpush1.msra.mxu0 0.0
  %7253 = vmatprep.subr.mxu0 0.0
  %7254 = vmatpush1.msra.mxu0 0.0
  %7255 = vmatprep.subr.mxu0 0.0
  %7256 = vmatpush1.msra.mxu0 0.0
  %7257 = vmatprep.subr.mxu0 0.0
  %7258 = vmatpush1.msra.mxu0 0.0
  %7259 = vmatprep.subr.mxu0 0.0
  %7260 = vmatpush1.msra.mxu0 0.0
  %7261 = vmatprep.subr.mxu0 0.0
  %7262 = vmatpush1.msra.mxu0 0.0
  %7263 = vmatprep.subr.mxu0 0.0
  %7264 = vmatpush1.msra.mxu0 0.0
  %7265 = vmatprep.subr.mxu0 0.0
  %7266 = vmatpush1.msra.mxu0 0.0
  %7267 = vmatprep.subr.mxu0 0.0
  %7268 = vmatpush1.msra.mxu0 0.0
  %7269 = vmatprep.subr.mxu0 0.0
  %7270 = vmatpush1.msra.mxu0 0.0
  %7271 = vmatprep.subr.mxu0 0.0
  %7272 = vmatpush1.msra.mxu0 0.0
  %7273 = vmatprep.subr.mxu0 0.0
  %7274 = vmatpush1.msra.mxu0 0.0
  %7275 = vmatprep.subr.mxu0 0.0
  %7276 = vmatpush1.msra.mxu0 0.0
  %7277 = vmatprep.subr.mxu0 0.0
  %7278 = vmatpush1.msra.mxu0 0.0
  %7279 = vmatprep.subr.mxu0 0.0
  %7280 = vmatpush1.msra.mxu0 0.0
  %7281 = vmatprep.subr.mxu0 0.0
  %7282 = vmatpush1.msra.mxu0 0.0
  %7283 = vmatprep.subr.mxu0 0.0
  %7284 = vmatpush1.msra.mxu0 0.0
  %7285 = vmatprep.subr.mxu0 0.0
  %7286 = vmatpush1.msra.mxu0 0.0
  %7287 = vmatprep.subr.mxu0 0.0
  %7288 = vmatpush1.msra.mxu0 0.0
  %7289 = vmatprep.subr.mxu0 0.0
  %7290 = vmatpush1.msra.mxu0 0.0
  %7291 = vmatprep.subr.mxu0 0.0
  %7292 = vmatpush1.msra.mxu0 0.0
  %7293 = vmatprep.mubr.f32.mxu0 0.0
  %7294 = vmatmul.mubr.f32.gmra.mrb[0].mxu0 %v7221
  %v7295 = vpop.f32.mrb[0].mxu0
  %v7296 = vadd.f32 0.0, %v7295
  %v7297 = vpop.f32.mrb[0].mxu0
  %v7298 = vadd.f32 0.0, %v7297
  %7299 = vdwg.mxu0
  %v7300 = vadd.f32 %v6956, %v7296
  %v7301 = vadd.f32 %v6958, %v7298
  %v7302 = vld [vmem:[#allocation4 + $0x40] sm:$0xff]
  %s7303 = scalar_lea.vmem %s9, 256
  %v7304 = vld [vmem:[%s7303] sm:$0xff]
  %v7305 = vld [vmem:[%s7303 + $0x8] sm:$0xff]
  %v7306 = vld [vmem:[%s7303 + $0x10] sm:$0x3f]
  %v7307 = vld [vmem:[%s7303 + $0x18] sm:$0x3f]
  %v7309 = vsel %vm104, %v7302, 0
  %v7312 = vsel %vm195, %v7306, 0
  %v7315 = vsel %vm195, %v7307, 0
  %7317 = vmatprep.subr.mxu0 %v7305
  %7318 = vmatpush1.msra.mxu0 %v7304
  %7319 = vmatprep.subr.mxu0 %v7315
  %7320 = vmatpush1.msra.mxu0 %v7312
  %7321 = vmatprep.subr.mxu0 0.0
  %7322 = vmatpush1.msra.mxu0 0.0
  %7323 = vmatprep.subr.mxu0 0.0
  %7324 = vmatpush1.msra.mxu0 0.0
  %7325 = vmatprep.subr.mxu0 0.0
  %7326 = vmatpush1.msra.mxu0 0.0
  %7327 = vmatprep.subr.mxu0 0.0
  %7328 = vmatpush1.msra.mxu0 0.0
  %7329 = vmatprep.subr.mxu0 0.0
  %7330 = vmatpush1.msra.mxu0 0.0
  %7331 = vmatprep.subr.mxu0 0.0
  %7332 = vmatpush1.msra.mxu0 0.0
  %7333 = vmatprep.subr.mxu0 0.0
  %7334 = vmatpush1.msra.mxu0 0.0
  %7335 = vmatprep.subr.mxu0 0.0
  %7336 = vmatpush1.msra.mxu0 0.0
  %7337 = vmatprep.subr.mxu0 0.0
  %7338 = vmatpush1.msra.mxu0 0.0
  %7339 = vmatprep.subr.mxu0 0.0
  %7340 = vmatpush1.msra.mxu0 0.0
  %7341 = vmatprep.subr.mxu0 0.0
  %7342 = vmatpush1.msra.mxu0 0.0
  %7343 = vmatprep.subr.mxu0 0.0
  %7344 = vmatpush1.msra.mxu0 0.0
  %7345 = vmatprep.subr.mxu0 0.0
  %7346 = vmatpush1.msra.mxu0 0.0
  %7347 = vmatprep.subr.mxu0 0.0
  %7348 = vmatpush1.msra.mxu0 0.0
  %7349 = vmatprep.subr.mxu0 0.0
  %7350 = vmatpush1.msra.mxu0 0.0
  %7351 = vmatprep.subr.mxu0 0.0
  %7352 = vmatpush1.msra.mxu0 0.0
  %7353 = vmatprep.subr.mxu0 0.0
  %7354 = vmatpush1.msra.mxu0 0.0
  %7355 = vmatprep.subr.mxu0 0.0
  %7356 = vmatpush1.msra.mxu0 0.0
  %7357 = vmatprep.subr.mxu0 0.0
  %7358 = vmatpush1.msra.mxu0 0.0
  %7359 = vmatprep.subr.mxu0 0.0
  %7360 = vmatpush1.msra.mxu0 0.0
  %7361 = vmatprep.subr.mxu0 0.0
  %7362 = vmatpush1.msra.mxu0 0.0
  %7363 = vmatprep.subr.mxu0 0.0
  %7364 = vmatpush1.msra.mxu0 0.0
  %7365 = vmatprep.subr.mxu0 0.0
  %7366 = vmatpush1.msra.mxu0 0.0
  %7367 = vmatprep.subr.mxu0 0.0
  %7368 = vmatpush1.msra.mxu0 0.0
  %7369 = vmatprep.subr.mxu0 0.0
  %7370 = vmatpush1.msra.mxu0 0.0
  %7371 = vmatprep.subr.mxu0 0.0
  %7372 = vmatpush1.msra.mxu0 0.0
  %7373 = vmatprep.subr.mxu0 0.0
  %7374 = vmatpush1.msra.mxu0 0.0
  %7375 = vmatprep.subr.mxu0 0.0
  %7376 = vmatpush1.msra.mxu0 0.0
  %7377 = vmatprep.subr.mxu0 0.0
  %7378 = vmatpush1.msra.mxu0 0.0
  %7379 = vmatprep.subr.mxu0 0.0
  %7380 = vmatpush1.msra.mxu0 0.0
  %7381 = vmatprep.mubr.f32.mxu0 0.0
  %7382 = vmatmul.mubr.f32.gmra.mrb[0].mxu0 %v7309
  %v7383 = vpop.f32.mrb[0].mxu0
  %v7384 = vadd.f32 0.0, %v7383
  %v7385 = vpop.f32.mrb[0].mxu0
  %v7386 = vadd.f32 0.0, %v7385
  %7387 = vdwg.mxu0
  %v7388 = vadd.f32 %v7122, %v7384
  %v7389 = vadd.f32 %v7124, %v7386
  %v7390 = vld [vmem:[#allocation4 + $0x48] sm:$0xff]
  %s7391 = scalar_lea.vmem %s9, 288
  %v7392 = vld [vmem:[%s7391] sm:$0xff]
  %v7393 = vld [vmem:[%s7391 + $0x8] sm:$0xff]
  %v7394 = vld [vmem:[%s7391 + $0x10] sm:$0x3f]
  %v7395 = vld [vmem:[%s7391 + $0x18] sm:$0x3f]
  %v7397 = vsel %vm104, %v7390, 0
  %v7400 = vsel %vm195, %v7394, 0
  %v7403 = vsel %vm195, %v7395, 0
  %7405 = vmatprep.subr.mxu0 %v7393
  %7406 = vmatpush1.msra.mxu0 %v7392
  %7407 = vmatprep.subr.mxu0 %v7403
  %7408 = vmatpush1.msra.mxu0 %v7400
  %7409 = vmatprep.subr.mxu0 0.0
  %7410 = vmatpush1.msra.mxu0 0.0
  %7411 = vmatprep.subr.mxu0 0.0
  %7412 = vmatpush1.msra.mxu0 0.0
  %7413 = vmatprep.subr.mxu0 0.0
  %7414 = vmatpush1.msra.mxu0 0.0
  %7415 = vmatprep.subr.mxu0 0.0
  %7416 = vmatpush1.msra.mxu0 0.0
  %7417 = vmatprep.subr.mxu0 0.0
  %7418 = vmatpush1.msra.mxu0 0.0
  %7419 = vmatprep.subr.mxu0 0.0
  %7420 = vmatpush1.msra.mxu0 0.0
  %7421 = vmatprep.subr.mxu0 0.0
  %7422 = vmatpush1.msra.mxu0 0.0
  %7423 = vmatprep.subr.mxu0 0.0
  %7424 = vmatpush1.msra.mxu0 0.0
  %7425 = vmatprep.subr.mxu0 0.0
  %7426 = vmatpush1.msra.mxu0 0.0
  %7427 = vmatprep.subr.mxu0 0.0
  %7428 = vmatpush1.msra.mxu0 0.0
  %7429 = vmatprep.subr.mxu0 0.0
  %7430 = vmatpush1.msra.mxu0 0.0
  %7431 = vmatprep.subr.mxu0 0.0
  %7432 = vmatpush1.msra.mxu0 0.0
  %7433 = vmatprep.subr.mxu0 0.0
  %7434 = vmatpush1.msra.mxu0 0.0
  %7435 = vmatprep.subr.mxu0 0.0
  %7436 = vmatpush1.msra.mxu0 0.0
  %7437 = vmatprep.subr.mxu0 0.0
  %7438 = vmatpush1.msra.mxu0 0.0
  %7439 = vmatprep.subr.mxu0 0.0
  %7440 = vmatpush1.msra.mxu0 0.0
  %7441 = vmatprep.subr.mxu0 0.0
  %7442 = vmatpush1.msra.mxu0 0.0
  %7443 = vmatprep.subr.mxu0 0.0
  %7444 = vmatpush1.msra.mxu0 0.0
  %7445 = vmatprep.subr.mxu0 0.0
  %7446 = vmatpush1.msra.mxu0 0.0
  %7447 = vmatprep.subr.mxu0 0.0
  %7448 = vmatpush1.msra.mxu0 0.0
  %7449 = vmatprep.subr.mxu0 0.0
  %7450 = vmatpush1.msra.mxu0 0.0
  %7451 = vmatprep.subr.mxu0 0.0
  %7452 = vmatpush1.msra.mxu0 0.0
  %7453 = vmatprep.subr.mxu0 0.0
  %7454 = vmatpush1.msra.mxu0 0.0
  %7455 = vmatprep.subr.mxu0 0.0
  %7456 = vmatpush1.msra.mxu0 0.0
  %7457 = vmatprep.subr.mxu0 0.0
  %7458 = vmatpush1.msra.mxu0 0.0
  %7459 = vmatprep.subr.mxu0 0.0
  %7460 = vmatpush1.msra.mxu0 0.0
  %7461 = vmatprep.subr.mxu0 0.0
  %7462 = vmatpush1.msra.mxu0 0.0
  %7463 = vmatprep.subr.mxu0 0.0
  %7464 = vmatpush1.msra.mxu0 0.0
  %7465 = vmatprep.subr.mxu0 0.0
  %7466 = vmatpush1.msra.mxu0 0.0
  %7467 = vmatprep.subr.mxu0 0.0
  %7468 = vmatpush1.msra.mxu0 0.0
  %7469 = vmatprep.mubr.f32.mxu0 0.0
  %7470 = vmatmul.mubr.f32.gmra.mrb[0].mxu0 %v7397
  %v7471 = vpop.f32.mrb[0].mxu0
  %v7472 = vadd.f32 0.0, %v7471
  %v7473 = vpop.f32.mrb[0].mxu0
  %v7474 = vadd.f32 0.0, %v7473
  %7475 = vdwg.mxu0
  %v7476 = vadd.f32 %v7212, %v7472
  %v7477 = vadd.f32 %v7213, %v7474
  %v7478 = vld [vmem:[#allocation4 + $0x50] sm:$0xff]
  %s7479 = scalar_lea.vmem %s9, 320
  %v7480 = vld [vmem:[%s7479] sm:$0xff]
  %v7481 = vld [vmem:[%s7479 + $0x8] sm:$0xff]
  %v7482 = vld [vmem:[%s7479 + $0x10] sm:$0x3f]
  %v7483 = vld [vmem:[%s7479 + $0x18] sm:$0x3f]
  %v7485 = vsel %vm104, %v7478, 0
  %v7488 = vsel %vm195, %v7482, 0
  %v7491 = vsel %vm195, %v7483, 0
  %7493 = vmatprep.subr.mxu0 %v7481
  %7494 = vmatpush1.msra.mxu0 %v7480
  %7495 = vmatprep.subr.mxu0 %v7491
  %7496 = vmatpush1.msra.mxu0 %v7488
  %7497 = vmatprep.subr.mxu0 0.0
  %7498 = vmatpush1.msra.mxu0 0.0
  %7499 = vmatprep.subr.mxu0 0.0
  %7500 = vmatpush1.msra.mxu0 0.0
  %7501 = vmatprep.subr.mxu0 0.0
  %7502 = vmatpush1.msra.mxu0 0.0
  %7503 = vmatprep.subr.mxu0 0.0
  %7504 = vmatpush1.msra.mxu0 0.0
  %7505 = vmatprep.subr.mxu0 0.0
  %7506 = vmatpush1.msra.mxu0 0.0
  %7507 = vmatprep.subr.mxu0 0.0
  %7508 = vmatpush1.msra.mxu0 0.0
  %7509 = vmatprep.subr.mxu0 0.0
  %7510 = vmatpush1.msra.mxu0 0.0
  %7511 = vmatprep.subr.mxu0 0.0
  %7512 = vmatpush1.msra.mxu0 0.0
  %7513 = vmatprep.subr.mxu0 0.0
  %7514 = vmatpush1.msra.mxu0 0.0
  %7515 = vmatprep.subr.mxu0 0.0
  %7516 = vmatpush1.msra.mxu0 0.0
  %7517 = vmatprep.subr.mxu0 0.0
  %7518 = vmatpush1.msra.mxu0 0.0
  %7519 = vmatprep.subr.mxu0 0.0
  %7520 = vmatpush1.msra.mxu0 0.0
  %7521 = vmatprep.subr.mxu0 0.0
  %7522 = vmatpush1.msra.mxu0 0.0
  %7523 = vmatprep.subr.mxu0 0.0
  %7524 = vmatpush1.msra.mxu0 0.0
  %7525 = vmatprep.subr.mxu0 0.0
  %7526 = vmatpush1.msra.mxu0 0.0
  %7527 = vmatprep.subr.mxu0 0.0
  %7528 = vmatpush1.msra.mxu0 0.0
  %7529 = vmatprep.subr.mxu0 0.0
  %7530 = vmatpush1.msra.mxu0 0.0
  %7531 = vmatprep.subr.mxu0 0.0
  %7532 = vmatpush1.msra.mxu0 0.0
  %7533 = vmatprep.subr.mxu0 0.0
  %7534 = vmatpush1.msra.mxu0 0.0
  %7535 = vmatprep.subr.mxu0 0.0
  %7536 = vmatpush1.msra.mxu0 0.0
  %7537 = vmatprep.subr.mxu0 0.0
  %7538 = vmatpush1.msra.mxu0 0.0
  %7539 = vmatprep.subr.mxu0 0.0
  %7540 = vmatpush1.msra.mxu0 0.0
  %7541 = vmatprep.subr.mxu0 0.0
  %7542 = vmatpush1.msra.mxu0 0.0
  %7543 = vmatprep.subr.mxu0 0.0
  %7544 = vmatpush1.msra.mxu0 0.0
  %7545 = vmatprep.subr.mxu0 0.0
  %7546 = vmatpush1.msra.mxu0 0.0
  %7547 = vmatprep.subr.mxu0 0.0
  %7548 = vmatpush1.msra.mxu0 0.0
  %7549 = vmatprep.subr.mxu0 0.0
  %7550 = vmatpush1.msra.mxu0 0.0
  %7551 = vmatprep.subr.mxu0 0.0
  %7552 = vmatpush1.msra.mxu0 0.0
  %7553 = vmatprep.subr.mxu0 0.0
  %7554 = vmatpush1.msra.mxu0 0.0
  %7555 = vmatprep.subr.mxu0 0.0
  %7556 = vmatpush1.msra.mxu0 0.0
  %7557 = vmatprep.mubr.f32.mxu0 0.0
  %7558 = vmatmul.mubr.f32.gmra.mrb[0].mxu0 %v7485
  %v7559 = vpop.f32.mrb[0].mxu0
  %v7560 = vadd.f32 0.0, %v7559
  %v7561 = vpop.f32.mrb[0].mxu0
  %v7562 = vadd.f32 0.0, %v7561
  %7563 = vdwg.mxu0
  %v7564 = vadd.f32 %v7300, %v7560
  %v7565 = vadd.f32 %v7301, %v7562
  %v7566 = vld [vmem:[#allocation4 + $0x58] sm:$0xff]
  %s7567 = scalar_lea.vmem %s9, 352
  %v7568 = vld [vmem:[%s7567] sm:$0xff]
  %v7569 = vld [vmem:[%s7567 + $0x8] sm:$0xff]
  %v7570 = vld [vmem:[%s7567 + $0x10] sm:$0x3f]
  %v7571 = vld [vmem:[%s7567 + $0x18] sm:$0x3f]
  %v7573 = vsel %vm104, %v7566, 0
  %v7576 = vsel %vm195, %v7570, 0
  %v7579 = vsel %vm195, %v7571, 0
  %7581 = vmatprep.subr.mxu0 %v7569
  %7582 = vmatpush1.msra.mxu0 %v7568
  %7583 = vmatprep.subr.mxu0 %v7579
  %7584 = vmatpush1.msra.mxu0 %v7576
  %7585 = vmatprep.subr.mxu0 0.0
  %7586 = vmatpush1.msra.mxu0 0.0
  %7587 = vmatprep.subr.mxu0 0.0
  %7588 = vmatpush1.msra.mxu0 0.0
  %7589 = vmatprep.subr.mxu0 0.0
  %7590 = vmatpush1.msra.mxu0 0.0
  %7591 = vmatprep.subr.mxu0 0.0
  %7592 = vmatpush1.msra.mxu0 0.0
  %7593 = vmatprep.subr.mxu0 0.0
  %7594 = vmatpush1.msra.mxu0 0.0
  %7595 = vmatprep.subr.mxu0 0.0
  %7596 = vmatpush1.msra.mxu0 0.0
  %7597 = vmatprep.subr.mxu0 0.0
  %7598 = vmatpush1.msra.mxu0 0.0
  %7599 = vmatprep.subr.mxu0 0.0
  %7600 = vmatpush1.msra.mxu0 0.0
  %7601 = vmatprep.subr.mxu0 0.0
  %7602 = vmatpush1.msra.mxu0 0.0
  %7603 = vmatprep.subr.mxu0 0.0
  %7604 = vmatpush1.msra.mxu0 0.0
  %7605 = vmatprep.subr.mxu0 0.0
  %7606 = vmatpush1.msra.mxu0 0.0
  %7607 = vmatprep.subr.mxu0 0.0
  %7608 = vmatpush1.msra.mxu0 0.0
  %7609 = vmatprep.subr.mxu0 0.0
  %7610 = vmatpush1.msra.mxu0 0.0
  %7611 = vmatprep.subr.mxu0 0.0
  %7612 = vmatpush1.msra.mxu0 0.0
  %7613 = vmatprep.subr.mxu0 0.0
  %7614 = vmatpush1.msra.mxu0 0.0
  %7615 = vmatprep.subr.mxu0 0.0
  %7616 = vmatpush1.msra.mxu0 0.0
  %7617 = vmatprep.subr.mxu0 0.0
  %7618 = vmatpush1.msra.mxu0 0.0
  %7619 = vmatprep.subr.mxu0 0.0
  %7620 = vmatpush1.msra.mxu0 0.0
  %7621 = vmatprep.subr.mxu0 0.0
  %7622 = vmatpush1.msra.mxu0 0.0
  %7623 = vmatprep.subr.mxu0 0.0
  %7624 = vmatpush1.msra.mxu0 0.0
  %7625 = vmatprep.subr.mxu0 0.0
  %7626 = vmatpush1.msra.mxu0 0.0
  %7627 = vmatprep.subr.mxu0 0.0
  %7628 = vmatpush1.msra.mxu0 0.0
  %7629 = vmatprep.subr.mxu0 0.0
  %7630 = vmatpush1.msra.mxu0 0.0
  %7631 = vmatprep.subr.mxu0 0.0
  %7632 = vmatpush1.msra.mxu0 0.0
  %7633 = vmatprep.subr.mxu0 0.0
  %7634 = vmatpush1.msra.mxu0 0.0
  %7635 = vmatprep.subr.mxu0 0.0
  %7636 = vmatpush1.msra.mxu0 0.0
  %7637 = vmatprep.subr.mxu0 0.0
  %7638 = vmatpush1.msra.mxu0 0.0
  %7639 = vmatprep.subr.mxu0 0.0
  %7640 = vmatpush1.msra.mxu0 0.0
  %7641 = vmatprep.subr.mxu0 0.0
  %7642 = vmatpush1.msra.mxu0 0.0
  %7643 = vmatprep.subr.mxu0 0.0
  %7644 = vmatpush1.msra.mxu0 0.0
  %7645 = vmatprep.mubr.f32.mxu0 0.0
  %7646 = vmatmul.mubr.f32.gmra.mrb[0].mxu0 %v7573
  %v7647 = vpop.f32.mrb[0].mxu0
  %v7648 = vadd.f32 0.0, %v7647
  %v7649 = vpop.f32.mrb[0].mxu0
  %v7650 = vadd.f32 0.0, %v7649
  %7651 = vdwg.mxu0
  %v7652 = vadd.f32 %v7388, %v7648
  %v7653 = vadd.f32 %v7389, %v7650
  %v7654 = vld [vmem:[#allocation4 + $0x60] sm:$0xff]
  %s7655 = scalar_lea.vmem %s9, 384
  %v7656 = vld [vmem:[%s7655] sm:$0xff]
  %v7657 = vld [vmem:[%s7655 + $0x8] sm:$0xff]
  %v7658 = vld [vmem:[%s7655 + $0x10] sm:$0x3f]
  %v7659 = vld [vmem:[%s7655 + $0x18] sm:$0x3f]
  %v7661 = vsel %vm104, %v7654, 0
  %v7664 = vsel %vm195, %v7658, 0
  %v7667 = vsel %vm195, %v7659, 0
  %7669 = vmatprep.subr.mxu0 %v7657
  %7670 = vmatpush1.msra.mxu0 %v7656
  %7671 = vmatprep.subr.mxu0 %v7667
  %7672 = vmatpush1.msra.mxu0 %v7664
  %7673 = vmatprep.subr.mxu0 0.0
  %7674 = vmatpush1.msra.mxu0 0.0
  %7675 = vmatprep.subr.mxu0 0.0
  %7676 = vmatpush1.msra.mxu0 0.0
  %7677 = vmatprep.subr.mxu0 0.0
  %7678 = vmatpush1.msra.mxu0 0.0
  %7679 = vmatprep.subr.mxu0 0.0
  %7680 = vmatpush1.msra.mxu0 0.0
  %7681 = vmatprep.subr.mxu0 0.0
  %7682 = vmatpush1.msra.mxu0 0.0
  %7683 = vmatprep.subr.mxu0 0.0
  %7684 = vmatpush1.msra.mxu0 0.0
  %7685 = vmatprep.subr.mxu0 0.0
  %7686 = vmatpush1.msra.mxu0 0.0
  %7687 = vmatprep.subr.mxu0 0.0
  %7688 = vmatpush1.msra.mxu0 0.0
  %7689 = vmatprep.subr.mxu0 0.0
  %7690 = vmatpush1.msra.mxu0 0.0
  %7691 = vmatprep.subr.mxu0 0.0
  %7692 = vmatpush1.msra.mxu0 0.0
  %7693 = vmatprep.subr.mxu0 0.0
  %7694 = vmatpush1.msra.mxu0 0.0
  %7695 = vmatprep.subr.mxu0 0.0
  %7696 = vmatpush1.msra.mxu0 0.0
  %7697 = vmatprep.subr.mxu0 0.0
  %7698 = vmatpush1.msra.mxu0 0.0
  %7699 = vmatprep.subr.mxu0 0.0
  %7700 = vmatpush1.msra.mxu0 0.0
  %7701 = vmatprep.subr.mxu0 0.0
  %7702 = vmatpush1.msra.mxu0 0.0
  %7703 = vmatprep.subr.mxu0 0.0
  %7704 = vmatpush1.msra.mxu0 0.0
  %7705 = vmatprep.subr.mxu0 0.0
  %7706 = vmatpush1.msra.mxu0 0.0
  %7707 = vmatprep.subr.mxu0 0.0
  %7708 = vmatpush1.msra.mxu0 0.0
  %7709 = vmatprep.subr.mxu0 0.0
  %7710 = vmatpush1.msra.mxu0 0.0
  %7711 = vmatprep.subr.mxu0 0.0
  %7712 = vmatpush1.msra.mxu0 0.0
  %7713 = vmatprep.subr.mxu0 0.0
  %7714 = vmatpush1.msra.mxu0 0.0
  %7715 = vmatprep.subr.mxu0 0.0
  %7716 = vmatpush1.msra.mxu0 0.0
  %7717 = vmatprep.subr.mxu0 0.0
  %7718 = vmatpush1.msra.mxu0 0.0
  %7719 = vmatprep.subr.mxu0 0.0
  %7720 = vmatpush1.msra.mxu0 0.0
  %7721 = vmatprep.subr.mxu0 0.0
  %7722 = vmatpush1.msra.mxu0 0.0
  %7723 = vmatprep.subr.mxu0 0.0
  %7724 = vmatpush1.msra.mxu0 0.0
  %7725 = vmatprep.subr.mxu0 0.0
  %7726 = vmatpush1.msra.mxu0 0.0
  %7727 = vmatprep.subr.mxu0 0.0
  %7728 = vmatpush1.msra.mxu0 0.0
  %7729 = vmatprep.subr.mxu0 0.0
  %7730 = vmatpush1.msra.mxu0 0.0
  %7731 = vmatprep.subr.mxu0 0.0
  %7732 = vmatpush1.msra.mxu0 0.0
  %7733 = vmatprep.mubr.f32.mxu0 0.0
  %7734 = vmatmul.mubr.f32.gmra.mrb[0].mxu0 %v7661
  %v7735 = vpop.f32.mrb[0].mxu0
  %v7736 = vadd.f32 0.0, %v7735
  %v7737 = vpop.f32.mrb[0].mxu0
  %v7738 = vadd.f32 0.0, %v7737
  %7739 = vdwg.mxu0
  %v7740 = vadd.f32 %v7476, %v7736
  %v7741 = vadd.f32 %v7477, %v7738
  %v7742 = vld [vmem:[#allocation4 + $0x68] sm:$0xff]
  %s7743 = scalar_lea.vmem %s9, 416
  %v7744 = vld [vmem:[%s7743] sm:$0xff]
  %v7745 = vld [vmem:[%s7743 + $0x8] sm:$0xff]
  %v7746 = vld [vmem:[%s7743 + $0x10] sm:$0x3f]
  %v7747 = vld [vmem:[%s7743 + $0x18] sm:$0x3f]
  %v7749 = vsel %vm104, %v7742, 0
  %v7752 = vsel %vm195, %v7746, 0
  %v7755 = vsel %vm195, %v7747, 0
  %7757 = vmatprep.subr.mxu0 %v7745
  %7758 = vmatpush1.msra.mxu0 %v7744
  %7759 = vmatprep.subr.mxu0 %v7755
  %7760 = vmatpush1.msra.mxu0 %v7752
  %7761 = vmatprep.subr.mxu0 0.0
  %7762 = vmatpush1.msra.mxu0 0.0
  %7763 = vmatprep.subr.mxu0 0.0
  %7764 = vmatpush1.msra.mxu0 0.0
  %7765 = vmatprep.subr.mxu0 0.0
  %7766 = vmatpush1.msra.mxu0 0.0
  %7767 = vmatprep.subr.mxu0 0.0
  %7768 = vmatpush1.msra.mxu0 0.0
  %7769 = vmatprep.subr.mxu0 0.0
  %7770 = vmatpush1.msra.mxu0 0.0
  %7771 = vmatprep.subr.mxu0 0.0
  %7772 = vmatpush1.msra.mxu0 0.0
  %7773 = vmatprep.subr.mxu0 0.0
  %7774 = vmatpush1.msra.mxu0 0.0
  %7775 = vmatprep.subr.mxu0 0.0
  %7776 = vmatpush1.msra.mxu0 0.0
  %7777 = vmatprep.subr.mxu0 0.0
  %7778 = vmatpush1.msra.mxu0 0.0
  %7779 = vmatprep.subr.mxu0 0.0
  %7780 = vmatpush1.msra.mxu0 0.0
  %7781 = vmatprep.subr.mxu0 0.0
  %7782 = vmatpush1.msra.mxu0 0.0
  %7783 = vmatprep.subr.mxu0 0.0
  %7784 = vmatpush1.msra.mxu0 0.0
  %7785 = vmatprep.subr.mxu0 0.0
  %7786 = vmatpush1.msra.mxu0 0.0
  %7787 = vmatprep.subr.mxu0 0.0
  %7788 = vmatpush1.msra.mxu0 0.0
  %7789 = vmatprep.subr.mxu0 0.0
  %7790 = vmatpush1.msra.mxu0 0.0
  %7791 = vmatprep.subr.mxu0 0.0
  %7792 = vmatpush1.msra.mxu0 0.0
  %7793 = vmatprep.subr.mxu0 0.0
  %7794 = vmatpush1.msra.mxu0 0.0
  %7795 = vmatprep.subr.mxu0 0.0
  %7796 = vmatpush1.msra.mxu0 0.0
  %7797 = vmatprep.subr.mxu0 0.0
  %7798 = vmatpush1.msra.mxu0 0.0
  %7799 = vmatprep.subr.mxu0 0.0
  %7800 = vmatpush1.msra.mxu0 0.0
  %7801 = vmatprep.subr.mxu0 0.0
  %7802 = vmatpush1.msra.mxu0 0.0
  %7803 = vmatprep.subr.mxu0 0.0
  %7804 = vmatpush1.msra.mxu0 0.0
  %7805 = vmatprep.subr.mxu0 0.0
  %7806 = vmatpush1.msra.mxu0 0.0
  %7807 = vmatprep.subr.mxu0 0.0
  %7808 = vmatpush1.msra.mxu0 0.0
  %7809 = vmatprep.subr.mxu0 0.0
  %7810 = vmatpush1.msra.mxu0 0.0
  %7811 = vmatprep.subr.mxu0 0.0
  %7812 = vmatpush1.msra.mxu0 0.0
  %7813 = vmatprep.subr.mxu0 0.0
  %7814 = vmatpush1.msra.mxu0 0.0
  %7815 = vmatprep.subr.mxu0 0.0
  %7816 = vmatpush1.msra.mxu0 0.0
  %7817 = vmatprep.subr.mxu0 0.0
  %7818 = vmatpush1.msra.mxu0 0.0
  %7819 = vmatprep.subr.mxu0 0.0
  %7820 = vmatpush1.msra.mxu0 0.0
  %7821 = vmatprep.mubr.f32.mxu0 0.0
  %7822 = vmatmul.mubr.f32.gmra.mrb[0].mxu0 %v7749
  %v7823 = vpop.f32.mrb[0].mxu0
  %v7824 = vadd.f32 0.0, %v7823
  %v7825 = vpop.f32.mrb[0].mxu0
  %v7826 = vadd.f32 0.0, %v7825
  %7827 = vdwg.mxu0
  %v7828 = vadd.f32 %v7564, %v7824
  %v7829 = vadd.f32 %v7565, %v7826
  %v7830 = vld [vmem:[#allocation4 + $0x70] sm:$0xff]
  %s7831 = scalar_lea.vmem %s9, 448
  %v7832 = vld [vmem:[%s7831] sm:$0xff]
  %v7833 = vld [vmem:[%s7831 + $0x8] sm:$0xff]
  %v7834 = vld [vmem:[%s7831 + $0x10] sm:$0x3f]
  %v7835 = vld [vmem:[%s7831 + $0x18] sm:$0x3f]
  %v7837 = vsel %vm104, %v7830, 0
  %v7840 = vsel %vm195, %v7834, 0
  %v7843 = vsel %vm195, %v7835, 0
  %7845 = vmatprep.subr.mxu0 %v7833
  %7846 = vmatpush1.msra.mxu0 %v7832
  %7847 = vmatprep.subr.mxu0 %v7843
  %7848 = vmatpush1.msra.mxu0 %v7840
  %7849 = vmatprep.subr.mxu0 0.0
  %7850 = vmatpush1.msra.mxu0 0.0
  %7851 = vmatprep.subr.mxu0 0.0
  %7852 = vmatpush1.msra.mxu0 0.0
  %7853 = vmatprep.subr.mxu0 0.0
  %7854 = vmatpush1.msra.mxu0 0.0
  %7855 = vmatprep.subr.mxu0 0.0
  %7856 = vmatpush1.msra.mxu0 0.0
  %7857 = vmatprep.subr.mxu0 0.0
  %7858 = vmatpush1.msra.mxu0 0.0
  %7859 = vmatprep.subr.mxu0 0.0
  %7860 = vmatpush1.msra.mxu0 0.0
  %7861 = vmatprep.subr.mxu0 0.0
  %7862 = vmatpush1.msra.mxu0 0.0
  %7863 = vmatprep.subr.mxu0 0.0
  %7864 = vmatpush1.msra.mxu0 0.0
  %7865 = vmatprep.subr.mxu0 0.0
  %7866 = vmatpush1.msra.mxu0 0.0
  %7867 = vmatprep.subr.mxu0 0.0
  %7868 = vmatpush1.msra.mxu0 0.0
  %7869 = vmatprep.subr.mxu0 0.0
  %7870 = vmatpush1.msra.mxu0 0.0
  %7871 = vmatprep.subr.mxu0 0.0
  %7872 = vmatpush1.msra.mxu0 0.0
  %7873 = vmatprep.subr.mxu0 0.0
  %7874 = vmatpush1.msra.mxu0 0.0
  %7875 = vmatprep.subr.mxu0 0.0
  %7876 = vmatpush1.msra.mxu0 0.0
  %7877 = vmatprep.subr.mxu0 0.0
  %7878 = vmatpush1.msra.mxu0 0.0
  %7879 = vmatprep.subr.mxu0 0.0
  %7880 = vmatpush1.msra.mxu0 0.0
  %7881 = vmatprep.subr.mxu0 0.0
  %7882 = vmatpush1.msra.mxu0 0.0
  %7883 = vmatprep.subr.mxu0 0.0
  %7884 = vmatpush1.msra.mxu0 0.0
  %7885 = vmatprep.subr.mxu0 0.0
  %7886 = vmatpush1.msra.mxu0 0.0
  %7887 = vmatprep.subr.mxu0 0.0
  %7888 = vmatpush1.msra.mxu0 0.0
  %7889 = vmatprep.subr.mxu0 0.0
  %7890 = vmatpush1.msra.mxu0 0.0
  %7891 = vmatprep.subr.mxu0 0.0
  %7892 = vmatpush1.msra.mxu0 0.0
  %7893 = vmatprep.subr.mxu0 0.0
  %7894 = vmatpush1.msra.mxu0 0.0
  %7895 = vmatprep.subr.mxu0 0.0
  %7896 = vmatpush1.msra.mxu0 0.0
  %7897 = vmatprep.subr.mxu0 0.0
  %7898 = vmatpush1.msra.mxu0 0.0
  %7899 = vmatprep.subr.mxu0 0.0
  %7900 = vmatpush1.msra.mxu0 0.0
  %7901 = vmatprep.subr.mxu0 0.0
  %7902 = vmatpush1.msra.mxu0 0.0
  %7903 = vmatprep.subr.mxu0 0.0
  %7904 = vmatpush1.msra.mxu0 0.0
  %7905 = vmatprep.subr.mxu0 0.0
  %7906 = vmatpush1.msra.mxu0 0.0
  %7907 = vmatprep.subr.mxu0 0.0
  %7908 = vmatpush1.msra.mxu0 0.0
  %7909 = vmatprep.mubr.f32.mxu0 0.0
  %7910 = vmatmul.mubr.f32.gmra.mrb[0].mxu0 %v7837
  %v7911 = vpop.f32.mrb[0].mxu0
  %v7912 = vadd.f32 0.0, %v7911
  %v7913 = vpop.f32.mrb[0].mxu0
  %v7914 = vadd.f32 0.0, %v7913
  %7915 = vdwg.mxu0
  %v7916 = vadd.f32 %v7652, %v7912
  %v7917 = vadd.f32 %v7653, %v7914
  %v7918 = vld [vmem:[#allocation4 + $0x78] sm:$0xff]
  %s7919 = scalar_lea.vmem %s9, 480
  %v7920 = vld [vmem:[%s7919] sm:$0xff]
  %v7921 = vld [vmem:[%s7919 + $0x8] sm:$0xff]
  %v7922 = vld [vmem:[%s7919 + $0x10] sm:$0x3f]
  %v7923 = vld [vmem:[%s7919 + $0x18] sm:$0x3f]
  %v7925 = vsel %vm104, %v7918, 0
  %v7928 = vsel %vm195, %v7922, 0
  %v7931 = vsel %vm195, %v7923, 0
  %7933 = vmatprep.subr.mxu0 %v7921
  %7934 = vmatpush1.msra.mxu0 %v7920
  %7935 = vmatprep.subr.mxu0 %v7931
  %7936 = vmatpush1.msra.mxu0 %v7928
  %7937 = vmatprep.subr.mxu0 0.0
  %7938 = vmatpush1.msra.mxu0 0.0
  %7939 = vmatprep.subr.mxu0 0.0
  %7940 = vmatpush1.msra.mxu0 0.0
  %7941 = vmatprep.subr.mxu0 0.0
  %7942 = vmatpush1.msra.mxu0 0.0
  %7943 = vmatprep.subr.mxu0 0.0
  %7944 = vmatpush1.msra.mxu0 0.0
  %7945 = vmatprep.subr.mxu0 0.0
  %7946 = vmatpush1.msra.mxu0 0.0
  %7947 = vmatprep.subr.mxu0 0.0
  %7948 = vmatpush1.msra.mxu0 0.0
  %7949 = vmatprep.subr.mxu0 0.0
  %7950 = vmatpush1.msra.mxu0 0.0
  %7951 = vmatprep.subr.mxu0 0.0
  %7952 = vmatpush1.msra.mxu0 0.0
  %7953 = vmatprep.subr.mxu0 0.0
  %7954 = vmatpush1.msra.mxu0 0.0
  %7955 = vmatprep.subr.mxu0 0.0
  %7956 = vmatpush1.msra.mxu0 0.0
  %7957 = vmatprep.subr.mxu0 0.0
  %7958 = vmatpush1.msra.mxu0 0.0
  %7959 = vmatprep.subr.mxu0 0.0
  %7960 = vmatpush1.msra.mxu0 0.0
  %7961 = vmatprep.subr.mxu0 0.0
  %7962 = vmatpush1.msra.mxu0 0.0
  %7963 = vmatprep.subr.mxu0 0.0
  %7964 = vmatpush1.msra.mxu0 0.0
  %7965 = vmatprep.subr.mxu0 0.0
  %7966 = vmatpush1.msra.mxu0 0.0
  %7967 = vmatprep.subr.mxu0 0.0
  %7968 = vmatpush1.msra.mxu0 0.0
  %7969 = vmatprep.subr.mxu0 0.0
  %7970 = vmatpush1.msra.mxu0 0.0
  %7971 = vmatprep.subr.mxu0 0.0
  %7972 = vmatpush1.msra.mxu0 0.0
  %7973 = vmatprep.subr.mxu0 0.0
  %7974 = vmatpush1.msra.mxu0 0.0
  %7975 = vmatprep.subr.mxu0 0.0
  %7976 = vmatpush1.msra.mxu0 0.0
  %7977 = vmatprep.subr.mxu0 0.0
  %7978 = vmatpush1.msra.mxu0 0.0
  %7979 = vmatprep.subr.mxu0 0.0
  %7980 = vmatpush1.msra.mxu0 0.0
  %7981 = vmatprep.subr.mxu0 0.0
  %7982 = vmatpush1.msra.mxu0 0.0
  %7983 = vmatprep.subr.mxu0 0.0
  %7984 = vmatpush1.msra.mxu0 0.0
  %7985 = vmatprep.subr.mxu0 0.0
  %7986 = vmatpush1.msra.mxu0 0.0
  %7987 = vmatprep.subr.mxu0 0.0
  %7988 = vmatpush1.msra.mxu0 0.0
  %7989 = vmatprep.subr.mxu0 0.0
  %7990 = vmatpush1.msra.mxu0 0.0
  %7991 = vmatprep.subr.mxu0 0.0
  %7992 = vmatpush1.msra.mxu0 0.0
  %7993 = vmatprep.subr.mxu0 0.0
  %7994 = vmatpush1.msra.mxu0 0.0
  %7995 = vmatprep.subr.mxu0 0.0
  %7996 = vmatpush1.msra.mxu0 0.0
  %7997 = vmatprep.mubr.f32.mxu0 0.0
  %7998 = vmatmul.mubr.f32.gmra.mrb[0].mxu0 %v7925
  %v7999 = vpop.f32.mrb[0].mxu0
  %v8000 = vadd.f32 0.0, %v7999
  %v8001 = vpop.f32.mrb[0].mxu0
  %v8002 = vadd.f32 0.0, %v8001
  %8003 = vdwg.mxu0
  %v8004 = vadd.f32 %v7740, %v8000
  %v8005 = vadd.f32 %v7741, %v8002
  %v8006 = vld [vmem:[#allocation4 + $0x80] sm:$0xff]
  %s8007 = scalar_lea.vmem %s9, 512
  %v8008 = vld [vmem:[%s8007] sm:$0xff]
  %v8009 = vld [vmem:[%s8007 + $0x8] sm:$0xff]
  %v8010 = vld [vmem:[%s8007 + $0x10] sm:$0x3f]
  %v8011 = vld [vmem:[%s8007 + $0x18] sm:$0x3f]
  %v8013 = vsel %vm104, %v8006, 0
  %v8016 = vsel %vm195, %v8010, 0
  %v8019 = vsel %vm195, %v8011, 0
  %8021 = vmatprep.subr.mxu0 %v8009
  %8022 = vmatpush1.msra.mxu0 %v8008
  %8023 = vmatprep.subr.mxu0 %v8019
  %8024 = vmatpush1.msra.mxu0 %v8016
  %8025 = vmatprep.subr.mxu0 0.0
  %8026 = vmatpush1.msra.mxu0 0.0
  %8027 = vmatprep.subr.mxu0 0.0
  %8028 = vmatpush1.msra.mxu0 0.0
  %8029 = vmatprep.subr.mxu0 0.0
  %8030 = vmatpush1.msra.mxu0 0.0
  %8031 = vmatprep.subr.mxu0 0.0
  %8032 = vmatpush1.msra.mxu0 0.0
  %8033 = vmatprep.subr.mxu0 0.0
  %8034 = vmatpush1.msra.mxu0 0.0
  %8035 = vmatprep.subr.mxu0 0.0
  %8036 = vmatpush1.msra.mxu0 0.0
  %8037 = vmatprep.subr.mxu0 0.0
  %8038 = vmatpush1.msra.mxu0 0.0
  %8039 = vmatprep.subr.mxu0 0.0
  %8040 = vmatpush1.msra.mxu0 0.0
  %8041 = vmatprep.subr.mxu0 0.0
  %8042 = vmatpush1.msra.mxu0 0.0
  %8043 = vmatprep.subr.mxu0 0.0
  %8044 = vmatpush1.msra.mxu0 0.0
  %8045 = vmatprep.subr.mxu0 0.0
  %8046 = vmatpush1.msra.mxu0 0.0
  %8047 = vmatprep.subr.mxu0 0.0
  %8048 = vmatpush1.msra.mxu0 0.0
  %8049 = vmatprep.subr.mxu0 0.0
  %8050 = vmatpush1.msra.mxu0 0.0
  %8051 = vmatprep.subr.mxu0 0.0
  %8052 = vmatpush1.msra.mxu0 0.0
  %8053 = vmatprep.subr.mxu0 0.0
  %8054 = vmatpush1.msra.mxu0 0.0
  %8055 = vmatprep.subr.mxu0 0.0
  %8056 = vmatpush1.msra.mxu0 0.0
  %8057 = vmatprep.subr.mxu0 0.0
  %8058 = vmatpush1.msra.mxu0 0.0
  %8059 = vmatprep.subr.mxu0 0.0
  %8060 = vmatpush1.msra.mxu0 0.0
  %8061 = vmatprep.subr.mxu0 0.0
  %8062 = vmatpush1.msra.mxu0 0.0
  %8063 = vmatprep.subr.mxu0 0.0
  %8064 = vmatpush1.msra.mxu0 0.0
  %8065 = vmatprep.subr.mxu0 0.0
  %8066 = vmatpush1.msra.mxu0 0.0
  %8067 = vmatprep.subr.mxu0 0.0
  %8068 = vmatpush1.msra.mxu0 0.0
  %8069 = vmatprep.subr.mxu0 0.0
  %8070 = vmatpush1.msra.mxu0 0.0
  %8071 = vmatprep.subr.mxu0 0.0
  %8072 = vmatpush1.msra.mxu0 0.0
  %8073 = vmatprep.subr.mxu0 0.0
  %8074 = vmatpush1.msra.mxu0 0.0
  %8075 = vmatprep.subr.mxu0 0.0
  %8076 = vmatpush1.msra.mxu0 0.0
  %8077 = vmatprep.subr.mxu0 0.0
  %8078 = vmatpush1.msra.mxu0 0.0
  %8079 = vmatprep.subr.mxu0 0.0
  %8080 = vmatpush1.msra.mxu0 0.0
  %8081 = vmatprep.subr.mxu0 0.0
  %8082 = vmatpush1.msra.mxu0 0.0
  %8083 = vmatprep.subr.mxu0 0.0
  %8084 = vmatpush1.msra.mxu0 0.0
  %8085 = vmatprep.mubr.f32.mxu0 0.0
  %8086 = vmatmul.mubr.f32.gmra.mrb[0].mxu0 %v8013
  %v8087 = vpop.f32.mrb[0].mxu0
  %v8088 = vadd.f32 0.0, %v8087
  %v8089 = vpop.f32.mrb[0].mxu0
  %v8090 = vadd.f32 0.0, %v8089
  %8091 = vdwg.mxu0
  %v8092 = vadd.f32 %v7828, %v8088
  %v8093 = vadd.f32 %v7829, %v8090
  %v8094 = vld [vmem:[#allocation4 + $0x88] sm:$0xff]
  %s8095 = scalar_lea.vmem %s9, 544
  %v8096 = vld [vmem:[%s8095] sm:$0xff]
  %v8097 = vld [vmem:[%s8095 + $0x8] sm:$0xff]
  %v8098 = vld [vmem:[%s8095 + $0x10] sm:$0x3f]
  %v8099 = vld [vmem:[%s8095 + $0x18] sm:$0x3f]
  %v8101 = vsel %vm104, %v8094, 0
  %v8104 = vsel %vm195, %v8098, 0
  %v8107 = vsel %vm195, %v8099, 0
  %8109 = vmatprep.subr.mxu0 %v8097
  %8110 = vmatpush1.msra.mxu0 %v8096
  %8111 = vmatprep.subr.mxu0 %v8107
  %8112 = vmatpush1.msra.mxu0 %v8104
  %8113 = vmatprep.subr.mxu0 0.0
  %8114 = vmatpush1.msra.mxu0 0.0
  %8115 = vmatprep.subr.mxu0 0.0
  %8116 = vmatpush1.msra.mxu0 0.0
  %8117 = vmatprep.subr.mxu0 0.0
  %8118 = vmatpush1.msra.mxu0 0.0
  %8119 = vmatprep.subr.mxu0 0.0
  %8120 = vmatpush1.msra.mxu0 0.0
  %8121 = vmatprep.subr.mxu0 0.0
  %8122 = vmatpush1.msra.mxu0 0.0
  %8123 = vmatprep.subr.mxu0 0.0
  %8124 = vmatpush1.msra.mxu0 0.0
  %8125 = vmatprep.subr.mxu0 0.0
  %8126 = vmatpush1.msra.mxu0 0.0
  %8127 = vmatprep.subr.mxu0 0.0
  %8128 = vmatpush1.msra.mxu0 0.0
  %8129 = vmatprep.subr.mxu0 0.0
  %8130 = vmatpush1.msra.mxu0 0.0
  %8131 = vmatprep.subr.mxu0 0.0
  %8132 = vmatpush1.msra.mxu0 0.0
  %8133 = vmatprep.subr.mxu0 0.0
  %8134 = vmatpush1.msra.mxu0 0.0
  %8135 = vmatprep.subr.mxu0 0.0
  %8136 = vmatpush1.msra.mxu0 0.0
  %8137 = vmatprep.subr.mxu0 0.0
  %8138 = vmatpush1.msra.mxu0 0.0
  %8139 = vmatprep.subr.mxu0 0.0
  %8140 = vmatpush1.msra.mxu0 0.0
  %8141 = vmatprep.subr.mxu0 0.0
  %8142 = vmatpush1.msra.mxu0 0.0
  %8143 = vmatprep.subr.mxu0 0.0
  %8144 = vmatpush1.msra.mxu0 0.0
  %8145 = vmatprep.subr.mxu0 0.0
  %8146 = vmatpush1.msra.mxu0 0.0
  %8147 = vmatprep.subr.mxu0 0.0
  %8148 = vmatpush1.msra.mxu0 0.0
  %8149 = vmatprep.subr.mxu0 0.0
  %8150 = vmatpush1.msra.mxu0 0.0
  %8151 = vmatprep.subr.mxu0 0.0
  %8152 = vmatpush1.msra.mxu0 0.0
  %8153 = vmatprep.subr.mxu0 0.0
  %8154 = vmatpush1.msra.mxu0 0.0
  %8155 = vmatprep.subr.mxu0 0.0
  %8156 = vmatpush1.msra.mxu0 0.0
  %8157 = vmatprep.subr.mxu0 0.0
  %8158 = vmatpush1.msra.mxu0 0.0
  %8159 = vmatprep.subr.mxu0 0.0
  %8160 = vmatpush1.msra.mxu0 0.0
  %8161 = vmatprep.subr.mxu0 0.0
  %8162 = vmatpush1.msra.mxu0 0.0
  %8163 = vmatprep.subr.mxu0 0.0
  %8164 = vmatpush1.msra.mxu0 0.0
  %8165 = vmatprep.subr.mxu0 0.0
  %8166 = vmatpush1.msra.mxu0 0.0
  %8167 = vmatprep.subr.mxu0 0.0
  %8168 = vmatpush1.msra.mxu0 0.0
  %8169 = vmatprep.subr.mxu0 0.0
  %8170 = vmatpush1.msra.mxu0 0.0
  %8171 = vmatprep.subr.mxu0 0.0
  %8172 = vmatpush1.msra.mxu0 0.0
  %8173 = vmatprep.mubr.f32.mxu0 0.0
  %8174 = vmatmul.mubr.f32.gmra.mrb[0].mxu0 %v8101
  %v8175 = vpop.f32.mrb[0].mxu0
  %v8176 = vadd.f32 0.0, %v8175
  %v8177 = vpop.f32.mrb[0].mxu0
  %v8178 = vadd.f32 0.0, %v8177
  %8179 = vdwg.mxu0
  %v8180 = vadd.f32 %v7916, %v8176
  %v8181 = vadd.f32 %v7917, %v8178
  %v8182 = vld [vmem:[#allocation4 + $0x90] sm:$0xff]
  %s8183 = scalar_lea.vmem %s9, 576
  %v8184 = vld [vmem:[%s8183] sm:$0xff]
  %v8185 = vld [vmem:[%s8183 + $0x8] sm:$0xff]
  %v8186 = vld [vmem:[%s8183 + $0x10] sm:$0x3f]
  %v8187 = vld [vmem:[%s8183 + $0x18] sm:$0x3f]
  %v8189 = vsel %vm104, %v8182, 0
  %v8192 = vsel %vm195, %v8186, 0
  %v8195 = vsel %vm195, %v8187, 0
  %8197 = vmatprep.subr.mxu0 %v8185
  %8198 = vmatpush1.msra.mxu0 %v8184
  %8199 = vmatprep.subr.mxu0 %v8195
  %8200 = vmatpush1.msra.mxu0 %v8192
  %8201 = vmatprep.subr.mxu0 0.0
  %8202 = vmatpush1.msra.mxu0 0.0
  %8203 = vmatprep.subr.mxu0 0.0
  %8204 = vmatpush1.msra.mxu0 0.0
  %8205 = vmatprep.subr.mxu0 0.0
  %8206 = vmatpush1.msra.mxu0 0.0
  %8207 = vmatprep.subr.mxu0 0.0
  %8208 = vmatpush1.msra.mxu0 0.0
  %8209 = vmatprep.subr.mxu0 0.0
  %8210 = vmatpush1.msra.mxu0 0.0
  %8211 = vmatprep.subr.mxu0 0.0
  %8212 = vmatpush1.msra.mxu0 0.0
  %8213 = vmatprep.subr.mxu0 0.0
  %8214 = vmatpush1.msra.mxu0 0.0
  %8215 = vmatprep.subr.mxu0 0.0
  %8216 = vmatpush1.msra.mxu0 0.0
  %8217 = vmatprep.subr.mxu0 0.0
  %8218 = vmatpush1.msra.mxu0 0.0
  %8219 = vmatprep.subr.mxu0 0.0
  %8220 = vmatpush1.msra.mxu0 0.0
  %8221 = vmatprep.subr.mxu0 0.0
  %8222 = vmatpush1.msra.mxu0 0.0
  %8223 = vmatprep.subr.mxu0 0.0
  %8224 = vmatpush1.msra.mxu0 0.0
  %8225 = vmatprep.subr.mxu0 0.0
  %8226 = vmatpush1.msra.mxu0 0.0
  %8227 = vmatprep.subr.mxu0 0.0
  %8228 = vmatpush1.msra.mxu0 0.0
  %8229 = vmatprep.subr.mxu0 0.0
  %8230 = vmatpush1.msra.mxu0 0.0
  %8231 = vmatprep.subr.mxu0 0.0
  %8232 = vmatpush1.msra.mxu0 0.0
  %8233 = vmatprep.subr.mxu0 0.0
  %8234 = vmatpush1.msra.mxu0 0.0
  %8235 = vmatprep.subr.mxu0 0.0
  %8236 = vmatpush1.msra.mxu0 0.0
  %8237 = vmatprep.subr.mxu0 0.0
  %8238 = vmatpush1.msra.mxu0 0.0
  %8239 = vmatprep.subr.mxu0 0.0
  %8240 = vmatpush1.msra.mxu0 0.0
  %8241 = vmatprep.subr.mxu0 0.0
  %8242 = vmatpush1.msra.mxu0 0.0
  %8243 = vmatprep.subr.mxu0 0.0
  %8244 = vmatpush1.msra.mxu0 0.0
  %8245 = vmatprep.subr.mxu0 0.0
  %8246 = vmatpush1.msra.mxu0 0.0
  %8247 = vmatprep.subr.mxu0 0.0
  %8248 = vmatpush1.msra.mxu0 0.0
  %8249 = vmatprep.subr.mxu0 0.0
  %8250 = vmatpush1.msra.mxu0 0.0
  %8251 = vmatprep.subr.mxu0 0.0
  %8252 = vmatpush1.msra.mxu0 0.0
  %8253 = vmatprep.subr.mxu0 0.0
  %8254 = vmatpush1.msra.mxu0 0.0
  %8255 = vmatprep.subr.mxu0 0.0
  %8256 = vmatpush1.msra.mxu0 0.0
  %8257 = vmatprep.subr.mxu0 0.0
  %8258 = vmatpush1.msra.mxu0 0.0
  %8259 = vmatprep.subr.mxu0 0.0
  %8260 = vmatpush1.msra.mxu0 0.0
  %8261 = vmatprep.mubr.f32.mxu0 0.0
  %8262 = vmatmul.mubr.f32.gmra.mrb[0].mxu0 %v8189
  %v8263 = vpop.f32.mrb[0].mxu0
  %v8264 = vadd.f32 0.0, %v8263
  %v8265 = vpop.f32.mrb[0].mxu0
  %v8266 = vadd.f32 0.0, %v8265
  %8267 = vdwg.mxu0
  %v8268 = vadd.f32 %v8004, %v8264
  %v8269 = vadd.f32 %v8005, %v8266
  %v8270 = vld [vmem:[#allocation4 + $0x98] sm:$0xff]
  %s8271 = scalar_lea.vmem %s9, 608
  %v8272 = vld [vmem:[%s8271] sm:$0xff]
  %v8273 = vld [vmem:[%s8271 + $0x8] sm:$0xff]
  %v8274 = vld [vmem:[%s8271 + $0x10] sm:$0x3f]
  %v8275 = vld [vmem:[%s8271 + $0x18] sm:$0x3f]
  %v8277 = vsel %vm104, %v8270, 0
  %v8280 = vsel %vm195, %v8274, 0
  %v8283 = vsel %vm195, %v8275, 0
  %8285 = vmatprep.subr.mxu0 %v8273
  %8286 = vmatpush1.msra.mxu0 %v8272
  %8287 = vmatprep.subr.mxu0 %v8283
  %8288 = vmatpush1.msra.mxu0 %v8280
  %8289 = vmatprep.subr.mxu0 0.0
  %8290 = vmatpush1.msra.mxu0 0.0
  %8291 = vmatprep.subr.mxu0 0.0
  %8292 = vmatpush1.msra.mxu0 0.0
  %8293 = vmatprep.subr.mxu0 0.0
  %8294 = vmatpush1.msra.mxu0 0.0
  %8295 = vmatprep.subr.mxu0 0.0
  %8296 = vmatpush1.msra.mxu0 0.0
  %8297 = vmatprep.subr.mxu0 0.0
  %8298 = vmatpush1.msra.mxu0 0.0
  %8299 = vmatprep.subr.mxu0 0.0
  %8300 = vmatpush1.msra.mxu0 0.0
  %8301 = vmatprep.subr.mxu0 0.0
  %8302 = vmatpush1.msra.mxu0 0.0
  %8303 = vmatprep.subr.mxu0 0.0
  %8304 = vmatpush1.msra.mxu0 0.0
  %8305 = vmatprep.subr.mxu0 0.0
  %8306 = vmatpush1.msra.mxu0 0.0
  %8307 = vmatprep.subr.mxu0 0.0
  %8308 = vmatpush1.msra.mxu0 0.0
  %8309 = vmatprep.subr.mxu0 0.0
  %8310 = vmatpush1.msra.mxu0 0.0
  %8311 = vmatprep.subr.mxu0 0.0
  %8312 = vmatpush1.msra.mxu0 0.0
  %8313 = vmatprep.subr.mxu0 0.0
  %8314 = vmatpush1.msra.mxu0 0.0
  %8315 = vmatprep.subr.mxu0 0.0
  %8316 = vmatpush1.msra.mxu0 0.0
  %8317 = vmatprep.subr.mxu0 0.0
  %8318 = vmatpush1.msra.mxu0 0.0
  %8319 = vmatprep.subr.mxu0 0.0
  %8320 = vmatpush1.msra.mxu0 0.0
  %8321 = vmatprep.subr.mxu0 0.0
  %8322 = vmatpush1.msra.mxu0 0.0
  %8323 = vmatprep.subr.mxu0 0.0
  %8324 = vmatpush1.msra.mxu0 0.0
  %8325 = vmatprep.subr.mxu0 0.0
  %8326 = vmatpush1.msra.mxu0 0.0
  %8327 = vmatprep.subr.mxu0 0.0
  %8328 = vmatpush1.msra.mxu0 0.0
  %8329 = vmatprep.subr.mxu0 0.0
  %8330 = vmatpush1.msra.mxu0 0.0
  %8331 = vmatprep.subr.mxu0 0.0
  %8332 = vmatpush1.msra.mxu0 0.0
  %8333 = vmatprep.subr.mxu0 0.0
  %8334 = vmatpush1.msra.mxu0 0.0
  %8335 = vmatprep.subr.mxu0 0.0
  %8336 = vmatpush1.msra.mxu0 0.0
  %8337 = vmatprep.subr.mxu0 0.0
  %8338 = vmatpush1.msra.mxu0 0.0
  %8339 = vmatprep.subr.mxu0 0.0
  %8340 = vmatpush1.msra.mxu0 0.0
  %8341 = vmatprep.subr.mxu0 0.0
  %8342 = vmatpush1.msra.mxu0 0.0
  %8343 = vmatprep.subr.mxu0 0.0
  %8344 = vmatpush1.msra.mxu0 0.0
  %8345 = vmatprep.subr.mxu0 0.0
  %8346 = vmatpush1.msra.mxu0 0.0
  %8347 = vmatprep.subr.mxu0 0.0
  %8348 = vmatpush1.msra.mxu0 0.0
  %8349 = vmatprep.mubr.f32.mxu0 0.0
  %8350 = vmatmul.mubr.f32.gmra.mrb[0].mxu0 %v8277
  %v8351 = vpop.f32.mrb[0].mxu0
  %v8352 = vadd.f32 0.0, %v8351
  %v8353 = vpop.f32.mrb[0].mxu0
  %v8354 = vadd.f32 0.0, %v8353
  %8355 = vdwg.mxu0
  %v8356 = vadd.f32 %v8092, %v8352
  %v8357 = vadd.f32 %v8093, %v8354
  %v8358 = vld [vmem:[#allocation4 + $0xa0] sm:$0xff]
  %s8359 = scalar_lea.vmem %s9, 640
  %v8360 = vld [vmem:[%s8359] sm:$0xff]
  %v8361 = vld [vmem:[%s8359 + $0x8] sm:$0xff]
  %v8362 = vld [vmem:[%s8359 + $0x10] sm:$0x3f]
  %v8363 = vld [vmem:[%s8359 + $0x18] sm:$0x3f]
  %v8365 = vsel %vm104, %v8358, 0
  %v8368 = vsel %vm195, %v8362, 0
  %v8371 = vsel %vm195, %v8363, 0
  %8373 = vmatprep.subr.mxu0 %v8361
  %8374 = vmatpush1.msra.mxu0 %v8360
  %8375 = vmatprep.subr.mxu0 %v8371
  %8376 = vmatpush1.msra.mxu0 %v8368
  %8377 = vmatprep.subr.mxu0 0.0
  %8378 = vmatpush1.msra.mxu0 0.0
  %8379 = vmatprep.subr.mxu0 0.0
  %8380 = vmatpush1.msra.mxu0 0.0
  %8381 = vmatprep.subr.mxu0 0.0
  %8382 = vmatpush1.msra.mxu0 0.0
  %8383 = vmatprep.subr.mxu0 0.0
  %8384 = vmatpush1.msra.mxu0 0.0
  %8385 = vmatprep.subr.mxu0 0.0
  %8386 = vmatpush1.msra.mxu0 0.0
  %8387 = vmatprep.subr.mxu0 0.0
  %8388 = vmatpush1.msra.mxu0 0.0
  %8389 = vmatprep.subr.mxu0 0.0
  %8390 = vmatpush1.msra.mxu0 0.0
  %8391 = vmatprep.subr.mxu0 0.0
  %8392 = vmatpush1.msra.mxu0 0.0
  %8393 = vmatprep.subr.mxu0 0.0
  %8394 = vmatpush1.msra.mxu0 0.0
  %8395 = vmatprep.subr.mxu0 0.0
  %8396 = vmatpush1.msra.mxu0 0.0
  %8397 = vmatprep.subr.mxu0 0.0
  %8398 = vmatpush1.msra.mxu0 0.0
  %8399 = vmatprep.subr.mxu0 0.0
  %8400 = vmatpush1.msra.mxu0 0.0
  %8401 = vmatprep.subr.mxu0 0.0
  %8402 = vmatpush1.msra.mxu0 0.0
  %8403 = vmatprep.subr.mxu0 0.0
  %8404 = vmatpush1.msra.mxu0 0.0
  %8405 = vmatprep.subr.mxu0 0.0
  %8406 = vmatpush1.msra.mxu0 0.0
  %8407 = vmatprep.subr.mxu0 0.0
  %8408 = vmatpush1.msra.mxu0 0.0
  %8409 = vmatprep.subr.mxu0 0.0
  %8410 = vmatpush1.msra.mxu0 0.0
  %8411 = vmatprep.subr.mxu0 0.0
  %8412 = vmatpush1.msra.mxu0 0.0
  %8413 = vmatprep.subr.mxu0 0.0
  %8414 = vmatpush1.msra.mxu0 0.0
  %8415 = vmatprep.subr.mxu0 0.0
  %8416 = vmatpush1.msra.mxu0 0.0
  %8417 = vmatprep.subr.mxu0 0.0
  %8418 = vmatpush1.msra.mxu0 0.0
  %8419 = vmatprep.subr.mxu0 0.0
  %8420 = vmatpush1.msra.mxu0 0.0
  %8421 = vmatprep.subr.mxu0 0.0
  %8422 = vmatpush1.msra.mxu0 0.0
  %8423 = vmatprep.subr.mxu0 0.0
  %8424 = vmatpush1.msra.mxu0 0.0
  %8425 = vmatprep.subr.mxu0 0.0
  %8426 = vmatpush1.msra.mxu0 0.0
  %8427 = vmatprep.subr.mxu0 0.0
  %8428 = vmatpush1.msra.mxu0 0.0
  %8429 = vmatprep.subr.mxu0 0.0
  %8430 = vmatpush1.msra.mxu0 0.0
  %8431 = vmatprep.subr.mxu0 0.0
  %8432 = vmatpush1.msra.mxu0 0.0
  %8433 = vmatprep.subr.mxu0 0.0
  %8434 = vmatpush1.msra.mxu0 0.0
  %8435 = vmatprep.subr.mxu0 0.0
  %8436 = vmatpush1.msra.mxu0 0.0
  %8437 = vmatprep.mubr.f32.mxu0 0.0
  %8438 = vmatmul.mubr.f32.gmra.mrb[0].mxu0 %v8365
  %v8439 = vpop.f32.mrb[0].mxu0
  %v8440 = vadd.f32 0.0, %v8439
  %v8441 = vpop.f32.mrb[0].mxu0
  %v8442 = vadd.f32 0.0, %v8441
  %8443 = vdwg.mxu0
  %v8444 = vadd.f32 %v8180, %v8440
  %v8445 = vadd.f32 %v8181, %v8442
  %v8446 = vld [vmem:[#allocation4 + $0xa8] sm:$0xff]
  %s8447 = scalar_lea.vmem %s9, 672
  %v8448 = vld [vmem:[%s8447] sm:$0xff]
  %v8449 = vld [vmem:[%s8447 + $0x8] sm:$0xff]
  %v8450 = vld [vmem:[%s8447 + $0x10] sm:$0x3f]
  %v8451 = vld [vmem:[%s8447 + $0x18] sm:$0x3f]
  %v8453 = vsel %vm104, %v8446, 0
  %v8456 = vsel %vm195, %v8450, 0
  %v8459 = vsel %vm195, %v8451, 0
  %8461 = vmatprep.subr.mxu0 %v8449
  %8462 = vmatpush1.msra.mxu0 %v8448
  %8463 = vmatprep.subr.mxu0 %v8459
  %8464 = vmatpush1.msra.mxu0 %v8456
  %8465 = vmatprep.subr.mxu0 0.0
  %8466 = vmatpush1.msra.mxu0 0.0
  %8467 = vmatprep.subr.mxu0 0.0
  %8468 = vmatpush1.msra.mxu0 0.0
  %8469 = vmatprep.subr.mxu0 0.0
  %8470 = vmatpush1.msra.mxu0 0.0
  %8471 = vmatprep.subr.mxu0 0.0
  %8472 = vmatpush1.msra.mxu0 0.0
  %8473 = vmatprep.subr.mxu0 0.0
  %8474 = vmatpush1.msra.mxu0 0.0
  %8475 = vmatprep.subr.mxu0 0.0
  %8476 = vmatpush1.msra.mxu0 0.0
  %8477 = vmatprep.subr.mxu0 0.0
  %8478 = vmatpush1.msra.mxu0 0.0
  %8479 = vmatprep.subr.mxu0 0.0
  %8480 = vmatpush1.msra.mxu0 0.0
  %8481 = vmatprep.subr.mxu0 0.0
  %8482 = vmatpush1.msra.mxu0 0.0
  %8483 = vmatprep.subr.mxu0 0.0
  %8484 = vmatpush1.msra.mxu0 0.0
  %8485 = vmatprep.subr.mxu0 0.0
  %8486 = vmatpush1.msra.mxu0 0.0
  %8487 = vmatprep.subr.mxu0 0.0
  %8488 = vmatpush1.msra.mxu0 0.0
  %8489 = vmatprep.subr.mxu0 0.0
  %8490 = vmatpush1.msra.mxu0 0.0
  %8491 = vmatprep.subr.mxu0 0.0
  %8492 = vmatpush1.msra.mxu0 0.0
  %8493 = vmatprep.subr.mxu0 0.0
  %8494 = vmatpush1.msra.mxu0 0.0
  %8495 = vmatprep.subr.mxu0 0.0
  %8496 = vmatpush1.msra.mxu0 0.0
  %8497 = vmatprep.subr.mxu0 0.0
  %8498 = vmatpush1.msra.mxu0 0.0
  %8499 = vmatprep.subr.mxu0 0.0
  %8500 = vmatpush1.msra.mxu0 0.0
  %8501 = vmatprep.subr.mxu0 0.0
  %8502 = vmatpush1.msra.mxu0 0.0
  %8503 = vmatprep.subr.mxu0 0.0
  %8504 = vmatpush1.msra.mxu0 0.0
  %8505 = vmatprep.subr.mxu0 0.0
  %8506 = vmatpush1.msra.mxu0 0.0
  %8507 = vmatprep.subr.mxu0 0.0
  %8508 = vmatpush1.msra.mxu0 0.0
  %8509 = vmatprep.subr.mxu0 0.0
  %8510 = vmatpush1.msra.mxu0 0.0
  %8511 = vmatprep.subr.mxu0 0.0
  %8512 = vmatpush1.msra.mxu0 0.0
  %8513 = vmatprep.subr.mxu0 0.0
  %8514 = vmatpush1.msra.mxu0 0.0
  %8515 = vmatprep.subr.mxu0 0.0
  %8516 = vmatpush1.msra.mxu0 0.0
  %8517 = vmatprep.subr.mxu0 0.0
  %8518 = vmatpush1.msra.mxu0 0.0
  %8519 = vmatprep.subr.mxu0 0.0
  %8520 = vmatpush1.msra.mxu0 0.0
  %8521 = vmatprep.subr.mxu0 0.0
  %8522 = vmatpush1.msra.mxu0 0.0
  %8523 = vmatprep.subr.mxu0 0.0
  %8524 = vmatpush1.msra.mxu0 0.0
  %8525 = vmatprep.mubr.f32.mxu0 0.0
  %8526 = vmatmul.mubr.f32.gmra.mrb[0].mxu0 %v8453
  %v8527 = vpop.f32.mrb[0].mxu0
  %v8528 = vadd.f32 0.0, %v8527
  %v8529 = vpop.f32.mrb[0].mxu0
  %v8530 = vadd.f32 0.0, %v8529
  %8531 = vdwg.mxu0
  %v8532 = vadd.f32 %v8268, %v8528
  %v8533 = vadd.f32 %v8269, %v8530
  %v8534 = vld [vmem:[#allocation4 + $0xb0] sm:$0xff]
  %s8535 = scalar_lea.vmem %s9, 704
  %v8536 = vld [vmem:[%s8535] sm:$0xff]
  %v8537 = vld [vmem:[%s8535 + $0x8] sm:$0xff]
  %v8538 = vld [vmem:[%s8535 + $0x10] sm:$0x3f]
  %v8539 = vld [vmem:[%s8535 + $0x18] sm:$0x3f]
  %v8541 = vsel %vm104, %v8534, 0
  %v8544 = vsel %vm195, %v8538, 0
  %v8547 = vsel %vm195, %v8539, 0
  %8549 = vmatprep.subr.mxu0 %v8537
  %8550 = vmatpush1.msra.mxu0 %v8536
  %8551 = vmatprep.subr.mxu0 %v8547
  %8552 = vmatpush1.msra.mxu0 %v8544
  %8553 = vmatprep.subr.mxu0 0.0
  %8554 = vmatpush1.msra.mxu0 0.0
  %8555 = vmatprep.subr.mxu0 0.0
  %8556 = vmatpush1.msra.mxu0 0.0
  %8557 = vmatprep.subr.mxu0 0.0
  %8558 = vmatpush1.msra.mxu0 0.0
  %8559 = vmatprep.subr.mxu0 0.0
  %8560 = vmatpush1.msra.mxu0 0.0
  %8561 = vmatprep.subr.mxu0 0.0
  %8562 = vmatpush1.msra.mxu0 0.0
  %8563 = vmatprep.subr.mxu0 0.0
  %8564 = vmatpush1.msra.mxu0 0.0
  %8565 = vmatprep.subr.mxu0 0.0
  %8566 = vmatpush1.msra.mxu0 0.0
  %8567 = vmatprep.subr.mxu0 0.0
  %8568 = vmatpush1.msra.mxu0 0.0
  %8569 = vmatprep.subr.mxu0 0.0
  %8570 = vmatpush1.msra.mxu0 0.0
  %8571 = vmatprep.subr.mxu0 0.0
  %8572 = vmatpush1.msra.mxu0 0.0
  %8573 = vmatprep.subr.mxu0 0.0
  %8574 = vmatpush1.msra.mxu0 0.0
  %8575 = vmatprep.subr.mxu0 0.0
  %8576 = vmatpush1.msra.mxu0 0.0
  %8577 = vmatprep.subr.mxu0 0.0
  %8578 = vmatpush1.msra.mxu0 0.0
  %8579 = vmatprep.subr.mxu0 0.0
  %8580 = vmatpush1.msra.mxu0 0.0
  %8581 = vmatprep.subr.mxu0 0.0
  %8582 = vmatpush1.msra.mxu0 0.0
  %8583 = vmatprep.subr.mxu0 0.0
  %8584 = vmatpush1.msra.mxu0 0.0
  %8585 = vmatprep.subr.mxu0 0.0
  %8586 = vmatpush1.msra.mxu0 0.0
  %8587 = vmatprep.subr.mxu0 0.0
  %8588 = vmatpush1.msra.mxu0 0.0
  %8589 = vmatprep.subr.mxu0 0.0
  %8590 = vmatpush1.msra.mxu0 0.0
  %8591 = vmatprep.subr.mxu0 0.0
  %8592 = vmatpush1.msra.mxu0 0.0
  %8593 = vmatprep.subr.mxu0 0.0
  %8594 = vmatpush1.msra.mxu0 0.0
  %8595 = vmatprep.subr.mxu0 0.0
  %8596 = vmatpush1.msra.mxu0 0.0
  %8597 = vmatprep.subr.mxu0 0.0
  %8598 = vmatpush1.msra.mxu0 0.0
  %8599 = vmatprep.subr.mxu0 0.0
  %8600 = vmatpush1.msra.mxu0 0.0
  %8601 = vmatprep.subr.mxu0 0.0
  %8602 = vmatpush1.msra.mxu0 0.0
  %8603 = vmatprep.subr.mxu0 0.0
  %8604 = vmatpush1.msra.mxu0 0.0
  %8605 = vmatprep.subr.mxu0 0.0
  %8606 = vmatpush1.msra.mxu0 0.0
  %8607 = vmatprep.subr.mxu0 0.0
  %8608 = vmatpush1.msra.mxu0 0.0
  %8609 = vmatprep.subr.mxu0 0.0
  %8610 = vmatpush1.msra.mxu0 0.0
  %8611 = vmatprep.subr.mxu0 0.0
  %8612 = vmatpush1.msra.mxu0 0.0
  %8613 = vmatprep.mubr.f32.mxu0 0.0
  %8614 = vmatmul.mubr.f32.gmra.mrb[0].mxu0 %v8541
  %v8615 = vpop.f32.mrb[0].mxu0
  %v8616 = vadd.f32 0.0, %v8615
  %v8617 = vpop.f32.mrb[0].mxu0
  %v8618 = vadd.f32 0.0, %v8617
  %8619 = vdwg.mxu0
  %v8620 = vadd.f32 %v8356, %v8616
  %v8621 = vadd.f32 %v8357, %v8618
  %v8622 = vld [vmem:[#allocation4 + $0xb8] sm:$0xff]
  %s8623 = scalar_lea.vmem %s9, 736
  %v8624 = vld [vmem:[%s8623] sm:$0xff]
  %v8625 = vld [vmem:[%s8623 + $0x8] sm:$0xff]
  %v8626 = vld [vmem:[%s8623 + $0x10] sm:$0x3f]
  %v8627 = vld [vmem:[%s8623 + $0x18] sm:$0x3f]
  %v8629 = vsel %vm104, %v8622, 0
  %v8632 = vsel %vm195, %v8626, 0
  %v8635 = vsel %vm195, %v8627, 0
  %8637 = vmatprep.subr.mxu0 %v8625
  %8638 = vmatpush1.msra.mxu0 %v8624
  %8639 = vmatprep.subr.mxu0 %v8635
  %8640 = vmatpush1.msra.mxu0 %v8632
  %8641 = vmatprep.subr.mxu0 0.0
  %8642 = vmatpush1.msra.mxu0 0.0
  %8643 = vmatprep.subr.mxu0 0.0
  %8644 = vmatpush1.msra.mxu0 0.0
  %8645 = vmatprep.subr.mxu0 0.0
  %8646 = vmatpush1.msra.mxu0 0.0
  %8647 = vmatprep.subr.mxu0 0.0
  %8648 = vmatpush1.msra.mxu0 0.0
  %8649 = vmatprep.subr.mxu0 0.0
  %8650 = vmatpush1.msra.mxu0 0.0
  %8651 = vmatprep.subr.mxu0 0.0
  %8652 = vmatpush1.msra.mxu0 0.0
  %8653 = vmatprep.subr.mxu0 0.0
  %8654 = vmatpush1.msra.mxu0 0.0
  %8655 = vmatprep.subr.mxu0 0.0
  %8656 = vmatpush1.msra.mxu0 0.0
  %8657 = vmatprep.subr.mxu0 0.0
  %8658 = vmatpush1.msra.mxu0 0.0
  %8659 = vmatprep.subr.mxu0 0.0
  %8660 = vmatpush1.msra.mxu0 0.0
  %8661 = vmatprep.subr.mxu0 0.0
  %8662 = vmatpush1.msra.mxu0 0.0
  %8663 = vmatprep.subr.mxu0 0.0
  %8664 = vmatpush1.msra.mxu0 0.0
  %8665 = vmatprep.subr.mxu0 0.0
  %8666 = vmatpush1.msra.mxu0 0.0
  %8667 = vmatprep.subr.mxu0 0.0
  %8668 = vmatpush1.msra.mxu0 0.0
  %8669 = vmatprep.subr.mxu0 0.0
  %8670 = vmatpush1.msra.mxu0 0.0
  %8671 = vmatprep.subr.mxu0 0.0
  %8672 = vmatpush1.msra.mxu0 0.0
  %8673 = vmatprep.subr.mxu0 0.0
  %8674 = vmatpush1.msra.mxu0 0.0
  %8675 = vmatprep.subr.mxu0 0.0
  %8676 = vmatpush1.msra.mxu0 0.0
  %8677 = vmatprep.subr.mxu0 0.0
  %8678 = vmatpush1.msra.mxu0 0.0
  %8679 = vmatprep.subr.mxu0 0.0
  %8680 = vmatpush1.msra.mxu0 0.0
  %8681 = vmatprep.subr.mxu0 0.0
  %8682 = vmatpush1.msra.mxu0 0.0
  %8683 = vmatprep.subr.mxu0 0.0
  %8684 = vmatpush1.msra.mxu0 0.0
  %8685 = vmatprep.subr.mxu0 0.0
  %8686 = vmatpush1.msra.mxu0 0.0
  %8687 = vmatprep.subr.mxu0 0.0
  %8688 = vmatpush1.msra.mxu0 0.0
  %8689 = vmatprep.subr.mxu0 0.0
  %8690 = vmatpush1.msra.mxu0 0.0
  %8691 = vmatprep.subr.mxu0 0.0
  %8692 = vmatpush1.msra.mxu0 0.0
  %8693 = vmatprep.subr.mxu0 0.0
  %8694 = vmatpush1.msra.mxu0 0.0
  %8695 = vmatprep.subr.mxu0 0.0
  %8696 = vmatpush1.msra.mxu0 0.0
  %8697 = vmatprep.subr.mxu0 0.0
  %8698 = vmatpush1.msra.mxu0 0.0
  %8699 = vmatprep.subr.mxu0 0.0
  %8700 = vmatpush1.msra.mxu0 0.0
  %8701 = vmatprep.mubr.f32.mxu0 0.0
  %8702 = vmatmul.mubr.f32.gmra.mrb[0].mxu0 %v8629
  %v8703 = vpop.f32.mrb[0].mxu0
  %v8704 = vadd.f32 0.0, %v8703
  %v8705 = vpop.f32.mrb[0].mxu0
  %v8706 = vadd.f32 0.0, %v8705
  %8707 = vdwg.mxu0
  %v8708 = vadd.f32 %v8444, %v8704
  %v8709 = vadd.f32 %v8445, %v8706
  %v8710 = vld [vmem:[#allocation4 + $0xc0] sm:$0xff]
  %s8711 = scalar_lea.vmem %s9, 768
  %v8712 = vld [vmem:[%s8711] sm:$0xff]
  %v8713 = vld [vmem:[%s8711 + $0x8] sm:$0xff]
  %v8714 = vld [vmem:[%s8711 + $0x10] sm:$0x3f]
  %v8715 = vld [vmem:[%s8711 + $0x18] sm:$0x3f]
  %v8717 = vsel %vm104, %v8710, 0
  %v8720 = vsel %vm195, %v8714, 0
  %v8723 = vsel %vm195, %v8715, 0
  %8725 = vmatprep.subr.mxu0 %v8713
  %8726 = vmatpush1.msra.mxu0 %v8712
  %8727 = vmatprep.subr.mxu0 %v8723
  %8728 = vmatpush1.msra.mxu0 %v8720
  %8729 = vmatprep.subr.mxu0 0.0
  %8730 = vmatpush1.msra.mxu0 0.0
  %8731 = vmatprep.subr.mxu0 0.0
  %8732 = vmatpush1.msra.mxu0 0.0
  %8733 = vmatprep.subr.mxu0 0.0
  %8734 = vmatpush1.msra.mxu0 0.0
  %8735 = vmatprep.subr.mxu0 0.0
  %8736 = vmatpush1.msra.mxu0 0.0
  %8737 = vmatprep.subr.mxu0 0.0
  %8738 = vmatpush1.msra.mxu0 0.0
  %8739 = vmatprep.subr.mxu0 0.0
  %8740 = vmatpush1.msra.mxu0 0.0
  %8741 = vmatprep.subr.mxu0 0.0
  %8742 = vmatpush1.msra.mxu0 0.0
  %8743 = vmatprep.subr.mxu0 0.0
  %8744 = vmatpush1.msra.mxu0 0.0
  %8745 = vmatprep.subr.mxu0 0.0
  %8746 = vmatpush1.msra.mxu0 0.0
  %8747 = vmatprep.subr.mxu0 0.0
  %8748 = vmatpush1.msra.mxu0 0.0
  %8749 = vmatprep.subr.mxu0 0.0
  %8750 = vmatpush1.msra.mxu0 0.0
  %8751 = vmatprep.subr.mxu0 0.0
  %8752 = vmatpush1.msra.mxu0 0.0
  %8753 = vmatprep.subr.mxu0 0.0
  %8754 = vmatpush1.msra.mxu0 0.0
  %8755 = vmatprep.subr.mxu0 0.0
  %8756 = vmatpush1.msra.mxu0 0.0
  %8757 = vmatprep.subr.mxu0 0.0
  %8758 = vmatpush1.msra.mxu0 0.0
  %8759 = vmatprep.subr.mxu0 0.0
  %8760 = vmatpush1.msra.mxu0 0.0
  %8761 = vmatprep.subr.mxu0 0.0
  %8762 = vmatpush1.msra.mxu0 0.0
  %8763 = vmatprep.subr.mxu0 0.0
  %8764 = vmatpush1.msra.mxu0 0.0
  %8765 = vmatprep.subr.mxu0 0.0
  %8766 = vmatpush1.msra.mxu0 0.0
  %8767 = vmatprep.subr.mxu0 0.0
  %8768 = vmatpush1.msra.mxu0 0.0
  %8769 = vmatprep.subr.mxu0 0.0
  %8770 = vmatpush1.msra.mxu0 0.0
  %8771 = vmatprep.subr.mxu0 0.0
  %8772 = vmatpush1.msra.mxu0 0.0
  %8773 = vmatprep.subr.mxu0 0.0
  %8774 = vmatpush1.msra.mxu0 0.0
  %8775 = vmatprep.subr.mxu0 0.0
  %8776 = vmatpush1.msra.mxu0 0.0
  %8777 = vmatprep.subr.mxu0 0.0
  %8778 = vmatpush1.msra.mxu0 0.0
  %8779 = vmatprep.subr.mxu0 0.0
  %8780 = vmatpush1.msra.mxu0 0.0
  %8781 = vmatprep.subr.mxu0 0.0
  %8782 = vmatpush1.msra.mxu0 0.0
  %8783 = vmatprep.subr.mxu0 0.0
  %8784 = vmatpush1.msra.mxu0 0.0
  %8785 = vmatprep.subr.mxu0 0.0
  %8786 = vmatpush1.msra.mxu0 0.0
  %8787 = vmatprep.subr.mxu0 0.0
  %8788 = vmatpush1.msra.mxu0 0.0
  %8789 = vmatprep.mubr.f32.mxu0 0.0
  %8790 = vmatmul.mubr.f32.gmra.mrb[0].mxu0 %v8717
  %v8791 = vpop.f32.mrb[0].mxu0
  %v8792 = vadd.f32 0.0, %v8791
  %v8793 = vpop.f32.mrb[0].mxu0
  %v8794 = vadd.f32 0.0, %v8793
  %8795 = vdwg.mxu0
  %v8796 = vadd.f32 %v8532, %v8792
  %v8797 = vadd.f32 %v8533, %v8794
  %v8798 = vld [vmem:[#allocation4 + $0xc8] sm:$0xff]
  %s8799 = scalar_lea.vmem %s9, 800
  %v8800 = vld [vmem:[%s8799] sm:$0xff]
  %v8801 = vld [vmem:[%s8799 + $0x8] sm:$0xff]
  %v8802 = vld [vmem:[%s8799 + $0x10] sm:$0x3f]
  %v8803 = vld [vmem:[%s8799 + $0x18] sm:$0x3f]
  %v8805 = vsel %vm104, %v8798, 0
  %v8808 = vsel %vm195, %v8802, 0
  %v8811 = vsel %vm195, %v8803, 0
  %8813 = vmatprep.subr.mxu0 %v8801
  %8814 = vmatpush1.msra.mxu0 %v8800
  %8815 = vmatprep.subr.mxu0 %v8811
  %8816 = vmatpush1.msra.mxu0 %v8808
  %8817 = vmatprep.subr.mxu0 0.0
  %8818 = vmatpush1.msra.mxu0 0.0
  %8819 = vmatprep.subr.mxu0 0.0
  %8820 = vmatpush1.msra.mxu0 0.0
  %8821 = vmatprep.subr.mxu0 0.0
  %8822 = vmatpush1.msra.mxu0 0.0
  %8823 = vmatprep.subr.mxu0 0.0
  %8824 = vmatpush1.msra.mxu0 0.0
  %8825 = vmatprep.subr.mxu0 0.0
  %8826 = vmatpush1.msra.mxu0 0.0
  %8827 = vmatprep.subr.mxu0 0.0
  %8828 = vmatpush1.msra.mxu0 0.0
  %8829 = vmatprep.subr.mxu0 0.0
  %8830 = vmatpush1.msra.mxu0 0.0
  %8831 = vmatprep.subr.mxu0 0.0
  %8832 = vmatpush1.msra.mxu0 0.0
  %8833 = vmatprep.subr.mxu0 0.0
  %8834 = vmatpush1.msra.mxu0 0.0
  %8835 = vmatprep.subr.mxu0 0.0
  %8836 = vmatpush1.msra.mxu0 0.0
  %8837 = vmatprep.subr.mxu0 0.0
  %8838 = vmatpush1.msra.mxu0 0.0
  %8839 = vmatprep.subr.mxu0 0.0
  %8840 = vmatpush1.msra.mxu0 0.0
  %8841 = vmatprep.subr.mxu0 0.0
  %8842 = vmatpush1.msra.mxu0 0.0
  %8843 = vmatprep.subr.mxu0 0.0
  %8844 = vmatpush1.msra.mxu0 0.0
  %8845 = vmatprep.subr.mxu0 0.0
  %8846 = vmatpush1.msra.mxu0 0.0
  %8847 = vmatprep.subr.mxu0 0.0
  %8848 = vmatpush1.msra.mxu0 0.0
  %8849 = vmatprep.subr.mxu0 0.0
  %8850 = vmatpush1.msra.mxu0 0.0
  %8851 = vmatprep.subr.mxu0 0.0
  %8852 = vmatpush1.msra.mxu0 0.0
  %8853 = vmatprep.subr.mxu0 0.0
  %8854 = vmatpush1.msra.mxu0 0.0
  %8855 = vmatprep.subr.mxu0 0.0
  %8856 = vmatpush1.msra.mxu0 0.0
  %8857 = vmatprep.subr.mxu0 0.0
  %8858 = vmatpush1.msra.mxu0 0.0
  %8859 = vmatprep.subr.mxu0 0.0
  %8860 = vmatpush1.msra.mxu0 0.0
  %8861 = vmatprep.subr.mxu0 0.0
  %8862 = vmatpush1.msra.mxu0 0.0
  %8863 = vmatprep.subr.mxu0 0.0
  %8864 = vmatpush1.msra.mxu0 0.0
  %8865 = vmatprep.subr.mxu0 0.0
  %8866 = vmatpush1.msra.mxu0 0.0
  %8867 = vmatprep.subr.mxu0 0.0
  %8868 = vmatpush1.msra.mxu0 0.0
  %8869 = vmatprep.subr.mxu0 0.0
  %8870 = vmatpush1.msra.mxu0 0.0
  %8871 = vmatprep.subr.mxu0 0.0
  %8872 = vmatpush1.msra.mxu0 0.0
  %8873 = vmatprep.subr.mxu0 0.0
  %8874 = vmatpush1.msra.mxu0 0.0
  %8875 = vmatprep.subr.mxu0 0.0
  %8876 = vmatpush1.msra.mxu0 0.0
  %8877 = vmatprep.mubr.f32.mxu0 0.0
  %8878 = vmatmul.mubr.f32.gmra.mrb[0].mxu0 %v8805
  %v8879 = vpop.f32.mrb[0].mxu0
  %v8880 = vadd.f32 0.0, %v8879
  %v8881 = vpop.f32.mrb[0].mxu0
  %v8882 = vadd.f32 0.0, %v8881
  %8883 = vdwg.mxu0
  %v8884 = vadd.f32 %v8620, %v8880
  %v8885 = vadd.f32 %v8621, %v8882
  %v8886 = vld [vmem:[#allocation4 + $0xd0] sm:$0xff]
  %s8887 = scalar_lea.vmem %s9, 832
  %v8888 = vld [vmem:[%s8887] sm:$0xff]
  %v8889 = vld [vmem:[%s8887 + $0x8] sm:$0xff]
  %v8890 = vld [vmem:[%s8887 + $0x10] sm:$0x3f]
  %v8891 = vld [vmem:[%s8887 + $0x18] sm:$0x3f]
  %v8893 = vsel %vm104, %v8886, 0
  %v8896 = vsel %vm195, %v8890, 0
  %v8899 = vsel %vm195, %v8891, 0
  %8901 = vmatprep.subr.mxu0 %v8889
  %8902 = vmatpush1.msra.mxu0 %v8888
  %8903 = vmatprep.subr.mxu0 %v8899
  %8904 = vmatpush1.msra.mxu0 %v8896
  %8905 = vmatprep.subr.mxu0 0.0
  %8906 = vmatpush1.msra.mxu0 0.0
  %8907 = vmatprep.subr.mxu0 0.0
  %8908 = vmatpush1.msra.mxu0 0.0
  %8909 = vmatprep.subr.mxu0 0.0
  %8910 = vmatpush1.msra.mxu0 0.0
  %8911 = vmatprep.subr.mxu0 0.0
  %8912 = vmatpush1.msra.mxu0 0.0
  %8913 = vmatprep.subr.mxu0 0.0
  %8914 = vmatpush1.msra.mxu0 0.0
  %8915 = vmatprep.subr.mxu0 0.0
  %8916 = vmatpush1.msra.mxu0 0.0
  %8917 = vmatprep.subr.mxu0 0.0
  %8918 = vmatpush1.msra.mxu0 0.0
  %8919 = vmatprep.subr.mxu0 0.0
  %8920 = vmatpush1.msra.mxu0 0.0
  %8921 = vmatprep.subr.mxu0 0.0
  %8922 = vmatpush1.msra.mxu0 0.0
  %8923 = vmatprep.subr.mxu0 0.0
  %8924 = vmatpush1.msra.mxu0 0.0
  %8925 = vmatprep.subr.mxu0 0.0
  %8926 = vmatpush1.msra.mxu0 0.0
  %8927 = vmatprep.subr.mxu0 0.0
  %8928 = vmatpush1.msra.mxu0 0.0
  %8929 = vmatprep.subr.mxu0 0.0
  %8930 = vmatpush1.msra.mxu0 0.0
  %8931 = vmatprep.subr.mxu0 0.0
  %8932 = vmatpush1.msra.mxu0 0.0
  %8933 = vmatprep.subr.mxu0 0.0
  %8934 = vmatpush1.msra.mxu0 0.0
  %8935 = vmatprep.subr.mxu0 0.0
  %8936 = vmatpush1.msra.mxu0 0.0
  %8937 = vmatprep.subr.mxu0 0.0
  %8938 = vmatpush1.msra.mxu0 0.0
  %8939 = vmatprep.subr.mxu0 0.0
  %8940 = vmatpush1.msra.mxu0 0.0
  %8941 = vmatprep.subr.mxu0 0.0
  %8942 = vmatpush1.msra.mxu0 0.0
  %8943 = vmatprep.subr.mxu0 0.0
  %8944 = vmatpush1.msra.mxu0 0.0
  %8945 = vmatprep.subr.mxu0 0.0
  %8946 = vmatpush1.msra.mxu0 0.0
  %8947 = vmatprep.subr.mxu0 0.0
  %8948 = vmatpush1.msra.mxu0 0.0
  %8949 = vmatprep.subr.mxu0 0.0
  %8950 = vmatpush1.msra.mxu0 0.0
  %8951 = vmatprep.subr.mxu0 0.0
  %8952 = vmatpush1.msra.mxu0 0.0
  %8953 = vmatprep.subr.mxu0 0.0
  %8954 = vmatpush1.msra.mxu0 0.0
  %8955 = vmatprep.subr.mxu0 0.0
  %8956 = vmatpush1.msra.mxu0 0.0
  %8957 = vmatprep.subr.mxu0 0.0
  %8958 = vmatpush1.msra.mxu0 0.0
  %8959 = vmatprep.subr.mxu0 0.0
  %8960 = vmatpush1.msra.mxu0 0.0
  %8961 = vmatprep.subr.mxu0 0.0
  %8962 = vmatpush1.msra.mxu0 0.0
  %8963 = vmatprep.subr.mxu0 0.0
  %8964 = vmatpush1.msra.mxu0 0.0
  %8965 = vmatprep.mubr.f32.mxu0 0.0
  %8966 = vmatmul.mubr.f32.gmra.mrb[0].mxu0 %v8893
  %v8967 = vpop.f32.mrb[0].mxu0
  %v8968 = vadd.f32 0.0, %v8967
  %v8969 = vpop.f32.mrb[0].mxu0
  %v8970 = vadd.f32 0.0, %v8969
  %8971 = vdwg.mxu0
  %v8972 = vadd.f32 %v8708, %v8968
  %v8973 = vadd.f32 %v8709, %v8970
  %v8974 = vld [vmem:[#allocation4 + $0xd8] sm:$0xff]
  %s8975 = scalar_lea.vmem %s9, 864
  %v8976 = vld [vmem:[%s8975] sm:$0xff]
  %v8977 = vld [vmem:[%s8975 + $0x8] sm:$0xff]
  %v8978 = vld [vmem:[%s8975 + $0x10] sm:$0x3f]
  %v8979 = vld [vmem:[%s8975 + $0x18] sm:$0x3f]
  %v8981 = vsel %vm104, %v8974, 0
  %v8984 = vsel %vm195, %v8978, 0
  %v8987 = vsel %vm195, %v8979, 0
  %8989 = vmatprep.subr.mxu0 %v8977
  %8990 = vmatpush1.msra.mxu0 %v8976
  %8991 = vmatprep.subr.mxu0 %v8987
  %8992 = vmatpush1.msra.mxu0 %v8984
  %8993 = vmatprep.subr.mxu0 0.0
  %8994 = vmatpush1.msra.mxu0 0.0
  %8995 = vmatprep.subr.mxu0 0.0
  %8996 = vmatpush1.msra.mxu0 0.0
  %8997 = vmatprep.subr.mxu0 0.0
  %8998 = vmatpush1.msra.mxu0 0.0
  %8999 = vmatprep.subr.mxu0 0.0
  %9000 = vmatpush1.msra.mxu0 0.0
  %9001 = vmatprep.subr.mxu0 0.0
  %9002 = vmatpush1.msra.mxu0 0.0
  %9003 = vmatprep.subr.mxu0 0.0
  %9004 = vmatpush1.msra.mxu0 0.0
  %9005 = vmatprep.subr.mxu0 0.0
  %9006 = vmatpush1.msra.mxu0 0.0
  %9007 = vmatprep.subr.mxu0 0.0
  %9008 = vmatpush1.msra.mxu0 0.0
  %9009 = vmatprep.subr.mxu0 0.0
  %9010 = vmatpush1.msra.mxu0 0.0
  %9011 = vmatprep.subr.mxu0 0.0
  %9012 = vmatpush1.msra.mxu0 0.0
  %9013 = vmatprep.subr.mxu0 0.0
  %9014 = vmatpush1.msra.mxu0 0.0
  %9015 = vmatprep.subr.mxu0 0.0
  %9016 = vmatpush1.msra.mxu0 0.0
  %9017 = vmatprep.subr.mxu0 0.0
  %9018 = vmatpush1.msra.mxu0 0.0
  %9019 = vmatprep.subr.mxu0 0.0
  %9020 = vmatpush1.msra.mxu0 0.0
  %9021 = vmatprep.subr.mxu0 0.0
  %9022 = vmatpush1.msra.mxu0 0.0
  %9023 = vmatprep.subr.mxu0 0.0
  %9024 = vmatpush1.msra.mxu0 0.0
  %9025 = vmatprep.subr.mxu0 0.0
  %9026 = vmatpush1.msra.mxu0 0.0
  %9027 = vmatprep.subr.mxu0 0.0
  %9028 = vmatpush1.msra.mxu0 0.0
  %9029 = vmatprep.subr.mxu0 0.0
  %9030 = vmatpush1.msra.mxu0 0.0
  %9031 = vmatprep.subr.mxu0 0.0
  %9032 = vmatpush1.msra.mxu0 0.0
  %9033 = vmatprep.subr.mxu0 0.0
  %9034 = vmatpush1.msra.mxu0 0.0
  %9035 = vmatprep.subr.mxu0 0.0
  %9036 = vmatpush1.msra.mxu0 0.0
  %9037 = vmatprep.subr.mxu0 0.0
  %9038 = vmatpush1.msra.mxu0 0.0
  %9039 = vmatprep.subr.mxu0 0.0
  %9040 = vmatpush1.msra.mxu0 0.0
  %9041 = vmatprep.subr.mxu0 0.0
  %9042 = vmatpush1.msra.mxu0 0.0
  %9043 = vmatprep.subr.mxu0 0.0
  %9044 = vmatpush1.msra.mxu0 0.0
  %9045 = vmatprep.subr.mxu0 0.0
  %9046 = vmatpush1.msra.mxu0 0.0
  %9047 = vmatprep.subr.mxu0 0.0
  %9048 = vmatpush1.msra.mxu0 0.0
  %9049 = vmatprep.subr.mxu0 0.0
  %9050 = vmatpush1.msra.mxu0 0.0
  %9051 = vmatprep.subr.mxu0 0.0
  %9052 = vmatpush1.msra.mxu0 0.0
  %9053 = vmatprep.mubr.f32.mxu0 0.0
  %9054 = vmatmul.mubr.f32.gmra.mrb[0].mxu0 %v8981
  %v9055 = vpop.f32.mrb[0].mxu0
  %v9056 = vadd.f32 0.0, %v9055
  %v9057 = vpop.f32.mrb[0].mxu0
  %v9058 = vadd.f32 0.0, %v9057
  %9059 = vdwg.mxu0
  %v9060 = vadd.f32 %v8796, %v9056
  %v9061 = vadd.f32 %v8797, %v9058
  %v9062 = vld [vmem:[#allocation4 + $0xe0] sm:$0xff]
  %s9063 = scalar_lea.vmem %s9, 896
  %v9064 = vld [vmem:[%s9063] sm:$0xff]
  %v9065 = vld [vmem:[%s9063 + $0x8] sm:$0xff]
  %v9066 = vld [vmem:[%s9063 + $0x10] sm:$0x3f]
  %v9067 = vld [vmem:[%s9063 + $0x18] sm:$0x3f]
  %v9069 = vsel %vm104, %v9062, 0
  %v9072 = vsel %vm195, %v9066, 0
  %v9075 = vsel %vm195, %v9067, 0
  %9077 = vmatprep.subr.mxu0 %v9065
  %9078 = vmatpush1.msra.mxu0 %v9064
  %9079 = vmatprep.subr.mxu0 %v9075
  %9080 = vmatpush1.msra.mxu0 %v9072
  %9081 = vmatprep.subr.mxu0 0.0
  %9082 = vmatpush1.msra.mxu0 0.0
  %9083 = vmatprep.subr.mxu0 0.0
  %9084 = vmatpush1.msra.mxu0 0.0
  %9085 = vmatprep.subr.mxu0 0.0
  %9086 = vmatpush1.msra.mxu0 0.0
  %9087 = vmatprep.subr.mxu0 0.0
  %9088 = vmatpush1.msra.mxu0 0.0
  %9089 = vmatprep.subr.mxu0 0.0
  %9090 = vmatpush1.msra.mxu0 0.0
  %9091 = vmatprep.subr.mxu0 0.0
  %9092 = vmatpush1.msra.mxu0 0.0
  %9093 = vmatprep.subr.mxu0 0.0
  %9094 = vmatpush1.msra.mxu0 0.0
  %9095 = vmatprep.subr.mxu0 0.0
  %9096 = vmatpush1.msra.mxu0 0.0
  %9097 = vmatprep.subr.mxu0 0.0
  %9098 = vmatpush1.msra.mxu0 0.0
  %9099 = vmatprep.subr.mxu0 0.0
  %9100 = vmatpush1.msra.mxu0 0.0
  %9101 = vmatprep.subr.mxu0 0.0
  %9102 = vmatpush1.msra.mxu0 0.0
  %9103 = vmatprep.subr.mxu0 0.0
  %9104 = vmatpush1.msra.mxu0 0.0
  %9105 = vmatprep.subr.mxu0 0.0
  %9106 = vmatpush1.msra.mxu0 0.0
  %9107 = vmatprep.subr.mxu0 0.0
  %9108 = vmatpush1.msra.mxu0 0.0
  %9109 = vmatprep.subr.mxu0 0.0
  %9110 = vmatpush1.msra.mxu0 0.0
  %9111 = vmatprep.subr.mxu0 0.0
  %9112 = vmatpush1.msra.mxu0 0.0
  %9113 = vmatprep.subr.mxu0 0.0
  %9114 = vmatpush1.msra.mxu0 0.0
  %9115 = vmatprep.subr.mxu0 0.0
  %9116 = vmatpush1.msra.mxu0 0.0
  %9117 = vmatprep.subr.mxu0 0.0
  %9118 = vmatpush1.msra.mxu0 0.0
  %9119 = vmatprep.subr.mxu0 0.0
  %9120 = vmatpush1.msra.mxu0 0.0
  %9121 = vmatprep.subr.mxu0 0.0
  %9122 = vmatpush1.msra.mxu0 0.0
  %9123 = vmatprep.subr.mxu0 0.0
  %9124 = vmatpush1.msra.mxu0 0.0
  %9125 = vmatprep.subr.mxu0 0.0
  %9126 = vmatpush1.msra.mxu0 0.0
  %9127 = vmatprep.subr.mxu0 0.0
  %9128 = vmatpush1.msra.mxu0 0.0
  %9129 = vmatprep.subr.mxu0 0.0
  %9130 = vmatpush1.msra.mxu0 0.0
  %9131 = vmatprep.subr.mxu0 0.0
  %9132 = vmatpush1.msra.mxu0 0.0
  %9133 = vmatprep.subr.mxu0 0.0
  %9134 = vmatpush1.msra.mxu0 0.0
  %9135 = vmatprep.subr.mxu0 0.0
  %9136 = vmatpush1.msra.mxu0 0.0
  %9137 = vmatprep.subr.mxu0 0.0
  %9138 = vmatpush1.msra.mxu0 0.0
  %9139 = vmatprep.subr.mxu0 0.0
  %9140 = vmatpush1.msra.mxu0 0.0
  %9141 = vmatprep.mubr.f32.mxu0 0.0
  %9142 = vmatmul.mubr.f32.gmra.mrb[0].mxu0 %v9069
  %v9143 = vpop.f32.mrb[0].mxu0
  %v9144 = vadd.f32 0.0, %v9143
  %v9145 = vpop.f32.mrb[0].mxu0
  %v9146 = vadd.f32 0.0, %v9145
  %9147 = vdwg.mxu0
  %v9148 = vadd.f32 %v8884, %v9144
  %v9149 = vadd.f32 %v8885, %v9146
  %v9150 = vld [vmem:[#allocation4 + $0xe8] sm:$0xff]
  %s9151 = scalar_lea.vmem %s9, 928
  %v9152 = vld [vmem:[%s9151] sm:$0xff]
  %v9153 = vld [vmem:[%s9151 + $0x8] sm:$0xff]
  %v9154 = vld [vmem:[%s9151 + $0x10] sm:$0x3f]
  %v9155 = vld [vmem:[%s9151 + $0x18] sm:$0x3f]
  %v9157 = vsel %vm104, %v9150, 0
  %v9160 = vsel %vm195, %v9154, 0
  %v9163 = vsel %vm195, %v9155, 0
  %9165 = vmatprep.subr.mxu0 %v9153
  %9166 = vmatpush1.msra.mxu0 %v9152
  %9167 = vmatprep.subr.mxu0 %v9163
  %9168 = vmatpush1.msra.mxu0 %v9160
  %9169 = vmatprep.subr.mxu0 0.0
  %9170 = vmatpush1.msra.mxu0 0.0
  %9171 = vmatprep.subr.mxu0 0.0
  %9172 = vmatpush1.msra.mxu0 0.0
  %9173 = vmatprep.subr.mxu0 0.0
  %9174 = vmatpush1.msra.mxu0 0.0
  %9175 = vmatprep.subr.mxu0 0.0
  %9176 = vmatpush1.msra.mxu0 0.0
  %9177 = vmatprep.subr.mxu0 0.0
  %9178 = vmatpush1.msra.mxu0 0.0
  %9179 = vmatprep.subr.mxu0 0.0
  %9180 = vmatpush1.msra.mxu0 0.0
  %9181 = vmatprep.subr.mxu0 0.0
  %9182 = vmatpush1.msra.mxu0 0.0
  %9183 = vmatprep.subr.mxu0 0.0
  %9184 = vmatpush1.msra.mxu0 0.0
  %9185 = vmatprep.subr.mxu0 0.0
  %9186 = vmatpush1.msra.mxu0 0.0
  %9187 = vmatprep.subr.mxu0 0.0
  %9188 = vmatpush1.msra.mxu0 0.0
  %9189 = vmatprep.subr.mxu0 0.0
  %9190 = vmatpush1.msra.mxu0 0.0
  %9191 = vmatprep.subr.mxu0 0.0
  %9192 = vmatpush1.msra.mxu0 0.0
  %9193 = vmatprep.subr.mxu0 0.0
  %9194 = vmatpush1.msra.mxu0 0.0
  %9195 = vmatprep.subr.mxu0 0.0
  %9196 = vmatpush1.msra.mxu0 0.0
  %9197 = vmatprep.subr.mxu0 0.0
  %9198 = vmatpush1.msra.mxu0 0.0
  %9199 = vmatprep.subr.mxu0 0.0
  %9200 = vmatpush1.msra.mxu0 0.0
  %9201 = vmatprep.subr.mxu0 0.0
  %9202 = vmatpush1.msra.mxu0 0.0
  %9203 = vmatprep.subr.mxu0 0.0
  %9204 = vmatpush1.msra.mxu0 0.0
  %9205 = vmatprep.subr.mxu0 0.0
  %9206 = vmatpush1.msra.mxu0 0.0
  %9207 = vmatprep.subr.mxu0 0.0
  %9208 = vmatpush1.msra.mxu0 0.0
  %9209 = vmatprep.subr.mxu0 0.0
  %9210 = vmatpush1.msra.mxu0 0.0
  %9211 = vmatprep.subr.mxu0 0.0
  %9212 = vmatpush1.msra.mxu0 0.0
  %9213 = vmatprep.subr.mxu0 0.0
  %9214 = vmatpush1.msra.mxu0 0.0
  %9215 = vmatprep.subr.mxu0 0.0
  %9216 = vmatpush1.msra.mxu0 0.0
  %9217 = vmatprep.subr.mxu0 0.0
  %9218 = vmatpush1.msra.mxu0 0.0
  %9219 = vmatprep.subr.mxu0 0.0
  %9220 = vmatpush1.msra.mxu0 0.0
  %9221 = vmatprep.subr.mxu0 0.0
  %9222 = vmatpush1.msra.mxu0 0.0
  %9223 = vmatprep.subr.mxu0 0.0
  %9224 = vmatpush1.msra.mxu0 0.0
  %9225 = vmatprep.subr.mxu0 0.0
  %9226 = vmatpush1.msra.mxu0 0.0
  %9227 = vmatprep.subr.mxu0 0.0
  %9228 = vmatpush1.msra.mxu0 0.0
  %9229 = vmatprep.mubr.f32.mxu0 0.0
  %9230 = vmatmul.mubr.f32.gmra.mrb[0].mxu0 %v9157
  %v9231 = vpop.f32.mrb[0].mxu0
  %v9232 = vadd.f32 0.0, %v9231
  %v9233 = vpop.f32.mrb[0].mxu0
  %v9234 = vadd.f32 0.0, %v9233
  %9235 = vdwg.mxu0
  %v9236 = vadd.f32 %v8972, %v9232
  %v9237 = vadd.f32 %v8973, %v9234
  %v9238 = vadd.f32 %v9060, %v9148
  %v9239 = vadd.f32 %v9061, %v9149
  %v9240 = vadd.f32 %v9238, %v9236
  %v9241 = vadd.f32 %v9239, %v9237
  %v9242 = vld [vmem:[%s10] sm:$0x3]
  %v9244 = vlaneseq
  %v9245 = vshrl.u32 %v9244, 7
  %v9246 = vsub.s32 0, %v9245
  %v9247 = vrot.slane %v9242, %v9246
  %v9248 = vlaneseq
  %v9249 = vshrl.u32 %v9248, 7
  %v9250 = vsub.s32 1, %v9249
  %v9251 = vrot.slane %v9242, %v9250
  %v9254 = vadd.f32 %v9240, %v9247
  %v9255 = vadd.f32 %v9241, %v9251
  %v9256 = vmax.f32 %v9254, 0.0
  %v9257 = vld [vmem:[%s11] sm:$0xff]
  %v9258 = vld [vmem:[%s11 + $0x8] sm:$0xff]
  %v9259 = vld [vmem:[%s11 + $0x10] sm:$0xff]
  %v9260 = vld [vmem:[%s11 + $0x18] sm:$0xff]
  %v9261 = vld [vmem:[%s11 + $0x20] sm:$0xff]
  %v9262 = vld [vmem:[%s11 + $0x28] sm:$0xff]
  %v9263 = vld [vmem:[%s11 + $0x30] sm:$0xff]
  %v9264 = vld [vmem:[%s11 + $0x38] sm:$0xff]
  %v9265 = vld [vmem:[%s11 + $0x40] sm:$0xff]
  %v9266 = vld [vmem:[%s11 + $0x48] sm:$0xff]
  %v9267 = vld [vmem:[%s11 + $0x50] sm:$0xff]
  %v9268 = vld [vmem:[%s11 + $0x58] sm:$0xff]
  %v9269 = vld [vmem:[%s11 + $0x60] sm:$0xff]
  %v9270 = vld [vmem:[%s11 + $0x68] sm:$0xff]
  %v9271 = vld [vmem:[%s11 + $0x70] sm:$0xff]
  %v9272 = vld [vmem:[%s11 + $0x78] sm:$0xff]
  %v9273 = vld [vmem:[%s12] sm:$0x1]
  %v9275 = vlaneseq
  %v9276 = vshrl.u32 %v9275, 7
  %v9277 = vsub.s32 0, %v9276
  %v9278 = vrot.slane %v9273, %v9277
  %9280 = vmatprep.subr.mxu0 0.0
  %9281 = vmatpush1.msra.mxu0 %v9257
  %9282 = vmatprep.subr.mxu0 0.0
  %9283 = vmatpush1.msra.mxu0 %v9258
  %9284 = vmatprep.subr.mxu0 0.0
  %9285 = vmatpush1.msra.mxu0 %v9259
  %9286 = vmatprep.subr.mxu0 0.0
  %9287 = vmatpush1.msra.mxu0 %v9260
  %9288 = vmatprep.subr.mxu0 0.0
  %9289 = vmatpush1.msra.mxu0 %v9261
  %9290 = vmatprep.subr.mxu0 0.0
  %9291 = vmatpush1.msra.mxu0 %v9262
  %9292 = vmatprep.subr.mxu0 0.0
  %9293 = vmatpush1.msra.mxu0 %v9263
  %9294 = vmatprep.subr.mxu0 0.0
  %9295 = vmatpush1.msra.mxu0 %v9264
  %9296 = vmatprep.subr.mxu0 0.0
  %9297 = vmatpush1.msra.mxu0 %v9265
  %9298 = vmatprep.subr.mxu0 0.0
  %9299 = vmatpush1.msra.mxu0 %v9266
  %9300 = vmatprep.subr.mxu0 0.0
  %9301 = vmatpush1.msra.mxu0 %v9267
  %9302 = vmatprep.subr.mxu0 0.0
  %9303 = vmatpush1.msra.mxu0 %v9268
  %9304 = vmatprep.subr.mxu0 0.0
  %9305 = vmatpush1.msra.mxu0 %v9269
  %9306 = vmatprep.subr.mxu0 0.0
  %9307 = vmatpush1.msra.mxu0 %v9270
  %9308 = vmatprep.subr.mxu0 0.0
  %9309 = vmatpush1.msra.mxu0 %v9271
  %9310 = vmatprep.subr.mxu0 0.0
  %9311 = vmatpush1.msra.mxu0 %v9272
  %9312 = vmatprep.subr.mxu0 0.0
  %9313 = vmatpush1.msra.mxu0 0.0
  %9314 = vmatprep.subr.mxu0 0.0
  %9315 = vmatpush1.msra.mxu0 0.0
  %9316 = vmatprep.subr.mxu0 0.0
  %9317 = vmatpush1.msra.mxu0 0.0
  %9318 = vmatprep.subr.mxu0 0.0
  %9319 = vmatpush1.msra.mxu0 0.0
  %9320 = vmatprep.subr.mxu0 0.0
  %9321 = vmatpush1.msra.mxu0 0.0
  %9322 = vmatprep.subr.mxu0 0.0
  %9323 = vmatpush1.msra.mxu0 0.0
  %9324 = vmatprep.subr.mxu0 0.0
  %9325 = vmatpush1.msra.mxu0 0.0
  %9326 = vmatprep.subr.mxu0 0.0
  %9327 = vmatpush1.msra.mxu0 0.0
  %9328 = vmatprep.subr.mxu0 0.0
  %9329 = vmatpush1.msra.mxu0 0.0
  %9330 = vmatprep.subr.mxu0 0.0
  %9331 = vmatpush1.msra.mxu0 0.0
  %9332 = vmatprep.subr.mxu0 0.0
  %9333 = vmatpush1.msra.mxu0 0.0
  %9334 = vmatprep.subr.mxu0 0.0
  %9335 = vmatpush1.msra.mxu0 0.0
  %9336 = vmatprep.subr.mxu0 0.0
  %9337 = vmatpush1.msra.mxu0 0.0
  %9338 = vmatprep.subr.mxu0 0.0
  %9339 = vmatpush1.msra.mxu0 0.0
  %9340 = vmatprep.subr.mxu0 0.0
  %9341 = vmatpush1.msra.mxu0 0.0
  %9342 = vmatprep.subr.mxu0 0.0
  %9343 = vmatpush1.msra.mxu0 0.0
  %9344 = vmatprep.mubr.f32.mxu0 0.0
  %9345 = vmatmul.mubr.f32.gmra.mrb[0].mxu0 %v9256
  %v9346 = vpop.f32.mrb[0].mxu0
  %v9347 = vadd.f32 %v9278, %v9346
  %v9348 = vpop.f32.mrb[0].mxu0
  %9349 = vdwg.mxu0
  %v9350 = vadd.f32 %v9347, %v9255
  %v9351 = vsel %vm448, %v9350, 0.0
  %9352 = vadd.xlane.f32.xlu0 %v9351
  %v9353 = vpop.xlane.xlu0 %9352
  %v9354 = vrcp.pop 64.0
  %v9355 = vmul.f32 %v9353, %v9354
  %v9356 = vsub.f32 %v9350, %v9355
  %v9357 = vmul.f32 %v9356, %v9356
  %v9358 = vsel %vm448, %v9357, 0.0
  %9359 = vadd.xlane.f32.xlu0 %v9358
  %v9360 = vpop.xlane.xlu0 %9359
  %v9361 = vmul.f32 %v9360, %v9354
  %v9362 = vadd.f32 %v9361, 1e-05
  %v9363 = vrsqrt.pop %v9362
  %v9364 = vmul.f32 %v9356, %v9363
  %v9365 = vld [vmem:[%s13] sm:$0x1]
  %v9367 = vlaneseq
  %v9368 = vshrl.u32 %v9367, 7
  %v9369 = vsub.s32 0, %v9368
  %v9370 = vrot.slane %v9365, %v9369
  %v9372 = vmul.f32 %v9364, %v9370
  %v9373 = vld [vmem:[%s14] sm:$0x1]
  %v9375 = vlaneseq
  %v9376 = vshrl.u32 %v9375, 7
  %v9377 = vsub.s32 0, %v9376
  %v9378 = vrot.slane %v9373, %v9377
  %v9380 = vadd.f32 %v9372, %v9378
  %v9381 = vld [vmem:[%s15] sm:$0xff]
  %v9382 = vld [vmem:[%s15 + $0x8] sm:$0xff]
  %v9383 = vld [vmem:[%s15 + $0x10] sm:$0xff]
  %v9384 = vld [vmem:[%s15 + $0x18] sm:$0xff]
  %v9385 = vld [vmem:[%s15 + $0x20] sm:$0xff]
  %v9386 = vld [vmem:[%s15 + $0x28] sm:$0xff]
  %v9387 = vld [vmem:[%s15 + $0x30] sm:$0xff]
  %v9388 = vld [vmem:[%s15 + $0x38] sm:$0xff]
  %v9389 = vld [vmem:[#allocation5] sm:$0x1]
  %v9391 = vlaneseq
  %v9392 = vshrl.u32 %v9391, 7
  %v9393 = vsub.s32 0, %v9392
  %v9394 = vrot.slane %v9389, %v9393
  %v9397 = vsel %vm448, %v9380, 0
  %9399 = vmatprep.subr.mxu0 0.0
  %9400 = vmatpush1.msra.mxu0 %v9381
  %9401 = vmatprep.subr.mxu0 0.0
  %9402 = vmatpush1.msra.mxu0 %v9382
  %9403 = vmatprep.subr.mxu0 0.0
  %9404 = vmatpush1.msra.mxu0 %v9383
  %9405 = vmatprep.subr.mxu0 0.0
  %9406 = vmatpush1.msra.mxu0 %v9384
  %9407 = vmatprep.subr.mxu0 0.0
  %9408 = vmatpush1.msra.mxu0 %v9385
  %9409 = vmatprep.subr.mxu0 0.0
  %9410 = vmatpush1.msra.mxu0 %v9386
  %9411 = vmatprep.subr.mxu0 0.0
  %9412 = vmatpush1.msra.mxu0 %v9387
  %9413 = vmatprep.subr.mxu0 0.0
  %9414 = vmatpush1.msra.mxu0 %v9388
  %9415 = vmatprep.subr.mxu0 0.0
  %9416 = vmatpush1.msra.mxu0 0.0
  %9417 = vmatprep.subr.mxu0 0.0
  %9418 = vmatpush1.msra.mxu0 0.0
  %9419 = vmatprep.subr.mxu0 0.0
  %9420 = vmatpush1.msra.mxu0 0.0
  %9421 = vmatprep.subr.mxu0 0.0
  %9422 = vmatpush1.msra.mxu0 0.0
  %9423 = vmatprep.subr.mxu0 0.0
  %9424 = vmatpush1.msra.mxu0 0.0
  %9425 = vmatprep.subr.mxu0 0.0
  %9426 = vmatpush1.msra.mxu0 0.0
  %9427 = vmatprep.subr.mxu0 0.0
  %9428 = vmatpush1.msra.mxu0 0.0
  %9429 = vmatprep.subr.mxu0 0.0
  %9430 = vmatpush1.msra.mxu0 0.0
  %9431 = vmatprep.subr.mxu0 0.0
  %9432 = vmatpush1.msra.mxu0 0.0
  %9433 = vmatprep.subr.mxu0 0.0
  %9434 = vmatpush1.msra.mxu0 0.0
  %9435 = vmatprep.subr.mxu0 0.0
  %9436 = vmatpush1.msra.mxu0 0.0
  %9437 = vmatprep.subr.mxu0 0.0
  %9438 = vmatpush1.msra.mxu0 0.0
  %9439 = vmatprep.subr.mxu0 0.0
  %9440 = vmatpush1.msra.mxu0 0.0
  %9441 = vmatprep.subr.mxu0 0.0
  %9442 = vmatpush1.msra.mxu0 0.0
  %9443 = vmatprep.subr.mxu0 0.0
  %9444 = vmatpush1.msra.mxu0 0.0
  %9445 = vmatprep.subr.mxu0 0.0
  %9446 = vmatpush1.msra.mxu0 0.0
  %9447 = vmatprep.subr.mxu0 0.0
  %9448 = vmatpush1.msra.mxu0 0.0
  %9449 = vmatprep.subr.mxu0 0.0
  %9450 = vmatpush1.msra.mxu0 0.0
  %9451 = vmatprep.subr.mxu0 0.0
  %9452 = vmatpush1.msra.mxu0 0.0
  %9453 = vmatprep.subr.mxu0 0.0
  %9454 = vmatpush1.msra.mxu0 0.0
  %9455 = vmatprep.subr.mxu0 0.0
  %9456 = vmatpush1.msra.mxu0 0.0
  %9457 = vmatprep.subr.mxu0 0.0
  %9458 = vmatpush1.msra.mxu0 0.0
  %9459 = vmatprep.subr.mxu0 0.0
  %9460 = vmatpush1.msra.mxu0 0.0
  %9461 = vmatprep.subr.mxu0 0.0
  %9462 = vmatpush1.msra.mxu0 0.0
  %9463 = vmatprep.mubr.f32.mxu0 0.0
  %9464 = vmatmul.mubr.f32.gmra.mrb[0].mxu0 %v9397
  %v9465 = vpop.f32.mrb[0].mxu0
  %v9466 = vadd.f32 %v9394, %v9465
  %v9467 = vpop.f32.mrb[0].mxu0
  %9468 = vdwg.mxu0
  %vm9469 = vcmask 7168
  %9470 = vst.msk [vmem:[%s17] sm:$0xff] %vm9469, %v9466
  // Predicated region
  $region70: #{encoder_forward.1} parent=0 // pred_check
    _
  $region71: #{encoder_forward.1} parent=0 // pred_check_branch
    %9472 = sbr.rel (0) target = $region73
  $region72: #{encoder_forward.1} parent=0 // pred_region
    _
  $region73: #{encoder_forward.1} parent=0 // pred_fallthru
    _
  // Predicated region
  $region74: #{encoder_forward.1} parent=0 // pred_check
    _
  $region75: #{encoder_forward.1} parent=0 // pred_check_branch
    %9474 = sbr.rel (0) target = $region77
  $region76: #{encoder_forward.1} parent=0 // pred_region
    _
  $region77: #{encoder_forward.1} parent=0 // pred_fallthru
    _

</llo_original>
